<compile_context>
chip_gen: v7x
topology: tpu7x:2x2x1
jax: 0.10.0
libtpu: 0.0.40
codegen_flags: <defaults>
</compile_context>

<pallas_src>
import jax
import jax.numpy as jnp
import numpy as np
from jax import lax
from jax.experimental import pallas as pl
from jax.experimental.pallas import tpu as pltpu


# ----------------------------- configuration ---------------------------------
SIGMA = 25.0                     # SDE sigma (sigma=1 would divide by log(1)=0)
EMBED_DIM = 128                  # ScoreNet embed_dim
N_LAYERS = 8                     # -> (N_LAYERS - 2) hidden Linear+SiLU, 1 final Linear
IN_DIM = 16
OUT_DIM = 16
BATCH = 256                      # demo batch; must be a multiple of the batch tile
WEIGHT_DTYPE = jnp.bfloat16      # MXU-input dtype for weights/activations

LOG_SIGMA = float(np.log(SIGMA))
INV_2LOG_SIGMA = float(1.0 / (2.0 * np.log(SIGMA)))


# ------------------------------- kernel --------------------------------------
def _silu_kernel(x):
    # EUP-friendly SiLU: exp (EUP) + approximate reciprocal (EUP) instead of
    # letting the exact-divide sigmoid burn VALU slots (Newton iterations).
    # Relative error ~1e-4, well inside the 2e-2 validation tolerance.
    return x * pl.reciprocal(1.0 + jnp.exp(-x), approx=True)


def scorenet_kernel(
    x_ref,    # (T, in_dim)                 f32
    t_ref,    # (T, 1)                      f32
    g_ref,    # (2, E)                      f32   row0 = [W,W]*2pi, row1 = [0, pi/2] phase
    w1_ref,   # (in_dim, E)                 bf16
    ws_ref,   # (2 + n_hidden, E, E)        bf16  [W_embed, W_hidden..., W_final(padded)]
    bs_ref,   # (3 + n_hidden, 1, E)        f32   [b_embed, b1, b_hidden..., b_final(padded)]
    o_ref,    # (T, E)                      f32   lane-dense; only [:, :OUT_DIM] is real
):
    cdt = ws_ref.dtype                        # MXU-input dtype (bf16)
    n_hidden = ws_ref.shape[0] - 2

    t = t_ref[...]                            # (T, 1) f32

    # --- GaussianFourierProjection --------------------------------------------
    # torch: cat([sin(t*W*2pi), cos(t*W*2pi)]); W is duplicated [W, W] and cos is
    # obtained as sin(theta + pi/2) via the precomputed phase row, so a single
    # sin covers the full (T, E) tile (halves the EUP transcendental work).
    proj = t * g_ref[0:1, :] + g_ref[1:2, :]  # (T, E)
    gfp = jnp.sin(proj)

    # --- embed = silu(Linear(GFP(t))) ------------------------------------------
    embed = jnp.dot(gfp.astype(cdt), ws_ref[0],
                    preferred_element_type=jnp.float32) + bs_ref[0]
    embed = _silu_kernel(embed)

    # --- h = silu(Linear1(x)) + embed ------------------------------------------
    h = jnp.dot(x_ref[...].astype(cdt), w1_ref[...],
                preferred_element_type=jnp.float32) + bs_ref[1]
    h = _silu_kernel(h) + embed

    # --- hidden layers: (N_LAYERS - 2) x [Linear(E,E) + SiLU] -------------------
    # fori_loop bounds the weight-slab live ranges (no hoisting past the
    # 64-vreg file); unroll=True keeps LLO scheduling visibility.
    def hidden_layer(i, h):
        h = jnp.dot(h.astype(cdt), ws_ref[1 + i],
                    preferred_element_type=jnp.float32) + bs_ref[2 + i]
        return _silu_kernel(h)

    h = lax.fori_loop(0, n_hidden, hidden_layer, h, unroll=True)

    # --- final Linear (weight lane-padded to E; only :OUT_DIM columns are real) -
    h = jnp.dot(h.astype(cdt), ws_ref[1 + n_hidden],
                preferred_element_type=jnp.float32) + bs_ref[2 + n_hidden]

    # --- divide by marginal_prob_std(t) = sqrt((sigma^{2t}-1)/(2 ln sigma)) ----
    # rsqrt + multiply (1/(2 ln sigma) folded into a compile-time constant).
    # NOTE: std -> 0 as t -> 0 (same as the PyTorch module); callers must keep t
    # bounded away from 0.
    inv_std = lax.rsqrt((jnp.exp(t * (2.0 * LOG_SIGMA)) - 1.0) * INV_2LOG_SIGMA)

    # Lane-dense store: full (T, E) slab.  Pad columns [OUT_DIM:] are exactly
    # zero because wf/bf are zero-padded, so they remain zero after scaling.
    o_ref[...] = h * inv_std


# ------------------------------- wrapper --------------------------------------
def _num_tensorcores():
    try:
        kind = jax.devices()[0].device_kind.lower()
        return 2 if "v7" in kind else 1       # v5e/v6e: 1 TC/chip, v7x: 2 TC/chip
    except Exception:
        return 1


def _pick_tile_b(B):
    """v5e/v6e: single grid step (no pipeline-step overhead, params fit trivially).
    v7x: keep >= 2 tiles so both TensorCores get work; 256-row tiles once B >= 1024."""
    if _num_tensorcores() <= 1 or B < 256:
        return B
    tile = 256 if B >= 1024 else 128
    while B % tile:
        tile //= 2
    return max(tile, 8)


def scorenet_forward(x, t, params, *, tile_b=None):
    """x: (B, in_dim) f32, t: (B,) f32  ->  (B, OUT_DIM) f32."""
    B, in_dim = x.shape
    if tile_b is None:
        tile_b = _pick_tile_b(B)
    tile_b = min(tile_b, B)
    assert B % tile_b == 0, "batch must be a multiple of the batch tile"

    x = x.astype(jnp.float32)
    t2 = t.reshape(B, 1).astype(jnp.float32)
    g, w1, ws, bs = params["gfp"], params["w1"], params["wstack"], params["bstack"]

    grid = (B // tile_b,)
    in_specs = [
        pl.BlockSpec((tile_b, in_dim), lambda i: (i, 0)),       # x: tiled over batch
        pl.BlockSpec((tile_b, 1), lambda i: (i, 0)),            # t: tiled over batch
        pl.BlockSpec(g.shape, lambda i: (0, 0)),                # params: constant index map
        pl.BlockSpec(w1.shape, lambda i: (0, 0)),               #   -> VMEM-resident across
        pl.BlockSpec(ws.shape, lambda i: (0, 0, 0)),            #      grid steps
        pl.BlockSpec(bs.shape, lambda i: (0, 0, 0)),
    ]
    # Lane-dense output slab (tile_b, EMBED_DIM); wrapper slices to OUT_DIM.
    out_specs = pl.BlockSpec((tile_b, EMBED_DIM), lambda i: (i, 0))

    out_full = pl.pallas_call(
        scorenet_kernel,
        out_shape=jax.ShapeDtypeStruct((B, EMBED_DIM), jnp.float32),
        grid=grid,
        in_specs=in_specs,
        out_specs=out_specs,
        compiler_params=pltpu.CompilerParams(
            dimension_semantics=("parallel",),     # v7x: batch tiles split across 2 TCs
        ),
    )(x, t2, g, w1, ws, bs)
    return out_full[:, :OUT_DIM]


# ------------------------- deterministic parameters ---------------------------
def init_params(key, weight_dtype=WEIGHT_DTYPE):
    """Returns (kernel_params, reference_params)."""
    n_hidden = N_LAYERS - 2
    ks = jax.random.split(key, n_hidden + 4)
    E, half = EMBED_DIM, EMBED_DIM // 2

    def lin(k, fan_in, fan_out):
        kw, kb = jax.random.split(k)
        w = jax.random.normal(kw, (fan_in, fan_out), jnp.float32) / np.sqrt(fan_in)
        b = jax.random.normal(kb, (fan_out,), jnp.float32) * 0.01
        return w, b

    # GaussianFourierProjection weight (frozen): randn(embed_dim//2) * 30
    w_half = jax.random.normal(ks[0], (half,), jnp.float32) * 30.0
    g_w2pi = jnp.concatenate([w_half, w_half]) * (2.0 * np.pi)       # duplicated [W, W]
    g_phase = jnp.concatenate(
        [jnp.zeros((half,), jnp.float32), jnp.full((half,), np.pi / 2.0, jnp.float32)])
    gfp = jnp.stack([g_w2pi, g_phase]).astype(jnp.float32)           # (2, E)

    we, be = lin(ks[1], E, E)                 # embed Linear
    w1, b1 = lin(ks[2], IN_DIM, E)            # Linear1
    wm, bm = [], []
    for i in range(n_hidden):
        w, b = lin(ks[3 + i], E, E)
        wm.append(w)
        bm.append(b)
    wf, bf = lin(ks[3 + n_hidden], E, OUT_DIM)  # final Linear

    # Pack: final weight/bias zero-padded to E so they join the stacks AND so the
    # lane-dense output's pad columns are exactly zero (wrapper slices them off).
    wf_pad = jnp.zeros((E, E), jnp.float32).at[:, :OUT_DIM].set(wf)
    bf_pad = jnp.zeros((E,), jnp.float32).at[:OUT_DIM].set(bf)
    kernel_params = dict(
        gfp=gfp,
        w1=w1.astype(weight_dtype),
        wstack=jnp.stack([we] + wm + [wf_pad]).astype(weight_dtype),          # (2+nh, E, E)
        bstack=jnp.stack([be, b1] + bm + [bf_pad])[:, None, :].astype(jnp.float32),  # (3+nh, 1, E)
    )
    ref_params = dict(
        w_half=w_half, we=we, be=be, w1=w1, b1=b1,
        wm=jnp.stack(wm), bm=jnp.stack(bm), wf=wf, bf=bf,
    )
    return kernel_params, ref_params


# ----------------------------- pure-JAX reference ------------------------------
def scorenet_reference(x, t, p, weight_dtype=WEIGHT_DTYPE):
    """Independent formulation (concat(sin, cos), exact sigmoid, sqrt + divide).
    Matmul inputs are cast to `weight_dtype` with f32 accumulation, matching the
    kernel's mixed-precision policy so the comparison isolates kernel structure."""
    def mm(a, w):
        return jnp.dot(a.astype(weight_dtype), w.astype(weight_dtype),
                       preferred_element_type=jnp.float32)

    def silu(v):
        return v * jax.nn.sigmoid(v)

    t2 = t.reshape(-1, 1)
    proj = t2 * p["w_half"][None, :] * (2.0 * np.pi)
    gfp = jnp.concatenate([jnp.sin(proj), jnp.cos(proj)], axis=-1)
    embed = silu(mm(gfp, p["we"]) + p["be"])
    h = silu(mm(x, p["w1"]) + p["b1"]) + embed
    for i in range(p["wm"].shape[0]):
        h = silu(mm(h, p["wm"][i]) + p["bm"][i])
    h = mm(h, p["wf"]) + p["bf"]
    std = jnp.sqrt((jnp.exp(2.0 * t2 * LOG_SIGMA) - 1.0) / (2.0 * LOG_SIGMA))
    return h / std


# ------------------------------------ main -------------------------------------
if __name__ == "__main__":
    key = jax.random.PRNGKey(0)
    kp, kx, kt = jax.random.split(key, 3)

    kernel_params, ref_params = init_params(kp)
    x = jax.random.normal(kx, (BATCH, IN_DIM), jnp.float32)
    # t in [0.1, 1.0] keeps marginal_prob_std well away from zero
    t = jax.random.uniform(kt, (BATCH,), jnp.float32, minval=0.1, maxval=1.0)

    out = jax.block_until_ready(scorenet_forward(x, t, kernel_params))
    ref = scorenet_reference(x, t, ref_params)

    assert out.shape == (BATCH, OUT_DIM)
    assert bool(jnp.all(jnp.isfinite(out)))
    np.testing.assert_allclose(np.asarray(out), np.asarray(ref), rtol=2e-2, atol=2e-2)

    print("KERNEL_OK")
</pallas_src>

<mosaic_0001>
module attributes {stable_mosaic.version = 11 : i64} {
  func.func @scorenet_kernel(%arg0: i32, %arg1: memref<256x16xf32, #tpu.memory_space<vmem>>, %arg2: memref<256x1xf32, #tpu.memory_space<vmem>>, %arg3: memref<2x128xf32, #tpu.memory_space<vmem>>, %arg4: memref<16x128xbf16, #tpu.memory_space<vmem>>, %arg5: memref<8x128x128xbf16, #tpu.memory_space<vmem>>, %arg6: memref<9x1x128xf32, #tpu.memory_space<vmem>>, %arg7: memref<256x128xf32, #tpu.memory_space<vmem>>) attributes {dimension_semantics = [#tpu.dimension_semantics<parallel>], iteration_bounds = array<i64: 1>, scalar_prefetch = 0 : i64, scratch_operands = 0 : i64, tpu.core_type = #tpu.core_type<tc>, window_params = [{transform_indices = @transform_0, window_bounds = array<i64: 256, 16>}, {transform_indices = @transform_1, window_bounds = array<i64: 256, 1>}, {pipeline_mode = #tpu.pipeline_mode<synchronous>, transform_indices = @transform_2, window_bounds = array<i64: 2, 128>}, {pipeline_mode = #tpu.pipeline_mode<synchronous>, transform_indices = @transform_3, window_bounds = array<i64: 16, 128>}, {pipeline_mode = #tpu.pipeline_mode<synchronous>, transform_indices = @transform_4, window_bounds = array<i64: 8, 128, 128>}, {pipeline_mode = #tpu.pipeline_mode<synchronous>, transform_indices = @transform_5, window_bounds = array<i64: 9, 1, 128>}, {transform_indices = @transform_6, window_bounds = array<i64: 256, 128>}]} {
    %c0 = arith.constant 0 : index
    %c0_0 = arith.constant 0 : index
    %0 = vector.load %arg2[%c0, %c0_0] : memref<256x1xf32, #tpu.memory_space<vmem>>, vector<256x1xf32>
    %c0_1 = arith.constant 0 : index
    %c0_2 = arith.constant 0 : index
    %1 = vector.load %arg3[%c0_1, %c0_2] : memref<2x128xf32, #tpu.memory_space<vmem>>, vector<1x128xf32>
    %2 = vector.broadcast %0 : vector<256x1xf32> to vector<256x128xf32>
    %3 = vector.broadcast %1 : vector<1x128xf32> to vector<256x128xf32>
    %4 = arith.mulf %2, %3 : vector<256x128xf32>
    %c1 = arith.constant 1 : index
    %c0_3 = arith.constant 0 : index
    %5 = vector.load %arg3[%c1, %c0_3] : memref<2x128xf32, #tpu.memory_space<vmem>>, vector<1x128xf32>
    %6 = vector.broadcast %5 : vector<1x128xf32> to vector<256x128xf32>
    %7 = arith.addf %4, %6 : vector<256x128xf32>
    %8 = math.sin %7 : vector<256x128xf32>
    %9 = arith.truncf %8 : vector<256x128xf32> to vector<256x128xbf16>
    %c0_4 = arith.constant 0 : index
    %c0_5 = arith.constant 0 : index
    %c0_6 = arith.constant 0 : index
    %10 = vector.load %arg5[%c0_4, %c0_5, %c0_6] : memref<8x128x128xbf16, #tpu.memory_space<vmem>>, vector<1x128x128xbf16>
    %11 = vector.shape_cast %10 : vector<1x128x128xbf16> to vector<128x128xbf16>
    %cst = arith.constant dense<0.000000e+00> : vector<256x128xf32>
    %12 = tpu.matmul %9, %11, %cst {dimension_numbers = #tpu.dot_dimension_numbers<[1], [0], [0], [1], [0, 0, 1, 1], [], []>} : vector<256x128xbf16>, vector<128x128xbf16>, vector<256x128xf32> -> vector<256x128xf32>
    %c0_7 = arith.constant 0 : index
    %c0_8 = arith.constant 0 : index
    %c0_9 = arith.constant 0 : index
    %13 = vector.load %arg6[%c0_7, %c0_8, %c0_9] : memref<9x1x128xf32, #tpu.memory_space<vmem>>, vector<1x1x128xf32>
    %14 = vector.shape_cast %13 : vector<1x1x128xf32> to vector<1x128xf32>
    %15 = vector.broadcast %14 : vector<1x128xf32> to vector<256x128xf32>
    %16 = arith.addf %12, %15 : vector<256x128xf32>
    %cst_10 = arith.constant 0.000000e+00 : f32
    %17 = vector.broadcast %cst_10 : f32 to vector<256x128xf32>
    %18 = arith.subf %17, %16 : vector<256x128xf32>
    %19 = math.exp %18 : vector<256x128xf32>
    %cst_11 = arith.constant 1.000000e+00 : f32
    %20 = vector.broadcast %cst_11 : f32 to vector<256x128xf32>
    %21 = arith.addf %20, %19 : vector<256x128xf32>
    %22 = tpu.reciprocal %21 {approx = true} : vector<256x128xf32> -> vector<256x128xf32>
    %23 = arith.mulf %16, %22 : vector<256x128xf32>
    %c0_12 = arith.constant 0 : index
    %c0_13 = arith.constant 0 : index
    %24 = vector.load %arg1[%c0_12, %c0_13] : memref<256x16xf32, #tpu.memory_space<vmem>>, vector<256x16xf32>
    %25 = arith.truncf %24 : vector<256x16xf32> to vector<256x16xbf16>
    %c0_14 = arith.constant 0 : index
    %c0_15 = arith.constant 0 : index
    %26 = vector.load %arg4[%c0_14, %c0_15] : memref<16x128xbf16, #tpu.memory_space<vmem>>, vector<16x128xbf16>
    %cst_16 = arith.constant dense<0.000000e+00> : vector<256x128xf32>
    %27 = tpu.matmul %25, %26, %cst_16 {dimension_numbers = #tpu.dot_dimension_numbers<[1], [0], [0], [1], [0, 0, 1, 1], [], []>} : vector<256x16xbf16>, vector<16x128xbf16>, vector<256x128xf32> -> vector<256x128xf32>
    %c1_17 = arith.constant 1 : index
    %c0_18 = arith.constant 0 : index
    %c0_19 = arith.constant 0 : index
    %28 = vector.load %arg6[%c1_17, %c0_18, %c0_19] : memref<9x1x128xf32, #tpu.memory_space<vmem>>, vector<1x1x128xf32>
    %29 = vector.shape_cast %28 : vector<1x1x128xf32> to vector<1x128xf32>
    %30 = vector.broadcast %29 : vector<1x128xf32> to vector<256x128xf32>
    %31 = arith.addf %27, %30 : vector<256x128xf32>
    %cst_20 = arith.constant 0.000000e+00 : f32
    %32 = vector.broadcast %cst_20 : f32 to vector<256x128xf32>
    %33 = arith.subf %32, %31 : vector<256x128xf32>
    %34 = math.exp %33 : vector<256x128xf32>
    %cst_21 = arith.constant 1.000000e+00 : f32
    %35 = vector.broadcast %cst_21 : f32 to vector<256x128xf32>
    %36 = arith.addf %35, %34 : vector<256x128xf32>
    %37 = tpu.reciprocal %36 {approx = true} : vector<256x128xf32> -> vector<256x128xf32>
    %38 = arith.mulf %31, %37 : vector<256x128xf32>
    %39 = arith.addf %38, %23 : vector<256x128xf32>
    %c0_i32 = arith.constant 0 : i32
    %40 = arith.truncf %39 : vector<256x128xf32> to vector<256x128xbf16>
    %c1_i32 = arith.constant 1 : i32
    %41 = arith.addi %c1_i32, %c0_i32 : i32
    %42 = arith.index_cast %41 : i32 to index
    %c0_22 = arith.constant 0 : index
    %c0_23 = arith.constant 0 : index
    %43 = vector.load %arg5[%42, %c0_22, %c0_23] : memref<8x128x128xbf16, #tpu.memory_space<vmem>>, vector<1x128x128xbf16>
    %44 = vector.shape_cast %43 : vector<1x128x128xbf16> to vector<128x128xbf16>
    %cst_24 = arith.constant dense<0.000000e+00> : vector<256x128xf32>
    %45 = tpu.matmul %40, %44, %cst_24 {dimension_numbers = #tpu.dot_dimension_numbers<[1], [0], [0], [1], [0, 0, 1, 1], [], []>} : vector<256x128xbf16>, vector<128x128xbf16>, vector<256x128xf32> -> vector<256x128xf32>
    %c2_i32 = arith.constant 2 : i32
    %46 = arith.addi %c2_i32, %c0_i32 : i32
    %47 = arith.index_cast %46 : i32 to index
    %c0_25 = arith.constant 0 : index
    %c0_26 = arith.constant 0 : index
    %48 = vector.load %arg6[%47, %c0_25, %c0_26] : memref<9x1x128xf32, #tpu.memory_space<vmem>>, vector<1x1x128xf32>
    %49 = vector.shape_cast %48 : vector<1x1x128xf32> to vector<1x128xf32>
    %50 = vector.broadcast %49 : vector<1x128xf32> to vector<256x128xf32>
    %51 = arith.addf %45, %50 : vector<256x128xf32>
    %cst_27 = arith.constant 0.000000e+00 : f32
    %52 = vector.broadcast %cst_27 : f32 to vector<256x128xf32>
    %53 = arith.subf %52, %51 : vector<256x128xf32>
    %54 = math.exp %53 : vector<256x128xf32>
    %cst_28 = arith.constant 1.000000e+00 : f32
    %55 = vector.broadcast %cst_28 : f32 to vector<256x128xf32>
    %56 = arith.addf %55, %54 : vector<256x128xf32>
    %57 = tpu.reciprocal %56 {approx = true} : vector<256x128xf32> -> vector<256x128xf32>
    %58 = arith.mulf %51, %57 : vector<256x128xf32>
    %c1_i32_29 = arith.constant 1 : i32
    %59 = arith.truncf %58 : vector<256x128xf32> to vector<256x128xbf16>
    %c1_i32_30 = arith.constant 1 : i32
    %60 = arith.addi %c1_i32_30, %c1_i32_29 : i32
    %61 = arith.index_cast %60 : i32 to index
    %c0_31 = arith.constant 0 : index
    %c0_32 = arith.constant 0 : index
    %62 = vector.load %arg5[%61, %c0_31, %c0_32] : memref<8x128x128xbf16, #tpu.memory_space<vmem>>, vector<1x128x128xbf16>
    %63 = vector.shape_cast %62 : vector<1x128x128xbf16> to vector<128x128xbf16>
    %cst_33 = arith.constant dense<0.000000e+00> : vector<256x128xf32>
    %64 = tpu.matmul %59, %63, %cst_33 {dimension_numbers = #tpu.dot_dimension_numbers<[1], [0], [0], [1], [0, 0, 1, 1], [], []>} : vector<256x128xbf16>, vector<128x128xbf16>, vector<256x128xf32> -> vector<256x128xf32>
    %c2_i32_34 = arith.constant 2 : i32
    %65 = arith.addi %c2_i32_34, %c1_i32_29 : i32
    %66 = arith.index_cast %65 : i32 to index
    %c0_35 = arith.constant 0 : index
    %c0_36 = arith.constant 0 : index
    %67 = vector.load %arg6[%66, %c0_35, %c0_36] : memref<9x1x128xf32, #tpu.memory_space<vmem>>, vector<1x1x128xf32>
    %68 = vector.shape_cast %67 : vector<1x1x128xf32> to vector<1x128xf32>
    %69 = vector.broadcast %68 : vector<1x128xf32> to vector<256x128xf32>
    %70 = arith.addf %64, %69 : vector<256x128xf32>
    %cst_37 = arith.constant 0.000000e+00 : f32
    %71 = vector.broadcast %cst_37 : f32 to vector<256x128xf32>
    %72 = arith.subf %71, %70 : vector<256x128xf32>
    %73 = math.exp %72 : vector<256x128xf32>
    %cst_38 = arith.constant 1.000000e+00 : f32
    %74 = vector.broadcast %cst_38 : f32 to vector<256x128xf32>
    %75 = arith.addf %74, %73 : vector<256x128xf32>
    %76 = tpu.reciprocal %75 {approx = true} : vector<256x128xf32> -> vector<256x128xf32>
    %77 = arith.mulf %70, %76 : vector<256x128xf32>
    %c2_i32_39 = arith.constant 2 : i32
    %78 = arith.truncf %77 : vector<256x128xf32> to vector<256x128xbf16>
    %c1_i32_40 = arith.constant 1 : i32
    %79 = arith.addi %c1_i32_40, %c2_i32_39 : i32
    %80 = arith.index_cast %79 : i32 to index
    %c0_41 = arith.constant 0 : index
    %c0_42 = arith.constant 0 : index
    %81 = vector.load %arg5[%80, %c0_41, %c0_42] : memref<8x128x128xbf16, #tpu.memory_space<vmem>>, vector<1x128x128xbf16>
    %82 = vector.shape_cast %81 : vector<1x128x128xbf16> to vector<128x128xbf16>
    %cst_43 = arith.constant dense<0.000000e+00> : vector<256x128xf32>
    %83 = tpu.matmul %78, %82, %cst_43 {dimension_numbers = #tpu.dot_dimension_numbers<[1], [0], [0], [1], [0, 0, 1, 1], [], []>} : vector<256x128xbf16>, vector<128x128xbf16>, vector<256x128xf32> -> vector<256x128xf32>
    %c2_i32_44 = arith.constant 2 : i32
    %84 = arith.addi %c2_i32_44, %c2_i32_39 : i32
    %85 = arith.index_cast %84 : i32 to index
    %c0_45 = arith.constant 0 : index
    %c0_46 = arith.constant 0 : index
    %86 = vector.load %arg6[%85, %c0_45, %c0_46] : memref<9x1x128xf32, #tpu.memory_space<vmem>>, vector<1x1x128xf32>
    %87 = vector.shape_cast %86 : vector<1x1x128xf32> to vector<1x128xf32>
    %88 = vector.broadcast %87 : vector<1x128xf32> to vector<256x128xf32>
    %89 = arith.addf %83, %88 : vector<256x128xf32>
    %cst_47 = arith.constant 0.000000e+00 : f32
    %90 = vector.broadcast %cst_47 : f32 to vector<256x128xf32>
    %91 = arith.subf %90, %89 : vector<256x128xf32>
    %92 = math.exp %91 : vector<256x128xf32>
    %cst_48 = arith.constant 1.000000e+00 : f32
    %93 = vector.broadcast %cst_48 : f32 to vector<256x128xf32>
    %94 = arith.addf %93, %92 : vector<256x128xf32>
    %95 = tpu.reciprocal %94 {approx = true} : vector<256x128xf32> -> vector<256x128xf32>
    %96 = arith.mulf %89, %95 : vector<256x128xf32>
    %c3_i32 = arith.constant 3 : i32
    %97 = arith.truncf %96 : vector<256x128xf32> to vector<256x128xbf16>
    %c1_i32_49 = arith.constant 1 : i32
    %98 = arith.addi %c1_i32_49, %c3_i32 : i32
    %99 = arith.index_cast %98 : i32 to index
    %c0_50 = arith.constant 0 : index
    %c0_51 = arith.constant 0 : index
    %100 = vector.load %arg5[%99, %c0_50, %c0_51] : memref<8x128x128xbf16, #tpu.memory_space<vmem>>, vector<1x128x128xbf16>
    %101 = vector.shape_cast %100 : vector<1x128x128xbf16> to vector<128x128xbf16>
    %cst_52 = arith.constant dense<0.000000e+00> : vector<256x128xf32>
    %102 = tpu.matmul %97, %101, %cst_52 {dimension_numbers = #tpu.dot_dimension_numbers<[1], [0], [0], [1], [0, 0, 1, 1], [], []>} : vector<256x128xbf16>, vector<128x128xbf16>, vector<256x128xf32> -> vector<256x128xf32>
    %c2_i32_53 = arith.constant 2 : i32
    %103 = arith.addi %c2_i32_53, %c3_i32 : i32
    %104 = arith.index_cast %103 : i32 to index
    %c0_54 = arith.constant 0 : index
    %c0_55 = arith.constant 0 : index
    %105 = vector.load %arg6[%104, %c0_54, %c0_55] : memref<9x1x128xf32, #tpu.memory_space<vmem>>, vector<1x1x128xf32>
    %106 = vector.shape_cast %105 : vector<1x1x128xf32> to vector<1x128xf32>
    %107 = vector.broadcast %106 : vector<1x128xf32> to vector<256x128xf32>
    %108 = arith.addf %102, %107 : vector<256x128xf32>
    %cst_56 = arith.constant 0.000000e+00 : f32
    %109 = vector.broadcast %cst_56 : f32 to vector<256x128xf32>
    %110 = arith.subf %109, %108 : vector<256x128xf32>
    %111 = math.exp %110 : vector<256x128xf32>
    %cst_57 = arith.constant 1.000000e+00 : f32
    %112 = vector.broadcast %cst_57 : f32 to vector<256x128xf32>
    %113 = arith.addf %112, %111 : vector<256x128xf32>
    %114 = tpu.reciprocal %113 {approx = true} : vector<256x128xf32> -> vector<256x128xf32>
    %115 = arith.mulf %108, %114 : vector<256x128xf32>
    %c4_i32 = arith.constant 4 : i32
    %116 = arith.truncf %115 : vector<256x128xf32> to vector<256x128xbf16>
    %c1_i32_58 = arith.constant 1 : i32
    %117 = arith.addi %c1_i32_58, %c4_i32 : i32
    %118 = arith.index_cast %117 : i32 to index
    %c0_59 = arith.constant 0 : index
    %c0_60 = arith.constant 0 : index
    %119 = vector.load %arg5[%118, %c0_59, %c0_60] : memref<8x128x128xbf16, #tpu.memory_space<vmem>>, vector<1x128x128xbf16>
    %120 = vector.shape_cast %119 : vector<1x128x128xbf16> to vector<128x128xbf16>
    %cst_61 = arith.constant dense<0.000000e+00> : vector<256x128xf32>
    %121 = tpu.matmul %116, %120, %cst_61 {dimension_numbers = #tpu.dot_dimension_numbers<[1], [0], [0], [1], [0, 0, 1, 1], [], []>} : vector<256x128xbf16>, vector<128x128xbf16>, vector<256x128xf32> -> vector<256x128xf32>
    %c2_i32_62 = arith.constant 2 : i32
    %122 = arith.addi %c2_i32_62, %c4_i32 : i32
    %123 = arith.index_cast %122 : i32 to index
    %c0_63 = arith.constant 0 : index
    %c0_64 = arith.constant 0 : index
    %124 = vector.load %arg6[%123, %c0_63, %c0_64] : memref<9x1x128xf32, #tpu.memory_space<vmem>>, vector<1x1x128xf32>
    %125 = vector.shape_cast %124 : vector<1x1x128xf32> to vector<1x128xf32>
    %126 = vector.broadcast %125 : vector<1x128xf32> to vector<256x128xf32>
    %127 = arith.addf %121, %126 : vector<256x128xf32>
    %cst_65 = arith.constant 0.000000e+00 : f32
    %128 = vector.broadcast %cst_65 : f32 to vector<256x128xf32>
    %129 = arith.subf %128, %127 : vector<256x128xf32>
    %130 = math.exp %129 : vector<256x128xf32>
    %cst_66 = arith.constant 1.000000e+00 : f32
    %131 = vector.broadcast %cst_66 : f32 to vector<256x128xf32>
    %132 = arith.addf %131, %130 : vector<256x128xf32>
    %133 = tpu.reciprocal %132 {approx = true} : vector<256x128xf32> -> vector<256x128xf32>
    %134 = arith.mulf %127, %133 : vector<256x128xf32>
    %c5_i32 = arith.constant 5 : i32
    %135 = arith.truncf %134 : vector<256x128xf32> to vector<256x128xbf16>
    %c1_i32_67 = arith.constant 1 : i32
    %136 = arith.addi %c1_i32_67, %c5_i32 : i32
    %137 = arith.index_cast %136 : i32 to index
    %c0_68 = arith.constant 0 : index
    %c0_69 = arith.constant 0 : index
    %138 = vector.load %arg5[%137, %c0_68, %c0_69] : memref<8x128x128xbf16, #tpu.memory_space<vmem>>, vector<1x128x128xbf16>
    %139 = vector.shape_cast %138 : vector<1x128x128xbf16> to vector<128x128xbf16>
    %cst_70 = arith.constant dense<0.000000e+00> : vector<256x128xf32>
    %140 = tpu.matmul %135, %139, %cst_70 {dimension_numbers = #tpu.dot_dimension_numbers<[1], [0], [0], [1], [0, 0, 1, 1], [], []>} : vector<256x128xbf16>, vector<128x128xbf16>, vector<256x128xf32> -> vector<256x128xf32>
    %c2_i32_71 = arith.constant 2 : i32
    %141 = arith.addi %c2_i32_71, %c5_i32 : i32
    %142 = arith.index_cast %141 : i32 to index
    %c0_72 = arith.constant 0 : index
    %c0_73 = arith.constant 0 : index
    %143 = vector.load %arg6[%142, %c0_72, %c0_73] : memref<9x1x128xf32, #tpu.memory_space<vmem>>, vector<1x1x128xf32>
    %144 = vector.shape_cast %143 : vector<1x1x128xf32> to vector<1x128xf32>
    %145 = vector.broadcast %144 : vector<1x128xf32> to vector<256x128xf32>
    %146 = arith.addf %140, %145 : vector<256x128xf32>
    %cst_74 = arith.constant 0.000000e+00 : f32
    %147 = vector.broadcast %cst_74 : f32 to vector<256x128xf32>
    %148 = arith.subf %147, %146 : vector<256x128xf32>
    %149 = math.exp %148 : vector<256x128xf32>
    %cst_75 = arith.constant 1.000000e+00 : f32
    %150 = vector.broadcast %cst_75 : f32 to vector<256x128xf32>
    %151 = arith.addf %150, %149 : vector<256x128xf32>
    %152 = tpu.reciprocal %151 {approx = true} : vector<256x128xf32> -> vector<256x128xf32>
    %153 = arith.mulf %146, %152 : vector<256x128xf32>
    %c6_i32 = arith.constant 6 : i32
    %154 = arith.truncf %153 : vector<256x128xf32> to vector<256x128xbf16>
    %c7 = arith.constant 7 : index
    %c0_76 = arith.constant 0 : index
    %c0_77 = arith.constant 0 : index
    %155 = vector.load %arg5[%c7, %c0_76, %c0_77] : memref<8x128x128xbf16, #tpu.memory_space<vmem>>, vector<1x128x128xbf16>
    %156 = vector.shape_cast %155 : vector<1x128x128xbf16> to vector<128x128xbf16>
    %cst_78 = arith.constant dense<0.000000e+00> : vector<256x128xf32>
    %157 = tpu.matmul %154, %156, %cst_78 {dimension_numbers = #tpu.dot_dimension_numbers<[1], [0], [0], [1], [0, 0, 1, 1], [], []>} : vector<256x128xbf16>, vector<128x128xbf16>, vector<256x128xf32> -> vector<256x128xf32>
    %c8 = arith.constant 8 : index
    %c0_79 = arith.constant 0 : index
    %c0_80 = arith.constant 0 : index
    %158 = vector.load %arg6[%c8, %c0_79, %c0_80] : memref<9x1x128xf32, #tpu.memory_space<vmem>>, vector<1x1x128xf32>
    %159 = vector.shape_cast %158 : vector<1x1x128xf32> to vector<1x128xf32>
    %160 = vector.broadcast %159 : vector<1x128xf32> to vector<256x128xf32>
    %161 = arith.addf %157, %160 : vector<256x128xf32>
    %cst_81 = arith.constant 6.43775177 : f32
    %162 = vector.broadcast %cst_81 : f32 to vector<256x1xf32>
    %163 = arith.mulf %0, %162 : vector<256x1xf32>
    %164 = math.exp %163 : vector<256x1xf32>
    %cst_82 = arith.constant 1.000000e+00 : f32
    %165 = vector.broadcast %cst_82 : f32 to vector<256x1xf32>
    %166 = arith.subf %164, %165 : vector<256x1xf32>
    %cst_83 = arith.constant 0.155333728 : f32
    %167 = vector.broadcast %cst_83 : f32 to vector<256x1xf32>
    %168 = arith.mulf %166, %167 : vector<256x1xf32>
    %169 = math.rsqrt %168 : vector<256x1xf32>
    %170 = vector.broadcast %169 : vector<256x1xf32> to vector<256x128xf32>
    %171 = arith.mulf %161, %170 : vector<256x128xf32>
    %c0_84 = arith.constant 0 : index
    %c0_85 = arith.constant 0 : index
    %172 = vector.load %arg7[%c0_84, %c0_85] : memref<256x128xf32, #tpu.memory_space<vmem>>, vector<256x128xf32>
    tpu.vector_store %arg7[%c0_84, %c0_85], %171 {strides = array<i32>} : memref<256x128xf32, #tpu.memory_space<vmem>>, vector<256x128xf32>,
    return
  }
  func.func @transform_0(%arg0: i32) -> (i32, i32) {
    %c0_i32 = arith.constant 0 : i32
    %c0_i32_0 = arith.constant 0 : i32
    return %arg0, %c0_i32 : i32, i32
  }
  func.func @transform_1(%arg0: i32) -> (i32, i32) {
    %c0_i32 = arith.constant 0 : i32
    %c0_i32_0 = arith.constant 0 : i32
    return %arg0, %c0_i32 : i32, i32
  }
  func.func @transform_2(%arg0: i32) -> (i32, i32) {
    %c0_i32 = arith.constant 0 : i32
    %c0_i32_0 = arith.constant 0 : i32
    %c0_i32_1 = arith.constant 0 : i32
    return %c0_i32, %c0_i32_0 : i32, i32
  }
  func.func @transform_3(%arg0: i32) -> (i32, i32) {
    %c0_i32 = arith.constant 0 : i32
    %c0_i32_0 = arith.constant 0 : i32
    %c0_i32_1 = arith.constant 0 : i32
    return %c0_i32, %c0_i32_0 : i32, i32
  }
  func.func @transform_4(%arg0: i32) -> (i32, i32, i32) {
    %c0_i32 = arith.constant 0 : i32
    %c0_i32_0 = arith.constant 0 : i32
    %c0_i32_1 = arith.constant 0 : i32
    %c0_i32_2 = arith.constant 0 : i32
    return %c0_i32, %c0_i32_0, %c0_i32_1 : i32, i32, i32
  }
  func.func @transform_5(%arg0: i32) -> (i32, i32, i32) {
    %c0_i32 = arith.constant 0 : i32
    %c0_i32_0 = arith.constant 0 : i32
    %c0_i32_1 = arith.constant 0 : i32
    %c0_i32_2 = arith.constant 0 : i32
    return %c0_i32, %c0_i32_0, %c0_i32_1 : i32, i32, i32
  }
  func.func @transform_6(%arg0: i32) -> (i32, i32) {
    %c0_i32 = arith.constant 0 : i32
    %c0_i32_0 = arith.constant 0 : i32
    return %arg0, %c0_i32 : i32, i32
  }
}

</mosaic_0001>

<llo_original>
// kernel: tpu_custom_call.1
$region0: #{tpu_custom_call.1}
  #allocation0 [shape = 'u32[]', space=smem, size = 0x4, offset = 0x4, fixed_abs, tag = 'smem constant byte address 0x4 - core index']
  #allocation1 [shape = 'u32[144,128]{1,0:T(1,128)}', space=vmem, size = 0x12000, scoped, tag = 'internal scratch']
  %s0 = inlined_call_operand.vmem [shape: f32[256,16], index: 0, kind: input, shape index: {}]
  %s1 = inlined_call_operand.vmem [shape: f32[256,1], index: 1, kind: input, shape index: {}]
  %s2 = inlined_call_operand.vmem [shape: f32[2,128], index: 2, kind: input, shape index: {}]
  %s3 = inlined_call_operand.vmem [shape: bf16[16,128], index: 3, kind: input, shape index: {}]
  %s4 = inlined_call_operand.vmem [shape: bf16[8,128,128], index: 4, kind: input, shape index: {}]
  %s5 = inlined_call_operand.vmem [shape: f32[9,1,128], index: 5, kind: input, shape index: {}]
  %s6 = inlined_call_operand.hbm [shape: f32[256,128], index: 6, kind: output, shape index: {}]
  %s7 = sld [smem:[#allocation0]]
  $region34: #{tpu_custom_call.1} parent=0
    _
  %s9 = ssub.s32 1, %s7
  %s10 = scalar_select 0, %s9, %s7
  $region1: #{tpu_custom_call.1} parent=0
    #allocation2 [shape = 'u8[131072]{0}', space=vmem, size = 0x20000, scoped, tag = 'output window, operand 0, single buffered']
    #allocation3 [shape = 's32[1]{0}', space=sflag, size = 0x4, scoped, tag = 'scoped memory for tpu_custom_call.1']
    %11 = vsyncpa [#allocation3], 0
    // Predicated region
    $region2: #{tpu_custom_call.1} parent=1 // pred_check
      _
    $region3: #{tpu_custom_call.1} parent=1 // pred_check_branch
      %13 = sbr.rel (0) target = $region5
    $region4: #{tpu_custom_call.1} parent=1 // pred_region
      _
    $region5: #{tpu_custom_call.1} parent=1 // pred_fallthru
      _
    // Predicated region
    $region6: #{tpu_custom_call.1} parent=1 // pred_check
      _
    $region7: #{tpu_custom_call.1} parent=1 // pred_check_branch
      %15 = sbr.rel (0) target = $region9
    $region8: #{tpu_custom_call.1} parent=1 // pred_region
      _
    $region9: #{tpu_custom_call.1} parent=1 // pred_fallthru
      _
    // Predicated region
    $region10: #{tpu_custom_call.1} parent=1 // pred_check
      _
    $region11: #{tpu_custom_call.1} parent=1 // pred_check_branch
      %17 = sbr.rel (0) target = $region13
    $region12: #{tpu_custom_call.1} parent=1 // pred_region
      _
    $region13: #{tpu_custom_call.1} parent=1 // pred_fallthru
      _
    // Predicated region
    $region14: #{tpu_custom_call.1} parent=1 // pred_check
      _
    $region15: #{tpu_custom_call.1} parent=1 // pred_check_branch
      %19 = sbr.rel (0) target = $region17
    $region16: #{tpu_custom_call.1} parent=1 // pred_region
      _
    $region17: #{tpu_custom_call.1} parent=1 // pred_fallthru
      _
    // Predicated region
    $region18: #{tpu_custom_call.1} parent=1 // pred_check
      _
    $region19: #{tpu_custom_call.1} parent=1 // pred_check_branch
      %21 = sbr.rel (0) target = $region21
    $region20: #{tpu_custom_call.1} parent=1 // pred_region
      _
    $region21: #{tpu_custom_call.1} parent=1 // pred_fallthru
      _
    // Predicated region
    $region22: #{tpu_custom_call.1} parent=1 // pred_check
      _
    $region23: #{tpu_custom_call.1} parent=1 // pred_check_branch
      %23 = sbr.rel (0) target = $region25
    $region24: #{tpu_custom_call.1} parent=1 // pred_region
      _
    $region25: #{tpu_custom_call.1} parent=1 // pred_fallthru
      _
    %v25 = vld [vmem:[%s1] sm:$0xff]
    %v26 = vld [vmem:[%s1 + $0x8] sm:$0xff]
    %v27 = vld [vmem:[%s1 + $0x10] sm:$0xff]
    %v28 = vld [vmem:[%s1 + $0x18] sm:$0xff]
    %v29 = vld [vmem:[%s1 + $0x20] sm:$0xff]
    %v30 = vld [vmem:[%s1 + $0x28] sm:$0xff]
    %v31 = vld [vmem:[%s1 + $0x30] sm:$0xff]
    %v32 = vld [vmem:[%s1 + $0x38] sm:$0xff]
    %v33 = vld [vmem:[%s1 + $0x40] sm:$0xff]
    %v34 = vld [vmem:[%s1 + $0x48] sm:$0xff]
    %v35 = vld [vmem:[%s1 + $0x50] sm:$0xff]
    %v36 = vld [vmem:[%s1 + $0x58] sm:$0xff]
    %v37 = vld [vmem:[%s1 + $0x60] sm:$0xff]
    %v38 = vld [vmem:[%s1 + $0x68] sm:$0xff]
    %v39 = vld [vmem:[%s1 + $0x70] sm:$0xff]
    %v40 = vld [vmem:[%s1 + $0x78] sm:$0xff]
    %v41 = vld [vmem:[%s1 + $0x80] sm:$0xff]
    %v42 = vld [vmem:[%s1 + $0x88] sm:$0xff]
    %v43 = vld [vmem:[%s1 + $0x90] sm:$0xff]
    %v44 = vld [vmem:[%s1 + $0x98] sm:$0xff]
    %v45 = vld [vmem:[%s1 + $0xa0] sm:$0xff]
    %v46 = vld [vmem:[%s1 + $0xa8] sm:$0xff]
    %v47 = vld [vmem:[%s1 + $0xb0] sm:$0xff]
    %v48 = vld [vmem:[%s1 + $0xb8] sm:$0xff]
    %v49 = vld [vmem:[%s1 + $0xc0] sm:$0xff]
    %v50 = vld [vmem:[%s1 + $0xc8] sm:$0xff]
    %v51 = vld [vmem:[%s1 + $0xd0] sm:$0xff]
    %v52 = vld [vmem:[%s1 + $0xd8] sm:$0xff]
    %v53 = vld [vmem:[%s1 + $0xe0] sm:$0xff]
    %v54 = vld [vmem:[%s1 + $0xe8] sm:$0xff]
    %v55 = vld [vmem:[%s1 + $0xf0] sm:$0xff]
    %v56 = vld [vmem:[%s1 + $0xf8] sm:$0xff]
    %v57 = vld [vmem:[%s2] sm:$0x1]
    %59 = vset.pattern.permute.xlu0 0
    %60 = vperm.xlu0 %59, %v25
    %v61 = vpop.permute.xlu0 %60
    %64 = vset.pattern.permute.xlu0 0
    %65 = vperm.xlu0 %64, %v26
    %v66 = vpop.permute.xlu0 %65
    %69 = vset.pattern.permute.xlu0 0
    %70 = vperm.xlu0 %69, %v27
    %v71 = vpop.permute.xlu0 %70
    %74 = vset.pattern.permute.xlu0 0
    %75 = vperm.xlu0 %74, %v28
    %v76 = vpop.permute.xlu0 %75
    %79 = vset.pattern.permute.xlu0 0
    %80 = vperm.xlu0 %79, %v29
    %v81 = vpop.permute.xlu0 %80
    %84 = vset.pattern.permute.xlu0 0
    %85 = vperm.xlu0 %84, %v30
    %v86 = vpop.permute.xlu0 %85
    %89 = vset.pattern.permute.xlu0 0
    %90 = vperm.xlu0 %89, %v31
    %v91 = vpop.permute.xlu0 %90
    %94 = vset.pattern.permute.xlu0 0
    %95 = vperm.xlu0 %94, %v32
    %v96 = vpop.permute.xlu0 %95
    %99 = vset.pattern.permute.xlu0 0
    %100 = vperm.xlu0 %99, %v33
    %v101 = vpop.permute.xlu0 %100
    %104 = vset.pattern.permute.xlu0 0
    %105 = vperm.xlu0 %104, %v34
    %v106 = vpop.permute.xlu0 %105
    %109 = vset.pattern.permute.xlu0 0
    %110 = vperm.xlu0 %109, %v35
    %v111 = vpop.permute.xlu0 %110
    %114 = vset.pattern.permute.xlu0 0
    %115 = vperm.xlu0 %114, %v36
    %v116 = vpop.permute.xlu0 %115
    %119 = vset.pattern.permute.xlu0 0
    %120 = vperm.xlu0 %119, %v37
    %v121 = vpop.permute.xlu0 %120
    %124 = vset.pattern.permute.xlu0 0
    %125 = vperm.xlu0 %124, %v38
    %v126 = vpop.permute.xlu0 %125
    %129 = vset.pattern.permute.xlu0 0
    %130 = vperm.xlu0 %129, %v39
    %v131 = vpop.permute.xlu0 %130
    %134 = vset.pattern.permute.xlu0 0
    %135 = vperm.xlu0 %134, %v40
    %v136 = vpop.permute.xlu0 %135
    %139 = vset.pattern.permute.xlu0 0
    %140 = vperm.xlu0 %139, %v41
    %v141 = vpop.permute.xlu0 %140
    %144 = vset.pattern.permute.xlu0 0
    %145 = vperm.xlu0 %144, %v42
    %v146 = vpop.permute.xlu0 %145
    %149 = vset.pattern.permute.xlu0 0
    %150 = vperm.xlu0 %149, %v43
    %v151 = vpop.permute.xlu0 %150
    %154 = vset.pattern.permute.xlu0 0
    %155 = vperm.xlu0 %154, %v44
    %v156 = vpop.permute.xlu0 %155
    %159 = vset.pattern.permute.xlu0 0
    %160 = vperm.xlu0 %159, %v45
    %v161 = vpop.permute.xlu0 %160
    %164 = vset.pattern.permute.xlu0 0
    %165 = vperm.xlu0 %164, %v46
    %v166 = vpop.permute.xlu0 %165
    %169 = vset.pattern.permute.xlu0 0
    %170 = vperm.xlu0 %169, %v47
    %v171 = vpop.permute.xlu0 %170
    %174 = vset.pattern.permute.xlu0 0
    %175 = vperm.xlu0 %174, %v48
    %v176 = vpop.permute.xlu0 %175
    %179 = vset.pattern.permute.xlu0 0
    %180 = vperm.xlu0 %179, %v49
    %v181 = vpop.permute.xlu0 %180
    %184 = vset.pattern.permute.xlu0 0
    %185 = vperm.xlu0 %184, %v50
    %v186 = vpop.permute.xlu0 %185
    %189 = vset.pattern.permute.xlu0 0
    %190 = vperm.xlu0 %189, %v51
    %v191 = vpop.permute.xlu0 %190
    %194 = vset.pattern.permute.xlu0 0
    %195 = vperm.xlu0 %194, %v52
    %v196 = vpop.permute.xlu0 %195
    %199 = vset.pattern.permute.xlu0 0
    %200 = vperm.xlu0 %199, %v53
    %v201 = vpop.permute.xlu0 %200
    %204 = vset.pattern.permute.xlu0 0
    %205 = vperm.xlu0 %204, %v54
    %v206 = vpop.permute.xlu0 %205
    %209 = vset.pattern.permute.xlu0 0
    %210 = vperm.xlu0 %209, %v55
    %v211 = vpop.permute.xlu0 %210
    %214 = vset.pattern.permute.xlu0 0
    %215 = vperm.xlu0 %214, %v56
    %v216 = vpop.permute.xlu0 %215
    %v218 = vlaneseq
    %v219 = vshrl.u32 %v218, 7
    %v220 = vsub.s32 0, %v219
    %v221 = vrot.slane %v57, %v220
    %v222 = vmul.f32 %v61, %v221
    %v223 = vmul.f32 %v66, %v221
    %v224 = vmul.f32 %v71, %v221
    %v225 = vmul.f32 %v76, %v221
    %v226 = vmul.f32 %v81, %v221
    %v227 = vmul.f32 %v86, %v221
    %v228 = vmul.f32 %v91, %v221
    %v229 = vmul.f32 %v96, %v221
    %v230 = vmul.f32 %v101, %v221
    %v231 = vmul.f32 %v106, %v221
    %v232 = vmul.f32 %v111, %v221
    %v233 = vmul.f32 %v116, %v221
    %v234 = vmul.f32 %v121, %v221
    %v235 = vmul.f32 %v126, %v221
    %v236 = vmul.f32 %v131, %v221
    %v237 = vmul.f32 %v136, %v221
    %v238 = vmul.f32 %v141, %v221
    %v239 = vmul.f32 %v146, %v221
    %v240 = vmul.f32 %v151, %v221
    %v241 = vmul.f32 %v156, %v221
    %v242 = vmul.f32 %v161, %v221
    %v243 = vmul.f32 %v166, %v221
    %v244 = vmul.f32 %v171, %v221
    %v245 = vmul.f32 %v176, %v221
    %v246 = vmul.f32 %v181, %v221
    %v247 = vmul.f32 %v186, %v221
    %v248 = vmul.f32 %v191, %v221
    %v249 = vmul.f32 %v196, %v221
    %v250 = vmul.f32 %v201, %v221
    %v251 = vmul.f32 %v206, %v221
    %v252 = vmul.f32 %v211, %v221
    %v253 = vmul.f32 %v216, %v221
    %v254 = vld [vmem:[%s2 + $0x1] sm:$0x1]
    %v255 = vlaneseq
    %v256 = vshrl.u32 %v255, 7
    %v257 = vsub.s32 0, %v256
    %v258 = vrot.slane %v254, %v257
    %v259 = vadd.f32 %v222, %v258
    %v260 = vadd.f32 %v223, %v258
    %v261 = vadd.f32 %v224, %v258
    %v262 = vadd.f32 %v225, %v258
    %v263 = vadd.f32 %v226, %v258
    %v264 = vadd.f32 %v227, %v258
    %v265 = vadd.f32 %v228, %v258
    %v266 = vadd.f32 %v229, %v258
    %v267 = vadd.f32 %v230, %v258
    %v268 = vadd.f32 %v231, %v258
    %v269 = vadd.f32 %v232, %v258
    %v270 = vadd.f32 %v233, %v258
    %v271 = vadd.f32 %v234, %v258
    %v272 = vadd.f32 %v235, %v258
    %v273 = vadd.f32 %v236, %v258
    %v274 = vadd.f32 %v237, %v258
    %v275 = vadd.f32 %v238, %v258
    %v276 = vadd.f32 %v239, %v258
    %v277 = vadd.f32 %v240, %v258
    %v278 = vadd.f32 %v241, %v258
    %v279 = vadd.f32 %v242, %v258
    %v280 = vadd.f32 %v243, %v258
    %v281 = vadd.f32 %v244, %v258
    %v282 = vadd.f32 %v245, %v258
    %v283 = vadd.f32 %v246, %v258
    %v284 = vadd.f32 %v247, %v258
    %v285 = vadd.f32 %v248, %v258
    %v286 = vadd.f32 %v249, %v258
    %v287 = vadd.f32 %v250, %v258
    %v288 = vadd.f32 %v251, %v258
    %v289 = vadd.f32 %v252, %v258
    %v290 = vadd.f32 %v253, %v258
    %v291 = vand.u32 2147483647, %v259
    %vm292 = vcmp.le.f32.partialorder %v291, 0.7853982
    %vm293 = vcmp.lt.s32.totalorder %v259, 0
    %v294 = vand.u32 %v259, 2139095040
    %v295 = vshrl.u32 %v294, 23
    %v296 = vsub.s32 %v295, 127
    %v297 = vand.u32 2147483647, %v259
    %v298 = vand.u32 %v297, 8388607
    %v299 = vor.u32 %v298, 8388608
    %v300 = vsub.s32 0, %v299
    %v301 = vadd.s32 %v296, 1
    %vm302 = vcmp.gt.s32.totalorder %v301, 0
    %v303 = vsel %vm302, %v301, 0
    %v304 = vshrl.u32 %v303, 5
    %v305 = vand.u32 %v303, 31
    %v306 = vsub.s32 32, %v305
    %v307 = vshrl.u32 683565275, %v306
    %v308 = vshll.u32 683565275, %v305
    %v309 = vshrl.u32 2475754826, %v306
    %v310 = vor.u32 %v308, %v309
    %v311 = vshll.u32 2475754826, %v305
    %v312 = vshrl.u32 2131351028, %v306
    %v313 = vor.u32 %v311, %v312
    %v314 = vshll.u32 2131351028, %v305
    %v315 = vshrl.u32 2102212464, %v306
    %v316 = vor.u32 %v314, %v315
    %v317 = vshll.u32 2102212464, %v305
    %v318 = vshrl.u32 920167782, %v306
    %v319 = vor.u32 %v317, %v318
    %v320 = vshll.u32 920167782, %v305
    %v321 = vshrl.u32 1326507024, %v306
    %v322 = vor.u32 %v320, %v321
    %vm323 = vcmp.lt.s32.totalorder %v304, 1
    %vm324 = vcmp.lt.s32.totalorder %v304, 2
    %vm325 = vcmp.lt.s32.totalorder %v304, 3
    %vm326 = vcmp.lt.s32.totalorder %v304, 4
    %v327 = vsel %vm323, %v307, %v310
    %v328 = vsel %vm326, %v316, 2102212464
    %v329 = vsel %vm325, %v313, %v328
    %v330 = vsel %vm324, %v327, %v329
    %v331 = vsel %vm323, %v310, %v313
    %v332 = vsel %vm326, %v319, 920167782
    %v333 = vsel %vm325, %v316, %v332
    %v334 = vsel %vm324, %v331, %v333
    %v335 = vsel %vm323, %v313, %v316
    %v336 = vsel %vm326, %v322, 1326507024
    %v337 = vsel %vm325, %v319, %v336
    %v338 = vsel %vm324, %v335, %v337
    %v339 = vshll.u32 %v299, 8
    %v340 = vmul.u32.u64.compose %v339, %v338
    %v341 = vextract.low.u32 %v340
    %v342 = vextract.high.u32 %v340
    %v343 = vmul.u32.u64.compose %v339, %v334
    %v344 = vextract.low.u32 %v343
    %v345 = vextract.high.u32 %v343
    %v346 = vmul.u32 %v339, %v330
    %v347 = vadd.s32 %v342, %v344
    %vm348 = vc.u32 %v342, %v344
    %v349 = vadd.s32 %v345, 1
    %v350 = vsel %vm348, %v349, %v345
    %v351 = vadd.s32 %v346, %v350
    %v352 = vadd.s32 %v351, 536870912
    %v353 = vshrl.u32 %v352, 30
    %v354 = vshll.u32 %v353, 30
    %v355 = vsub.s32 %v351, %v354
    %vm356 = vcmp.lt.s32.totalorder %v355, 0
    %v357 = vsub.s32 0, %v355
    %v358 = vsel %vm356, %v357, %v355
    %v359 = vclz %v358
    %v360 = vsub.s32 %v359, 2
    %vm361 = vcmp.gt.s32.totalorder 0, %v360
    %v362 = vsel %vm361, 0, %v360
    %v363 = vsub.s32 32, %v362
    %v364 = vshll.u32 %v355, %v362
    %v365 = vshrl.u32 %v347, %v363
    %v366 = vor.u32 %v364, %v365
    %v367 = vsub.s32 4294967266, %v362
    %v368 = vadd.s32 %v367, 127
    %v369 = vshll.u32 %v368, 23
    %v370 = vor.u32 4788187, %v369
    %v371 = vand.u32 2147483647, %v370
    %v373 = vcvt.s32.f32 %v366
    %v374 = vmul.f32 %v373, %v371
    %v375 = vxor.u32 %v374, 2147483648
    %v376 = vsel %vm293, %v375, %v374
    %v377 = vsub.s32 4, %v353
    %v378 = vsel %vm293, %v377, %v353
    %v379 = vsel %vm292, %v259, %v376
    %v380 = vsel %vm292, 0, %v378
    %v381 = vcosq.f32.pop %v379
    %v382 = vsinq.f32.pop %v379
    %vm383 = vweird.f32 %v259
    %v384 = vadd.s32 %v380, 3
    %v385 = vand.u32 %v384, 3
    %vm386 = vcmp.lt.s32.totalorder %v385, 2
    %vm387 = vcmp.eq.s32.totalorder %v385, 0
    %v388 = vxor.u32 %v382, 2147483648
    %v389 = vsel %vm387, %v381, %v388
    %vm390 = vcmp.eq.s32.totalorder %v385, 2
    %v391 = vxor.u32 %v381, 2147483648
    %v392 = vsel %vm390, %v391, %v382
    %v393 = vsel %vm386, %v389, %v392
    %v394 = vsel %vm383, nan, %v393
    %v395 = vand.u32 2147483647, %v260
    %vm396 = vcmp.le.f32.partialorder %v395, 0.7853982
    %vm397 = vcmp.lt.s32.totalorder %v260, 0
    %v398 = vand.u32 %v260, 2139095040
    %v399 = vshrl.u32 %v398, 23
    %v400 = vsub.s32 %v399, 127
    %v401 = vand.u32 2147483647, %v260
    %v402 = vand.u32 %v401, 8388607
    %v403 = vor.u32 %v402, 8388608
    %v404 = vsub.s32 0, %v403
    %v405 = vadd.s32 %v400, 1
    %vm406 = vcmp.gt.s32.totalorder %v405, 0
    %v407 = vsel %vm406, %v405, 0
    %v408 = vshrl.u32 %v407, 5
    %v409 = vand.u32 %v407, 31
    %v410 = vsub.s32 32, %v409
    %v411 = vshrl.u32 683565275, %v410
    %v412 = vshll.u32 683565275, %v409
    %v413 = vshrl.u32 2475754826, %v410
    %v414 = vor.u32 %v412, %v413
    %v415 = vshll.u32 2475754826, %v409
    %v416 = vshrl.u32 2131351028, %v410
    %v417 = vor.u32 %v415, %v416
    %v418 = vshll.u32 2131351028, %v409
    %v419 = vshrl.u32 2102212464, %v410
    %v420 = vor.u32 %v418, %v419
    %v421 = vshll.u32 2102212464, %v409
    %v422 = vshrl.u32 920167782, %v410
    %v423 = vor.u32 %v421, %v422
    %v424 = vshll.u32 920167782, %v409
    %v425 = vshrl.u32 1326507024, %v410
    %v426 = vor.u32 %v424, %v425
    %vm427 = vcmp.lt.s32.totalorder %v408, 1
    %vm428 = vcmp.lt.s32.totalorder %v408, 2
    %vm429 = vcmp.lt.s32.totalorder %v408, 3
    %vm430 = vcmp.lt.s32.totalorder %v408, 4
    %v431 = vsel %vm427, %v411, %v414
    %v432 = vsel %vm430, %v420, 2102212464
    %v433 = vsel %vm429, %v417, %v432
    %v434 = vsel %vm428, %v431, %v433
    %v435 = vsel %vm427, %v414, %v417
    %v436 = vsel %vm430, %v423, 920167782
    %v437 = vsel %vm429, %v420, %v436
    %v438 = vsel %vm428, %v435, %v437
    %v439 = vsel %vm427, %v417, %v420
    %v440 = vsel %vm430, %v426, 1326507024
    %v441 = vsel %vm429, %v423, %v440
    %v442 = vsel %vm428, %v439, %v441
    %v443 = vshll.u32 %v403, 8
    %v444 = vmul.u32.u64.compose %v443, %v442
    %v445 = vextract.low.u32 %v444
    %v446 = vextract.high.u32 %v444
    %v447 = vmul.u32.u64.compose %v443, %v438
    %v448 = vextract.low.u32 %v447
    %v449 = vextract.high.u32 %v447
    %v450 = vmul.u32 %v443, %v434
    %v451 = vadd.s32 %v446, %v448
    %vm452 = vc.u32 %v446, %v448
    %v453 = vadd.s32 %v449, 1
    %v454 = vsel %vm452, %v453, %v449
    %v455 = vadd.s32 %v450, %v454
    %v456 = vadd.s32 %v455, 536870912
    %v457 = vshrl.u32 %v456, 30
    %v458 = vshll.u32 %v457, 30
    %v459 = vsub.s32 %v455, %v458
    %vm460 = vcmp.lt.s32.totalorder %v459, 0
    %v461 = vsub.s32 0, %v459
    %v462 = vsel %vm460, %v461, %v459
    %v463 = vclz %v462
    %v464 = vsub.s32 %v463, 2
    %vm465 = vcmp.gt.s32.totalorder 0, %v464
    %v466 = vsel %vm465, 0, %v464
    %v467 = vsub.s32 32, %v466
    %v468 = vshll.u32 %v459, %v466
    %v469 = vshrl.u32 %v451, %v467
    %v470 = vor.u32 %v468, %v469
    %v471 = vsub.s32 4294967266, %v466
    %v472 = vadd.s32 %v471, 127
    %v473 = vshll.u32 %v472, 23
    %v474 = vor.u32 4788187, %v473
    %v475 = vand.u32 2147483647, %v474
    %v477 = vcvt.s32.f32 %v470
    %v478 = vmul.f32 %v477, %v475
    %v479 = vxor.u32 %v478, 2147483648
    %v480 = vsel %vm397, %v479, %v478
    %v481 = vsub.s32 4, %v457
    %v482 = vsel %vm397, %v481, %v457
    %v483 = vsel %vm396, %v260, %v480
    %v484 = vsel %vm396, 0, %v482
    %v485 = vcosq.f32.pop %v483
    %v486 = vsinq.f32.pop %v483
    %vm487 = vweird.f32 %v260
    %v488 = vadd.s32 %v484, 3
    %v489 = vand.u32 %v488, 3
    %vm490 = vcmp.lt.s32.totalorder %v489, 2
    %vm491 = vcmp.eq.s32.totalorder %v489, 0
    %v492 = vxor.u32 %v486, 2147483648
    %v493 = vsel %vm491, %v485, %v492
    %vm494 = vcmp.eq.s32.totalorder %v489, 2
    %v495 = vxor.u32 %v485, 2147483648
    %v496 = vsel %vm494, %v495, %v486
    %v497 = vsel %vm490, %v493, %v496
    %v498 = vsel %vm487, nan, %v497
    %v499 = vand.u32 2147483647, %v261
    %vm500 = vcmp.le.f32.partialorder %v499, 0.7853982
    %vm501 = vcmp.lt.s32.totalorder %v261, 0
    %v502 = vand.u32 %v261, 2139095040
    %v503 = vshrl.u32 %v502, 23
    %v504 = vsub.s32 %v503, 127
    %v505 = vand.u32 2147483647, %v261
    %v506 = vand.u32 %v505, 8388607
    %v507 = vor.u32 %v506, 8388608
    %v508 = vsub.s32 0, %v507
    %v509 = vadd.s32 %v504, 1
    %vm510 = vcmp.gt.s32.totalorder %v509, 0
    %v511 = vsel %vm510, %v509, 0
    %v512 = vshrl.u32 %v511, 5
    %v513 = vand.u32 %v511, 31
    %v514 = vsub.s32 32, %v513
    %v515 = vshrl.u32 683565275, %v514
    %v516 = vshll.u32 683565275, %v513
    %v517 = vshrl.u32 2475754826, %v514
    %v518 = vor.u32 %v516, %v517
    %v519 = vshll.u32 2475754826, %v513
    %v520 = vshrl.u32 2131351028, %v514
    %v521 = vor.u32 %v519, %v520
    %v522 = vshll.u32 2131351028, %v513
    %v523 = vshrl.u32 2102212464, %v514
    %v524 = vor.u32 %v522, %v523
    %v525 = vshll.u32 2102212464, %v513
    %v526 = vshrl.u32 920167782, %v514
    %v527 = vor.u32 %v525, %v526
    %v528 = vshll.u32 920167782, %v513
    %v529 = vshrl.u32 1326507024, %v514
    %v530 = vor.u32 %v528, %v529
    %vm531 = vcmp.lt.s32.totalorder %v512, 1
    %vm532 = vcmp.lt.s32.totalorder %v512, 2
    %vm533 = vcmp.lt.s32.totalorder %v512, 3
    %vm534 = vcmp.lt.s32.totalorder %v512, 4
    %v535 = vsel %vm531, %v515, %v518
    %v536 = vsel %vm534, %v524, 2102212464
    %v537 = vsel %vm533, %v521, %v536
    %v538 = vsel %vm532, %v535, %v537
    %v539 = vsel %vm531, %v518, %v521
    %v540 = vsel %vm534, %v527, 920167782
    %v541 = vsel %vm533, %v524, %v540
    %v542 = vsel %vm532, %v539, %v541
    %v543 = vsel %vm531, %v521, %v524
    %v544 = vsel %vm534, %v530, 1326507024
    %v545 = vsel %vm533, %v527, %v544
    %v546 = vsel %vm532, %v543, %v545
    %v547 = vshll.u32 %v507, 8
    %v548 = vmul.u32.u64.compose %v547, %v546
    %v549 = vextract.low.u32 %v548
    %v550 = vextract.high.u32 %v548
    %v551 = vmul.u32.u64.compose %v547, %v542
    %v552 = vextract.low.u32 %v551
    %v553 = vextract.high.u32 %v551
    %v554 = vmul.u32 %v547, %v538
    %v555 = vadd.s32 %v550, %v552
    %vm556 = vc.u32 %v550, %v552
    %v557 = vadd.s32 %v553, 1
    %v558 = vsel %vm556, %v557, %v553
    %v559 = vadd.s32 %v554, %v558
    %v560 = vadd.s32 %v559, 536870912
    %v561 = vshrl.u32 %v560, 30
    %v562 = vshll.u32 %v561, 30
    %v563 = vsub.s32 %v559, %v562
    %vm564 = vcmp.lt.s32.totalorder %v563, 0
    %v565 = vsub.s32 0, %v563
    %v566 = vsel %vm564, %v565, %v563
    %v567 = vclz %v566
    %v568 = vsub.s32 %v567, 2
    %vm569 = vcmp.gt.s32.totalorder 0, %v568
    %v570 = vsel %vm569, 0, %v568
    %v571 = vsub.s32 32, %v570
    %v572 = vshll.u32 %v563, %v570
    %v573 = vshrl.u32 %v555, %v571
    %v574 = vor.u32 %v572, %v573
    %v575 = vsub.s32 4294967266, %v570
    %v576 = vadd.s32 %v575, 127
    %v577 = vshll.u32 %v576, 23
    %v578 = vor.u32 4788187, %v577
    %v579 = vand.u32 2147483647, %v578
    %v581 = vcvt.s32.f32 %v574
    %v582 = vmul.f32 %v581, %v579
    %v583 = vxor.u32 %v582, 2147483648
    %v584 = vsel %vm501, %v583, %v582
    %v585 = vsub.s32 4, %v561
    %v586 = vsel %vm501, %v585, %v561
    %v587 = vsel %vm500, %v261, %v584
    %v588 = vsel %vm500, 0, %v586
    %v589 = vcosq.f32.pop %v587
    %v590 = vsinq.f32.pop %v587
    %vm591 = vweird.f32 %v261
    %v592 = vadd.s32 %v588, 3
    %v593 = vand.u32 %v592, 3
    %vm594 = vcmp.lt.s32.totalorder %v593, 2
    %vm595 = vcmp.eq.s32.totalorder %v593, 0
    %v596 = vxor.u32 %v590, 2147483648
    %v597 = vsel %vm595, %v589, %v596
    %vm598 = vcmp.eq.s32.totalorder %v593, 2
    %v599 = vxor.u32 %v589, 2147483648
    %v600 = vsel %vm598, %v599, %v590
    %v601 = vsel %vm594, %v597, %v600
    %v602 = vsel %vm591, nan, %v601
    %v603 = vand.u32 2147483647, %v262
    %vm604 = vcmp.le.f32.partialorder %v603, 0.7853982
    %vm605 = vcmp.lt.s32.totalorder %v262, 0
    %v606 = vand.u32 %v262, 2139095040
    %v607 = vshrl.u32 %v606, 23
    %v608 = vsub.s32 %v607, 127
    %v609 = vand.u32 2147483647, %v262
    %v610 = vand.u32 %v609, 8388607
    %v611 = vor.u32 %v610, 8388608
    %v612 = vsub.s32 0, %v611
    %v613 = vadd.s32 %v608, 1
    %vm614 = vcmp.gt.s32.totalorder %v613, 0
    %v615 = vsel %vm614, %v613, 0
    %v616 = vshrl.u32 %v615, 5
    %v617 = vand.u32 %v615, 31
    %v618 = vsub.s32 32, %v617
    %v619 = vshrl.u32 683565275, %v618
    %v620 = vshll.u32 683565275, %v617
    %v621 = vshrl.u32 2475754826, %v618
    %v622 = vor.u32 %v620, %v621
    %v623 = vshll.u32 2475754826, %v617
    %v624 = vshrl.u32 2131351028, %v618
    %v625 = vor.u32 %v623, %v624
    %v626 = vshll.u32 2131351028, %v617
    %v627 = vshrl.u32 2102212464, %v618
    %v628 = vor.u32 %v626, %v627
    %v629 = vshll.u32 2102212464, %v617
    %v630 = vshrl.u32 920167782, %v618
    %v631 = vor.u32 %v629, %v630
    %v632 = vshll.u32 920167782, %v617
    %v633 = vshrl.u32 1326507024, %v618
    %v634 = vor.u32 %v632, %v633
    %vm635 = vcmp.lt.s32.totalorder %v616, 1
    %vm636 = vcmp.lt.s32.totalorder %v616, 2
    %vm637 = vcmp.lt.s32.totalorder %v616, 3
    %vm638 = vcmp.lt.s32.totalorder %v616, 4
    %v639 = vsel %vm635, %v619, %v622
    %v640 = vsel %vm638, %v628, 2102212464
    %v641 = vsel %vm637, %v625, %v640
    %v642 = vsel %vm636, %v639, %v641
    %v643 = vsel %vm635, %v622, %v625
    %v644 = vsel %vm638, %v631, 920167782
    %v645 = vsel %vm637, %v628, %v644
    %v646 = vsel %vm636, %v643, %v645
    %v647 = vsel %vm635, %v625, %v628
    %v648 = vsel %vm638, %v634, 1326507024
    %v649 = vsel %vm637, %v631, %v648
    %v650 = vsel %vm636, %v647, %v649
    %v651 = vshll.u32 %v611, 8
    %v652 = vmul.u32.u64.compose %v651, %v650
    %v653 = vextract.low.u32 %v652
    %v654 = vextract.high.u32 %v652
    %v655 = vmul.u32.u64.compose %v651, %v646
    %v656 = vextract.low.u32 %v655
    %v657 = vextract.high.u32 %v655
    %v658 = vmul.u32 %v651, %v642
    %v659 = vadd.s32 %v654, %v656
    %vm660 = vc.u32 %v654, %v656
    %v661 = vadd.s32 %v657, 1
    %v662 = vsel %vm660, %v661, %v657
    %v663 = vadd.s32 %v658, %v662
    %v664 = vadd.s32 %v663, 536870912
    %v665 = vshrl.u32 %v664, 30
    %v666 = vshll.u32 %v665, 30
    %v667 = vsub.s32 %v663, %v666
    %vm668 = vcmp.lt.s32.totalorder %v667, 0
    %v669 = vsub.s32 0, %v667
    %v670 = vsel %vm668, %v669, %v667
    %v671 = vclz %v670
    %v672 = vsub.s32 %v671, 2
    %vm673 = vcmp.gt.s32.totalorder 0, %v672
    %v674 = vsel %vm673, 0, %v672
    %v675 = vsub.s32 32, %v674
    %v676 = vshll.u32 %v667, %v674
    %v677 = vshrl.u32 %v659, %v675
    %v678 = vor.u32 %v676, %v677
    %v679 = vsub.s32 4294967266, %v674
    %v680 = vadd.s32 %v679, 127
    %v681 = vshll.u32 %v680, 23
    %v682 = vor.u32 4788187, %v681
    %v683 = vand.u32 2147483647, %v682
    %v685 = vcvt.s32.f32 %v678
    %v686 = vmul.f32 %v685, %v683
    %v687 = vxor.u32 %v686, 2147483648
    %v688 = vsel %vm605, %v687, %v686
    %v689 = vsub.s32 4, %v665
    %v690 = vsel %vm605, %v689, %v665
    %v691 = vsel %vm604, %v262, %v688
    %v692 = vsel %vm604, 0, %v690
    %v693 = vcosq.f32.pop %v691
    %v694 = vsinq.f32.pop %v691
    %vm695 = vweird.f32 %v262
    %v696 = vadd.s32 %v692, 3
    %v697 = vand.u32 %v696, 3
    %vm698 = vcmp.lt.s32.totalorder %v697, 2
    %vm699 = vcmp.eq.s32.totalorder %v697, 0
    %v700 = vxor.u32 %v694, 2147483648
    %v701 = vsel %vm699, %v693, %v700
    %vm702 = vcmp.eq.s32.totalorder %v697, 2
    %v703 = vxor.u32 %v693, 2147483648
    %v704 = vsel %vm702, %v703, %v694
    %v705 = vsel %vm698, %v701, %v704
    %v706 = vsel %vm695, nan, %v705
    %v707 = vand.u32 2147483647, %v263
    %vm708 = vcmp.le.f32.partialorder %v707, 0.7853982
    %vm709 = vcmp.lt.s32.totalorder %v263, 0
    %v710 = vand.u32 %v263, 2139095040
    %v711 = vshrl.u32 %v710, 23
    %v712 = vsub.s32 %v711, 127
    %v713 = vand.u32 2147483647, %v263
    %v714 = vand.u32 %v713, 8388607
    %v715 = vor.u32 %v714, 8388608
    %v716 = vsub.s32 0, %v715
    %v717 = vadd.s32 %v712, 1
    %vm718 = vcmp.gt.s32.totalorder %v717, 0
    %v719 = vsel %vm718, %v717, 0
    %v720 = vshrl.u32 %v719, 5
    %v721 = vand.u32 %v719, 31
    %v722 = vsub.s32 32, %v721
    %v723 = vshrl.u32 683565275, %v722
    %v724 = vshll.u32 683565275, %v721
    %v725 = vshrl.u32 2475754826, %v722
    %v726 = vor.u32 %v724, %v725
    %v727 = vshll.u32 2475754826, %v721
    %v728 = vshrl.u32 2131351028, %v722
    %v729 = vor.u32 %v727, %v728
    %v730 = vshll.u32 2131351028, %v721
    %v731 = vshrl.u32 2102212464, %v722
    %v732 = vor.u32 %v730, %v731
    %v733 = vshll.u32 2102212464, %v721
    %v734 = vshrl.u32 920167782, %v722
    %v735 = vor.u32 %v733, %v734
    %v736 = vshll.u32 920167782, %v721
    %v737 = vshrl.u32 1326507024, %v722
    %v738 = vor.u32 %v736, %v737
    %vm739 = vcmp.lt.s32.totalorder %v720, 1
    %vm740 = vcmp.lt.s32.totalorder %v720, 2
    %vm741 = vcmp.lt.s32.totalorder %v720, 3
    %vm742 = vcmp.lt.s32.totalorder %v720, 4
    %v743 = vsel %vm739, %v723, %v726
    %v744 = vsel %vm742, %v732, 2102212464
    %v745 = vsel %vm741, %v729, %v744
    %v746 = vsel %vm740, %v743, %v745
    %v747 = vsel %vm739, %v726, %v729
    %v748 = vsel %vm742, %v735, 920167782
    %v749 = vsel %vm741, %v732, %v748
    %v750 = vsel %vm740, %v747, %v749
    %v751 = vsel %vm739, %v729, %v732
    %v752 = vsel %vm742, %v738, 1326507024
    %v753 = vsel %vm741, %v735, %v752
    %v754 = vsel %vm740, %v751, %v753
    %v755 = vshll.u32 %v715, 8
    %v756 = vmul.u32.u64.compose %v755, %v754
    %v757 = vextract.low.u32 %v756
    %v758 = vextract.high.u32 %v756
    %v759 = vmul.u32.u64.compose %v755, %v750
    %v760 = vextract.low.u32 %v759
    %v761 = vextract.high.u32 %v759
    %v762 = vmul.u32 %v755, %v746
    %v763 = vadd.s32 %v758, %v760
    %vm764 = vc.u32 %v758, %v760
    %v765 = vadd.s32 %v761, 1
    %v766 = vsel %vm764, %v765, %v761
    %v767 = vadd.s32 %v762, %v766
    %v768 = vadd.s32 %v767, 536870912
    %v769 = vshrl.u32 %v768, 30
    %v770 = vshll.u32 %v769, 30
    %v771 = vsub.s32 %v767, %v770
    %vm772 = vcmp.lt.s32.totalorder %v771, 0
    %v773 = vsub.s32 0, %v771
    %v774 = vsel %vm772, %v773, %v771
    %v775 = vclz %v774
    %v776 = vsub.s32 %v775, 2
    %vm777 = vcmp.gt.s32.totalorder 0, %v776
    %v778 = vsel %vm777, 0, %v776
    %v779 = vsub.s32 32, %v778
    %v780 = vshll.u32 %v771, %v778
    %v781 = vshrl.u32 %v763, %v779
    %v782 = vor.u32 %v780, %v781
    %v783 = vsub.s32 4294967266, %v778
    %v784 = vadd.s32 %v783, 127
    %v785 = vshll.u32 %v784, 23
    %v786 = vor.u32 4788187, %v785
    %v787 = vand.u32 2147483647, %v786
    %v789 = vcvt.s32.f32 %v782
    %v790 = vmul.f32 %v789, %v787
    %v791 = vxor.u32 %v790, 2147483648
    %v792 = vsel %vm709, %v791, %v790
    %v793 = vsub.s32 4, %v769
    %v794 = vsel %vm709, %v793, %v769
    %v795 = vsel %vm708, %v263, %v792
    %v796 = vsel %vm708, 0, %v794
    %v797 = vcosq.f32.pop %v795
    %v798 = vsinq.f32.pop %v795
    %vm799 = vweird.f32 %v263
    %v800 = vadd.s32 %v796, 3
    %v801 = vand.u32 %v800, 3
    %vm802 = vcmp.lt.s32.totalorder %v801, 2
    %vm803 = vcmp.eq.s32.totalorder %v801, 0
    %v804 = vxor.u32 %v798, 2147483648
    %v805 = vsel %vm803, %v797, %v804
    %vm806 = vcmp.eq.s32.totalorder %v801, 2
    %v807 = vxor.u32 %v797, 2147483648
    %v808 = vsel %vm806, %v807, %v798
    %v809 = vsel %vm802, %v805, %v808
    %v810 = vsel %vm799, nan, %v809
    %v811 = vand.u32 2147483647, %v264
    %vm812 = vcmp.le.f32.partialorder %v811, 0.7853982
    %vm813 = vcmp.lt.s32.totalorder %v264, 0
    %v814 = vand.u32 %v264, 2139095040
    %v815 = vshrl.u32 %v814, 23
    %v816 = vsub.s32 %v815, 127
    %v817 = vand.u32 2147483647, %v264
    %v818 = vand.u32 %v817, 8388607
    %v819 = vor.u32 %v818, 8388608
    %v820 = vsub.s32 0, %v819
    %v821 = vadd.s32 %v816, 1
    %vm822 = vcmp.gt.s32.totalorder %v821, 0
    %v823 = vsel %vm822, %v821, 0
    %v824 = vshrl.u32 %v823, 5
    %v825 = vand.u32 %v823, 31
    %v826 = vsub.s32 32, %v825
    %v827 = vshrl.u32 683565275, %v826
    %v828 = vshll.u32 683565275, %v825
    %v829 = vshrl.u32 2475754826, %v826
    %v830 = vor.u32 %v828, %v829
    %v831 = vshll.u32 2475754826, %v825
    %v832 = vshrl.u32 2131351028, %v826
    %v833 = vor.u32 %v831, %v832
    %v834 = vshll.u32 2131351028, %v825
    %v835 = vshrl.u32 2102212464, %v826
    %v836 = vor.u32 %v834, %v835
    %v837 = vshll.u32 2102212464, %v825
    %v838 = vshrl.u32 920167782, %v826
    %v839 = vor.u32 %v837, %v838
    %v840 = vshll.u32 920167782, %v825
    %v841 = vshrl.u32 1326507024, %v826
    %v842 = vor.u32 %v840, %v841
    %vm843 = vcmp.lt.s32.totalorder %v824, 1
    %vm844 = vcmp.lt.s32.totalorder %v824, 2
    %vm845 = vcmp.lt.s32.totalorder %v824, 3
    %vm846 = vcmp.lt.s32.totalorder %v824, 4
    %v847 = vsel %vm843, %v827, %v830
    %v848 = vsel %vm846, %v836, 2102212464
    %v849 = vsel %vm845, %v833, %v848
    %v850 = vsel %vm844, %v847, %v849
    %v851 = vsel %vm843, %v830, %v833
    %v852 = vsel %vm846, %v839, 920167782
    %v853 = vsel %vm845, %v836, %v852
    %v854 = vsel %vm844, %v851, %v853
    %v855 = vsel %vm843, %v833, %v836
    %v856 = vsel %vm846, %v842, 1326507024
    %v857 = vsel %vm845, %v839, %v856
    %v858 = vsel %vm844, %v855, %v857
    %v859 = vshll.u32 %v819, 8
    %v860 = vmul.u32.u64.compose %v859, %v858
    %v861 = vextract.low.u32 %v860
    %v862 = vextract.high.u32 %v860
    %v863 = vmul.u32.u64.compose %v859, %v854
    %v864 = vextract.low.u32 %v863
    %v865 = vextract.high.u32 %v863
    %v866 = vmul.u32 %v859, %v850
    %v867 = vadd.s32 %v862, %v864
    %vm868 = vc.u32 %v862, %v864
    %v869 = vadd.s32 %v865, 1
    %v870 = vsel %vm868, %v869, %v865
    %v871 = vadd.s32 %v866, %v870
    %v872 = vadd.s32 %v871, 536870912
    %v873 = vshrl.u32 %v872, 30
    %v874 = vshll.u32 %v873, 30
    %v875 = vsub.s32 %v871, %v874
    %vm876 = vcmp.lt.s32.totalorder %v875, 0
    %v877 = vsub.s32 0, %v875
    %v878 = vsel %vm876, %v877, %v875
    %v879 = vclz %v878
    %v880 = vsub.s32 %v879, 2
    %vm881 = vcmp.gt.s32.totalorder 0, %v880
    %v882 = vsel %vm881, 0, %v880
    %v883 = vsub.s32 32, %v882
    %v884 = vshll.u32 %v875, %v882
    %v885 = vshrl.u32 %v867, %v883
    %v886 = vor.u32 %v884, %v885
    %v887 = vsub.s32 4294967266, %v882
    %v888 = vadd.s32 %v887, 127
    %v889 = vshll.u32 %v888, 23
    %v890 = vor.u32 4788187, %v889
    %v891 = vand.u32 2147483647, %v890
    %v893 = vcvt.s32.f32 %v886
    %v894 = vmul.f32 %v893, %v891
    %v895 = vxor.u32 %v894, 2147483648
    %v896 = vsel %vm813, %v895, %v894
    %v897 = vsub.s32 4, %v873
    %v898 = vsel %vm813, %v897, %v873
    %v899 = vsel %vm812, %v264, %v896
    %v900 = vsel %vm812, 0, %v898
    %v901 = vcosq.f32.pop %v899
    %v902 = vsinq.f32.pop %v899
    %vm903 = vweird.f32 %v264
    %v904 = vadd.s32 %v900, 3
    %v905 = vand.u32 %v904, 3
    %vm906 = vcmp.lt.s32.totalorder %v905, 2
    %vm907 = vcmp.eq.s32.totalorder %v905, 0
    %v908 = vxor.u32 %v902, 2147483648
    %v909 = vsel %vm907, %v901, %v908
    %vm910 = vcmp.eq.s32.totalorder %v905, 2
    %v911 = vxor.u32 %v901, 2147483648
    %v912 = vsel %vm910, %v911, %v902
    %v913 = vsel %vm906, %v909, %v912
    %v914 = vsel %vm903, nan, %v913
    %v915 = vand.u32 2147483647, %v265
    %vm916 = vcmp.le.f32.partialorder %v915, 0.7853982
    %vm917 = vcmp.lt.s32.totalorder %v265, 0
    %v918 = vand.u32 %v265, 2139095040
    %v919 = vshrl.u32 %v918, 23
    %v920 = vsub.s32 %v919, 127
    %v921 = vand.u32 2147483647, %v265
    %v922 = vand.u32 %v921, 8388607
    %v923 = vor.u32 %v922, 8388608
    %v924 = vsub.s32 0, %v923
    %v925 = vadd.s32 %v920, 1
    %vm926 = vcmp.gt.s32.totalorder %v925, 0
    %v927 = vsel %vm926, %v925, 0
    %v928 = vshrl.u32 %v927, 5
    %v929 = vand.u32 %v927, 31
    %v930 = vsub.s32 32, %v929
    %v931 = vshrl.u32 683565275, %v930
    %v932 = vshll.u32 683565275, %v929
    %v933 = vshrl.u32 2475754826, %v930
    %v934 = vor.u32 %v932, %v933
    %v935 = vshll.u32 2475754826, %v929
    %v936 = vshrl.u32 2131351028, %v930
    %v937 = vor.u32 %v935, %v936
    %v938 = vshll.u32 2131351028, %v929
    %v939 = vshrl.u32 2102212464, %v930
    %v940 = vor.u32 %v938, %v939
    %v941 = vshll.u32 2102212464, %v929
    %v942 = vshrl.u32 920167782, %v930
    %v943 = vor.u32 %v941, %v942
    %v944 = vshll.u32 920167782, %v929
    %v945 = vshrl.u32 1326507024, %v930
    %v946 = vor.u32 %v944, %v945
    %vm947 = vcmp.lt.s32.totalorder %v928, 1
    %vm948 = vcmp.lt.s32.totalorder %v928, 2
    %vm949 = vcmp.lt.s32.totalorder %v928, 3
    %vm950 = vcmp.lt.s32.totalorder %v928, 4
    %v951 = vsel %vm947, %v931, %v934
    %v952 = vsel %vm950, %v940, 2102212464
    %v953 = vsel %vm949, %v937, %v952
    %v954 = vsel %vm948, %v951, %v953
    %v955 = vsel %vm947, %v934, %v937
    %v956 = vsel %vm950, %v943, 920167782
    %v957 = vsel %vm949, %v940, %v956
    %v958 = vsel %vm948, %v955, %v957
    %v959 = vsel %vm947, %v937, %v940
    %v960 = vsel %vm950, %v946, 1326507024
    %v961 = vsel %vm949, %v943, %v960
    %v962 = vsel %vm948, %v959, %v961
    %v963 = vshll.u32 %v923, 8
    %v964 = vmul.u32.u64.compose %v963, %v962
    %v965 = vextract.low.u32 %v964
    %v966 = vextract.high.u32 %v964
    %v967 = vmul.u32.u64.compose %v963, %v958
    %v968 = vextract.low.u32 %v967
    %v969 = vextract.high.u32 %v967
    %v970 = vmul.u32 %v963, %v954
    %v971 = vadd.s32 %v966, %v968
    %vm972 = vc.u32 %v966, %v968
    %v973 = vadd.s32 %v969, 1
    %v974 = vsel %vm972, %v973, %v969
    %v975 = vadd.s32 %v970, %v974
    %v976 = vadd.s32 %v975, 536870912
    %v977 = vshrl.u32 %v976, 30
    %v978 = vshll.u32 %v977, 30
    %v979 = vsub.s32 %v975, %v978
    %vm980 = vcmp.lt.s32.totalorder %v979, 0
    %v981 = vsub.s32 0, %v979
    %v982 = vsel %vm980, %v981, %v979
    %v983 = vclz %v982
    %v984 = vsub.s32 %v983, 2
    %vm985 = vcmp.gt.s32.totalorder 0, %v984
    %v986 = vsel %vm985, 0, %v984
    %v987 = vsub.s32 32, %v986
    %v988 = vshll.u32 %v979, %v986
    %v989 = vshrl.u32 %v971, %v987
    %v990 = vor.u32 %v988, %v989
    %v991 = vsub.s32 4294967266, %v986
    %v992 = vadd.s32 %v991, 127
    %v993 = vshll.u32 %v992, 23
    %v994 = vor.u32 4788187, %v993
    %v995 = vand.u32 2147483647, %v994
    %v997 = vcvt.s32.f32 %v990
    %v998 = vmul.f32 %v997, %v995
    %v999 = vxor.u32 %v998, 2147483648
    %v1000 = vsel %vm917, %v999, %v998
    %v1001 = vsub.s32 4, %v977
    %v1002 = vsel %vm917, %v1001, %v977
    %v1003 = vsel %vm916, %v265, %v1000
    %v1004 = vsel %vm916, 0, %v1002
    %v1005 = vcosq.f32.pop %v1003
    %v1006 = vsinq.f32.pop %v1003
    %vm1007 = vweird.f32 %v265
    %v1008 = vadd.s32 %v1004, 3
    %v1009 = vand.u32 %v1008, 3
    %vm1010 = vcmp.lt.s32.totalorder %v1009, 2
    %vm1011 = vcmp.eq.s32.totalorder %v1009, 0
    %v1012 = vxor.u32 %v1006, 2147483648
    %v1013 = vsel %vm1011, %v1005, %v1012
    %vm1014 = vcmp.eq.s32.totalorder %v1009, 2
    %v1015 = vxor.u32 %v1005, 2147483648
    %v1016 = vsel %vm1014, %v1015, %v1006
    %v1017 = vsel %vm1010, %v1013, %v1016
    %v1018 = vsel %vm1007, nan, %v1017
    %v1019 = vand.u32 2147483647, %v266
    %vm1020 = vcmp.le.f32.partialorder %v1019, 0.7853982
    %vm1021 = vcmp.lt.s32.totalorder %v266, 0
    %v1022 = vand.u32 %v266, 2139095040
    %v1023 = vshrl.u32 %v1022, 23
    %v1024 = vsub.s32 %v1023, 127
    %v1025 = vand.u32 2147483647, %v266
    %v1026 = vand.u32 %v1025, 8388607
    %v1027 = vor.u32 %v1026, 8388608
    %v1028 = vsub.s32 0, %v1027
    %v1029 = vadd.s32 %v1024, 1
    %vm1030 = vcmp.gt.s32.totalorder %v1029, 0
    %v1031 = vsel %vm1030, %v1029, 0
    %v1032 = vshrl.u32 %v1031, 5
    %v1033 = vand.u32 %v1031, 31
    %v1034 = vsub.s32 32, %v1033
    %v1035 = vshrl.u32 683565275, %v1034
    %v1036 = vshll.u32 683565275, %v1033
    %v1037 = vshrl.u32 2475754826, %v1034
    %v1038 = vor.u32 %v1036, %v1037
    %v1039 = vshll.u32 2475754826, %v1033
    %v1040 = vshrl.u32 2131351028, %v1034
    %v1041 = vor.u32 %v1039, %v1040
    %v1042 = vshll.u32 2131351028, %v1033
    %v1043 = vshrl.u32 2102212464, %v1034
    %v1044 = vor.u32 %v1042, %v1043
    %v1045 = vshll.u32 2102212464, %v1033
    %v1046 = vshrl.u32 920167782, %v1034
    %v1047 = vor.u32 %v1045, %v1046
    %v1048 = vshll.u32 920167782, %v1033
    %v1049 = vshrl.u32 1326507024, %v1034
    %v1050 = vor.u32 %v1048, %v1049
    %vm1051 = vcmp.lt.s32.totalorder %v1032, 1
    %vm1052 = vcmp.lt.s32.totalorder %v1032, 2
    %vm1053 = vcmp.lt.s32.totalorder %v1032, 3
    %vm1054 = vcmp.lt.s32.totalorder %v1032, 4
    %v1055 = vsel %vm1051, %v1035, %v1038
    %v1056 = vsel %vm1054, %v1044, 2102212464
    %v1057 = vsel %vm1053, %v1041, %v1056
    %v1058 = vsel %vm1052, %v1055, %v1057
    %v1059 = vsel %vm1051, %v1038, %v1041
    %v1060 = vsel %vm1054, %v1047, 920167782
    %v1061 = vsel %vm1053, %v1044, %v1060
    %v1062 = vsel %vm1052, %v1059, %v1061
    %v1063 = vsel %vm1051, %v1041, %v1044
    %v1064 = vsel %vm1054, %v1050, 1326507024
    %v1065 = vsel %vm1053, %v1047, %v1064
    %v1066 = vsel %vm1052, %v1063, %v1065
    %v1067 = vshll.u32 %v1027, 8
    %v1068 = vmul.u32.u64.compose %v1067, %v1066
    %v1069 = vextract.low.u32 %v1068
    %v1070 = vextract.high.u32 %v1068
    %v1071 = vmul.u32.u64.compose %v1067, %v1062
    %v1072 = vextract.low.u32 %v1071
    %v1073 = vextract.high.u32 %v1071
    %v1074 = vmul.u32 %v1067, %v1058
    %v1075 = vadd.s32 %v1070, %v1072
    %vm1076 = vc.u32 %v1070, %v1072
    %v1077 = vadd.s32 %v1073, 1
    %v1078 = vsel %vm1076, %v1077, %v1073
    %v1079 = vadd.s32 %v1074, %v1078
    %v1080 = vadd.s32 %v1079, 536870912
    %v1081 = vshrl.u32 %v1080, 30
    %v1082 = vshll.u32 %v1081, 30
    %v1083 = vsub.s32 %v1079, %v1082
    %vm1084 = vcmp.lt.s32.totalorder %v1083, 0
    %v1085 = vsub.s32 0, %v1083
    %v1086 = vsel %vm1084, %v1085, %v1083
    %v1087 = vclz %v1086
    %v1088 = vsub.s32 %v1087, 2
    %vm1089 = vcmp.gt.s32.totalorder 0, %v1088
    %v1090 = vsel %vm1089, 0, %v1088
    %v1091 = vsub.s32 32, %v1090
    %v1092 = vshll.u32 %v1083, %v1090
    %v1093 = vshrl.u32 %v1075, %v1091
    %v1094 = vor.u32 %v1092, %v1093
    %v1095 = vsub.s32 4294967266, %v1090
    %v1096 = vadd.s32 %v1095, 127
    %v1097 = vshll.u32 %v1096, 23
    %v1098 = vor.u32 4788187, %v1097
    %v1099 = vand.u32 2147483647, %v1098
    %v1101 = vcvt.s32.f32 %v1094
    %v1102 = vmul.f32 %v1101, %v1099
    %v1103 = vxor.u32 %v1102, 2147483648
    %v1104 = vsel %vm1021, %v1103, %v1102
    %v1105 = vsub.s32 4, %v1081
    %v1106 = vsel %vm1021, %v1105, %v1081
    %v1107 = vsel %vm1020, %v266, %v1104
    %v1108 = vsel %vm1020, 0, %v1106
    %v1109 = vcosq.f32.pop %v1107
    %v1110 = vsinq.f32.pop %v1107
    %vm1111 = vweird.f32 %v266
    %v1112 = vadd.s32 %v1108, 3
    %v1113 = vand.u32 %v1112, 3
    %vm1114 = vcmp.lt.s32.totalorder %v1113, 2
    %vm1115 = vcmp.eq.s32.totalorder %v1113, 0
    %v1116 = vxor.u32 %v1110, 2147483648
    %v1117 = vsel %vm1115, %v1109, %v1116
    %vm1118 = vcmp.eq.s32.totalorder %v1113, 2
    %v1119 = vxor.u32 %v1109, 2147483648
    %v1120 = vsel %vm1118, %v1119, %v1110
    %v1121 = vsel %vm1114, %v1117, %v1120
    %v1122 = vsel %vm1111, nan, %v1121
    %v1123 = vand.u32 2147483647, %v267
    %vm1124 = vcmp.le.f32.partialorder %v1123, 0.7853982
    %vm1125 = vcmp.lt.s32.totalorder %v267, 0
    %v1126 = vand.u32 %v267, 2139095040
    %v1127 = vshrl.u32 %v1126, 23
    %v1128 = vsub.s32 %v1127, 127
    %v1129 = vand.u32 2147483647, %v267
    %v1130 = vand.u32 %v1129, 8388607
    %v1131 = vor.u32 %v1130, 8388608
    %v1132 = vsub.s32 0, %v1131
    %v1133 = vadd.s32 %v1128, 1
    %vm1134 = vcmp.gt.s32.totalorder %v1133, 0
    %v1135 = vsel %vm1134, %v1133, 0
    %v1136 = vshrl.u32 %v1135, 5
    %v1137 = vand.u32 %v1135, 31
    %v1138 = vsub.s32 32, %v1137
    %v1139 = vshrl.u32 683565275, %v1138
    %v1140 = vshll.u32 683565275, %v1137
    %v1141 = vshrl.u32 2475754826, %v1138
    %v1142 = vor.u32 %v1140, %v1141
    %v1143 = vshll.u32 2475754826, %v1137
    %v1144 = vshrl.u32 2131351028, %v1138
    %v1145 = vor.u32 %v1143, %v1144
    %v1146 = vshll.u32 2131351028, %v1137
    %v1147 = vshrl.u32 2102212464, %v1138
    %v1148 = vor.u32 %v1146, %v1147
    %v1149 = vshll.u32 2102212464, %v1137
    %v1150 = vshrl.u32 920167782, %v1138
    %v1151 = vor.u32 %v1149, %v1150
    %v1152 = vshll.u32 920167782, %v1137
    %v1153 = vshrl.u32 1326507024, %v1138
    %v1154 = vor.u32 %v1152, %v1153
    %vm1155 = vcmp.lt.s32.totalorder %v1136, 1
    %vm1156 = vcmp.lt.s32.totalorder %v1136, 2
    %vm1157 = vcmp.lt.s32.totalorder %v1136, 3
    %vm1158 = vcmp.lt.s32.totalorder %v1136, 4
    %v1159 = vsel %vm1155, %v1139, %v1142
    %v1160 = vsel %vm1158, %v1148, 2102212464
    %v1161 = vsel %vm1157, %v1145, %v1160
    %v1162 = vsel %vm1156, %v1159, %v1161
    %v1163 = vsel %vm1155, %v1142, %v1145
    %v1164 = vsel %vm1158, %v1151, 920167782
    %v1165 = vsel %vm1157, %v1148, %v1164
    %v1166 = vsel %vm1156, %v1163, %v1165
    %v1167 = vsel %vm1155, %v1145, %v1148
    %v1168 = vsel %vm1158, %v1154, 1326507024
    %v1169 = vsel %vm1157, %v1151, %v1168
    %v1170 = vsel %vm1156, %v1167, %v1169
    %v1171 = vshll.u32 %v1131, 8
    %v1172 = vmul.u32.u64.compose %v1171, %v1170
    %v1173 = vextract.low.u32 %v1172
    %v1174 = vextract.high.u32 %v1172
    %v1175 = vmul.u32.u64.compose %v1171, %v1166
    %v1176 = vextract.low.u32 %v1175
    %v1177 = vextract.high.u32 %v1175
    %v1178 = vmul.u32 %v1171, %v1162
    %v1179 = vadd.s32 %v1174, %v1176
    %vm1180 = vc.u32 %v1174, %v1176
    %v1181 = vadd.s32 %v1177, 1
    %v1182 = vsel %vm1180, %v1181, %v1177
    %v1183 = vadd.s32 %v1178, %v1182
    %v1184 = vadd.s32 %v1183, 536870912
    %v1185 = vshrl.u32 %v1184, 30
    %v1186 = vshll.u32 %v1185, 30
    %v1187 = vsub.s32 %v1183, %v1186
    %vm1188 = vcmp.lt.s32.totalorder %v1187, 0
    %v1189 = vsub.s32 0, %v1187
    %v1190 = vsel %vm1188, %v1189, %v1187
    %v1191 = vclz %v1190
    %v1192 = vsub.s32 %v1191, 2
    %vm1193 = vcmp.gt.s32.totalorder 0, %v1192
    %v1194 = vsel %vm1193, 0, %v1192
    %v1195 = vsub.s32 32, %v1194
    %v1196 = vshll.u32 %v1187, %v1194
    %v1197 = vshrl.u32 %v1179, %v1195
    %v1198 = vor.u32 %v1196, %v1197
    %v1199 = vsub.s32 4294967266, %v1194
    %v1200 = vadd.s32 %v1199, 127
    %v1201 = vshll.u32 %v1200, 23
    %v1202 = vor.u32 4788187, %v1201
    %v1203 = vand.u32 2147483647, %v1202
    %v1205 = vcvt.s32.f32 %v1198
    %v1206 = vmul.f32 %v1205, %v1203
    %v1207 = vxor.u32 %v1206, 2147483648
    %v1208 = vsel %vm1125, %v1207, %v1206
    %v1209 = vsub.s32 4, %v1185
    %v1210 = vsel %vm1125, %v1209, %v1185
    %v1211 = vsel %vm1124, %v267, %v1208
    %v1212 = vsel %vm1124, 0, %v1210
    %v1213 = vcosq.f32.pop %v1211
    %v1214 = vsinq.f32.pop %v1211
    %vm1215 = vweird.f32 %v267
    %v1216 = vadd.s32 %v1212, 3
    %v1217 = vand.u32 %v1216, 3
    %vm1218 = vcmp.lt.s32.totalorder %v1217, 2
    %vm1219 = vcmp.eq.s32.totalorder %v1217, 0
    %v1220 = vxor.u32 %v1214, 2147483648
    %v1221 = vsel %vm1219, %v1213, %v1220
    %vm1222 = vcmp.eq.s32.totalorder %v1217, 2
    %v1223 = vxor.u32 %v1213, 2147483648
    %v1224 = vsel %vm1222, %v1223, %v1214
    %v1225 = vsel %vm1218, %v1221, %v1224
    %v1226 = vsel %vm1215, nan, %v1225
    %v1227 = vand.u32 2147483647, %v268
    %vm1228 = vcmp.le.f32.partialorder %v1227, 0.7853982
    %vm1229 = vcmp.lt.s32.totalorder %v268, 0
    %v1230 = vand.u32 %v268, 2139095040
    %v1231 = vshrl.u32 %v1230, 23
    %v1232 = vsub.s32 %v1231, 127
    %v1233 = vand.u32 2147483647, %v268
    %v1234 = vand.u32 %v1233, 8388607
    %v1235 = vor.u32 %v1234, 8388608
    %v1236 = vsub.s32 0, %v1235
    %v1237 = vadd.s32 %v1232, 1
    %vm1238 = vcmp.gt.s32.totalorder %v1237, 0
    %v1239 = vsel %vm1238, %v1237, 0
    %v1240 = vshrl.u32 %v1239, 5
    %v1241 = vand.u32 %v1239, 31
    %v1242 = vsub.s32 32, %v1241
    %v1243 = vshrl.u32 683565275, %v1242
    %v1244 = vshll.u32 683565275, %v1241
    %v1245 = vshrl.u32 2475754826, %v1242
    %v1246 = vor.u32 %v1244, %v1245
    %v1247 = vshll.u32 2475754826, %v1241
    %v1248 = vshrl.u32 2131351028, %v1242
    %v1249 = vor.u32 %v1247, %v1248
    %v1250 = vshll.u32 2131351028, %v1241
    %v1251 = vshrl.u32 2102212464, %v1242
    %v1252 = vor.u32 %v1250, %v1251
    %v1253 = vshll.u32 2102212464, %v1241
    %v1254 = vshrl.u32 920167782, %v1242
    %v1255 = vor.u32 %v1253, %v1254
    %v1256 = vshll.u32 920167782, %v1241
    %v1257 = vshrl.u32 1326507024, %v1242
    %v1258 = vor.u32 %v1256, %v1257
    %vm1259 = vcmp.lt.s32.totalorder %v1240, 1
    %vm1260 = vcmp.lt.s32.totalorder %v1240, 2
    %vm1261 = vcmp.lt.s32.totalorder %v1240, 3
    %vm1262 = vcmp.lt.s32.totalorder %v1240, 4
    %v1263 = vsel %vm1259, %v1243, %v1246
    %v1264 = vsel %vm1262, %v1252, 2102212464
    %v1265 = vsel %vm1261, %v1249, %v1264
    %v1266 = vsel %vm1260, %v1263, %v1265
    %v1267 = vsel %vm1259, %v1246, %v1249
    %v1268 = vsel %vm1262, %v1255, 920167782
    %v1269 = vsel %vm1261, %v1252, %v1268
    %v1270 = vsel %vm1260, %v1267, %v1269
    %v1271 = vsel %vm1259, %v1249, %v1252
    %v1272 = vsel %vm1262, %v1258, 1326507024
    %v1273 = vsel %vm1261, %v1255, %v1272
    %v1274 = vsel %vm1260, %v1271, %v1273
    %v1275 = vshll.u32 %v1235, 8
    %v1276 = vmul.u32.u64.compose %v1275, %v1274
    %v1277 = vextract.low.u32 %v1276
    %v1278 = vextract.high.u32 %v1276
    %v1279 = vmul.u32.u64.compose %v1275, %v1270
    %v1280 = vextract.low.u32 %v1279
    %v1281 = vextract.high.u32 %v1279
    %v1282 = vmul.u32 %v1275, %v1266
    %v1283 = vadd.s32 %v1278, %v1280
    %vm1284 = vc.u32 %v1278, %v1280
    %v1285 = vadd.s32 %v1281, 1
    %v1286 = vsel %vm1284, %v1285, %v1281
    %v1287 = vadd.s32 %v1282, %v1286
    %v1288 = vadd.s32 %v1287, 536870912
    %v1289 = vshrl.u32 %v1288, 30
    %v1290 = vshll.u32 %v1289, 30
    %v1291 = vsub.s32 %v1287, %v1290
    %vm1292 = vcmp.lt.s32.totalorder %v1291, 0
    %v1293 = vsub.s32 0, %v1291
    %v1294 = vsel %vm1292, %v1293, %v1291
    %v1295 = vclz %v1294
    %v1296 = vsub.s32 %v1295, 2
    %vm1297 = vcmp.gt.s32.totalorder 0, %v1296
    %v1298 = vsel %vm1297, 0, %v1296
    %v1299 = vsub.s32 32, %v1298
    %v1300 = vshll.u32 %v1291, %v1298
    %v1301 = vshrl.u32 %v1283, %v1299
    %v1302 = vor.u32 %v1300, %v1301
    %v1303 = vsub.s32 4294967266, %v1298
    %v1304 = vadd.s32 %v1303, 127
    %v1305 = vshll.u32 %v1304, 23
    %v1306 = vor.u32 4788187, %v1305
    %v1307 = vand.u32 2147483647, %v1306
    %v1309 = vcvt.s32.f32 %v1302
    %v1310 = vmul.f32 %v1309, %v1307
    %v1311 = vxor.u32 %v1310, 2147483648
    %v1312 = vsel %vm1229, %v1311, %v1310
    %v1313 = vsub.s32 4, %v1289
    %v1314 = vsel %vm1229, %v1313, %v1289
    %v1315 = vsel %vm1228, %v268, %v1312
    %v1316 = vsel %vm1228, 0, %v1314
    %v1317 = vcosq.f32.pop %v1315
    %v1318 = vsinq.f32.pop %v1315
    %vm1319 = vweird.f32 %v268
    %v1320 = vadd.s32 %v1316, 3
    %v1321 = vand.u32 %v1320, 3
    %vm1322 = vcmp.lt.s32.totalorder %v1321, 2
    %vm1323 = vcmp.eq.s32.totalorder %v1321, 0
    %v1324 = vxor.u32 %v1318, 2147483648
    %v1325 = vsel %vm1323, %v1317, %v1324
    %vm1326 = vcmp.eq.s32.totalorder %v1321, 2
    %v1327 = vxor.u32 %v1317, 2147483648
    %v1328 = vsel %vm1326, %v1327, %v1318
    %v1329 = vsel %vm1322, %v1325, %v1328
    %v1330 = vsel %vm1319, nan, %v1329
    %v1331 = vand.u32 2147483647, %v269
    %vm1332 = vcmp.le.f32.partialorder %v1331, 0.7853982
    %vm1333 = vcmp.lt.s32.totalorder %v269, 0
    %v1334 = vand.u32 %v269, 2139095040
    %v1335 = vshrl.u32 %v1334, 23
    %v1336 = vsub.s32 %v1335, 127
    %v1337 = vand.u32 2147483647, %v269
    %v1338 = vand.u32 %v1337, 8388607
    %v1339 = vor.u32 %v1338, 8388608
    %v1340 = vsub.s32 0, %v1339
    %v1341 = vadd.s32 %v1336, 1
    %vm1342 = vcmp.gt.s32.totalorder %v1341, 0
    %v1343 = vsel %vm1342, %v1341, 0
    %v1344 = vshrl.u32 %v1343, 5
    %v1345 = vand.u32 %v1343, 31
    %v1346 = vsub.s32 32, %v1345
    %v1347 = vshrl.u32 683565275, %v1346
    %v1348 = vshll.u32 683565275, %v1345
    %v1349 = vshrl.u32 2475754826, %v1346
    %v1350 = vor.u32 %v1348, %v1349
    %v1351 = vshll.u32 2475754826, %v1345
    %v1352 = vshrl.u32 2131351028, %v1346
    %v1353 = vor.u32 %v1351, %v1352
    %v1354 = vshll.u32 2131351028, %v1345
    %v1355 = vshrl.u32 2102212464, %v1346
    %v1356 = vor.u32 %v1354, %v1355
    %v1357 = vshll.u32 2102212464, %v1345
    %v1358 = vshrl.u32 920167782, %v1346
    %v1359 = vor.u32 %v1357, %v1358
    %v1360 = vshll.u32 920167782, %v1345
    %v1361 = vshrl.u32 1326507024, %v1346
    %v1362 = vor.u32 %v1360, %v1361
    %vm1363 = vcmp.lt.s32.totalorder %v1344, 1
    %vm1364 = vcmp.lt.s32.totalorder %v1344, 2
    %vm1365 = vcmp.lt.s32.totalorder %v1344, 3
    %vm1366 = vcmp.lt.s32.totalorder %v1344, 4
    %v1367 = vsel %vm1363, %v1347, %v1350
    %v1368 = vsel %vm1366, %v1356, 2102212464
    %v1369 = vsel %vm1365, %v1353, %v1368
    %v1370 = vsel %vm1364, %v1367, %v1369
    %v1371 = vsel %vm1363, %v1350, %v1353
    %v1372 = vsel %vm1366, %v1359, 920167782
    %v1373 = vsel %vm1365, %v1356, %v1372
    %v1374 = vsel %vm1364, %v1371, %v1373
    %v1375 = vsel %vm1363, %v1353, %v1356
    %v1376 = vsel %vm1366, %v1362, 1326507024
    %v1377 = vsel %vm1365, %v1359, %v1376
    %v1378 = vsel %vm1364, %v1375, %v1377
    %v1379 = vshll.u32 %v1339, 8
    %v1380 = vmul.u32.u64.compose %v1379, %v1378
    %v1381 = vextract.low.u32 %v1380
    %v1382 = vextract.high.u32 %v1380
    %v1383 = vmul.u32.u64.compose %v1379, %v1374
    %v1384 = vextract.low.u32 %v1383
    %v1385 = vextract.high.u32 %v1383
    %v1386 = vmul.u32 %v1379, %v1370
    %v1387 = vadd.s32 %v1382, %v1384
    %vm1388 = vc.u32 %v1382, %v1384
    %v1389 = vadd.s32 %v1385, 1
    %v1390 = vsel %vm1388, %v1389, %v1385
    %v1391 = vadd.s32 %v1386, %v1390
    %v1392 = vadd.s32 %v1391, 536870912
    %v1393 = vshrl.u32 %v1392, 30
    %v1394 = vshll.u32 %v1393, 30
    %v1395 = vsub.s32 %v1391, %v1394
    %vm1396 = vcmp.lt.s32.totalorder %v1395, 0
    %v1397 = vsub.s32 0, %v1395
    %v1398 = vsel %vm1396, %v1397, %v1395
    %v1399 = vclz %v1398
    %v1400 = vsub.s32 %v1399, 2
    %vm1401 = vcmp.gt.s32.totalorder 0, %v1400
    %v1402 = vsel %vm1401, 0, %v1400
    %v1403 = vsub.s32 32, %v1402
    %v1404 = vshll.u32 %v1395, %v1402
    %v1405 = vshrl.u32 %v1387, %v1403
    %v1406 = vor.u32 %v1404, %v1405
    %v1407 = vsub.s32 4294967266, %v1402
    %v1408 = vadd.s32 %v1407, 127
    %v1409 = vshll.u32 %v1408, 23
    %v1410 = vor.u32 4788187, %v1409
    %v1411 = vand.u32 2147483647, %v1410
    %v1413 = vcvt.s32.f32 %v1406
    %v1414 = vmul.f32 %v1413, %v1411
    %v1415 = vxor.u32 %v1414, 2147483648
    %v1416 = vsel %vm1333, %v1415, %v1414
    %v1417 = vsub.s32 4, %v1393
    %v1418 = vsel %vm1333, %v1417, %v1393
    %v1419 = vsel %vm1332, %v269, %v1416
    %v1420 = vsel %vm1332, 0, %v1418
    %v1421 = vcosq.f32.pop %v1419
    %v1422 = vsinq.f32.pop %v1419
    %vm1423 = vweird.f32 %v269
    %v1424 = vadd.s32 %v1420, 3
    %v1425 = vand.u32 %v1424, 3
    %vm1426 = vcmp.lt.s32.totalorder %v1425, 2
    %vm1427 = vcmp.eq.s32.totalorder %v1425, 0
    %v1428 = vxor.u32 %v1422, 2147483648
    %v1429 = vsel %vm1427, %v1421, %v1428
    %vm1430 = vcmp.eq.s32.totalorder %v1425, 2
    %v1431 = vxor.u32 %v1421, 2147483648
    %v1432 = vsel %vm1430, %v1431, %v1422
    %v1433 = vsel %vm1426, %v1429, %v1432
    %v1434 = vsel %vm1423, nan, %v1433
    %v1435 = vand.u32 2147483647, %v270
    %vm1436 = vcmp.le.f32.partialorder %v1435, 0.7853982
    %vm1437 = vcmp.lt.s32.totalorder %v270, 0
    %v1438 = vand.u32 %v270, 2139095040
    %v1439 = vshrl.u32 %v1438, 23
    %v1440 = vsub.s32 %v1439, 127
    %v1441 = vand.u32 2147483647, %v270
    %v1442 = vand.u32 %v1441, 8388607
    %v1443 = vor.u32 %v1442, 8388608
    %v1444 = vsub.s32 0, %v1443
    %v1445 = vadd.s32 %v1440, 1
    %vm1446 = vcmp.gt.s32.totalorder %v1445, 0
    %v1447 = vsel %vm1446, %v1445, 0
    %v1448 = vshrl.u32 %v1447, 5
    %v1449 = vand.u32 %v1447, 31
    %v1450 = vsub.s32 32, %v1449
    %v1451 = vshrl.u32 683565275, %v1450
    %v1452 = vshll.u32 683565275, %v1449
    %v1453 = vshrl.u32 2475754826, %v1450
    %v1454 = vor.u32 %v1452, %v1453
    %v1455 = vshll.u32 2475754826, %v1449
    %v1456 = vshrl.u32 2131351028, %v1450
    %v1457 = vor.u32 %v1455, %v1456
    %v1458 = vshll.u32 2131351028, %v1449
    %v1459 = vshrl.u32 2102212464, %v1450
    %v1460 = vor.u32 %v1458, %v1459
    %v1461 = vshll.u32 2102212464, %v1449
    %v1462 = vshrl.u32 920167782, %v1450
    %v1463 = vor.u32 %v1461, %v1462
    %v1464 = vshll.u32 920167782, %v1449
    %v1465 = vshrl.u32 1326507024, %v1450
    %v1466 = vor.u32 %v1464, %v1465
    %vm1467 = vcmp.lt.s32.totalorder %v1448, 1
    %vm1468 = vcmp.lt.s32.totalorder %v1448, 2
    %vm1469 = vcmp.lt.s32.totalorder %v1448, 3
    %vm1470 = vcmp.lt.s32.totalorder %v1448, 4
    %v1471 = vsel %vm1467, %v1451, %v1454
    %v1472 = vsel %vm1470, %v1460, 2102212464
    %v1473 = vsel %vm1469, %v1457, %v1472
    %v1474 = vsel %vm1468, %v1471, %v1473
    %v1475 = vsel %vm1467, %v1454, %v1457
    %v1476 = vsel %vm1470, %v1463, 920167782
    %v1477 = vsel %vm1469, %v1460, %v1476
    %v1478 = vsel %vm1468, %v1475, %v1477
    %v1479 = vsel %vm1467, %v1457, %v1460
    %v1480 = vsel %vm1470, %v1466, 1326507024
    %v1481 = vsel %vm1469, %v1463, %v1480
    %v1482 = vsel %vm1468, %v1479, %v1481
    %v1483 = vshll.u32 %v1443, 8
    %v1484 = vmul.u32.u64.compose %v1483, %v1482
    %v1485 = vextract.low.u32 %v1484
    %v1486 = vextract.high.u32 %v1484
    %v1487 = vmul.u32.u64.compose %v1483, %v1478
    %v1488 = vextract.low.u32 %v1487
    %v1489 = vextract.high.u32 %v1487
    %v1490 = vmul.u32 %v1483, %v1474
    %v1491 = vadd.s32 %v1486, %v1488
    %vm1492 = vc.u32 %v1486, %v1488
    %v1493 = vadd.s32 %v1489, 1
    %v1494 = vsel %vm1492, %v1493, %v1489
    %v1495 = vadd.s32 %v1490, %v1494
    %v1496 = vadd.s32 %v1495, 536870912
    %v1497 = vshrl.u32 %v1496, 30
    %v1498 = vshll.u32 %v1497, 30
    %v1499 = vsub.s32 %v1495, %v1498
    %vm1500 = vcmp.lt.s32.totalorder %v1499, 0
    %v1501 = vsub.s32 0, %v1499
    %v1502 = vsel %vm1500, %v1501, %v1499
    %v1503 = vclz %v1502
    %v1504 = vsub.s32 %v1503, 2
    %vm1505 = vcmp.gt.s32.totalorder 0, %v1504
    %v1506 = vsel %vm1505, 0, %v1504
    %v1507 = vsub.s32 32, %v1506
    %v1508 = vshll.u32 %v1499, %v1506
    %v1509 = vshrl.u32 %v1491, %v1507
    %v1510 = vor.u32 %v1508, %v1509
    %v1511 = vsub.s32 4294967266, %v1506
    %v1512 = vadd.s32 %v1511, 127
    %v1513 = vshll.u32 %v1512, 23
    %v1514 = vor.u32 4788187, %v1513
    %v1515 = vand.u32 2147483647, %v1514
    %v1517 = vcvt.s32.f32 %v1510
    %v1518 = vmul.f32 %v1517, %v1515
    %v1519 = vxor.u32 %v1518, 2147483648
    %v1520 = vsel %vm1437, %v1519, %v1518
    %v1521 = vsub.s32 4, %v1497
    %v1522 = vsel %vm1437, %v1521, %v1497
    %v1523 = vsel %vm1436, %v270, %v1520
    %v1524 = vsel %vm1436, 0, %v1522
    %v1525 = vcosq.f32.pop %v1523
    %v1526 = vsinq.f32.pop %v1523
    %vm1527 = vweird.f32 %v270
    %v1528 = vadd.s32 %v1524, 3
    %v1529 = vand.u32 %v1528, 3
    %vm1530 = vcmp.lt.s32.totalorder %v1529, 2
    %vm1531 = vcmp.eq.s32.totalorder %v1529, 0
    %v1532 = vxor.u32 %v1526, 2147483648
    %v1533 = vsel %vm1531, %v1525, %v1532
    %vm1534 = vcmp.eq.s32.totalorder %v1529, 2
    %v1535 = vxor.u32 %v1525, 2147483648
    %v1536 = vsel %vm1534, %v1535, %v1526
    %v1537 = vsel %vm1530, %v1533, %v1536
    %v1538 = vsel %vm1527, nan, %v1537
    %v1539 = vand.u32 2147483647, %v271
    %vm1540 = vcmp.le.f32.partialorder %v1539, 0.7853982
    %vm1541 = vcmp.lt.s32.totalorder %v271, 0
    %v1542 = vand.u32 %v271, 2139095040
    %v1543 = vshrl.u32 %v1542, 23
    %v1544 = vsub.s32 %v1543, 127
    %v1545 = vand.u32 2147483647, %v271
    %v1546 = vand.u32 %v1545, 8388607
    %v1547 = vor.u32 %v1546, 8388608
    %v1548 = vsub.s32 0, %v1547
    %v1549 = vadd.s32 %v1544, 1
    %vm1550 = vcmp.gt.s32.totalorder %v1549, 0
    %v1551 = vsel %vm1550, %v1549, 0
    %v1552 = vshrl.u32 %v1551, 5
    %v1553 = vand.u32 %v1551, 31
    %v1554 = vsub.s32 32, %v1553
    %v1555 = vshrl.u32 683565275, %v1554
    %v1556 = vshll.u32 683565275, %v1553
    %v1557 = vshrl.u32 2475754826, %v1554
    %v1558 = vor.u32 %v1556, %v1557
    %v1559 = vshll.u32 2475754826, %v1553
    %v1560 = vshrl.u32 2131351028, %v1554
    %v1561 = vor.u32 %v1559, %v1560
    %v1562 = vshll.u32 2131351028, %v1553
    %v1563 = vshrl.u32 2102212464, %v1554
    %v1564 = vor.u32 %v1562, %v1563
    %v1565 = vshll.u32 2102212464, %v1553
    %v1566 = vshrl.u32 920167782, %v1554
    %v1567 = vor.u32 %v1565, %v1566
    %v1568 = vshll.u32 920167782, %v1553
    %v1569 = vshrl.u32 1326507024, %v1554
    %v1570 = vor.u32 %v1568, %v1569
    %vm1571 = vcmp.lt.s32.totalorder %v1552, 1
    %vm1572 = vcmp.lt.s32.totalorder %v1552, 2
    %vm1573 = vcmp.lt.s32.totalorder %v1552, 3
    %vm1574 = vcmp.lt.s32.totalorder %v1552, 4
    %v1575 = vsel %vm1571, %v1555, %v1558
    %v1576 = vsel %vm1574, %v1564, 2102212464
    %v1577 = vsel %vm1573, %v1561, %v1576
    %v1578 = vsel %vm1572, %v1575, %v1577
    %v1579 = vsel %vm1571, %v1558, %v1561
    %v1580 = vsel %vm1574, %v1567, 920167782
    %v1581 = vsel %vm1573, %v1564, %v1580
    %v1582 = vsel %vm1572, %v1579, %v1581
    %v1583 = vsel %vm1571, %v1561, %v1564
    %v1584 = vsel %vm1574, %v1570, 1326507024
    %v1585 = vsel %vm1573, %v1567, %v1584
    %v1586 = vsel %vm1572, %v1583, %v1585
    %v1587 = vshll.u32 %v1547, 8
    %v1588 = vmul.u32.u64.compose %v1587, %v1586
    %v1589 = vextract.low.u32 %v1588
    %v1590 = vextract.high.u32 %v1588
    %v1591 = vmul.u32.u64.compose %v1587, %v1582
    %v1592 = vextract.low.u32 %v1591
    %v1593 = vextract.high.u32 %v1591
    %v1594 = vmul.u32 %v1587, %v1578
    %v1595 = vadd.s32 %v1590, %v1592
    %vm1596 = vc.u32 %v1590, %v1592
    %v1597 = vadd.s32 %v1593, 1
    %v1598 = vsel %vm1596, %v1597, %v1593
    %v1599 = vadd.s32 %v1594, %v1598
    %v1600 = vadd.s32 %v1599, 536870912
    %v1601 = vshrl.u32 %v1600, 30
    %v1602 = vshll.u32 %v1601, 30
    %v1603 = vsub.s32 %v1599, %v1602
    %vm1604 = vcmp.lt.s32.totalorder %v1603, 0
    %v1605 = vsub.s32 0, %v1603
    %v1606 = vsel %vm1604, %v1605, %v1603
    %v1607 = vclz %v1606
    %v1608 = vsub.s32 %v1607, 2
    %vm1609 = vcmp.gt.s32.totalorder 0, %v1608
    %v1610 = vsel %vm1609, 0, %v1608
    %v1611 = vsub.s32 32, %v1610
    %v1612 = vshll.u32 %v1603, %v1610
    %v1613 = vshrl.u32 %v1595, %v1611
    %v1614 = vor.u32 %v1612, %v1613
    %v1615 = vsub.s32 4294967266, %v1610
    %v1616 = vadd.s32 %v1615, 127
    %v1617 = vshll.u32 %v1616, 23
    %v1618 = vor.u32 4788187, %v1617
    %v1619 = vand.u32 2147483647, %v1618
    %v1621 = vcvt.s32.f32 %v1614
    %v1622 = vmul.f32 %v1621, %v1619
    %v1623 = vxor.u32 %v1622, 2147483648
    %v1624 = vsel %vm1541, %v1623, %v1622
    %v1625 = vsub.s32 4, %v1601
    %v1626 = vsel %vm1541, %v1625, %v1601
    %v1627 = vsel %vm1540, %v271, %v1624
    %v1628 = vsel %vm1540, 0, %v1626
    %v1629 = vcosq.f32.pop %v1627
    %v1630 = vsinq.f32.pop %v1627
    %vm1631 = vweird.f32 %v271
    %v1632 = vadd.s32 %v1628, 3
    %v1633 = vand.u32 %v1632, 3
    %vm1634 = vcmp.lt.s32.totalorder %v1633, 2
    %vm1635 = vcmp.eq.s32.totalorder %v1633, 0
    %v1636 = vxor.u32 %v1630, 2147483648
    %v1637 = vsel %vm1635, %v1629, %v1636
    %vm1638 = vcmp.eq.s32.totalorder %v1633, 2
    %v1639 = vxor.u32 %v1629, 2147483648
    %v1640 = vsel %vm1638, %v1639, %v1630
    %v1641 = vsel %vm1634, %v1637, %v1640
    %v1642 = vsel %vm1631, nan, %v1641
    %v1643 = vand.u32 2147483647, %v272
    %vm1644 = vcmp.le.f32.partialorder %v1643, 0.7853982
    %vm1645 = vcmp.lt.s32.totalorder %v272, 0
    %v1646 = vand.u32 %v272, 2139095040
    %v1647 = vshrl.u32 %v1646, 23
    %v1648 = vsub.s32 %v1647, 127
    %v1649 = vand.u32 2147483647, %v272
    %v1650 = vand.u32 %v1649, 8388607
    %v1651 = vor.u32 %v1650, 8388608
    %v1652 = vsub.s32 0, %v1651
    %v1653 = vadd.s32 %v1648, 1
    %vm1654 = vcmp.gt.s32.totalorder %v1653, 0
    %v1655 = vsel %vm1654, %v1653, 0
    %v1656 = vshrl.u32 %v1655, 5
    %v1657 = vand.u32 %v1655, 31
    %v1658 = vsub.s32 32, %v1657
    %v1659 = vshrl.u32 683565275, %v1658
    %v1660 = vshll.u32 683565275, %v1657
    %v1661 = vshrl.u32 2475754826, %v1658
    %v1662 = vor.u32 %v1660, %v1661
    %v1663 = vshll.u32 2475754826, %v1657
    %v1664 = vshrl.u32 2131351028, %v1658
    %v1665 = vor.u32 %v1663, %v1664
    %v1666 = vshll.u32 2131351028, %v1657
    %v1667 = vshrl.u32 2102212464, %v1658
    %v1668 = vor.u32 %v1666, %v1667
    %v1669 = vshll.u32 2102212464, %v1657
    %v1670 = vshrl.u32 920167782, %v1658
    %v1671 = vor.u32 %v1669, %v1670
    %v1672 = vshll.u32 920167782, %v1657
    %v1673 = vshrl.u32 1326507024, %v1658
    %v1674 = vor.u32 %v1672, %v1673
    %vm1675 = vcmp.lt.s32.totalorder %v1656, 1
    %vm1676 = vcmp.lt.s32.totalorder %v1656, 2
    %vm1677 = vcmp.lt.s32.totalorder %v1656, 3
    %vm1678 = vcmp.lt.s32.totalorder %v1656, 4
    %v1679 = vsel %vm1675, %v1659, %v1662
    %v1680 = vsel %vm1678, %v1668, 2102212464
    %v1681 = vsel %vm1677, %v1665, %v1680
    %v1682 = vsel %vm1676, %v1679, %v1681
    %v1683 = vsel %vm1675, %v1662, %v1665
    %v1684 = vsel %vm1678, %v1671, 920167782
    %v1685 = vsel %vm1677, %v1668, %v1684
    %v1686 = vsel %vm1676, %v1683, %v1685
    %v1687 = vsel %vm1675, %v1665, %v1668
    %v1688 = vsel %vm1678, %v1674, 1326507024
    %v1689 = vsel %vm1677, %v1671, %v1688
    %v1690 = vsel %vm1676, %v1687, %v1689
    %v1691 = vshll.u32 %v1651, 8
    %v1692 = vmul.u32.u64.compose %v1691, %v1690
    %v1693 = vextract.low.u32 %v1692
    %v1694 = vextract.high.u32 %v1692
    %v1695 = vmul.u32.u64.compose %v1691, %v1686
    %v1696 = vextract.low.u32 %v1695
    %v1697 = vextract.high.u32 %v1695
    %v1698 = vmul.u32 %v1691, %v1682
    %v1699 = vadd.s32 %v1694, %v1696
    %vm1700 = vc.u32 %v1694, %v1696
    %v1701 = vadd.s32 %v1697, 1
    %v1702 = vsel %vm1700, %v1701, %v1697
    %v1703 = vadd.s32 %v1698, %v1702
    %v1704 = vadd.s32 %v1703, 536870912
    %v1705 = vshrl.u32 %v1704, 30
    %v1706 = vshll.u32 %v1705, 30
    %v1707 = vsub.s32 %v1703, %v1706
    %vm1708 = vcmp.lt.s32.totalorder %v1707, 0
    %v1709 = vsub.s32 0, %v1707
    %v1710 = vsel %vm1708, %v1709, %v1707
    %v1711 = vclz %v1710
    %v1712 = vsub.s32 %v1711, 2
    %vm1713 = vcmp.gt.s32.totalorder 0, %v1712
    %v1714 = vsel %vm1713, 0, %v1712
    %v1715 = vsub.s32 32, %v1714
    %v1716 = vshll.u32 %v1707, %v1714
    %v1717 = vshrl.u32 %v1699, %v1715
    %v1718 = vor.u32 %v1716, %v1717
    %v1719 = vsub.s32 4294967266, %v1714
    %v1720 = vadd.s32 %v1719, 127
    %v1721 = vshll.u32 %v1720, 23
    %v1722 = vor.u32 4788187, %v1721
    %v1723 = vand.u32 2147483647, %v1722
    %v1725 = vcvt.s32.f32 %v1718
    %v1726 = vmul.f32 %v1725, %v1723
    %v1727 = vxor.u32 %v1726, 2147483648
    %v1728 = vsel %vm1645, %v1727, %v1726
    %v1729 = vsub.s32 4, %v1705
    %v1730 = vsel %vm1645, %v1729, %v1705
    %v1731 = vsel %vm1644, %v272, %v1728
    %v1732 = vsel %vm1644, 0, %v1730
    %v1733 = vcosq.f32.pop %v1731
    %v1734 = vsinq.f32.pop %v1731
    %vm1735 = vweird.f32 %v272
    %v1736 = vadd.s32 %v1732, 3
    %v1737 = vand.u32 %v1736, 3
    %vm1738 = vcmp.lt.s32.totalorder %v1737, 2
    %vm1739 = vcmp.eq.s32.totalorder %v1737, 0
    %v1740 = vxor.u32 %v1734, 2147483648
    %v1741 = vsel %vm1739, %v1733, %v1740
    %vm1742 = vcmp.eq.s32.totalorder %v1737, 2
    %v1743 = vxor.u32 %v1733, 2147483648
    %v1744 = vsel %vm1742, %v1743, %v1734
    %v1745 = vsel %vm1738, %v1741, %v1744
    %v1746 = vsel %vm1735, nan, %v1745
    %v1747 = vand.u32 2147483647, %v273
    %vm1748 = vcmp.le.f32.partialorder %v1747, 0.7853982
    %vm1749 = vcmp.lt.s32.totalorder %v273, 0
    %v1750 = vand.u32 %v273, 2139095040
    %v1751 = vshrl.u32 %v1750, 23
    %v1752 = vsub.s32 %v1751, 127
    %v1753 = vand.u32 2147483647, %v273
    %v1754 = vand.u32 %v1753, 8388607
    %v1755 = vor.u32 %v1754, 8388608
    %v1756 = vsub.s32 0, %v1755
    %v1757 = vadd.s32 %v1752, 1
    %vm1758 = vcmp.gt.s32.totalorder %v1757, 0
    %v1759 = vsel %vm1758, %v1757, 0
    %v1760 = vshrl.u32 %v1759, 5
    %v1761 = vand.u32 %v1759, 31
    %v1762 = vsub.s32 32, %v1761
    %v1763 = vshrl.u32 683565275, %v1762
    %v1764 = vshll.u32 683565275, %v1761
    %v1765 = vshrl.u32 2475754826, %v1762
    %v1766 = vor.u32 %v1764, %v1765
    %v1767 = vshll.u32 2475754826, %v1761
    %v1768 = vshrl.u32 2131351028, %v1762
    %v1769 = vor.u32 %v1767, %v1768
    %v1770 = vshll.u32 2131351028, %v1761
    %v1771 = vshrl.u32 2102212464, %v1762
    %v1772 = vor.u32 %v1770, %v1771
    %v1773 = vshll.u32 2102212464, %v1761
    %v1774 = vshrl.u32 920167782, %v1762
    %v1775 = vor.u32 %v1773, %v1774
    %v1776 = vshll.u32 920167782, %v1761
    %v1777 = vshrl.u32 1326507024, %v1762
    %v1778 = vor.u32 %v1776, %v1777
    %vm1779 = vcmp.lt.s32.totalorder %v1760, 1
    %vm1780 = vcmp.lt.s32.totalorder %v1760, 2
    %vm1781 = vcmp.lt.s32.totalorder %v1760, 3
    %vm1782 = vcmp.lt.s32.totalorder %v1760, 4
    %v1783 = vsel %vm1779, %v1763, %v1766
    %v1784 = vsel %vm1782, %v1772, 2102212464
    %v1785 = vsel %vm1781, %v1769, %v1784
    %v1786 = vsel %vm1780, %v1783, %v1785
    %v1787 = vsel %vm1779, %v1766, %v1769
    %v1788 = vsel %vm1782, %v1775, 920167782
    %v1789 = vsel %vm1781, %v1772, %v1788
    %v1790 = vsel %vm1780, %v1787, %v1789
    %v1791 = vsel %vm1779, %v1769, %v1772
    %v1792 = vsel %vm1782, %v1778, 1326507024
    %v1793 = vsel %vm1781, %v1775, %v1792
    %v1794 = vsel %vm1780, %v1791, %v1793
    %v1795 = vshll.u32 %v1755, 8
    %v1796 = vmul.u32.u64.compose %v1795, %v1794
    %v1797 = vextract.low.u32 %v1796
    %v1798 = vextract.high.u32 %v1796
    %v1799 = vmul.u32.u64.compose %v1795, %v1790
    %v1800 = vextract.low.u32 %v1799
    %v1801 = vextract.high.u32 %v1799
    %v1802 = vmul.u32 %v1795, %v1786
    %v1803 = vadd.s32 %v1798, %v1800
    %vm1804 = vc.u32 %v1798, %v1800
    %v1805 = vadd.s32 %v1801, 1
    %v1806 = vsel %vm1804, %v1805, %v1801
    %v1807 = vadd.s32 %v1802, %v1806
    %v1808 = vadd.s32 %v1807, 536870912
    %v1809 = vshrl.u32 %v1808, 30
    %v1810 = vshll.u32 %v1809, 30
    %v1811 = vsub.s32 %v1807, %v1810
    %vm1812 = vcmp.lt.s32.totalorder %v1811, 0
    %v1813 = vsub.s32 0, %v1811
    %v1814 = vsel %vm1812, %v1813, %v1811
    %v1815 = vclz %v1814
    %v1816 = vsub.s32 %v1815, 2
    %vm1817 = vcmp.gt.s32.totalorder 0, %v1816
    %v1818 = vsel %vm1817, 0, %v1816
    %v1819 = vsub.s32 32, %v1818
    %v1820 = vshll.u32 %v1811, %v1818
    %v1821 = vshrl.u32 %v1803, %v1819
    %v1822 = vor.u32 %v1820, %v1821
    %v1823 = vsub.s32 4294967266, %v1818
    %v1824 = vadd.s32 %v1823, 127
    %v1825 = vshll.u32 %v1824, 23
    %v1826 = vor.u32 4788187, %v1825
    %v1827 = vand.u32 2147483647, %v1826
    %v1829 = vcvt.s32.f32 %v1822
    %v1830 = vmul.f32 %v1829, %v1827
    %v1831 = vxor.u32 %v1830, 2147483648
    %v1832 = vsel %vm1749, %v1831, %v1830
    %v1833 = vsub.s32 4, %v1809
    %v1834 = vsel %vm1749, %v1833, %v1809
    %v1835 = vsel %vm1748, %v273, %v1832
    %v1836 = vsel %vm1748, 0, %v1834
    %v1837 = vcosq.f32.pop %v1835
    %v1838 = vsinq.f32.pop %v1835
    %vm1839 = vweird.f32 %v273
    %v1840 = vadd.s32 %v1836, 3
    %v1841 = vand.u32 %v1840, 3
    %vm1842 = vcmp.lt.s32.totalorder %v1841, 2
    %vm1843 = vcmp.eq.s32.totalorder %v1841, 0
    %v1844 = vxor.u32 %v1838, 2147483648
    %v1845 = vsel %vm1843, %v1837, %v1844
    %vm1846 = vcmp.eq.s32.totalorder %v1841, 2
    %v1847 = vxor.u32 %v1837, 2147483648
    %v1848 = vsel %vm1846, %v1847, %v1838
    %v1849 = vsel %vm1842, %v1845, %v1848
    %v1850 = vsel %vm1839, nan, %v1849
    %v1851 = vand.u32 2147483647, %v274
    %vm1852 = vcmp.le.f32.partialorder %v1851, 0.7853982
    %vm1853 = vcmp.lt.s32.totalorder %v274, 0
    %v1854 = vand.u32 %v274, 2139095040
    %v1855 = vshrl.u32 %v1854, 23
    %v1856 = vsub.s32 %v1855, 127
    %v1857 = vand.u32 2147483647, %v274
    %v1858 = vand.u32 %v1857, 8388607
    %v1859 = vor.u32 %v1858, 8388608
    %v1860 = vsub.s32 0, %v1859
    %v1861 = vadd.s32 %v1856, 1
    %vm1862 = vcmp.gt.s32.totalorder %v1861, 0
    %v1863 = vsel %vm1862, %v1861, 0
    %v1864 = vshrl.u32 %v1863, 5
    %v1865 = vand.u32 %v1863, 31
    %v1866 = vsub.s32 32, %v1865
    %v1867 = vshrl.u32 683565275, %v1866
    %v1868 = vshll.u32 683565275, %v1865
    %v1869 = vshrl.u32 2475754826, %v1866
    %v1870 = vor.u32 %v1868, %v1869
    %v1871 = vshll.u32 2475754826, %v1865
    %v1872 = vshrl.u32 2131351028, %v1866
    %v1873 = vor.u32 %v1871, %v1872
    %v1874 = vshll.u32 2131351028, %v1865
    %v1875 = vshrl.u32 2102212464, %v1866
    %v1876 = vor.u32 %v1874, %v1875
    %v1877 = vshll.u32 2102212464, %v1865
    %v1878 = vshrl.u32 920167782, %v1866
    %v1879 = vor.u32 %v1877, %v1878
    %v1880 = vshll.u32 920167782, %v1865
    %v1881 = vshrl.u32 1326507024, %v1866
    %v1882 = vor.u32 %v1880, %v1881
    %vm1883 = vcmp.lt.s32.totalorder %v1864, 1
    %vm1884 = vcmp.lt.s32.totalorder %v1864, 2
    %vm1885 = vcmp.lt.s32.totalorder %v1864, 3
    %vm1886 = vcmp.lt.s32.totalorder %v1864, 4
    %v1887 = vsel %vm1883, %v1867, %v1870
    %v1888 = vsel %vm1886, %v1876, 2102212464
    %v1889 = vsel %vm1885, %v1873, %v1888
    %v1890 = vsel %vm1884, %v1887, %v1889
    %v1891 = vsel %vm1883, %v1870, %v1873
    %v1892 = vsel %vm1886, %v1879, 920167782
    %v1893 = vsel %vm1885, %v1876, %v1892
    %v1894 = vsel %vm1884, %v1891, %v1893
    %v1895 = vsel %vm1883, %v1873, %v1876
    %v1896 = vsel %vm1886, %v1882, 1326507024
    %v1897 = vsel %vm1885, %v1879, %v1896
    %v1898 = vsel %vm1884, %v1895, %v1897
    %v1899 = vshll.u32 %v1859, 8
    %v1900 = vmul.u32.u64.compose %v1899, %v1898
    %v1901 = vextract.low.u32 %v1900
    %v1902 = vextract.high.u32 %v1900
    %v1903 = vmul.u32.u64.compose %v1899, %v1894
    %v1904 = vextract.low.u32 %v1903
    %v1905 = vextract.high.u32 %v1903
    %v1906 = vmul.u32 %v1899, %v1890
    %v1907 = vadd.s32 %v1902, %v1904
    %vm1908 = vc.u32 %v1902, %v1904
    %v1909 = vadd.s32 %v1905, 1
    %v1910 = vsel %vm1908, %v1909, %v1905
    %v1911 = vadd.s32 %v1906, %v1910
    %v1912 = vadd.s32 %v1911, 536870912
    %v1913 = vshrl.u32 %v1912, 30
    %v1914 = vshll.u32 %v1913, 30
    %v1915 = vsub.s32 %v1911, %v1914
    %vm1916 = vcmp.lt.s32.totalorder %v1915, 0
    %v1917 = vsub.s32 0, %v1915
    %v1918 = vsel %vm1916, %v1917, %v1915
    %v1919 = vclz %v1918
    %v1920 = vsub.s32 %v1919, 2
    %vm1921 = vcmp.gt.s32.totalorder 0, %v1920
    %v1922 = vsel %vm1921, 0, %v1920
    %v1923 = vsub.s32 32, %v1922
    %v1924 = vshll.u32 %v1915, %v1922
    %v1925 = vshrl.u32 %v1907, %v1923
    %v1926 = vor.u32 %v1924, %v1925
    %v1927 = vsub.s32 4294967266, %v1922
    %v1928 = vadd.s32 %v1927, 127
    %v1929 = vshll.u32 %v1928, 23
    %v1930 = vor.u32 4788187, %v1929
    %v1931 = vand.u32 2147483647, %v1930
    %v1933 = vcvt.s32.f32 %v1926
    %v1934 = vmul.f32 %v1933, %v1931
    %v1935 = vxor.u32 %v1934, 2147483648
    %v1936 = vsel %vm1853, %v1935, %v1934
    %v1937 = vsub.s32 4, %v1913
    %v1938 = vsel %vm1853, %v1937, %v1913
    %v1939 = vsel %vm1852, %v274, %v1936
    %v1940 = vsel %vm1852, 0, %v1938
    %v1941 = vcosq.f32.pop %v1939
    %v1942 = vsinq.f32.pop %v1939
    %vm1943 = vweird.f32 %v274
    %v1944 = vadd.s32 %v1940, 3
    %v1945 = vand.u32 %v1944, 3
    %vm1946 = vcmp.lt.s32.totalorder %v1945, 2
    %vm1947 = vcmp.eq.s32.totalorder %v1945, 0
    %v1948 = vxor.u32 %v1942, 2147483648
    %v1949 = vsel %vm1947, %v1941, %v1948
    %vm1950 = vcmp.eq.s32.totalorder %v1945, 2
    %v1951 = vxor.u32 %v1941, 2147483648
    %v1952 = vsel %vm1950, %v1951, %v1942
    %v1953 = vsel %vm1946, %v1949, %v1952
    %v1954 = vsel %vm1943, nan, %v1953
    %v1955 = vand.u32 2147483647, %v275
    %vm1956 = vcmp.le.f32.partialorder %v1955, 0.7853982
    %vm1957 = vcmp.lt.s32.totalorder %v275, 0
    %v1958 = vand.u32 %v275, 2139095040
    %v1959 = vshrl.u32 %v1958, 23
    %v1960 = vsub.s32 %v1959, 127
    %v1961 = vand.u32 2147483647, %v275
    %v1962 = vand.u32 %v1961, 8388607
    %v1963 = vor.u32 %v1962, 8388608
    %v1964 = vsub.s32 0, %v1963
    %v1965 = vadd.s32 %v1960, 1
    %vm1966 = vcmp.gt.s32.totalorder %v1965, 0
    %v1967 = vsel %vm1966, %v1965, 0
    %v1968 = vshrl.u32 %v1967, 5
    %v1969 = vand.u32 %v1967, 31
    %v1970 = vsub.s32 32, %v1969
    %v1971 = vshrl.u32 683565275, %v1970
    %v1972 = vshll.u32 683565275, %v1969
    %v1973 = vshrl.u32 2475754826, %v1970
    %v1974 = vor.u32 %v1972, %v1973
    %v1975 = vshll.u32 2475754826, %v1969
    %v1976 = vshrl.u32 2131351028, %v1970
    %v1977 = vor.u32 %v1975, %v1976
    %v1978 = vshll.u32 2131351028, %v1969
    %v1979 = vshrl.u32 2102212464, %v1970
    %v1980 = vor.u32 %v1978, %v1979
    %v1981 = vshll.u32 2102212464, %v1969
    %v1982 = vshrl.u32 920167782, %v1970
    %v1983 = vor.u32 %v1981, %v1982
    %v1984 = vshll.u32 920167782, %v1969
    %v1985 = vshrl.u32 1326507024, %v1970
    %v1986 = vor.u32 %v1984, %v1985
    %vm1987 = vcmp.lt.s32.totalorder %v1968, 1
    %vm1988 = vcmp.lt.s32.totalorder %v1968, 2
    %vm1989 = vcmp.lt.s32.totalorder %v1968, 3
    %vm1990 = vcmp.lt.s32.totalorder %v1968, 4
    %v1991 = vsel %vm1987, %v1971, %v1974
    %v1992 = vsel %vm1990, %v1980, 2102212464
    %v1993 = vsel %vm1989, %v1977, %v1992
    %v1994 = vsel %vm1988, %v1991, %v1993
    %v1995 = vsel %vm1987, %v1974, %v1977
    %v1996 = vsel %vm1990, %v1983, 920167782
    %v1997 = vsel %vm1989, %v1980, %v1996
    %v1998 = vsel %vm1988, %v1995, %v1997
    %v1999 = vsel %vm1987, %v1977, %v1980
    %v2000 = vsel %vm1990, %v1986, 1326507024
    %v2001 = vsel %vm1989, %v1983, %v2000
    %v2002 = vsel %vm1988, %v1999, %v2001
    %v2003 = vshll.u32 %v1963, 8
    %v2004 = vmul.u32.u64.compose %v2003, %v2002
    %v2005 = vextract.low.u32 %v2004
    %v2006 = vextract.high.u32 %v2004
    %v2007 = vmul.u32.u64.compose %v2003, %v1998
    %v2008 = vextract.low.u32 %v2007
    %v2009 = vextract.high.u32 %v2007
    %v2010 = vmul.u32 %v2003, %v1994
    %v2011 = vadd.s32 %v2006, %v2008
    %vm2012 = vc.u32 %v2006, %v2008
    %v2013 = vadd.s32 %v2009, 1
    %v2014 = vsel %vm2012, %v2013, %v2009
    %v2015 = vadd.s32 %v2010, %v2014
    %v2016 = vadd.s32 %v2015, 536870912
    %v2017 = vshrl.u32 %v2016, 30
    %v2018 = vshll.u32 %v2017, 30
    %v2019 = vsub.s32 %v2015, %v2018
    %vm2020 = vcmp.lt.s32.totalorder %v2019, 0
    %v2021 = vsub.s32 0, %v2019
    %v2022 = vsel %vm2020, %v2021, %v2019
    %v2023 = vclz %v2022
    %v2024 = vsub.s32 %v2023, 2
    %vm2025 = vcmp.gt.s32.totalorder 0, %v2024
    %v2026 = vsel %vm2025, 0, %v2024
    %v2027 = vsub.s32 32, %v2026
    %v2028 = vshll.u32 %v2019, %v2026
    %v2029 = vshrl.u32 %v2011, %v2027
    %v2030 = vor.u32 %v2028, %v2029
    %v2031 = vsub.s32 4294967266, %v2026
    %v2032 = vadd.s32 %v2031, 127
    %v2033 = vshll.u32 %v2032, 23
    %v2034 = vor.u32 4788187, %v2033
    %v2035 = vand.u32 2147483647, %v2034
    %v2037 = vcvt.s32.f32 %v2030
    %v2038 = vmul.f32 %v2037, %v2035
    %v2039 = vxor.u32 %v2038, 2147483648
    %v2040 = vsel %vm1957, %v2039, %v2038
    %v2041 = vsub.s32 4, %v2017
    %v2042 = vsel %vm1957, %v2041, %v2017
    %v2043 = vsel %vm1956, %v275, %v2040
    %v2044 = vsel %vm1956, 0, %v2042
    %v2045 = vcosq.f32.pop %v2043
    %v2046 = vsinq.f32.pop %v2043
    %vm2047 = vweird.f32 %v275
    %v2048 = vadd.s32 %v2044, 3
    %v2049 = vand.u32 %v2048, 3
    %vm2050 = vcmp.lt.s32.totalorder %v2049, 2
    %vm2051 = vcmp.eq.s32.totalorder %v2049, 0
    %v2052 = vxor.u32 %v2046, 2147483648
    %v2053 = vsel %vm2051, %v2045, %v2052
    %vm2054 = vcmp.eq.s32.totalorder %v2049, 2
    %v2055 = vxor.u32 %v2045, 2147483648
    %v2056 = vsel %vm2054, %v2055, %v2046
    %v2057 = vsel %vm2050, %v2053, %v2056
    %v2058 = vsel %vm2047, nan, %v2057
    %v2059 = vand.u32 2147483647, %v276
    %vm2060 = vcmp.le.f32.partialorder %v2059, 0.7853982
    %vm2061 = vcmp.lt.s32.totalorder %v276, 0
    %v2062 = vand.u32 %v276, 2139095040
    %v2063 = vshrl.u32 %v2062, 23
    %v2064 = vsub.s32 %v2063, 127
    %v2065 = vand.u32 2147483647, %v276
    %v2066 = vand.u32 %v2065, 8388607
    %v2067 = vor.u32 %v2066, 8388608
    %v2068 = vsub.s32 0, %v2067
    %v2069 = vadd.s32 %v2064, 1
    %vm2070 = vcmp.gt.s32.totalorder %v2069, 0
    %v2071 = vsel %vm2070, %v2069, 0
    %v2072 = vshrl.u32 %v2071, 5
    %v2073 = vand.u32 %v2071, 31
    %v2074 = vsub.s32 32, %v2073
    %v2075 = vshrl.u32 683565275, %v2074
    %v2076 = vshll.u32 683565275, %v2073
    %v2077 = vshrl.u32 2475754826, %v2074
    %v2078 = vor.u32 %v2076, %v2077
    %v2079 = vshll.u32 2475754826, %v2073
    %v2080 = vshrl.u32 2131351028, %v2074
    %v2081 = vor.u32 %v2079, %v2080
    %v2082 = vshll.u32 2131351028, %v2073
    %v2083 = vshrl.u32 2102212464, %v2074
    %v2084 = vor.u32 %v2082, %v2083
    %v2085 = vshll.u32 2102212464, %v2073
    %v2086 = vshrl.u32 920167782, %v2074
    %v2087 = vor.u32 %v2085, %v2086
    %v2088 = vshll.u32 920167782, %v2073
    %v2089 = vshrl.u32 1326507024, %v2074
    %v2090 = vor.u32 %v2088, %v2089
    %vm2091 = vcmp.lt.s32.totalorder %v2072, 1
    %vm2092 = vcmp.lt.s32.totalorder %v2072, 2
    %vm2093 = vcmp.lt.s32.totalorder %v2072, 3
    %vm2094 = vcmp.lt.s32.totalorder %v2072, 4
    %v2095 = vsel %vm2091, %v2075, %v2078
    %v2096 = vsel %vm2094, %v2084, 2102212464
    %v2097 = vsel %vm2093, %v2081, %v2096
    %v2098 = vsel %vm2092, %v2095, %v2097
    %v2099 = vsel %vm2091, %v2078, %v2081
    %v2100 = vsel %vm2094, %v2087, 920167782
    %v2101 = vsel %vm2093, %v2084, %v2100
    %v2102 = vsel %vm2092, %v2099, %v2101
    %v2103 = vsel %vm2091, %v2081, %v2084
    %v2104 = vsel %vm2094, %v2090, 1326507024
    %v2105 = vsel %vm2093, %v2087, %v2104
    %v2106 = vsel %vm2092, %v2103, %v2105
    %v2107 = vshll.u32 %v2067, 8
    %v2108 = vmul.u32.u64.compose %v2107, %v2106
    %v2109 = vextract.low.u32 %v2108
    %v2110 = vextract.high.u32 %v2108
    %v2111 = vmul.u32.u64.compose %v2107, %v2102
    %v2112 = vextract.low.u32 %v2111
    %v2113 = vextract.high.u32 %v2111
    %v2114 = vmul.u32 %v2107, %v2098
    %v2115 = vadd.s32 %v2110, %v2112
    %vm2116 = vc.u32 %v2110, %v2112
    %v2117 = vadd.s32 %v2113, 1
    %v2118 = vsel %vm2116, %v2117, %v2113
    %v2119 = vadd.s32 %v2114, %v2118
    %v2120 = vadd.s32 %v2119, 536870912
    %v2121 = vshrl.u32 %v2120, 30
    %v2122 = vshll.u32 %v2121, 30
    %v2123 = vsub.s32 %v2119, %v2122
    %vm2124 = vcmp.lt.s32.totalorder %v2123, 0
    %v2125 = vsub.s32 0, %v2123
    %v2126 = vsel %vm2124, %v2125, %v2123
    %v2127 = vclz %v2126
    %v2128 = vsub.s32 %v2127, 2
    %vm2129 = vcmp.gt.s32.totalorder 0, %v2128
    %v2130 = vsel %vm2129, 0, %v2128
    %v2131 = vsub.s32 32, %v2130
    %v2132 = vshll.u32 %v2123, %v2130
    %v2133 = vshrl.u32 %v2115, %v2131
    %v2134 = vor.u32 %v2132, %v2133
    %v2135 = vsub.s32 4294967266, %v2130
    %v2136 = vadd.s32 %v2135, 127
    %v2137 = vshll.u32 %v2136, 23
    %v2138 = vor.u32 4788187, %v2137
    %v2139 = vand.u32 2147483647, %v2138
    %v2141 = vcvt.s32.f32 %v2134
    %v2142 = vmul.f32 %v2141, %v2139
    %v2143 = vxor.u32 %v2142, 2147483648
    %v2144 = vsel %vm2061, %v2143, %v2142
    %v2145 = vsub.s32 4, %v2121
    %v2146 = vsel %vm2061, %v2145, %v2121
    %v2147 = vsel %vm2060, %v276, %v2144
    %v2148 = vsel %vm2060, 0, %v2146
    %v2149 = vcosq.f32.pop %v2147
    %v2150 = vsinq.f32.pop %v2147
    %vm2151 = vweird.f32 %v276
    %v2152 = vadd.s32 %v2148, 3
    %v2153 = vand.u32 %v2152, 3
    %vm2154 = vcmp.lt.s32.totalorder %v2153, 2
    %vm2155 = vcmp.eq.s32.totalorder %v2153, 0
    %v2156 = vxor.u32 %v2150, 2147483648
    %v2157 = vsel %vm2155, %v2149, %v2156
    %vm2158 = vcmp.eq.s32.totalorder %v2153, 2
    %v2159 = vxor.u32 %v2149, 2147483648
    %v2160 = vsel %vm2158, %v2159, %v2150
    %v2161 = vsel %vm2154, %v2157, %v2160
    %v2162 = vsel %vm2151, nan, %v2161
    %v2163 = vand.u32 2147483647, %v277
    %vm2164 = vcmp.le.f32.partialorder %v2163, 0.7853982
    %vm2165 = vcmp.lt.s32.totalorder %v277, 0
    %v2166 = vand.u32 %v277, 2139095040
    %v2167 = vshrl.u32 %v2166, 23
    %v2168 = vsub.s32 %v2167, 127
    %v2169 = vand.u32 2147483647, %v277
    %v2170 = vand.u32 %v2169, 8388607
    %v2171 = vor.u32 %v2170, 8388608
    %v2172 = vsub.s32 0, %v2171
    %v2173 = vadd.s32 %v2168, 1
    %vm2174 = vcmp.gt.s32.totalorder %v2173, 0
    %v2175 = vsel %vm2174, %v2173, 0
    %v2176 = vshrl.u32 %v2175, 5
    %v2177 = vand.u32 %v2175, 31
    %v2178 = vsub.s32 32, %v2177
    %v2179 = vshrl.u32 683565275, %v2178
    %v2180 = vshll.u32 683565275, %v2177
    %v2181 = vshrl.u32 2475754826, %v2178
    %v2182 = vor.u32 %v2180, %v2181
    %v2183 = vshll.u32 2475754826, %v2177
    %v2184 = vshrl.u32 2131351028, %v2178
    %v2185 = vor.u32 %v2183, %v2184
    %v2186 = vshll.u32 2131351028, %v2177
    %v2187 = vshrl.u32 2102212464, %v2178
    %v2188 = vor.u32 %v2186, %v2187
    %v2189 = vshll.u32 2102212464, %v2177
    %v2190 = vshrl.u32 920167782, %v2178
    %v2191 = vor.u32 %v2189, %v2190
    %v2192 = vshll.u32 920167782, %v2177
    %v2193 = vshrl.u32 1326507024, %v2178
    %v2194 = vor.u32 %v2192, %v2193
    %vm2195 = vcmp.lt.s32.totalorder %v2176, 1
    %vm2196 = vcmp.lt.s32.totalorder %v2176, 2
    %vm2197 = vcmp.lt.s32.totalorder %v2176, 3
    %vm2198 = vcmp.lt.s32.totalorder %v2176, 4
    %v2199 = vsel %vm2195, %v2179, %v2182
    %v2200 = vsel %vm2198, %v2188, 2102212464
    %v2201 = vsel %vm2197, %v2185, %v2200
    %v2202 = vsel %vm2196, %v2199, %v2201
    %v2203 = vsel %vm2195, %v2182, %v2185
    %v2204 = vsel %vm2198, %v2191, 920167782
    %v2205 = vsel %vm2197, %v2188, %v2204
    %v2206 = vsel %vm2196, %v2203, %v2205
    %v2207 = vsel %vm2195, %v2185, %v2188
    %v2208 = vsel %vm2198, %v2194, 1326507024
    %v2209 = vsel %vm2197, %v2191, %v2208
    %v2210 = vsel %vm2196, %v2207, %v2209
    %v2211 = vshll.u32 %v2171, 8
    %v2212 = vmul.u32.u64.compose %v2211, %v2210
    %v2213 = vextract.low.u32 %v2212
    %v2214 = vextract.high.u32 %v2212
    %v2215 = vmul.u32.u64.compose %v2211, %v2206
    %v2216 = vextract.low.u32 %v2215
    %v2217 = vextract.high.u32 %v2215
    %v2218 = vmul.u32 %v2211, %v2202
    %v2219 = vadd.s32 %v2214, %v2216
    %vm2220 = vc.u32 %v2214, %v2216
    %v2221 = vadd.s32 %v2217, 1
    %v2222 = vsel %vm2220, %v2221, %v2217
    %v2223 = vadd.s32 %v2218, %v2222
    %v2224 = vadd.s32 %v2223, 536870912
    %v2225 = vshrl.u32 %v2224, 30
    %v2226 = vshll.u32 %v2225, 30
    %v2227 = vsub.s32 %v2223, %v2226
    %vm2228 = vcmp.lt.s32.totalorder %v2227, 0
    %v2229 = vsub.s32 0, %v2227
    %v2230 = vsel %vm2228, %v2229, %v2227
    %v2231 = vclz %v2230
    %v2232 = vsub.s32 %v2231, 2
    %vm2233 = vcmp.gt.s32.totalorder 0, %v2232
    %v2234 = vsel %vm2233, 0, %v2232
    %v2235 = vsub.s32 32, %v2234
    %v2236 = vshll.u32 %v2227, %v2234
    %v2237 = vshrl.u32 %v2219, %v2235
    %v2238 = vor.u32 %v2236, %v2237
    %v2239 = vsub.s32 4294967266, %v2234
    %v2240 = vadd.s32 %v2239, 127
    %v2241 = vshll.u32 %v2240, 23
    %v2242 = vor.u32 4788187, %v2241
    %v2243 = vand.u32 2147483647, %v2242
    %v2245 = vcvt.s32.f32 %v2238
    %v2246 = vmul.f32 %v2245, %v2243
    %v2247 = vxor.u32 %v2246, 2147483648
    %v2248 = vsel %vm2165, %v2247, %v2246
    %v2249 = vsub.s32 4, %v2225
    %v2250 = vsel %vm2165, %v2249, %v2225
    %v2251 = vsel %vm2164, %v277, %v2248
    %v2252 = vsel %vm2164, 0, %v2250
    %v2253 = vcosq.f32.pop %v2251
    %v2254 = vsinq.f32.pop %v2251
    %vm2255 = vweird.f32 %v277
    %v2256 = vadd.s32 %v2252, 3
    %v2257 = vand.u32 %v2256, 3
    %vm2258 = vcmp.lt.s32.totalorder %v2257, 2
    %vm2259 = vcmp.eq.s32.totalorder %v2257, 0
    %v2260 = vxor.u32 %v2254, 2147483648
    %v2261 = vsel %vm2259, %v2253, %v2260
    %vm2262 = vcmp.eq.s32.totalorder %v2257, 2
    %v2263 = vxor.u32 %v2253, 2147483648
    %v2264 = vsel %vm2262, %v2263, %v2254
    %v2265 = vsel %vm2258, %v2261, %v2264
    %v2266 = vsel %vm2255, nan, %v2265
    %v2267 = vand.u32 2147483647, %v278
    %vm2268 = vcmp.le.f32.partialorder %v2267, 0.7853982
    %vm2269 = vcmp.lt.s32.totalorder %v278, 0
    %v2270 = vand.u32 %v278, 2139095040
    %v2271 = vshrl.u32 %v2270, 23
    %v2272 = vsub.s32 %v2271, 127
    %v2273 = vand.u32 2147483647, %v278
    %v2274 = vand.u32 %v2273, 8388607
    %v2275 = vor.u32 %v2274, 8388608
    %v2276 = vsub.s32 0, %v2275
    %v2277 = vadd.s32 %v2272, 1
    %vm2278 = vcmp.gt.s32.totalorder %v2277, 0
    %v2279 = vsel %vm2278, %v2277, 0
    %v2280 = vshrl.u32 %v2279, 5
    %v2281 = vand.u32 %v2279, 31
    %v2282 = vsub.s32 32, %v2281
    %v2283 = vshrl.u32 683565275, %v2282
    %v2284 = vshll.u32 683565275, %v2281
    %v2285 = vshrl.u32 2475754826, %v2282
    %v2286 = vor.u32 %v2284, %v2285
    %v2287 = vshll.u32 2475754826, %v2281
    %v2288 = vshrl.u32 2131351028, %v2282
    %v2289 = vor.u32 %v2287, %v2288
    %v2290 = vshll.u32 2131351028, %v2281
    %v2291 = vshrl.u32 2102212464, %v2282
    %v2292 = vor.u32 %v2290, %v2291
    %v2293 = vshll.u32 2102212464, %v2281
    %v2294 = vshrl.u32 920167782, %v2282
    %v2295 = vor.u32 %v2293, %v2294
    %v2296 = vshll.u32 920167782, %v2281
    %v2297 = vshrl.u32 1326507024, %v2282
    %v2298 = vor.u32 %v2296, %v2297
    %vm2299 = vcmp.lt.s32.totalorder %v2280, 1
    %vm2300 = vcmp.lt.s32.totalorder %v2280, 2
    %vm2301 = vcmp.lt.s32.totalorder %v2280, 3
    %vm2302 = vcmp.lt.s32.totalorder %v2280, 4
    %v2303 = vsel %vm2299, %v2283, %v2286
    %v2304 = vsel %vm2302, %v2292, 2102212464
    %v2305 = vsel %vm2301, %v2289, %v2304
    %v2306 = vsel %vm2300, %v2303, %v2305
    %v2307 = vsel %vm2299, %v2286, %v2289
    %v2308 = vsel %vm2302, %v2295, 920167782
    %v2309 = vsel %vm2301, %v2292, %v2308
    %v2310 = vsel %vm2300, %v2307, %v2309
    %v2311 = vsel %vm2299, %v2289, %v2292
    %v2312 = vsel %vm2302, %v2298, 1326507024
    %v2313 = vsel %vm2301, %v2295, %v2312
    %v2314 = vsel %vm2300, %v2311, %v2313
    %v2315 = vshll.u32 %v2275, 8
    %v2316 = vmul.u32.u64.compose %v2315, %v2314
    %v2317 = vextract.low.u32 %v2316
    %v2318 = vextract.high.u32 %v2316
    %v2319 = vmul.u32.u64.compose %v2315, %v2310
    %v2320 = vextract.low.u32 %v2319
    %v2321 = vextract.high.u32 %v2319
    %v2322 = vmul.u32 %v2315, %v2306
    %v2323 = vadd.s32 %v2318, %v2320
    %vm2324 = vc.u32 %v2318, %v2320
    %v2325 = vadd.s32 %v2321, 1
    %v2326 = vsel %vm2324, %v2325, %v2321
    %v2327 = vadd.s32 %v2322, %v2326
    %v2328 = vadd.s32 %v2327, 536870912
    %v2329 = vshrl.u32 %v2328, 30
    %v2330 = vshll.u32 %v2329, 30
    %v2331 = vsub.s32 %v2327, %v2330
    %vm2332 = vcmp.lt.s32.totalorder %v2331, 0
    %v2333 = vsub.s32 0, %v2331
    %v2334 = vsel %vm2332, %v2333, %v2331
    %v2335 = vclz %v2334
    %v2336 = vsub.s32 %v2335, 2
    %vm2337 = vcmp.gt.s32.totalorder 0, %v2336
    %v2338 = vsel %vm2337, 0, %v2336
    %v2339 = vsub.s32 32, %v2338
    %v2340 = vshll.u32 %v2331, %v2338
    %v2341 = vshrl.u32 %v2323, %v2339
    %v2342 = vor.u32 %v2340, %v2341
    %v2343 = vsub.s32 4294967266, %v2338
    %v2344 = vadd.s32 %v2343, 127
    %v2345 = vshll.u32 %v2344, 23
    %v2346 = vor.u32 4788187, %v2345
    %v2347 = vand.u32 2147483647, %v2346
    %v2349 = vcvt.s32.f32 %v2342
    %v2350 = vmul.f32 %v2349, %v2347
    %v2351 = vxor.u32 %v2350, 2147483648
    %v2352 = vsel %vm2269, %v2351, %v2350
    %v2353 = vsub.s32 4, %v2329
    %v2354 = vsel %vm2269, %v2353, %v2329
    %v2355 = vsel %vm2268, %v278, %v2352
    %v2356 = vsel %vm2268, 0, %v2354
    %v2357 = vcosq.f32.pop %v2355
    %v2358 = vsinq.f32.pop %v2355
    %vm2359 = vweird.f32 %v278
    %v2360 = vadd.s32 %v2356, 3
    %v2361 = vand.u32 %v2360, 3
    %vm2362 = vcmp.lt.s32.totalorder %v2361, 2
    %vm2363 = vcmp.eq.s32.totalorder %v2361, 0
    %v2364 = vxor.u32 %v2358, 2147483648
    %v2365 = vsel %vm2363, %v2357, %v2364
    %vm2366 = vcmp.eq.s32.totalorder %v2361, 2
    %v2367 = vxor.u32 %v2357, 2147483648
    %v2368 = vsel %vm2366, %v2367, %v2358
    %v2369 = vsel %vm2362, %v2365, %v2368
    %v2370 = vsel %vm2359, nan, %v2369
    %v2371 = vand.u32 2147483647, %v279
    %vm2372 = vcmp.le.f32.partialorder %v2371, 0.7853982
    %vm2373 = vcmp.lt.s32.totalorder %v279, 0
    %v2374 = vand.u32 %v279, 2139095040
    %v2375 = vshrl.u32 %v2374, 23
    %v2376 = vsub.s32 %v2375, 127
    %v2377 = vand.u32 2147483647, %v279
    %v2378 = vand.u32 %v2377, 8388607
    %v2379 = vor.u32 %v2378, 8388608
    %v2380 = vsub.s32 0, %v2379
    %v2381 = vadd.s32 %v2376, 1
    %vm2382 = vcmp.gt.s32.totalorder %v2381, 0
    %v2383 = vsel %vm2382, %v2381, 0
    %v2384 = vshrl.u32 %v2383, 5
    %v2385 = vand.u32 %v2383, 31
    %v2386 = vsub.s32 32, %v2385
    %v2387 = vshrl.u32 683565275, %v2386
    %v2388 = vshll.u32 683565275, %v2385
    %v2389 = vshrl.u32 2475754826, %v2386
    %v2390 = vor.u32 %v2388, %v2389
    %v2391 = vshll.u32 2475754826, %v2385
    %v2392 = vshrl.u32 2131351028, %v2386
    %v2393 = vor.u32 %v2391, %v2392
    %v2394 = vshll.u32 2131351028, %v2385
    %v2395 = vshrl.u32 2102212464, %v2386
    %v2396 = vor.u32 %v2394, %v2395
    %v2397 = vshll.u32 2102212464, %v2385
    %v2398 = vshrl.u32 920167782, %v2386
    %v2399 = vor.u32 %v2397, %v2398
    %v2400 = vshll.u32 920167782, %v2385
    %v2401 = vshrl.u32 1326507024, %v2386
    %v2402 = vor.u32 %v2400, %v2401
    %vm2403 = vcmp.lt.s32.totalorder %v2384, 1
    %vm2404 = vcmp.lt.s32.totalorder %v2384, 2
    %vm2405 = vcmp.lt.s32.totalorder %v2384, 3
    %vm2406 = vcmp.lt.s32.totalorder %v2384, 4
    %v2407 = vsel %vm2403, %v2387, %v2390
    %v2408 = vsel %vm2406, %v2396, 2102212464
    %v2409 = vsel %vm2405, %v2393, %v2408
    %v2410 = vsel %vm2404, %v2407, %v2409
    %v2411 = vsel %vm2403, %v2390, %v2393
    %v2412 = vsel %vm2406, %v2399, 920167782
    %v2413 = vsel %vm2405, %v2396, %v2412
    %v2414 = vsel %vm2404, %v2411, %v2413
    %v2415 = vsel %vm2403, %v2393, %v2396
    %v2416 = vsel %vm2406, %v2402, 1326507024
    %v2417 = vsel %vm2405, %v2399, %v2416
    %v2418 = vsel %vm2404, %v2415, %v2417
    %v2419 = vshll.u32 %v2379, 8
    %v2420 = vmul.u32.u64.compose %v2419, %v2418
    %v2421 = vextract.low.u32 %v2420
    %v2422 = vextract.high.u32 %v2420
    %v2423 = vmul.u32.u64.compose %v2419, %v2414
    %v2424 = vextract.low.u32 %v2423
    %v2425 = vextract.high.u32 %v2423
    %v2426 = vmul.u32 %v2419, %v2410
    %v2427 = vadd.s32 %v2422, %v2424
    %vm2428 = vc.u32 %v2422, %v2424
    %v2429 = vadd.s32 %v2425, 1
    %v2430 = vsel %vm2428, %v2429, %v2425
    %v2431 = vadd.s32 %v2426, %v2430
    %v2432 = vadd.s32 %v2431, 536870912
    %v2433 = vshrl.u32 %v2432, 30
    %v2434 = vshll.u32 %v2433, 30
    %v2435 = vsub.s32 %v2431, %v2434
    %vm2436 = vcmp.lt.s32.totalorder %v2435, 0
    %v2437 = vsub.s32 0, %v2435
    %v2438 = vsel %vm2436, %v2437, %v2435
    %v2439 = vclz %v2438
    %v2440 = vsub.s32 %v2439, 2
    %vm2441 = vcmp.gt.s32.totalorder 0, %v2440
    %v2442 = vsel %vm2441, 0, %v2440
    %v2443 = vsub.s32 32, %v2442
    %v2444 = vshll.u32 %v2435, %v2442
    %v2445 = vshrl.u32 %v2427, %v2443
    %v2446 = vor.u32 %v2444, %v2445
    %v2447 = vsub.s32 4294967266, %v2442
    %v2448 = vadd.s32 %v2447, 127
    %v2449 = vshll.u32 %v2448, 23
    %v2450 = vor.u32 4788187, %v2449
    %v2451 = vand.u32 2147483647, %v2450
    %v2453 = vcvt.s32.f32 %v2446
    %v2454 = vmul.f32 %v2453, %v2451
    %v2455 = vxor.u32 %v2454, 2147483648
    %v2456 = vsel %vm2373, %v2455, %v2454
    %v2457 = vsub.s32 4, %v2433
    %v2458 = vsel %vm2373, %v2457, %v2433
    %v2459 = vsel %vm2372, %v279, %v2456
    %v2460 = vsel %vm2372, 0, %v2458
    %v2461 = vcosq.f32.pop %v2459
    %v2462 = vsinq.f32.pop %v2459
    %vm2463 = vweird.f32 %v279
    %v2464 = vadd.s32 %v2460, 3
    %v2465 = vand.u32 %v2464, 3
    %vm2466 = vcmp.lt.s32.totalorder %v2465, 2
    %vm2467 = vcmp.eq.s32.totalorder %v2465, 0
    %v2468 = vxor.u32 %v2462, 2147483648
    %v2469 = vsel %vm2467, %v2461, %v2468
    %vm2470 = vcmp.eq.s32.totalorder %v2465, 2
    %v2471 = vxor.u32 %v2461, 2147483648
    %v2472 = vsel %vm2470, %v2471, %v2462
    %v2473 = vsel %vm2466, %v2469, %v2472
    %v2474 = vsel %vm2463, nan, %v2473
    %v2475 = vand.u32 2147483647, %v280
    %vm2476 = vcmp.le.f32.partialorder %v2475, 0.7853982
    %vm2477 = vcmp.lt.s32.totalorder %v280, 0
    %v2478 = vand.u32 %v280, 2139095040
    %v2479 = vshrl.u32 %v2478, 23
    %v2480 = vsub.s32 %v2479, 127
    %v2481 = vand.u32 2147483647, %v280
    %v2482 = vand.u32 %v2481, 8388607
    %v2483 = vor.u32 %v2482, 8388608
    %v2484 = vsub.s32 0, %v2483
    %v2485 = vadd.s32 %v2480, 1
    %vm2486 = vcmp.gt.s32.totalorder %v2485, 0
    %v2487 = vsel %vm2486, %v2485, 0
    %v2488 = vshrl.u32 %v2487, 5
    %v2489 = vand.u32 %v2487, 31
    %v2490 = vsub.s32 32, %v2489
    %v2491 = vshrl.u32 683565275, %v2490
    %v2492 = vshll.u32 683565275, %v2489
    %v2493 = vshrl.u32 2475754826, %v2490
    %v2494 = vor.u32 %v2492, %v2493
    %v2495 = vshll.u32 2475754826, %v2489
    %v2496 = vshrl.u32 2131351028, %v2490
    %v2497 = vor.u32 %v2495, %v2496
    %v2498 = vshll.u32 2131351028, %v2489
    %v2499 = vshrl.u32 2102212464, %v2490
    %v2500 = vor.u32 %v2498, %v2499
    %v2501 = vshll.u32 2102212464, %v2489
    %v2502 = vshrl.u32 920167782, %v2490
    %v2503 = vor.u32 %v2501, %v2502
    %v2504 = vshll.u32 920167782, %v2489
    %v2505 = vshrl.u32 1326507024, %v2490
    %v2506 = vor.u32 %v2504, %v2505
    %vm2507 = vcmp.lt.s32.totalorder %v2488, 1
    %vm2508 = vcmp.lt.s32.totalorder %v2488, 2
    %vm2509 = vcmp.lt.s32.totalorder %v2488, 3
    %vm2510 = vcmp.lt.s32.totalorder %v2488, 4
    %v2511 = vsel %vm2507, %v2491, %v2494
    %v2512 = vsel %vm2510, %v2500, 2102212464
    %v2513 = vsel %vm2509, %v2497, %v2512
    %v2514 = vsel %vm2508, %v2511, %v2513
    %v2515 = vsel %vm2507, %v2494, %v2497
    %v2516 = vsel %vm2510, %v2503, 920167782
    %v2517 = vsel %vm2509, %v2500, %v2516
    %v2518 = vsel %vm2508, %v2515, %v2517
    %v2519 = vsel %vm2507, %v2497, %v2500
    %v2520 = vsel %vm2510, %v2506, 1326507024
    %v2521 = vsel %vm2509, %v2503, %v2520
    %v2522 = vsel %vm2508, %v2519, %v2521
    %v2523 = vshll.u32 %v2483, 8
    %v2524 = vmul.u32.u64.compose %v2523, %v2522
    %v2525 = vextract.low.u32 %v2524
    %v2526 = vextract.high.u32 %v2524
    %v2527 = vmul.u32.u64.compose %v2523, %v2518
    %v2528 = vextract.low.u32 %v2527
    %v2529 = vextract.high.u32 %v2527
    %v2530 = vmul.u32 %v2523, %v2514
    %v2531 = vadd.s32 %v2526, %v2528
    %vm2532 = vc.u32 %v2526, %v2528
    %v2533 = vadd.s32 %v2529, 1
    %v2534 = vsel %vm2532, %v2533, %v2529
    %v2535 = vadd.s32 %v2530, %v2534
    %v2536 = vadd.s32 %v2535, 536870912
    %v2537 = vshrl.u32 %v2536, 30
    %v2538 = vshll.u32 %v2537, 30
    %v2539 = vsub.s32 %v2535, %v2538
    %vm2540 = vcmp.lt.s32.totalorder %v2539, 0
    %v2541 = vsub.s32 0, %v2539
    %v2542 = vsel %vm2540, %v2541, %v2539
    %v2543 = vclz %v2542
    %v2544 = vsub.s32 %v2543, 2
    %vm2545 = vcmp.gt.s32.totalorder 0, %v2544
    %v2546 = vsel %vm2545, 0, %v2544
    %v2547 = vsub.s32 32, %v2546
    %v2548 = vshll.u32 %v2539, %v2546
    %v2549 = vshrl.u32 %v2531, %v2547
    %v2550 = vor.u32 %v2548, %v2549
    %v2551 = vsub.s32 4294967266, %v2546
    %v2552 = vadd.s32 %v2551, 127
    %v2553 = vshll.u32 %v2552, 23
    %v2554 = vor.u32 4788187, %v2553
    %v2555 = vand.u32 2147483647, %v2554
    %v2557 = vcvt.s32.f32 %v2550
    %v2558 = vmul.f32 %v2557, %v2555
    %v2559 = vxor.u32 %v2558, 2147483648
    %v2560 = vsel %vm2477, %v2559, %v2558
    %v2561 = vsub.s32 4, %v2537
    %v2562 = vsel %vm2477, %v2561, %v2537
    %v2563 = vsel %vm2476, %v280, %v2560
    %v2564 = vsel %vm2476, 0, %v2562
    %v2565 = vcosq.f32.pop %v2563
    %v2566 = vsinq.f32.pop %v2563
    %vm2567 = vweird.f32 %v280
    %v2568 = vadd.s32 %v2564, 3
    %v2569 = vand.u32 %v2568, 3
    %vm2570 = vcmp.lt.s32.totalorder %v2569, 2
    %vm2571 = vcmp.eq.s32.totalorder %v2569, 0
    %v2572 = vxor.u32 %v2566, 2147483648
    %v2573 = vsel %vm2571, %v2565, %v2572
    %vm2574 = vcmp.eq.s32.totalorder %v2569, 2
    %v2575 = vxor.u32 %v2565, 2147483648
    %v2576 = vsel %vm2574, %v2575, %v2566
    %v2577 = vsel %vm2570, %v2573, %v2576
    %v2578 = vsel %vm2567, nan, %v2577
    %v2579 = vand.u32 2147483647, %v281
    %vm2580 = vcmp.le.f32.partialorder %v2579, 0.7853982
    %vm2581 = vcmp.lt.s32.totalorder %v281, 0
    %v2582 = vand.u32 %v281, 2139095040
    %v2583 = vshrl.u32 %v2582, 23
    %v2584 = vsub.s32 %v2583, 127
    %v2585 = vand.u32 2147483647, %v281
    %v2586 = vand.u32 %v2585, 8388607
    %v2587 = vor.u32 %v2586, 8388608
    %v2588 = vsub.s32 0, %v2587
    %v2589 = vadd.s32 %v2584, 1
    %vm2590 = vcmp.gt.s32.totalorder %v2589, 0
    %v2591 = vsel %vm2590, %v2589, 0
    %v2592 = vshrl.u32 %v2591, 5
    %v2593 = vand.u32 %v2591, 31
    %v2594 = vsub.s32 32, %v2593
    %v2595 = vshrl.u32 683565275, %v2594
    %v2596 = vshll.u32 683565275, %v2593
    %v2597 = vshrl.u32 2475754826, %v2594
    %v2598 = vor.u32 %v2596, %v2597
    %v2599 = vshll.u32 2475754826, %v2593
    %v2600 = vshrl.u32 2131351028, %v2594
    %v2601 = vor.u32 %v2599, %v2600
    %v2602 = vshll.u32 2131351028, %v2593
    %v2603 = vshrl.u32 2102212464, %v2594
    %v2604 = vor.u32 %v2602, %v2603
    %v2605 = vshll.u32 2102212464, %v2593
    %v2606 = vshrl.u32 920167782, %v2594
    %v2607 = vor.u32 %v2605, %v2606
    %v2608 = vshll.u32 920167782, %v2593
    %v2609 = vshrl.u32 1326507024, %v2594
    %v2610 = vor.u32 %v2608, %v2609
    %vm2611 = vcmp.lt.s32.totalorder %v2592, 1
    %vm2612 = vcmp.lt.s32.totalorder %v2592, 2
    %vm2613 = vcmp.lt.s32.totalorder %v2592, 3
    %vm2614 = vcmp.lt.s32.totalorder %v2592, 4
    %v2615 = vsel %vm2611, %v2595, %v2598
    %v2616 = vsel %vm2614, %v2604, 2102212464
    %v2617 = vsel %vm2613, %v2601, %v2616
    %v2618 = vsel %vm2612, %v2615, %v2617
    %v2619 = vsel %vm2611, %v2598, %v2601
    %v2620 = vsel %vm2614, %v2607, 920167782
    %v2621 = vsel %vm2613, %v2604, %v2620
    %v2622 = vsel %vm2612, %v2619, %v2621
    %v2623 = vsel %vm2611, %v2601, %v2604
    %v2624 = vsel %vm2614, %v2610, 1326507024
    %v2625 = vsel %vm2613, %v2607, %v2624
    %v2626 = vsel %vm2612, %v2623, %v2625
    %v2627 = vshll.u32 %v2587, 8
    %v2628 = vmul.u32.u64.compose %v2627, %v2626
    %v2629 = vextract.low.u32 %v2628
    %v2630 = vextract.high.u32 %v2628
    %v2631 = vmul.u32.u64.compose %v2627, %v2622
    %v2632 = vextract.low.u32 %v2631
    %v2633 = vextract.high.u32 %v2631
    %v2634 = vmul.u32 %v2627, %v2618
    %v2635 = vadd.s32 %v2630, %v2632
    %vm2636 = vc.u32 %v2630, %v2632
    %v2637 = vadd.s32 %v2633, 1
    %v2638 = vsel %vm2636, %v2637, %v2633
    %v2639 = vadd.s32 %v2634, %v2638
    %v2640 = vadd.s32 %v2639, 536870912
    %v2641 = vshrl.u32 %v2640, 30
    %v2642 = vshll.u32 %v2641, 30
    %v2643 = vsub.s32 %v2639, %v2642
    %vm2644 = vcmp.lt.s32.totalorder %v2643, 0
    %v2645 = vsub.s32 0, %v2643
    %v2646 = vsel %vm2644, %v2645, %v2643
    %v2647 = vclz %v2646
    %v2648 = vsub.s32 %v2647, 2
    %vm2649 = vcmp.gt.s32.totalorder 0, %v2648
    %v2650 = vsel %vm2649, 0, %v2648
    %v2651 = vsub.s32 32, %v2650
    %v2652 = vshll.u32 %v2643, %v2650
    %v2653 = vshrl.u32 %v2635, %v2651
    %v2654 = vor.u32 %v2652, %v2653
    %v2655 = vsub.s32 4294967266, %v2650
    %v2656 = vadd.s32 %v2655, 127
    %v2657 = vshll.u32 %v2656, 23
    %v2658 = vor.u32 4788187, %v2657
    %v2659 = vand.u32 2147483647, %v2658
    %v2661 = vcvt.s32.f32 %v2654
    %v2662 = vmul.f32 %v2661, %v2659
    %v2663 = vxor.u32 %v2662, 2147483648
    %v2664 = vsel %vm2581, %v2663, %v2662
    %v2665 = vsub.s32 4, %v2641
    %v2666 = vsel %vm2581, %v2665, %v2641
    %v2667 = vsel %vm2580, %v281, %v2664
    %v2668 = vsel %vm2580, 0, %v2666
    %v2669 = vcosq.f32.pop %v2667
    %v2670 = vsinq.f32.pop %v2667
    %vm2671 = vweird.f32 %v281
    %v2672 = vadd.s32 %v2668, 3
    %v2673 = vand.u32 %v2672, 3
    %vm2674 = vcmp.lt.s32.totalorder %v2673, 2
    %vm2675 = vcmp.eq.s32.totalorder %v2673, 0
    %v2676 = vxor.u32 %v2670, 2147483648
    %v2677 = vsel %vm2675, %v2669, %v2676
    %vm2678 = vcmp.eq.s32.totalorder %v2673, 2
    %v2679 = vxor.u32 %v2669, 2147483648
    %v2680 = vsel %vm2678, %v2679, %v2670
    %v2681 = vsel %vm2674, %v2677, %v2680
    %v2682 = vsel %vm2671, nan, %v2681
    %v2683 = vand.u32 2147483647, %v282
    %vm2684 = vcmp.le.f32.partialorder %v2683, 0.7853982
    %vm2685 = vcmp.lt.s32.totalorder %v282, 0
    %v2686 = vand.u32 %v282, 2139095040
    %v2687 = vshrl.u32 %v2686, 23
    %v2688 = vsub.s32 %v2687, 127
    %v2689 = vand.u32 2147483647, %v282
    %v2690 = vand.u32 %v2689, 8388607
    %v2691 = vor.u32 %v2690, 8388608
    %v2692 = vsub.s32 0, %v2691
    %v2693 = vadd.s32 %v2688, 1
    %vm2694 = vcmp.gt.s32.totalorder %v2693, 0
    %v2695 = vsel %vm2694, %v2693, 0
    %v2696 = vshrl.u32 %v2695, 5
    %v2697 = vand.u32 %v2695, 31
    %v2698 = vsub.s32 32, %v2697
    %v2699 = vshrl.u32 683565275, %v2698
    %v2700 = vshll.u32 683565275, %v2697
    %v2701 = vshrl.u32 2475754826, %v2698
    %v2702 = vor.u32 %v2700, %v2701
    %v2703 = vshll.u32 2475754826, %v2697
    %v2704 = vshrl.u32 2131351028, %v2698
    %v2705 = vor.u32 %v2703, %v2704
    %v2706 = vshll.u32 2131351028, %v2697
    %v2707 = vshrl.u32 2102212464, %v2698
    %v2708 = vor.u32 %v2706, %v2707
    %v2709 = vshll.u32 2102212464, %v2697
    %v2710 = vshrl.u32 920167782, %v2698
    %v2711 = vor.u32 %v2709, %v2710
    %v2712 = vshll.u32 920167782, %v2697
    %v2713 = vshrl.u32 1326507024, %v2698
    %v2714 = vor.u32 %v2712, %v2713
    %vm2715 = vcmp.lt.s32.totalorder %v2696, 1
    %vm2716 = vcmp.lt.s32.totalorder %v2696, 2
    %vm2717 = vcmp.lt.s32.totalorder %v2696, 3
    %vm2718 = vcmp.lt.s32.totalorder %v2696, 4
    %v2719 = vsel %vm2715, %v2699, %v2702
    %v2720 = vsel %vm2718, %v2708, 2102212464
    %v2721 = vsel %vm2717, %v2705, %v2720
    %v2722 = vsel %vm2716, %v2719, %v2721
    %v2723 = vsel %vm2715, %v2702, %v2705
    %v2724 = vsel %vm2718, %v2711, 920167782
    %v2725 = vsel %vm2717, %v2708, %v2724
    %v2726 = vsel %vm2716, %v2723, %v2725
    %v2727 = vsel %vm2715, %v2705, %v2708
    %v2728 = vsel %vm2718, %v2714, 1326507024
    %v2729 = vsel %vm2717, %v2711, %v2728
    %v2730 = vsel %vm2716, %v2727, %v2729
    %v2731 = vshll.u32 %v2691, 8
    %v2732 = vmul.u32.u64.compose %v2731, %v2730
    %v2733 = vextract.low.u32 %v2732
    %v2734 = vextract.high.u32 %v2732
    %v2735 = vmul.u32.u64.compose %v2731, %v2726
    %v2736 = vextract.low.u32 %v2735
    %v2737 = vextract.high.u32 %v2735
    %v2738 = vmul.u32 %v2731, %v2722
    %v2739 = vadd.s32 %v2734, %v2736
    %vm2740 = vc.u32 %v2734, %v2736
    %v2741 = vadd.s32 %v2737, 1
    %v2742 = vsel %vm2740, %v2741, %v2737
    %v2743 = vadd.s32 %v2738, %v2742
    %v2744 = vadd.s32 %v2743, 536870912
    %v2745 = vshrl.u32 %v2744, 30
    %v2746 = vshll.u32 %v2745, 30
    %v2747 = vsub.s32 %v2743, %v2746
    %vm2748 = vcmp.lt.s32.totalorder %v2747, 0
    %v2749 = vsub.s32 0, %v2747
    %v2750 = vsel %vm2748, %v2749, %v2747
    %v2751 = vclz %v2750
    %v2752 = vsub.s32 %v2751, 2
    %vm2753 = vcmp.gt.s32.totalorder 0, %v2752
    %v2754 = vsel %vm2753, 0, %v2752
    %v2755 = vsub.s32 32, %v2754
    %v2756 = vshll.u32 %v2747, %v2754
    %v2757 = vshrl.u32 %v2739, %v2755
    %v2758 = vor.u32 %v2756, %v2757
    %v2759 = vsub.s32 4294967266, %v2754
    %v2760 = vadd.s32 %v2759, 127
    %v2761 = vshll.u32 %v2760, 23
    %v2762 = vor.u32 4788187, %v2761
    %v2763 = vand.u32 2147483647, %v2762
    %v2765 = vcvt.s32.f32 %v2758
    %v2766 = vmul.f32 %v2765, %v2763
    %v2767 = vxor.u32 %v2766, 2147483648
    %v2768 = vsel %vm2685, %v2767, %v2766
    %v2769 = vsub.s32 4, %v2745
    %v2770 = vsel %vm2685, %v2769, %v2745
    %v2771 = vsel %vm2684, %v282, %v2768
    %v2772 = vsel %vm2684, 0, %v2770
    %v2773 = vcosq.f32.pop %v2771
    %v2774 = vsinq.f32.pop %v2771
    %vm2775 = vweird.f32 %v282
    %v2776 = vadd.s32 %v2772, 3
    %v2777 = vand.u32 %v2776, 3
    %vm2778 = vcmp.lt.s32.totalorder %v2777, 2
    %vm2779 = vcmp.eq.s32.totalorder %v2777, 0
    %v2780 = vxor.u32 %v2774, 2147483648
    %v2781 = vsel %vm2779, %v2773, %v2780
    %vm2782 = vcmp.eq.s32.totalorder %v2777, 2
    %v2783 = vxor.u32 %v2773, 2147483648
    %v2784 = vsel %vm2782, %v2783, %v2774
    %v2785 = vsel %vm2778, %v2781, %v2784
    %v2786 = vsel %vm2775, nan, %v2785
    %v2787 = vand.u32 2147483647, %v283
    %vm2788 = vcmp.le.f32.partialorder %v2787, 0.7853982
    %vm2789 = vcmp.lt.s32.totalorder %v283, 0
    %v2790 = vand.u32 %v283, 2139095040
    %v2791 = vshrl.u32 %v2790, 23
    %v2792 = vsub.s32 %v2791, 127
    %v2793 = vand.u32 2147483647, %v283
    %v2794 = vand.u32 %v2793, 8388607
    %v2795 = vor.u32 %v2794, 8388608
    %v2796 = vsub.s32 0, %v2795
    %v2797 = vadd.s32 %v2792, 1
    %vm2798 = vcmp.gt.s32.totalorder %v2797, 0
    %v2799 = vsel %vm2798, %v2797, 0
    %v2800 = vshrl.u32 %v2799, 5
    %v2801 = vand.u32 %v2799, 31
    %v2802 = vsub.s32 32, %v2801
    %v2803 = vshrl.u32 683565275, %v2802
    %v2804 = vshll.u32 683565275, %v2801
    %v2805 = vshrl.u32 2475754826, %v2802
    %v2806 = vor.u32 %v2804, %v2805
    %v2807 = vshll.u32 2475754826, %v2801
    %v2808 = vshrl.u32 2131351028, %v2802
    %v2809 = vor.u32 %v2807, %v2808
    %v2810 = vshll.u32 2131351028, %v2801
    %v2811 = vshrl.u32 2102212464, %v2802
    %v2812 = vor.u32 %v2810, %v2811
    %v2813 = vshll.u32 2102212464, %v2801
    %v2814 = vshrl.u32 920167782, %v2802
    %v2815 = vor.u32 %v2813, %v2814
    %v2816 = vshll.u32 920167782, %v2801
    %v2817 = vshrl.u32 1326507024, %v2802
    %v2818 = vor.u32 %v2816, %v2817
    %vm2819 = vcmp.lt.s32.totalorder %v2800, 1
    %vm2820 = vcmp.lt.s32.totalorder %v2800, 2
    %vm2821 = vcmp.lt.s32.totalorder %v2800, 3
    %vm2822 = vcmp.lt.s32.totalorder %v2800, 4
    %v2823 = vsel %vm2819, %v2803, %v2806
    %v2824 = vsel %vm2822, %v2812, 2102212464
    %v2825 = vsel %vm2821, %v2809, %v2824
    %v2826 = vsel %vm2820, %v2823, %v2825
    %v2827 = vsel %vm2819, %v2806, %v2809
    %v2828 = vsel %vm2822, %v2815, 920167782
    %v2829 = vsel %vm2821, %v2812, %v2828
    %v2830 = vsel %vm2820, %v2827, %v2829
    %v2831 = vsel %vm2819, %v2809, %v2812
    %v2832 = vsel %vm2822, %v2818, 1326507024
    %v2833 = vsel %vm2821, %v2815, %v2832
    %v2834 = vsel %vm2820, %v2831, %v2833
    %v2835 = vshll.u32 %v2795, 8
    %v2836 = vmul.u32.u64.compose %v2835, %v2834
    %v2837 = vextract.low.u32 %v2836
    %v2838 = vextract.high.u32 %v2836
    %v2839 = vmul.u32.u64.compose %v2835, %v2830
    %v2840 = vextract.low.u32 %v2839
    %v2841 = vextract.high.u32 %v2839
    %v2842 = vmul.u32 %v2835, %v2826
    %v2843 = vadd.s32 %v2838, %v2840
    %vm2844 = vc.u32 %v2838, %v2840
    %v2845 = vadd.s32 %v2841, 1
    %v2846 = vsel %vm2844, %v2845, %v2841
    %v2847 = vadd.s32 %v2842, %v2846
    %v2848 = vadd.s32 %v2847, 536870912
    %v2849 = vshrl.u32 %v2848, 30
    %v2850 = vshll.u32 %v2849, 30
    %v2851 = vsub.s32 %v2847, %v2850
    %vm2852 = vcmp.lt.s32.totalorder %v2851, 0
    %v2853 = vsub.s32 0, %v2851
    %v2854 = vsel %vm2852, %v2853, %v2851
    %v2855 = vclz %v2854
    %v2856 = vsub.s32 %v2855, 2
    %vm2857 = vcmp.gt.s32.totalorder 0, %v2856
    %v2858 = vsel %vm2857, 0, %v2856
    %v2859 = vsub.s32 32, %v2858
    %v2860 = vshll.u32 %v2851, %v2858
    %v2861 = vshrl.u32 %v2843, %v2859
    %v2862 = vor.u32 %v2860, %v2861
    %v2863 = vsub.s32 4294967266, %v2858
    %v2864 = vadd.s32 %v2863, 127
    %v2865 = vshll.u32 %v2864, 23
    %v2866 = vor.u32 4788187, %v2865
    %v2867 = vand.u32 2147483647, %v2866
    %v2869 = vcvt.s32.f32 %v2862
    %v2870 = vmul.f32 %v2869, %v2867
    %v2871 = vxor.u32 %v2870, 2147483648
    %v2872 = vsel %vm2789, %v2871, %v2870
    %v2873 = vsub.s32 4, %v2849
    %v2874 = vsel %vm2789, %v2873, %v2849
    %v2875 = vsel %vm2788, %v283, %v2872
    %v2876 = vsel %vm2788, 0, %v2874
    %v2877 = vcosq.f32.pop %v2875
    %v2878 = vsinq.f32.pop %v2875
    %vm2879 = vweird.f32 %v283
    %v2880 = vadd.s32 %v2876, 3
    %v2881 = vand.u32 %v2880, 3
    %vm2882 = vcmp.lt.s32.totalorder %v2881, 2
    %vm2883 = vcmp.eq.s32.totalorder %v2881, 0
    %v2884 = vxor.u32 %v2878, 2147483648
    %v2885 = vsel %vm2883, %v2877, %v2884
    %vm2886 = vcmp.eq.s32.totalorder %v2881, 2
    %v2887 = vxor.u32 %v2877, 2147483648
    %v2888 = vsel %vm2886, %v2887, %v2878
    %v2889 = vsel %vm2882, %v2885, %v2888
    %v2890 = vsel %vm2879, nan, %v2889
    %v2891 = vand.u32 2147483647, %v284
    %vm2892 = vcmp.le.f32.partialorder %v2891, 0.7853982
    %vm2893 = vcmp.lt.s32.totalorder %v284, 0
    %v2894 = vand.u32 %v284, 2139095040
    %v2895 = vshrl.u32 %v2894, 23
    %v2896 = vsub.s32 %v2895, 127
    %v2897 = vand.u32 2147483647, %v284
    %v2898 = vand.u32 %v2897, 8388607
    %v2899 = vor.u32 %v2898, 8388608
    %v2900 = vsub.s32 0, %v2899
    %v2901 = vadd.s32 %v2896, 1
    %vm2902 = vcmp.gt.s32.totalorder %v2901, 0
    %v2903 = vsel %vm2902, %v2901, 0
    %v2904 = vshrl.u32 %v2903, 5
    %v2905 = vand.u32 %v2903, 31
    %v2906 = vsub.s32 32, %v2905
    %v2907 = vshrl.u32 683565275, %v2906
    %v2908 = vshll.u32 683565275, %v2905
    %v2909 = vshrl.u32 2475754826, %v2906
    %v2910 = vor.u32 %v2908, %v2909
    %v2911 = vshll.u32 2475754826, %v2905
    %v2912 = vshrl.u32 2131351028, %v2906
    %v2913 = vor.u32 %v2911, %v2912
    %v2914 = vshll.u32 2131351028, %v2905
    %v2915 = vshrl.u32 2102212464, %v2906
    %v2916 = vor.u32 %v2914, %v2915
    %v2917 = vshll.u32 2102212464, %v2905
    %v2918 = vshrl.u32 920167782, %v2906
    %v2919 = vor.u32 %v2917, %v2918
    %v2920 = vshll.u32 920167782, %v2905
    %v2921 = vshrl.u32 1326507024, %v2906
    %v2922 = vor.u32 %v2920, %v2921
    %vm2923 = vcmp.lt.s32.totalorder %v2904, 1
    %vm2924 = vcmp.lt.s32.totalorder %v2904, 2
    %vm2925 = vcmp.lt.s32.totalorder %v2904, 3
    %vm2926 = vcmp.lt.s32.totalorder %v2904, 4
    %v2927 = vsel %vm2923, %v2907, %v2910
    %v2928 = vsel %vm2926, %v2916, 2102212464
    %v2929 = vsel %vm2925, %v2913, %v2928
    %v2930 = vsel %vm2924, %v2927, %v2929
    %v2931 = vsel %vm2923, %v2910, %v2913
    %v2932 = vsel %vm2926, %v2919, 920167782
    %v2933 = vsel %vm2925, %v2916, %v2932
    %v2934 = vsel %vm2924, %v2931, %v2933
    %v2935 = vsel %vm2923, %v2913, %v2916
    %v2936 = vsel %vm2926, %v2922, 1326507024
    %v2937 = vsel %vm2925, %v2919, %v2936
    %v2938 = vsel %vm2924, %v2935, %v2937
    %v2939 = vshll.u32 %v2899, 8
    %v2940 = vmul.u32.u64.compose %v2939, %v2938
    %v2941 = vextract.low.u32 %v2940
    %v2942 = vextract.high.u32 %v2940
    %v2943 = vmul.u32.u64.compose %v2939, %v2934
    %v2944 = vextract.low.u32 %v2943
    %v2945 = vextract.high.u32 %v2943
    %v2946 = vmul.u32 %v2939, %v2930
    %v2947 = vadd.s32 %v2942, %v2944
    %vm2948 = vc.u32 %v2942, %v2944
    %v2949 = vadd.s32 %v2945, 1
    %v2950 = vsel %vm2948, %v2949, %v2945
    %v2951 = vadd.s32 %v2946, %v2950
    %v2952 = vadd.s32 %v2951, 536870912
    %v2953 = vshrl.u32 %v2952, 30
    %v2954 = vshll.u32 %v2953, 30
    %v2955 = vsub.s32 %v2951, %v2954
    %vm2956 = vcmp.lt.s32.totalorder %v2955, 0
    %v2957 = vsub.s32 0, %v2955
    %v2958 = vsel %vm2956, %v2957, %v2955
    %v2959 = vclz %v2958
    %v2960 = vsub.s32 %v2959, 2
    %vm2961 = vcmp.gt.s32.totalorder 0, %v2960
    %v2962 = vsel %vm2961, 0, %v2960
    %v2963 = vsub.s32 32, %v2962
    %v2964 = vshll.u32 %v2955, %v2962
    %v2965 = vshrl.u32 %v2947, %v2963
    %v2966 = vor.u32 %v2964, %v2965
    %v2967 = vsub.s32 4294967266, %v2962
    %v2968 = vadd.s32 %v2967, 127
    %v2969 = vshll.u32 %v2968, 23
    %v2970 = vor.u32 4788187, %v2969
    %v2971 = vand.u32 2147483647, %v2970
    %v2973 = vcvt.s32.f32 %v2966
    %v2974 = vmul.f32 %v2973, %v2971
    %v2975 = vxor.u32 %v2974, 2147483648
    %v2976 = vsel %vm2893, %v2975, %v2974
    %v2977 = vsub.s32 4, %v2953
    %v2978 = vsel %vm2893, %v2977, %v2953
    %v2979 = vsel %vm2892, %v284, %v2976
    %v2980 = vsel %vm2892, 0, %v2978
    %v2981 = vcosq.f32.pop %v2979
    %v2982 = vsinq.f32.pop %v2979
    %vm2983 = vweird.f32 %v284
    %v2984 = vadd.s32 %v2980, 3
    %v2985 = vand.u32 %v2984, 3
    %vm2986 = vcmp.lt.s32.totalorder %v2985, 2
    %vm2987 = vcmp.eq.s32.totalorder %v2985, 0
    %v2988 = vxor.u32 %v2982, 2147483648
    %v2989 = vsel %vm2987, %v2981, %v2988
    %vm2990 = vcmp.eq.s32.totalorder %v2985, 2
    %v2991 = vxor.u32 %v2981, 2147483648
    %v2992 = vsel %vm2990, %v2991, %v2982
    %v2993 = vsel %vm2986, %v2989, %v2992
    %v2994 = vsel %vm2983, nan, %v2993
    %v2995 = vand.u32 2147483647, %v285
    %vm2996 = vcmp.le.f32.partialorder %v2995, 0.7853982
    %vm2997 = vcmp.lt.s32.totalorder %v285, 0
    %v2998 = vand.u32 %v285, 2139095040
    %v2999 = vshrl.u32 %v2998, 23
    %v3000 = vsub.s32 %v2999, 127
    %v3001 = vand.u32 2147483647, %v285
    %v3002 = vand.u32 %v3001, 8388607
    %v3003 = vor.u32 %v3002, 8388608
    %v3004 = vsub.s32 0, %v3003
    %v3005 = vadd.s32 %v3000, 1
    %vm3006 = vcmp.gt.s32.totalorder %v3005, 0
    %v3007 = vsel %vm3006, %v3005, 0
    %v3008 = vshrl.u32 %v3007, 5
    %v3009 = vand.u32 %v3007, 31
    %v3010 = vsub.s32 32, %v3009
    %v3011 = vshrl.u32 683565275, %v3010
    %v3012 = vshll.u32 683565275, %v3009
    %v3013 = vshrl.u32 2475754826, %v3010
    %v3014 = vor.u32 %v3012, %v3013
    %v3015 = vshll.u32 2475754826, %v3009
    %v3016 = vshrl.u32 2131351028, %v3010
    %v3017 = vor.u32 %v3015, %v3016
    %v3018 = vshll.u32 2131351028, %v3009
    %v3019 = vshrl.u32 2102212464, %v3010
    %v3020 = vor.u32 %v3018, %v3019
    %v3021 = vshll.u32 2102212464, %v3009
    %v3022 = vshrl.u32 920167782, %v3010
    %v3023 = vor.u32 %v3021, %v3022
    %v3024 = vshll.u32 920167782, %v3009
    %v3025 = vshrl.u32 1326507024, %v3010
    %v3026 = vor.u32 %v3024, %v3025
    %vm3027 = vcmp.lt.s32.totalorder %v3008, 1
    %vm3028 = vcmp.lt.s32.totalorder %v3008, 2
    %vm3029 = vcmp.lt.s32.totalorder %v3008, 3
    %vm3030 = vcmp.lt.s32.totalorder %v3008, 4
    %v3031 = vsel %vm3027, %v3011, %v3014
    %v3032 = vsel %vm3030, %v3020, 2102212464
    %v3033 = vsel %vm3029, %v3017, %v3032
    %v3034 = vsel %vm3028, %v3031, %v3033
    %v3035 = vsel %vm3027, %v3014, %v3017
    %v3036 = vsel %vm3030, %v3023, 920167782
    %v3037 = vsel %vm3029, %v3020, %v3036
    %v3038 = vsel %vm3028, %v3035, %v3037
    %v3039 = vsel %vm3027, %v3017, %v3020
    %v3040 = vsel %vm3030, %v3026, 1326507024
    %v3041 = vsel %vm3029, %v3023, %v3040
    %v3042 = vsel %vm3028, %v3039, %v3041
    %v3043 = vshll.u32 %v3003, 8
    %v3044 = vmul.u32.u64.compose %v3043, %v3042
    %v3045 = vextract.low.u32 %v3044
    %v3046 = vextract.high.u32 %v3044
    %v3047 = vmul.u32.u64.compose %v3043, %v3038
    %v3048 = vextract.low.u32 %v3047
    %v3049 = vextract.high.u32 %v3047
    %v3050 = vmul.u32 %v3043, %v3034
    %v3051 = vadd.s32 %v3046, %v3048
    %vm3052 = vc.u32 %v3046, %v3048
    %v3053 = vadd.s32 %v3049, 1
    %v3054 = vsel %vm3052, %v3053, %v3049
    %v3055 = vadd.s32 %v3050, %v3054
    %v3056 = vadd.s32 %v3055, 536870912
    %v3057 = vshrl.u32 %v3056, 30
    %v3058 = vshll.u32 %v3057, 30
    %v3059 = vsub.s32 %v3055, %v3058
    %vm3060 = vcmp.lt.s32.totalorder %v3059, 0
    %v3061 = vsub.s32 0, %v3059
    %v3062 = vsel %vm3060, %v3061, %v3059
    %v3063 = vclz %v3062
    %v3064 = vsub.s32 %v3063, 2
    %vm3065 = vcmp.gt.s32.totalorder 0, %v3064
    %v3066 = vsel %vm3065, 0, %v3064
    %v3067 = vsub.s32 32, %v3066
    %v3068 = vshll.u32 %v3059, %v3066
    %v3069 = vshrl.u32 %v3051, %v3067
    %v3070 = vor.u32 %v3068, %v3069
    %v3071 = vsub.s32 4294967266, %v3066
    %v3072 = vadd.s32 %v3071, 127
    %v3073 = vshll.u32 %v3072, 23
    %v3074 = vor.u32 4788187, %v3073
    %v3075 = vand.u32 2147483647, %v3074
    %v3077 = vcvt.s32.f32 %v3070
    %v3078 = vmul.f32 %v3077, %v3075
    %v3079 = vxor.u32 %v3078, 2147483648
    %v3080 = vsel %vm2997, %v3079, %v3078
    %v3081 = vsub.s32 4, %v3057
    %v3082 = vsel %vm2997, %v3081, %v3057
    %v3083 = vsel %vm2996, %v285, %v3080
    %v3084 = vsel %vm2996, 0, %v3082
    %v3085 = vcosq.f32.pop %v3083
    %v3086 = vsinq.f32.pop %v3083
    %vm3087 = vweird.f32 %v285
    %v3088 = vadd.s32 %v3084, 3
    %v3089 = vand.u32 %v3088, 3
    %vm3090 = vcmp.lt.s32.totalorder %v3089, 2
    %vm3091 = vcmp.eq.s32.totalorder %v3089, 0
    %v3092 = vxor.u32 %v3086, 2147483648
    %v3093 = vsel %vm3091, %v3085, %v3092
    %vm3094 = vcmp.eq.s32.totalorder %v3089, 2
    %v3095 = vxor.u32 %v3085, 2147483648
    %v3096 = vsel %vm3094, %v3095, %v3086
    %v3097 = vsel %vm3090, %v3093, %v3096
    %v3098 = vsel %vm3087, nan, %v3097
    %v3099 = vand.u32 2147483647, %v286
    %vm3100 = vcmp.le.f32.partialorder %v3099, 0.7853982
    %vm3101 = vcmp.lt.s32.totalorder %v286, 0
    %v3102 = vand.u32 %v286, 2139095040
    %v3103 = vshrl.u32 %v3102, 23
    %v3104 = vsub.s32 %v3103, 127
    %v3105 = vand.u32 2147483647, %v286
    %v3106 = vand.u32 %v3105, 8388607
    %v3107 = vor.u32 %v3106, 8388608
    %v3108 = vsub.s32 0, %v3107
    %v3109 = vadd.s32 %v3104, 1
    %vm3110 = vcmp.gt.s32.totalorder %v3109, 0
    %v3111 = vsel %vm3110, %v3109, 0
    %v3112 = vshrl.u32 %v3111, 5
    %v3113 = vand.u32 %v3111, 31
    %v3114 = vsub.s32 32, %v3113
    %v3115 = vshrl.u32 683565275, %v3114
    %v3116 = vshll.u32 683565275, %v3113
    %v3117 = vshrl.u32 2475754826, %v3114
    %v3118 = vor.u32 %v3116, %v3117
    %v3119 = vshll.u32 2475754826, %v3113
    %v3120 = vshrl.u32 2131351028, %v3114
    %v3121 = vor.u32 %v3119, %v3120
    %v3122 = vshll.u32 2131351028, %v3113
    %v3123 = vshrl.u32 2102212464, %v3114
    %v3124 = vor.u32 %v3122, %v3123
    %v3125 = vshll.u32 2102212464, %v3113
    %v3126 = vshrl.u32 920167782, %v3114
    %v3127 = vor.u32 %v3125, %v3126
    %v3128 = vshll.u32 920167782, %v3113
    %v3129 = vshrl.u32 1326507024, %v3114
    %v3130 = vor.u32 %v3128, %v3129
    %vm3131 = vcmp.lt.s32.totalorder %v3112, 1
    %vm3132 = vcmp.lt.s32.totalorder %v3112, 2
    %vm3133 = vcmp.lt.s32.totalorder %v3112, 3
    %vm3134 = vcmp.lt.s32.totalorder %v3112, 4
    %v3135 = vsel %vm3131, %v3115, %v3118
    %v3136 = vsel %vm3134, %v3124, 2102212464
    %v3137 = vsel %vm3133, %v3121, %v3136
    %v3138 = vsel %vm3132, %v3135, %v3137
    %v3139 = vsel %vm3131, %v3118, %v3121
    %v3140 = vsel %vm3134, %v3127, 920167782
    %v3141 = vsel %vm3133, %v3124, %v3140
    %v3142 = vsel %vm3132, %v3139, %v3141
    %v3143 = vsel %vm3131, %v3121, %v3124
    %v3144 = vsel %vm3134, %v3130, 1326507024
    %v3145 = vsel %vm3133, %v3127, %v3144
    %v3146 = vsel %vm3132, %v3143, %v3145
    %v3147 = vshll.u32 %v3107, 8
    %v3148 = vmul.u32.u64.compose %v3147, %v3146
    %v3149 = vextract.low.u32 %v3148
    %v3150 = vextract.high.u32 %v3148
    %v3151 = vmul.u32.u64.compose %v3147, %v3142
    %v3152 = vextract.low.u32 %v3151
    %v3153 = vextract.high.u32 %v3151
    %v3154 = vmul.u32 %v3147, %v3138
    %v3155 = vadd.s32 %v3150, %v3152
    %vm3156 = vc.u32 %v3150, %v3152
    %v3157 = vadd.s32 %v3153, 1
    %v3158 = vsel %vm3156, %v3157, %v3153
    %v3159 = vadd.s32 %v3154, %v3158
    %v3160 = vadd.s32 %v3159, 536870912
    %v3161 = vshrl.u32 %v3160, 30
    %v3162 = vshll.u32 %v3161, 30
    %v3163 = vsub.s32 %v3159, %v3162
    %vm3164 = vcmp.lt.s32.totalorder %v3163, 0
    %v3165 = vsub.s32 0, %v3163
    %v3166 = vsel %vm3164, %v3165, %v3163
    %v3167 = vclz %v3166
    %v3168 = vsub.s32 %v3167, 2
    %vm3169 = vcmp.gt.s32.totalorder 0, %v3168
    %v3170 = vsel %vm3169, 0, %v3168
    %v3171 = vsub.s32 32, %v3170
    %v3172 = vshll.u32 %v3163, %v3170
    %v3173 = vshrl.u32 %v3155, %v3171
    %v3174 = vor.u32 %v3172, %v3173
    %v3175 = vsub.s32 4294967266, %v3170
    %v3176 = vadd.s32 %v3175, 127
    %v3177 = vshll.u32 %v3176, 23
    %v3178 = vor.u32 4788187, %v3177
    %v3179 = vand.u32 2147483647, %v3178
    %v3181 = vcvt.s32.f32 %v3174
    %v3182 = vmul.f32 %v3181, %v3179
    %v3183 = vxor.u32 %v3182, 2147483648
    %v3184 = vsel %vm3101, %v3183, %v3182
    %v3185 = vsub.s32 4, %v3161
    %v3186 = vsel %vm3101, %v3185, %v3161
    %v3187 = vsel %vm3100, %v286, %v3184
    %v3188 = vsel %vm3100, 0, %v3186
    %v3189 = vcosq.f32.pop %v3187
    %v3190 = vsinq.f32.pop %v3187
    %vm3191 = vweird.f32 %v286
    %v3192 = vadd.s32 %v3188, 3
    %v3193 = vand.u32 %v3192, 3
    %vm3194 = vcmp.lt.s32.totalorder %v3193, 2
    %vm3195 = vcmp.eq.s32.totalorder %v3193, 0
    %v3196 = vxor.u32 %v3190, 2147483648
    %v3197 = vsel %vm3195, %v3189, %v3196
    %vm3198 = vcmp.eq.s32.totalorder %v3193, 2
    %v3199 = vxor.u32 %v3189, 2147483648
    %v3200 = vsel %vm3198, %v3199, %v3190
    %v3201 = vsel %vm3194, %v3197, %v3200
    %v3202 = vsel %vm3191, nan, %v3201
    %v3203 = vand.u32 2147483647, %v287
    %vm3204 = vcmp.le.f32.partialorder %v3203, 0.7853982
    %vm3205 = vcmp.lt.s32.totalorder %v287, 0
    %v3206 = vand.u32 %v287, 2139095040
    %v3207 = vshrl.u32 %v3206, 23
    %v3208 = vsub.s32 %v3207, 127
    %v3209 = vand.u32 2147483647, %v287
    %v3210 = vand.u32 %v3209, 8388607
    %v3211 = vor.u32 %v3210, 8388608
    %v3212 = vsub.s32 0, %v3211
    %v3213 = vadd.s32 %v3208, 1
    %vm3214 = vcmp.gt.s32.totalorder %v3213, 0
    %v3215 = vsel %vm3214, %v3213, 0
    %v3216 = vshrl.u32 %v3215, 5
    %v3217 = vand.u32 %v3215, 31
    %v3218 = vsub.s32 32, %v3217
    %v3219 = vshrl.u32 683565275, %v3218
    %v3220 = vshll.u32 683565275, %v3217
    %v3221 = vshrl.u32 2475754826, %v3218
    %v3222 = vor.u32 %v3220, %v3221
    %v3223 = vshll.u32 2475754826, %v3217
    %v3224 = vshrl.u32 2131351028, %v3218
    %v3225 = vor.u32 %v3223, %v3224
    %v3226 = vshll.u32 2131351028, %v3217
    %v3227 = vshrl.u32 2102212464, %v3218
    %v3228 = vor.u32 %v3226, %v3227
    %v3229 = vshll.u32 2102212464, %v3217
    %v3230 = vshrl.u32 920167782, %v3218
    %v3231 = vor.u32 %v3229, %v3230
    %v3232 = vshll.u32 920167782, %v3217
    %v3233 = vshrl.u32 1326507024, %v3218
    %v3234 = vor.u32 %v3232, %v3233
    %vm3235 = vcmp.lt.s32.totalorder %v3216, 1
    %vm3236 = vcmp.lt.s32.totalorder %v3216, 2
    %vm3237 = vcmp.lt.s32.totalorder %v3216, 3
    %vm3238 = vcmp.lt.s32.totalorder %v3216, 4
    %v3239 = vsel %vm3235, %v3219, %v3222
    %v3240 = vsel %vm3238, %v3228, 2102212464
    %v3241 = vsel %vm3237, %v3225, %v3240
    %v3242 = vsel %vm3236, %v3239, %v3241
    %v3243 = vsel %vm3235, %v3222, %v3225
    %v3244 = vsel %vm3238, %v3231, 920167782
    %v3245 = vsel %vm3237, %v3228, %v3244
    %v3246 = vsel %vm3236, %v3243, %v3245
    %v3247 = vsel %vm3235, %v3225, %v3228
    %v3248 = vsel %vm3238, %v3234, 1326507024
    %v3249 = vsel %vm3237, %v3231, %v3248
    %v3250 = vsel %vm3236, %v3247, %v3249
    %v3251 = vshll.u32 %v3211, 8
    %v3252 = vmul.u32.u64.compose %v3251, %v3250
    %v3253 = vextract.low.u32 %v3252
    %v3254 = vextract.high.u32 %v3252
    %v3255 = vmul.u32.u64.compose %v3251, %v3246
    %v3256 = vextract.low.u32 %v3255
    %v3257 = vextract.high.u32 %v3255
    %v3258 = vmul.u32 %v3251, %v3242
    %v3259 = vadd.s32 %v3254, %v3256
    %vm3260 = vc.u32 %v3254, %v3256
    %v3261 = vadd.s32 %v3257, 1
    %v3262 = vsel %vm3260, %v3261, %v3257
    %v3263 = vadd.s32 %v3258, %v3262
    %v3264 = vadd.s32 %v3263, 536870912
    %v3265 = vshrl.u32 %v3264, 30
    %v3266 = vshll.u32 %v3265, 30
    %v3267 = vsub.s32 %v3263, %v3266
    %vm3268 = vcmp.lt.s32.totalorder %v3267, 0
    %v3269 = vsub.s32 0, %v3267
    %v3270 = vsel %vm3268, %v3269, %v3267
    %v3271 = vclz %v3270
    %v3272 = vsub.s32 %v3271, 2
    %vm3273 = vcmp.gt.s32.totalorder 0, %v3272
    %v3274 = vsel %vm3273, 0, %v3272
    %v3275 = vsub.s32 32, %v3274
    %v3276 = vshll.u32 %v3267, %v3274
    %v3277 = vshrl.u32 %v3259, %v3275
    %v3278 = vor.u32 %v3276, %v3277
    %v3279 = vsub.s32 4294967266, %v3274
    %v3280 = vadd.s32 %v3279, 127
    %v3281 = vshll.u32 %v3280, 23
    %v3282 = vor.u32 4788187, %v3281
    %v3283 = vand.u32 2147483647, %v3282
    %v3285 = vcvt.s32.f32 %v3278
    %v3286 = vmul.f32 %v3285, %v3283
    %v3287 = vxor.u32 %v3286, 2147483648
    %v3288 = vsel %vm3205, %v3287, %v3286
    %v3289 = vsub.s32 4, %v3265
    %v3290 = vsel %vm3205, %v3289, %v3265
    %v3291 = vsel %vm3204, %v287, %v3288
    %v3292 = vsel %vm3204, 0, %v3290
    %v3293 = vcosq.f32.pop %v3291
    %v3294 = vsinq.f32.pop %v3291
    %vm3295 = vweird.f32 %v287
    %v3296 = vadd.s32 %v3292, 3
    %v3297 = vand.u32 %v3296, 3
    %vm3298 = vcmp.lt.s32.totalorder %v3297, 2
    %vm3299 = vcmp.eq.s32.totalorder %v3297, 0
    %v3300 = vxor.u32 %v3294, 2147483648
    %v3301 = vsel %vm3299, %v3293, %v3300
    %vm3302 = vcmp.eq.s32.totalorder %v3297, 2
    %v3303 = vxor.u32 %v3293, 2147483648
    %v3304 = vsel %vm3302, %v3303, %v3294
    %v3305 = vsel %vm3298, %v3301, %v3304
    %v3306 = vsel %vm3295, nan, %v3305
    %v3307 = vand.u32 2147483647, %v288
    %vm3308 = vcmp.le.f32.partialorder %v3307, 0.7853982
    %vm3309 = vcmp.lt.s32.totalorder %v288, 0
    %v3310 = vand.u32 %v288, 2139095040
    %v3311 = vshrl.u32 %v3310, 23
    %v3312 = vsub.s32 %v3311, 127
    %v3313 = vand.u32 2147483647, %v288
    %v3314 = vand.u32 %v3313, 8388607
    %v3315 = vor.u32 %v3314, 8388608
    %v3316 = vsub.s32 0, %v3315
    %v3317 = vadd.s32 %v3312, 1
    %vm3318 = vcmp.gt.s32.totalorder %v3317, 0
    %v3319 = vsel %vm3318, %v3317, 0
    %v3320 = vshrl.u32 %v3319, 5
    %v3321 = vand.u32 %v3319, 31
    %v3322 = vsub.s32 32, %v3321
    %v3323 = vshrl.u32 683565275, %v3322
    %v3324 = vshll.u32 683565275, %v3321
    %v3325 = vshrl.u32 2475754826, %v3322
    %v3326 = vor.u32 %v3324, %v3325
    %v3327 = vshll.u32 2475754826, %v3321
    %v3328 = vshrl.u32 2131351028, %v3322
    %v3329 = vor.u32 %v3327, %v3328
    %v3330 = vshll.u32 2131351028, %v3321
    %v3331 = vshrl.u32 2102212464, %v3322
    %v3332 = vor.u32 %v3330, %v3331
    %v3333 = vshll.u32 2102212464, %v3321
    %v3334 = vshrl.u32 920167782, %v3322
    %v3335 = vor.u32 %v3333, %v3334
    %v3336 = vshll.u32 920167782, %v3321
    %v3337 = vshrl.u32 1326507024, %v3322
    %v3338 = vor.u32 %v3336, %v3337
    %vm3339 = vcmp.lt.s32.totalorder %v3320, 1
    %vm3340 = vcmp.lt.s32.totalorder %v3320, 2
    %vm3341 = vcmp.lt.s32.totalorder %v3320, 3
    %vm3342 = vcmp.lt.s32.totalorder %v3320, 4
    %v3343 = vsel %vm3339, %v3323, %v3326
    %v3344 = vsel %vm3342, %v3332, 2102212464
    %v3345 = vsel %vm3341, %v3329, %v3344
    %v3346 = vsel %vm3340, %v3343, %v3345
    %v3347 = vsel %vm3339, %v3326, %v3329
    %v3348 = vsel %vm3342, %v3335, 920167782
    %v3349 = vsel %vm3341, %v3332, %v3348
    %v3350 = vsel %vm3340, %v3347, %v3349
    %v3351 = vsel %vm3339, %v3329, %v3332
    %v3352 = vsel %vm3342, %v3338, 1326507024
    %v3353 = vsel %vm3341, %v3335, %v3352
    %v3354 = vsel %vm3340, %v3351, %v3353
    %v3355 = vshll.u32 %v3315, 8
    %v3356 = vmul.u32.u64.compose %v3355, %v3354
    %v3357 = vextract.low.u32 %v3356
    %v3358 = vextract.high.u32 %v3356
    %v3359 = vmul.u32.u64.compose %v3355, %v3350
    %v3360 = vextract.low.u32 %v3359
    %v3361 = vextract.high.u32 %v3359
    %v3362 = vmul.u32 %v3355, %v3346
    %v3363 = vadd.s32 %v3358, %v3360
    %vm3364 = vc.u32 %v3358, %v3360
    %v3365 = vadd.s32 %v3361, 1
    %v3366 = vsel %vm3364, %v3365, %v3361
    %v3367 = vadd.s32 %v3362, %v3366
    %v3368 = vadd.s32 %v3367, 536870912
    %v3369 = vshrl.u32 %v3368, 30
    %v3370 = vshll.u32 %v3369, 30
    %v3371 = vsub.s32 %v3367, %v3370
    %vm3372 = vcmp.lt.s32.totalorder %v3371, 0
    %v3373 = vsub.s32 0, %v3371
    %v3374 = vsel %vm3372, %v3373, %v3371
    %v3375 = vclz %v3374
    %v3376 = vsub.s32 %v3375, 2
    %vm3377 = vcmp.gt.s32.totalorder 0, %v3376
    %v3378 = vsel %vm3377, 0, %v3376
    %v3379 = vsub.s32 32, %v3378
    %v3380 = vshll.u32 %v3371, %v3378
    %v3381 = vshrl.u32 %v3363, %v3379
    %v3382 = vor.u32 %v3380, %v3381
    %v3383 = vsub.s32 4294967266, %v3378
    %v3384 = vadd.s32 %v3383, 127
    %v3385 = vshll.u32 %v3384, 23
    %v3386 = vor.u32 4788187, %v3385
    %v3387 = vand.u32 2147483647, %v3386
    %v3389 = vcvt.s32.f32 %v3382
    %v3390 = vmul.f32 %v3389, %v3387
    %v3391 = vxor.u32 %v3390, 2147483648
    %v3392 = vsel %vm3309, %v3391, %v3390
    %v3393 = vsub.s32 4, %v3369
    %v3394 = vsel %vm3309, %v3393, %v3369
    %v3395 = vsel %vm3308, %v288, %v3392
    %v3396 = vsel %vm3308, 0, %v3394
    %v3397 = vcosq.f32.pop %v3395
    %v3398 = vsinq.f32.pop %v3395
    %vm3399 = vweird.f32 %v288
    %v3400 = vadd.s32 %v3396, 3
    %v3401 = vand.u32 %v3400, 3
    %vm3402 = vcmp.lt.s32.totalorder %v3401, 2
    %vm3403 = vcmp.eq.s32.totalorder %v3401, 0
    %v3404 = vxor.u32 %v3398, 2147483648
    %v3405 = vsel %vm3403, %v3397, %v3404
    %vm3406 = vcmp.eq.s32.totalorder %v3401, 2
    %v3407 = vxor.u32 %v3397, 2147483648
    %v3408 = vsel %vm3406, %v3407, %v3398
    %v3409 = vsel %vm3402, %v3405, %v3408
    %v3410 = vsel %vm3399, nan, %v3409
    %v3411 = vand.u32 2147483647, %v289
    %vm3412 = vcmp.le.f32.partialorder %v3411, 0.7853982
    %vm3413 = vcmp.lt.s32.totalorder %v289, 0
    %v3414 = vand.u32 %v289, 2139095040
    %v3415 = vshrl.u32 %v3414, 23
    %v3416 = vsub.s32 %v3415, 127
    %v3417 = vand.u32 2147483647, %v289
    %v3418 = vand.u32 %v3417, 8388607
    %v3419 = vor.u32 %v3418, 8388608
    %v3420 = vsub.s32 0, %v3419
    %v3421 = vadd.s32 %v3416, 1
    %vm3422 = vcmp.gt.s32.totalorder %v3421, 0
    %v3423 = vsel %vm3422, %v3421, 0
    %v3424 = vshrl.u32 %v3423, 5
    %v3425 = vand.u32 %v3423, 31
    %v3426 = vsub.s32 32, %v3425
    %v3427 = vshrl.u32 683565275, %v3426
    %v3428 = vshll.u32 683565275, %v3425
    %v3429 = vshrl.u32 2475754826, %v3426
    %v3430 = vor.u32 %v3428, %v3429
    %v3431 = vshll.u32 2475754826, %v3425
    %v3432 = vshrl.u32 2131351028, %v3426
    %v3433 = vor.u32 %v3431, %v3432
    %v3434 = vshll.u32 2131351028, %v3425
    %v3435 = vshrl.u32 2102212464, %v3426
    %v3436 = vor.u32 %v3434, %v3435
    %v3437 = vshll.u32 2102212464, %v3425
    %v3438 = vshrl.u32 920167782, %v3426
    %v3439 = vor.u32 %v3437, %v3438
    %v3440 = vshll.u32 920167782, %v3425
    %v3441 = vshrl.u32 1326507024, %v3426
    %v3442 = vor.u32 %v3440, %v3441
    %vm3443 = vcmp.lt.s32.totalorder %v3424, 1
    %vm3444 = vcmp.lt.s32.totalorder %v3424, 2
    %vm3445 = vcmp.lt.s32.totalorder %v3424, 3
    %vm3446 = vcmp.lt.s32.totalorder %v3424, 4
    %v3447 = vsel %vm3443, %v3427, %v3430
    %v3448 = vsel %vm3446, %v3436, 2102212464
    %v3449 = vsel %vm3445, %v3433, %v3448
    %v3450 = vsel %vm3444, %v3447, %v3449
    %v3451 = vsel %vm3443, %v3430, %v3433
    %v3452 = vsel %vm3446, %v3439, 920167782
    %v3453 = vsel %vm3445, %v3436, %v3452
    %v3454 = vsel %vm3444, %v3451, %v3453
    %v3455 = vsel %vm3443, %v3433, %v3436
    %v3456 = vsel %vm3446, %v3442, 1326507024
    %v3457 = vsel %vm3445, %v3439, %v3456
    %v3458 = vsel %vm3444, %v3455, %v3457
    %v3459 = vshll.u32 %v3419, 8
    %v3460 = vmul.u32.u64.compose %v3459, %v3458
    %v3461 = vextract.low.u32 %v3460
    %v3462 = vextract.high.u32 %v3460
    %v3463 = vmul.u32.u64.compose %v3459, %v3454
    %v3464 = vextract.low.u32 %v3463
    %v3465 = vextract.high.u32 %v3463
    %v3466 = vmul.u32 %v3459, %v3450
    %v3467 = vadd.s32 %v3462, %v3464
    %vm3468 = vc.u32 %v3462, %v3464
    %v3469 = vadd.s32 %v3465, 1
    %v3470 = vsel %vm3468, %v3469, %v3465
    %v3471 = vadd.s32 %v3466, %v3470
    %v3472 = vadd.s32 %v3471, 536870912
    %v3473 = vshrl.u32 %v3472, 30
    %v3474 = vshll.u32 %v3473, 30
    %v3475 = vsub.s32 %v3471, %v3474
    %vm3476 = vcmp.lt.s32.totalorder %v3475, 0
    %v3477 = vsub.s32 0, %v3475
    %v3478 = vsel %vm3476, %v3477, %v3475
    %v3479 = vclz %v3478
    %v3480 = vsub.s32 %v3479, 2
    %vm3481 = vcmp.gt.s32.totalorder 0, %v3480
    %v3482 = vsel %vm3481, 0, %v3480
    %v3483 = vsub.s32 32, %v3482
    %v3484 = vshll.u32 %v3475, %v3482
    %v3485 = vshrl.u32 %v3467, %v3483
    %v3486 = vor.u32 %v3484, %v3485
    %v3487 = vsub.s32 4294967266, %v3482
    %v3488 = vadd.s32 %v3487, 127
    %v3489 = vshll.u32 %v3488, 23
    %v3490 = vor.u32 4788187, %v3489
    %v3491 = vand.u32 2147483647, %v3490
    %v3493 = vcvt.s32.f32 %v3486
    %v3494 = vmul.f32 %v3493, %v3491
    %v3495 = vxor.u32 %v3494, 2147483648
    %v3496 = vsel %vm3413, %v3495, %v3494
    %v3497 = vsub.s32 4, %v3473
    %v3498 = vsel %vm3413, %v3497, %v3473
    %v3499 = vsel %vm3412, %v289, %v3496
    %v3500 = vsel %vm3412, 0, %v3498
    %v3501 = vcosq.f32.pop %v3499
    %v3502 = vsinq.f32.pop %v3499
    %vm3503 = vweird.f32 %v289
    %v3504 = vadd.s32 %v3500, 3
    %v3505 = vand.u32 %v3504, 3
    %vm3506 = vcmp.lt.s32.totalorder %v3505, 2
    %vm3507 = vcmp.eq.s32.totalorder %v3505, 0
    %v3508 = vxor.u32 %v3502, 2147483648
    %v3509 = vsel %vm3507, %v3501, %v3508
    %vm3510 = vcmp.eq.s32.totalorder %v3505, 2
    %v3511 = vxor.u32 %v3501, 2147483648
    %v3512 = vsel %vm3510, %v3511, %v3502
    %v3513 = vsel %vm3506, %v3509, %v3512
    %v3514 = vsel %vm3503, nan, %v3513
    %v3515 = vand.u32 2147483647, %v290
    %vm3516 = vcmp.le.f32.partialorder %v3515, 0.7853982
    %vm3517 = vcmp.lt.s32.totalorder %v290, 0
    %v3518 = vand.u32 %v290, 2139095040
    %v3519 = vshrl.u32 %v3518, 23
    %v3520 = vsub.s32 %v3519, 127
    %v3521 = vand.u32 2147483647, %v290
    %v3522 = vand.u32 %v3521, 8388607
    %v3523 = vor.u32 %v3522, 8388608
    %v3524 = vsub.s32 0, %v3523
    %v3525 = vadd.s32 %v3520, 1
    %vm3526 = vcmp.gt.s32.totalorder %v3525, 0
    %v3527 = vsel %vm3526, %v3525, 0
    %v3528 = vshrl.u32 %v3527, 5
    %v3529 = vand.u32 %v3527, 31
    %v3530 = vsub.s32 32, %v3529
    %v3531 = vshrl.u32 683565275, %v3530
    %v3532 = vshll.u32 683565275, %v3529
    %v3533 = vshrl.u32 2475754826, %v3530
    %v3534 = vor.u32 %v3532, %v3533
    %v3535 = vshll.u32 2475754826, %v3529
    %v3536 = vshrl.u32 2131351028, %v3530
    %v3537 = vor.u32 %v3535, %v3536
    %v3538 = vshll.u32 2131351028, %v3529
    %v3539 = vshrl.u32 2102212464, %v3530
    %v3540 = vor.u32 %v3538, %v3539
    %v3541 = vshll.u32 2102212464, %v3529
    %v3542 = vshrl.u32 920167782, %v3530
    %v3543 = vor.u32 %v3541, %v3542
    %v3544 = vshll.u32 920167782, %v3529
    %v3545 = vshrl.u32 1326507024, %v3530
    %v3546 = vor.u32 %v3544, %v3545
    %vm3547 = vcmp.lt.s32.totalorder %v3528, 1
    %vm3548 = vcmp.lt.s32.totalorder %v3528, 2
    %vm3549 = vcmp.lt.s32.totalorder %v3528, 3
    %vm3550 = vcmp.lt.s32.totalorder %v3528, 4
    %v3551 = vsel %vm3547, %v3531, %v3534
    %v3552 = vsel %vm3550, %v3540, 2102212464
    %v3553 = vsel %vm3549, %v3537, %v3552
    %v3554 = vsel %vm3548, %v3551, %v3553
    %v3555 = vsel %vm3547, %v3534, %v3537
    %v3556 = vsel %vm3550, %v3543, 920167782
    %v3557 = vsel %vm3549, %v3540, %v3556
    %v3558 = vsel %vm3548, %v3555, %v3557
    %v3559 = vsel %vm3547, %v3537, %v3540
    %v3560 = vsel %vm3550, %v3546, 1326507024
    %v3561 = vsel %vm3549, %v3543, %v3560
    %v3562 = vsel %vm3548, %v3559, %v3561
    %v3563 = vshll.u32 %v3523, 8
    %v3564 = vmul.u32.u64.compose %v3563, %v3562
    %v3565 = vextract.low.u32 %v3564
    %v3566 = vextract.high.u32 %v3564
    %v3567 = vmul.u32.u64.compose %v3563, %v3558
    %v3568 = vextract.low.u32 %v3567
    %v3569 = vextract.high.u32 %v3567
    %v3570 = vmul.u32 %v3563, %v3554
    %v3571 = vadd.s32 %v3566, %v3568
    %vm3572 = vc.u32 %v3566, %v3568
    %v3573 = vadd.s32 %v3569, 1
    %v3574 = vsel %vm3572, %v3573, %v3569
    %v3575 = vadd.s32 %v3570, %v3574
    %v3576 = vadd.s32 %v3575, 536870912
    %v3577 = vshrl.u32 %v3576, 30
    %v3578 = vshll.u32 %v3577, 30
    %v3579 = vsub.s32 %v3575, %v3578
    %vm3580 = vcmp.lt.s32.totalorder %v3579, 0
    %v3581 = vsub.s32 0, %v3579
    %v3582 = vsel %vm3580, %v3581, %v3579
    %v3583 = vclz %v3582
    %v3584 = vsub.s32 %v3583, 2
    %vm3585 = vcmp.gt.s32.totalorder 0, %v3584
    %v3586 = vsel %vm3585, 0, %v3584
    %v3587 = vsub.s32 32, %v3586
    %v3588 = vshll.u32 %v3579, %v3586
    %v3589 = vshrl.u32 %v3571, %v3587
    %v3590 = vor.u32 %v3588, %v3589
    %v3591 = vsub.s32 4294967266, %v3586
    %v3592 = vadd.s32 %v3591, 127
    %v3593 = vshll.u32 %v3592, 23
    %v3594 = vor.u32 4788187, %v3593
    %v3595 = vand.u32 2147483647, %v3594
    %v3597 = vcvt.s32.f32 %v3590
    %v3598 = vmul.f32 %v3597, %v3595
    %v3599 = vxor.u32 %v3598, 2147483648
    %v3600 = vsel %vm3517, %v3599, %v3598
    %v3601 = vsub.s32 4, %v3577
    %v3602 = vsel %vm3517, %v3601, %v3577
    %v3603 = vsel %vm3516, %v290, %v3600
    %v3604 = vsel %vm3516, 0, %v3602
    %v3605 = vcosq.f32.pop %v3603
    %v3606 = vsinq.f32.pop %v3603
    %vm3607 = vweird.f32 %v290
    %v3608 = vadd.s32 %v3604, 3
    %v3609 = vand.u32 %v3608, 3
    %vm3610 = vcmp.lt.s32.totalorder %v3609, 2
    %vm3611 = vcmp.eq.s32.totalorder %v3609, 0
    %v3612 = vxor.u32 %v3606, 2147483648
    %v3613 = vsel %vm3611, %v3605, %v3612
    %vm3614 = vcmp.eq.s32.totalorder %v3609, 2
    %v3615 = vxor.u32 %v3605, 2147483648
    %v3616 = vsel %vm3614, %v3615, %v3606
    %v3617 = vsel %vm3610, %v3613, %v3616
    %v3618 = vsel %vm3607, nan, %v3617
    %v3619 = vpack.c.bf16 %v498, %v394
    %v3620 = vpack.c.bf16 %v706, %v602
    %v3621 = vpack.c.bf16 %v914, %v810
    %v3622 = vpack.c.bf16 %v1122, %v1018
    %v3623 = vpack.c.bf16 %v1330, %v1226
    %v3624 = vpack.c.bf16 %v1538, %v1434
    %v3625 = vpack.c.bf16 %v1746, %v1642
    %v3626 = vpack.c.bf16 %v1954, %v1850
    %v3627 = vpack.c.bf16 %v2162, %v2058
    %v3628 = vpack.c.bf16 %v2370, %v2266
    %v3629 = vpack.c.bf16 %v2578, %v2474
    %v3630 = vpack.c.bf16 %v2786, %v2682
    %v3631 = vpack.c.bf16 %v2994, %v2890
    %v3632 = vpack.c.bf16 %v3202, %v3098
    %v3633 = vpack.c.bf16 %v3410, %v3306
    %v3634 = vpack.c.bf16 %v3618, %v3514
    %v3635 = vld [vmem:[%s4] sm:$0xf]
    %v3636 = vld [vmem:[%s4 + $0x4] sm:$0xf]
    %v3637 = vld [vmem:[%s4 + $0x8] sm:$0xf]
    %v3638 = vld [vmem:[%s4 + $0xc] sm:$0xf]
    %v3639 = vld [vmem:[%s4 + $0x10] sm:$0xf]
    %v3640 = vld [vmem:[%s4 + $0x14] sm:$0xf]
    %v3641 = vld [vmem:[%s4 + $0x18] sm:$0xf]
    %v3642 = vld [vmem:[%s4 + $0x1c] sm:$0xf]
    %v3643 = vld [vmem:[%s4 + $0x20] sm:$0xf]
    %v3644 = vld [vmem:[%s4 + $0x24] sm:$0xf]
    %v3645 = vld [vmem:[%s4 + $0x28] sm:$0xf]
    %v3646 = vld [vmem:[%s4 + $0x2c] sm:$0xf]
    %v3647 = vld [vmem:[%s4 + $0x30] sm:$0xf]
    %v3648 = vld [vmem:[%s4 + $0x34] sm:$0xf]
    %v3649 = vld [vmem:[%s4 + $0x38] sm:$0xf]
    %v3650 = vld [vmem:[%s4 + $0x3c] sm:$0xf]
    %v3651 = vld [vmem:[%s5] sm:$0x1]
    %v3653 = vlaneseq
    %v3654 = vshrl.u32 %v3653, 7
    %v3655 = vsub.s32 0, %v3654
    %v3656 = vrot.slane %v3651, %v3655
    %v3674 = vunpack.c.l.b16 %v3635
    %v3675 = vunpack.c.l.b16 %v3636
    %v3676 = vunpack.c.l.b16 %v3637
    %v3677 = vunpack.c.l.b16 %v3638
    %v3678 = vunpack.c.l.b16 %v3639
    %v3679 = vunpack.c.l.b16 %v3640
    %v3680 = vunpack.c.l.b16 %v3641
    %v3681 = vunpack.c.l.b16 %v3642
    %v3682 = vunpack.c.l.b16 %v3643
    %v3683 = vunpack.c.l.b16 %v3644
    %v3684 = vunpack.c.l.b16 %v3645
    %v3685 = vunpack.c.l.b16 %v3646
    %v3686 = vunpack.c.l.b16 %v3647
    %v3687 = vunpack.c.l.b16 %v3648
    %v3688 = vunpack.c.l.b16 %v3649
    %v3689 = vunpack.c.l.b16 %v3650
    %v3690 = vpack.c.b16 %v3675, %v3674
    %v3691 = vpack.c.b16 %v3677, %v3676
    %v3692 = vpack.c.b16 %v3679, %v3678
    %v3693 = vpack.c.b16 %v3681, %v3680
    %v3694 = vpack.c.b16 %v3683, %v3682
    %v3695 = vpack.c.b16 %v3685, %v3684
    %v3696 = vpack.c.b16 %v3687, %v3686
    %v3697 = vpack.c.b16 %v3689, %v3688
    %3706 = vmatprep.subr.bf16.mxu0 0
    %3707 = vmatpush1.bf16.msra.mxu0 %v3690
    %3708 = vmatprep.subr.bf16.mxu0 0
    %3709 = vmatpush1.bf16.msra.mxu0 %v3691
    %3710 = vmatprep.subr.bf16.mxu0 0
    %3711 = vmatpush1.bf16.msra.mxu0 %v3692
    %3712 = vmatprep.subr.bf16.mxu0 0
    %3713 = vmatpush1.bf16.msra.mxu0 %v3693
    %3714 = vmatprep.subr.bf16.mxu0 0
    %3715 = vmatpush1.bf16.msra.mxu0 %v3694
    %3716 = vmatprep.subr.bf16.mxu0 0
    %3717 = vmatpush1.bf16.msra.mxu0 %v3695
    %3718 = vmatprep.subr.bf16.mxu0 0
    %3719 = vmatpush1.bf16.msra.mxu0 %v3696
    %3720 = vmatprep.subr.bf16.mxu0 0
    %3721 = vmatpush1.bf16.msra.mxu0 %v3697
    %3722 = vmatprep.subr.bf16.mxu0 0
    %3723 = vmatpush1.bf16.msra.mxu0 0
    %3724 = vmatprep.subr.bf16.mxu0 0
    %3725 = vmatpush1.bf16.msra.mxu0 0
    %3726 = vmatprep.subr.bf16.mxu0 0
    %3727 = vmatpush1.bf16.msra.mxu0 0
    %3728 = vmatprep.subr.bf16.mxu0 0
    %3729 = vmatpush1.bf16.msra.mxu0 0
    %3730 = vmatprep.subr.bf16.mxu0 0
    %3731 = vmatpush1.bf16.msra.mxu0 0
    %3732 = vmatprep.subr.bf16.mxu0 0
    %3733 = vmatpush1.bf16.msra.mxu0 0
    %3734 = vmatprep.subr.bf16.mxu0 0
    %3735 = vmatpush1.bf16.msra.mxu0 0
    %3736 = vmatprep.subr.bf16.mxu0 0
    %3737 = vmatpush1.bf16.msra.mxu0 0
    %3738 = vmatprep.mubr.bf16.mxu0 0
    %3739 = vmatmul.mubr.bf16.gmra.mrb[0].mxu0 %v3619
    %v3740 = vpop.f32.mrb[0].mxu0
    %v3741 = vadd.f32 %v3656, %v3740
    %v3742 = vpop.f32.mrb[0].mxu0
    %v3743 = vpop.f32.mrb[0].mxu0
    %v3744 = vadd.f32 %v3656, %v3743
    %v3745 = vpop.f32.mrb[0].mxu0
    %3746 = vmatprep.mubr.bf16.mxu0 0
    %3747 = vmatmul.mubr.bf16.gmra.mrb[0].mxu0 %v3620
    %v3748 = vpop.f32.mrb[0].mxu0
    %v3749 = vadd.f32 %v3656, %v3748
    %v3750 = vpop.f32.mrb[0].mxu0
    %v3751 = vpop.f32.mrb[0].mxu0
    %v3752 = vadd.f32 %v3656, %v3751
    %v3753 = vpop.f32.mrb[0].mxu0
    %3754 = vmatprep.mubr.bf16.mxu0 0
    %3755 = vmatmul.mubr.bf16.gmra.mrb[0].mxu0 %v3621
    %v3756 = vpop.f32.mrb[0].mxu0
    %v3757 = vadd.f32 %v3656, %v3756
    %v3758 = vpop.f32.mrb[0].mxu0
    %v3759 = vpop.f32.mrb[0].mxu0
    %v3760 = vadd.f32 %v3656, %v3759
    %v3761 = vpop.f32.mrb[0].mxu0
    %3762 = vmatprep.mubr.bf16.mxu0 0
    %3763 = vmatmul.mubr.bf16.gmra.mrb[0].mxu0 %v3622
    %v3764 = vpop.f32.mrb[0].mxu0
    %v3765 = vadd.f32 %v3656, %v3764
    %v3766 = vpop.f32.mrb[0].mxu0
    %v3767 = vpop.f32.mrb[0].mxu0
    %v3768 = vadd.f32 %v3656, %v3767
    %v3769 = vpop.f32.mrb[0].mxu0
    %3770 = vmatprep.mubr.bf16.mxu0 0
    %3771 = vmatmul.mubr.bf16.gmra.mrb[0].mxu0 %v3623
    %v3772 = vpop.f32.mrb[0].mxu0
    %v3773 = vadd.f32 %v3656, %v3772
    %v3774 = vpop.f32.mrb[0].mxu0
    %v3775 = vpop.f32.mrb[0].mxu0
    %v3776 = vadd.f32 %v3656, %v3775
    %v3777 = vpop.f32.mrb[0].mxu0
    %3778 = vmatprep.mubr.bf16.mxu0 0
    %3779 = vmatmul.mubr.bf16.gmra.mrb[0].mxu0 %v3624
    %v3780 = vpop.f32.mrb[0].mxu0
    %v3781 = vadd.f32 %v3656, %v3780
    %v3782 = vpop.f32.mrb[0].mxu0
    %v3783 = vpop.f32.mrb[0].mxu0
    %v3784 = vadd.f32 %v3656, %v3783
    %v3785 = vpop.f32.mrb[0].mxu0
    %3786 = vmatprep.mubr.bf16.mxu0 0
    %3787 = vmatmul.mubr.bf16.gmra.mrb[0].mxu0 %v3625
    %v3788 = vpop.f32.mrb[0].mxu0
    %v3789 = vadd.f32 %v3656, %v3788
    %v3790 = vpop.f32.mrb[0].mxu0
    %v3791 = vpop.f32.mrb[0].mxu0
    %v3792 = vadd.f32 %v3656, %v3791
    %v3793 = vpop.f32.mrb[0].mxu0
    %3794 = vmatprep.mubr.bf16.mxu0 0
    %3795 = vmatmul.mubr.bf16.gmra.mrb[0].mxu0 %v3626
    %v3796 = vpop.f32.mrb[0].mxu0
    %v3797 = vadd.f32 %v3656, %v3796
    %v3798 = vpop.f32.mrb[0].mxu0
    %v3799 = vpop.f32.mrb[0].mxu0
    %v3800 = vadd.f32 %v3656, %v3799
    %v3801 = vpop.f32.mrb[0].mxu0
    %3802 = vmatprep.mubr.bf16.mxu0 0
    %3803 = vmatmul.mubr.bf16.gmra.mrb[0].mxu0 %v3627
    %v3804 = vpop.f32.mrb[0].mxu0
    %v3805 = vadd.f32 %v3656, %v3804
    %v3806 = vpop.f32.mrb[0].mxu0
    %v3807 = vpop.f32.mrb[0].mxu0
    %v3808 = vadd.f32 %v3656, %v3807
    %v3809 = vpop.f32.mrb[0].mxu0
    %3810 = vmatprep.mubr.bf16.mxu0 0
    %3811 = vmatmul.mubr.bf16.gmra.mrb[0].mxu0 %v3628
    %v3812 = vpop.f32.mrb[0].mxu0
    %v3813 = vadd.f32 %v3656, %v3812
    %v3814 = vpop.f32.mrb[0].mxu0
    %v3815 = vpop.f32.mrb[0].mxu0
    %v3816 = vadd.f32 %v3656, %v3815
    %v3817 = vpop.f32.mrb[0].mxu0
    %3818 = vmatprep.mubr.bf16.mxu0 0
    %3819 = vmatmul.mubr.bf16.gmra.mrb[0].mxu0 %v3629
    %v3820 = vpop.f32.mrb[0].mxu0
    %v3821 = vadd.f32 %v3656, %v3820
    %v3822 = vpop.f32.mrb[0].mxu0
    %v3823 = vpop.f32.mrb[0].mxu0
    %v3824 = vadd.f32 %v3656, %v3823
    %v3825 = vpop.f32.mrb[0].mxu0
    %3826 = vmatprep.mubr.bf16.mxu0 0
    %3827 = vmatmul.mubr.bf16.gmra.mrb[0].mxu0 %v3630
    %v3828 = vpop.f32.mrb[0].mxu0
    %v3829 = vadd.f32 %v3656, %v3828
    %v3830 = vpop.f32.mrb[0].mxu0
    %v3831 = vpop.f32.mrb[0].mxu0
    %v3832 = vadd.f32 %v3656, %v3831
    %v3833 = vpop.f32.mrb[0].mxu0
    %3834 = vmatprep.mubr.bf16.mxu0 0
    %3835 = vmatmul.mubr.bf16.gmra.mrb[0].mxu0 %v3631
    %v3836 = vpop.f32.mrb[0].mxu0
    %v3837 = vadd.f32 %v3656, %v3836
    %v3838 = vpop.f32.mrb[0].mxu0
    %v3839 = vpop.f32.mrb[0].mxu0
    %v3840 = vadd.f32 %v3656, %v3839
    %v3841 = vpop.f32.mrb[0].mxu0
    %3842 = vmatprep.mubr.bf16.mxu0 0
    %3843 = vmatmul.mubr.bf16.gmra.mrb[0].mxu0 %v3632
    %v3844 = vpop.f32.mrb[0].mxu0
    %v3845 = vadd.f32 %v3656, %v3844
    %v3846 = vpop.f32.mrb[0].mxu0
    %v3847 = vpop.f32.mrb[0].mxu0
    %v3848 = vadd.f32 %v3656, %v3847
    %v3849 = vpop.f32.mrb[0].mxu0
    %3850 = vmatprep.mubr.bf16.mxu0 0
    %3851 = vmatmul.mubr.bf16.gmra.mrb[0].mxu0 %v3633
    %v3852 = vpop.f32.mrb[0].mxu0
    %v3853 = vadd.f32 %v3656, %v3852
    %v3854 = vpop.f32.mrb[0].mxu0
    %v3855 = vpop.f32.mrb[0].mxu0
    %v3856 = vadd.f32 %v3656, %v3855
    %v3857 = vpop.f32.mrb[0].mxu0
    %3858 = vmatprep.mubr.bf16.mxu0 0
    %3859 = vmatmul.mubr.bf16.gmra.mrb[0].mxu0 %v3634
    %v3860 = vpop.f32.mrb[0].mxu0
    %v3861 = vadd.f32 %v3656, %v3860
    %v3862 = vpop.f32.mrb[0].mxu0
    %v3863 = vpop.f32.mrb[0].mxu0
    %v3864 = vadd.f32 %v3656, %v3863
    %v3865 = vpop.f32.mrb[0].mxu0
    %3866 = vdwg.mxu0
    %v3867 = vsub.f32 0.0, %v3741
    %v3868 = vsub.f32 0.0, %v3744
    %v3869 = vsub.f32 0.0, %v3749
    %v3870 = vsub.f32 0.0, %v3752
    %v3871 = vsub.f32 0.0, %v3757
    %v3872 = vsub.f32 0.0, %v3760
    %v3873 = vsub.f32 0.0, %v3765
    %v3874 = vsub.f32 0.0, %v3768
    %v3875 = vsub.f32 0.0, %v3773
    %v3876 = vsub.f32 0.0, %v3776
    %v3877 = vsub.f32 0.0, %v3781
    %v3878 = vsub.f32 0.0, %v3784
    %v3879 = vsub.f32 0.0, %v3789
    %v3880 = vsub.f32 0.0, %v3792
    %v3881 = vsub.f32 0.0, %v3797
    %v3882 = vsub.f32 0.0, %v3800
    %v3883 = vsub.f32 0.0, %v3805
    %v3884 = vsub.f32 0.0, %v3808
    %v3885 = vsub.f32 0.0, %v3813
    %v3886 = vsub.f32 0.0, %v3816
    %v3887 = vsub.f32 0.0, %v3821
    %v3888 = vsub.f32 0.0, %v3824
    %v3889 = vsub.f32 0.0, %v3829
    %v3890 = vsub.f32 0.0, %v3832
    %v3891 = vsub.f32 0.0, %v3837
    %v3892 = vsub.f32 0.0, %v3840
    %v3893 = vsub.f32 0.0, %v3845
    %v3894 = vsub.f32 0.0, %v3848
    %v3895 = vsub.f32 0.0, %v3853
    %v3896 = vsub.f32 0.0, %v3856
    %v3897 = vsub.f32 0.0, %v3861
    %v3898 = vsub.f32 0.0, %v3864
    %v3899 = vmul.f32 %v3867, 1.442695
    %v3900 = vpow.pop %v3899
    %v3901 = vmul.f32 %v3868, 1.442695
    %v3902 = vpow.pop %v3901
    %v3903 = vmul.f32 %v3869, 1.442695
    %v3904 = vpow.pop %v3903
    %v3905 = vmul.f32 %v3870, 1.442695
    %v3906 = vpow.pop %v3905
    %v3907 = vmul.f32 %v3871, 1.442695
    %v3908 = vpow.pop %v3907
    %v3909 = vmul.f32 %v3872, 1.442695
    %v3910 = vpow.pop %v3909
    %v3911 = vmul.f32 %v3873, 1.442695
    %v3912 = vpow.pop %v3911
    %v3913 = vmul.f32 %v3874, 1.442695
    %v3914 = vpow.pop %v3913
    %v3915 = vmul.f32 %v3875, 1.442695
    %v3916 = vpow.pop %v3915
    %v3917 = vmul.f32 %v3876, 1.442695
    %v3918 = vpow.pop %v3917
    %v3919 = vmul.f32 %v3877, 1.442695
    %v3920 = vpow.pop %v3919
    %v3921 = vmul.f32 %v3878, 1.442695
    %v3922 = vpow.pop %v3921
    %v3923 = vmul.f32 %v3879, 1.442695
    %v3924 = vpow.pop %v3923
    %v3925 = vmul.f32 %v3880, 1.442695
    %v3926 = vpow.pop %v3925
    %v3927 = vmul.f32 %v3881, 1.442695
    %v3928 = vpow.pop %v3927
    %v3929 = vmul.f32 %v3882, 1.442695
    %v3930 = vpow.pop %v3929
    %v3931 = vmul.f32 %v3883, 1.442695
    %v3932 = vpow.pop %v3931
    %v3933 = vmul.f32 %v3884, 1.442695
    %v3934 = vpow.pop %v3933
    %v3935 = vmul.f32 %v3885, 1.442695
    %v3936 = vpow.pop %v3935
    %v3937 = vmul.f32 %v3886, 1.442695
    %v3938 = vpow.pop %v3937
    %v3939 = vmul.f32 %v3887, 1.442695
    %v3940 = vpow.pop %v3939
    %v3941 = vmul.f32 %v3888, 1.442695
    %v3942 = vpow.pop %v3941
    %v3943 = vmul.f32 %v3889, 1.442695
    %v3944 = vpow.pop %v3943
    %v3945 = vmul.f32 %v3890, 1.442695
    %v3946 = vpow.pop %v3945
    %v3947 = vmul.f32 %v3891, 1.442695
    %v3948 = vpow.pop %v3947
    %v3949 = vmul.f32 %v3892, 1.442695
    %v3950 = vpow.pop %v3949
    %v3951 = vmul.f32 %v3893, 1.442695
    %v3952 = vpow.pop %v3951
    %v3953 = vmul.f32 %v3894, 1.442695
    %v3954 = vpow.pop %v3953
    %v3955 = vmul.f32 %v3895, 1.442695
    %v3956 = vpow.pop %v3955
    %v3957 = vmul.f32 %v3896, 1.442695
    %v3958 = vpow.pop %v3957
    %v3959 = vmul.f32 %v3897, 1.442695
    %v3960 = vpow.pop %v3959
    %v3961 = vmul.f32 %v3898, 1.442695
    %v3962 = vpow.pop %v3961
    %v3963 = vadd.f32 %v3900, 1.0
    %v3964 = vadd.f32 %v3902, 1.0
    %v3965 = vadd.f32 %v3904, 1.0
    %v3966 = vadd.f32 %v3906, 1.0
    %v3967 = vadd.f32 %v3908, 1.0
    %v3968 = vadd.f32 %v3910, 1.0
    %v3969 = vadd.f32 %v3912, 1.0
    %v3970 = vadd.f32 %v3914, 1.0
    %v3971 = vadd.f32 %v3916, 1.0
    %v3972 = vadd.f32 %v3918, 1.0
    %v3973 = vadd.f32 %v3920, 1.0
    %v3974 = vadd.f32 %v3922, 1.0
    %v3975 = vadd.f32 %v3924, 1.0
    %v3976 = vadd.f32 %v3926, 1.0
    %v3977 = vadd.f32 %v3928, 1.0
    %v3978 = vadd.f32 %v3930, 1.0
    %v3979 = vadd.f32 %v3932, 1.0
    %v3980 = vadd.f32 %v3934, 1.0
    %v3981 = vadd.f32 %v3936, 1.0
    %v3982 = vadd.f32 %v3938, 1.0
    %v3983 = vadd.f32 %v3940, 1.0
    %v3984 = vadd.f32 %v3942, 1.0
    %v3985 = vadd.f32 %v3944, 1.0
    %v3986 = vadd.f32 %v3946, 1.0
    %v3987 = vadd.f32 %v3948, 1.0
    %v3988 = vadd.f32 %v3950, 1.0
    %v3989 = vadd.f32 %v3952, 1.0
    %v3990 = vadd.f32 %v3954, 1.0
    %v3991 = vadd.f32 %v3956, 1.0
    %v3992 = vadd.f32 %v3958, 1.0
    %v3993 = vadd.f32 %v3960, 1.0
    %v3994 = vadd.f32 %v3962, 1.0
    %v3995 = vrcp.pop %v3963
    %v3996 = vrcp.pop %v3964
    %v3997 = vrcp.pop %v3965
    %v3998 = vrcp.pop %v3966
    %v3999 = vrcp.pop %v3967
    %v4000 = vrcp.pop %v3968
    %v4001 = vrcp.pop %v3969
    %v4002 = vrcp.pop %v3970
    %v4003 = vrcp.pop %v3971
    %v4004 = vrcp.pop %v3972
    %v4005 = vrcp.pop %v3973
    %v4006 = vrcp.pop %v3974
    %v4007 = vrcp.pop %v3975
    %v4008 = vrcp.pop %v3976
    %v4009 = vrcp.pop %v3977
    %v4010 = vrcp.pop %v3978
    %v4011 = vrcp.pop %v3979
    %v4012 = vrcp.pop %v3980
    %v4013 = vrcp.pop %v3981
    %v4014 = vrcp.pop %v3982
    %v4015 = vrcp.pop %v3983
    %v4016 = vrcp.pop %v3984
    %v4017 = vrcp.pop %v3985
    %v4018 = vrcp.pop %v3986
    %v4019 = vrcp.pop %v3987
    %v4020 = vrcp.pop %v3988
    %v4021 = vrcp.pop %v3989
    %v4022 = vrcp.pop %v3990
    %v4023 = vrcp.pop %v3991
    %v4024 = vrcp.pop %v3992
    %v4025 = vrcp.pop %v3993
    %v4026 = vrcp.pop %v3994
    %v4027 = vmul.f32 %v3741, %v3995
    %v4028 = vmul.f32 %v3744, %v3996
    %v4029 = vmul.f32 %v3749, %v3997
    %v4030 = vmul.f32 %v3752, %v3998
    %v4031 = vmul.f32 %v3757, %v3999
    %v4032 = vmul.f32 %v3760, %v4000
    %v4033 = vmul.f32 %v3765, %v4001
    %v4034 = vmul.f32 %v3768, %v4002
    %v4035 = vmul.f32 %v3773, %v4003
    %v4036 = vmul.f32 %v3776, %v4004
    %v4037 = vmul.f32 %v3781, %v4005
    %v4038 = vmul.f32 %v3784, %v4006
    %v4039 = vmul.f32 %v3789, %v4007
    %v4040 = vmul.f32 %v3792, %v4008
    %v4041 = vmul.f32 %v3797, %v4009
    %v4042 = vmul.f32 %v3800, %v4010
    %v4043 = vmul.f32 %v3805, %v4011
    %v4044 = vmul.f32 %v3808, %v4012
    %v4045 = vmul.f32 %v3813, %v4013
    %v4046 = vmul.f32 %v3816, %v4014
    %v4047 = vmul.f32 %v3821, %v4015
    %v4048 = vmul.f32 %v3824, %v4016
    %v4049 = vmul.f32 %v3829, %v4017
    %v4050 = vmul.f32 %v3832, %v4018
    %v4051 = vmul.f32 %v3837, %v4019
    %v4052 = vmul.f32 %v3840, %v4020
    %v4053 = vmul.f32 %v3845, %v4021
    %v4054 = vmul.f32 %v3848, %v4022
    %v4055 = vmul.f32 %v3853, %v4023
    %v4056 = vmul.f32 %v3856, %v4024
    %v4057 = vmul.f32 %v3861, %v4025
    %v4058 = vmul.f32 %v3864, %v4026
    %v4059 = vld [vmem:[%s0] sm:$0xff]
    %v4060 = vld [vmem:[%s0 + $0x8] sm:$0xff]
    %v4061 = vld [vmem:[%s0 + $0x10] sm:$0xff]
    %v4062 = vld [vmem:[%s0 + $0x18] sm:$0xff]
    %v4063 = vld [vmem:[%s0 + $0x20] sm:$0xff]
    %v4064 = vld [vmem:[%s0 + $0x28] sm:$0xff]
    %v4065 = vld [vmem:[%s0 + $0x30] sm:$0xff]
    %v4066 = vld [vmem:[%s0 + $0x38] sm:$0xff]
    %v4067 = vld [vmem:[%s0 + $0x40] sm:$0xff]
    %v4068 = vld [vmem:[%s0 + $0x48] sm:$0xff]
    %v4069 = vld [vmem:[%s0 + $0x50] sm:$0xff]
    %v4070 = vld [vmem:[%s0 + $0x58] sm:$0xff]
    %v4071 = vld [vmem:[%s0 + $0x60] sm:$0xff]
    %v4072 = vld [vmem:[%s0 + $0x68] sm:$0xff]
    %v4073 = vld [vmem:[%s0 + $0x70] sm:$0xff]
    %v4074 = vld [vmem:[%s0 + $0x78] sm:$0xff]
    %v4075 = vld [vmem:[%s0 + $0x80] sm:$0xff]
    %v4076 = vld [vmem:[%s0 + $0x88] sm:$0xff]
    %v4077 = vld [vmem:[%s0 + $0x90] sm:$0xff]
    %v4078 = vld [vmem:[%s0 + $0x98] sm:$0xff]
    %v4079 = vld [vmem:[%s0 + $0xa0] sm:$0xff]
    %v4080 = vld [vmem:[%s0 + $0xa8] sm:$0xff]
    %v4081 = vld [vmem:[%s0 + $0xb0] sm:$0xff]
    %v4082 = vld [vmem:[%s0 + $0xb8] sm:$0xff]
    %v4083 = vld [vmem:[%s0 + $0xc0] sm:$0xff]
    %v4084 = vld [vmem:[%s0 + $0xc8] sm:$0xff]
    %v4085 = vld [vmem:[%s0 + $0xd0] sm:$0xff]
    %v4086 = vld [vmem:[%s0 + $0xd8] sm:$0xff]
    %v4087 = vld [vmem:[%s0 + $0xe0] sm:$0xff]
    %v4088 = vld [vmem:[%s0 + $0xe8] sm:$0xff]
    %v4089 = vld [vmem:[%s0 + $0xf0] sm:$0xff]
    %v4090 = vld [vmem:[%s0 + $0xf8] sm:$0xff]
    %v4091 = vpack.c.bf16 %v4060, %v4059
    %v4092 = vpack.c.bf16 %v4062, %v4061
    %v4093 = vpack.c.bf16 %v4064, %v4063
    %v4094 = vpack.c.bf16 %v4066, %v4065
    %v4095 = vpack.c.bf16 %v4068, %v4067
    %v4096 = vpack.c.bf16 %v4070, %v4069
    %v4097 = vpack.c.bf16 %v4072, %v4071
    %v4098 = vpack.c.bf16 %v4074, %v4073
    %v4099 = vpack.c.bf16 %v4076, %v4075
    %v4100 = vpack.c.bf16 %v4078, %v4077
    %v4101 = vpack.c.bf16 %v4080, %v4079
    %v4102 = vpack.c.bf16 %v4082, %v4081
    %v4103 = vpack.c.bf16 %v4084, %v4083
    %v4104 = vpack.c.bf16 %v4086, %v4085
    %v4105 = vpack.c.bf16 %v4088, %v4087
    %v4106 = vpack.c.bf16 %v4090, %v4089
    %v4107 = vld [vmem:[%s3] sm:$0xf]
    %v4108 = vld [vmem:[%s3 + $0x4] sm:$0xf]
    %s4109 = scalar_lea.vmem %s5, 1
    %v4110 = vld [vmem:[%s4109] sm:$0x1]
    %v4112 = vlaneseq
    %v4113 = vshrl.u32 %v4112, 7
    %v4114 = vsub.s32 0, %v4113
    %v4115 = vrot.slane %v4110, %v4114
    %v4119 = vunpack.c.l.b16 %v4107
    %v4120 = vunpack.c.l.b16 %v4108
    %v4121 = vpack.c.b16 %v4120, %v4119
    %vm4123 = vcmask 130048
    %v4125 = vsel %vm4123, %v4091, 0
    %v4128 = vsel %vm4123, %v4092, 0
    %v4131 = vsel %vm4123, %v4093, 0
    %v4134 = vsel %vm4123, %v4094, 0
    %v4137 = vsel %vm4123, %v4095, 0
    %v4140 = vsel %vm4123, %v4096, 0
    %v4143 = vsel %vm4123, %v4097, 0
    %v4146 = vsel %vm4123, %v4098, 0
    %v4149 = vsel %vm4123, %v4099, 0
    %v4152 = vsel %vm4123, %v4100, 0
    %v4155 = vsel %vm4123, %v4101, 0
    %v4158 = vsel %vm4123, %v4102, 0
    %v4161 = vsel %vm4123, %v4103, 0
    %v4164 = vsel %vm4123, %v4104, 0
    %v4167 = vsel %vm4123, %v4105, 0
    %v4170 = vsel %vm4123, %v4106, 0
    %4172 = vmatprep.subr.bf16.mxu0 0
    %4173 = vmatpush1.bf16.msra.mxu0 %v4121
    %4174 = vmatprep.subr.bf16.mxu0 0
    %4175 = vmatpush1.bf16.msra.mxu0 0
    %4176 = vmatprep.subr.bf16.mxu0 0
    %4177 = vmatpush1.bf16.msra.mxu0 0
    %4178 = vmatprep.subr.bf16.mxu0 0
    %4179 = vmatpush1.bf16.msra.mxu0 0
    %4180 = vmatprep.subr.bf16.mxu0 0
    %4181 = vmatpush1.bf16.msra.mxu0 0
    %4182 = vmatprep.subr.bf16.mxu0 0
    %4183 = vmatpush1.bf16.msra.mxu0 0
    %4184 = vmatprep.subr.bf16.mxu0 0
    %4185 = vmatpush1.bf16.msra.mxu0 0
    %4186 = vmatprep.subr.bf16.mxu0 0
    %4187 = vmatpush1.bf16.msra.mxu0 0
    %4188 = vmatprep.subr.bf16.mxu0 0
    %4189 = vmatpush1.bf16.msra.mxu0 0
    %4190 = vmatprep.subr.bf16.mxu0 0
    %4191 = vmatpush1.bf16.msra.mxu0 0
    %4192 = vmatprep.subr.bf16.mxu0 0
    %4193 = vmatpush1.bf16.msra.mxu0 0
    %4194 = vmatprep.subr.bf16.mxu0 0
    %4195 = vmatpush1.bf16.msra.mxu0 0
    %4196 = vmatprep.subr.bf16.mxu0 0
    %4197 = vmatpush1.bf16.msra.mxu0 0
    %4198 = vmatprep.subr.bf16.mxu0 0
    %4199 = vmatpush1.bf16.msra.mxu0 0
    %4200 = vmatprep.subr.bf16.mxu0 0
    %4201 = vmatpush1.bf16.msra.mxu0 0
    %4202 = vmatprep.subr.bf16.mxu0 0
    %4203 = vmatpush1.bf16.msra.mxu0 0
    %4204 = vmatprep.mubr.bf16.mxu0 0
    %4205 = vmatmul.mubr.bf16.gmra.mrb[0].mxu0 %v4125
    %v4206 = vpop.f32.mrb[0].mxu0
    %v4207 = vadd.f32 %v4115, %v4206
    %v4208 = vpop.f32.mrb[0].mxu0
    %v4209 = vpop.f32.mrb[0].mxu0
    %v4210 = vadd.f32 %v4115, %v4209
    %v4211 = vpop.f32.mrb[0].mxu0
    %4212 = vmatprep.mubr.bf16.mxu0 0
    %4213 = vmatmul.mubr.bf16.gmra.mrb[0].mxu0 %v4128
    %v4214 = vpop.f32.mrb[0].mxu0
    %v4215 = vadd.f32 %v4115, %v4214
    %v4216 = vpop.f32.mrb[0].mxu0
    %v4217 = vpop.f32.mrb[0].mxu0
    %v4218 = vadd.f32 %v4115, %v4217
    %v4219 = vpop.f32.mrb[0].mxu0
    %4220 = vmatprep.mubr.bf16.mxu0 0
    %4221 = vmatmul.mubr.bf16.gmra.mrb[0].mxu0 %v4131
    %v4222 = vpop.f32.mrb[0].mxu0
    %v4223 = vadd.f32 %v4115, %v4222
    %v4224 = vpop.f32.mrb[0].mxu0
    %v4225 = vpop.f32.mrb[0].mxu0
    %v4226 = vadd.f32 %v4115, %v4225
    %v4227 = vpop.f32.mrb[0].mxu0
    %4228 = vmatprep.mubr.bf16.mxu0 0
    %4229 = vmatmul.mubr.bf16.gmra.mrb[0].mxu0 %v4134
    %v4230 = vpop.f32.mrb[0].mxu0
    %v4231 = vadd.f32 %v4115, %v4230
    %v4232 = vpop.f32.mrb[0].mxu0
    %v4233 = vpop.f32.mrb[0].mxu0
    %v4234 = vadd.f32 %v4115, %v4233
    %v4235 = vpop.f32.mrb[0].mxu0
    %4236 = vmatprep.mubr.bf16.mxu0 0
    %4237 = vmatmul.mubr.bf16.gmra.mrb[0].mxu0 %v4137
    %v4238 = vpop.f32.mrb[0].mxu0
    %v4239 = vadd.f32 %v4115, %v4238
    %v4240 = vpop.f32.mrb[0].mxu0
    %v4241 = vpop.f32.mrb[0].mxu0
    %v4242 = vadd.f32 %v4115, %v4241
    %v4243 = vpop.f32.mrb[0].mxu0
    %4244 = vmatprep.mubr.bf16.mxu0 0
    %4245 = vmatmul.mubr.bf16.gmra.mrb[0].mxu0 %v4140
    %v4246 = vpop.f32.mrb[0].mxu0
    %v4247 = vadd.f32 %v4115, %v4246
    %v4248 = vpop.f32.mrb[0].mxu0
    %v4249 = vpop.f32.mrb[0].mxu0
    %v4250 = vadd.f32 %v4115, %v4249
    %v4251 = vpop.f32.mrb[0].mxu0
    %4252 = vmatprep.mubr.bf16.mxu0 0
    %4253 = vmatmul.mubr.bf16.gmra.mrb[0].mxu0 %v4143
    %v4254 = vpop.f32.mrb[0].mxu0
    %v4255 = vadd.f32 %v4115, %v4254
    %v4256 = vpop.f32.mrb[0].mxu0
    %v4257 = vpop.f32.mrb[0].mxu0
    %v4258 = vadd.f32 %v4115, %v4257
    %v4259 = vpop.f32.mrb[0].mxu0
    %4260 = vmatprep.mubr.bf16.mxu0 0
    %4261 = vmatmul.mubr.bf16.gmra.mrb[0].mxu0 %v4146
    %v4262 = vpop.f32.mrb[0].mxu0
    %v4263 = vadd.f32 %v4115, %v4262
    %v4264 = vpop.f32.mrb[0].mxu0
    %v4265 = vpop.f32.mrb[0].mxu0
    %v4266 = vadd.f32 %v4115, %v4265
    %v4267 = vpop.f32.mrb[0].mxu0
    %4268 = vmatprep.mubr.bf16.mxu0 0
    %4269 = vmatmul.mubr.bf16.gmra.mrb[0].mxu0 %v4149
    %v4270 = vpop.f32.mrb[0].mxu0
    %v4271 = vadd.f32 %v4115, %v4270
    %v4272 = vpop.f32.mrb[0].mxu0
    %v4273 = vpop.f32.mrb[0].mxu0
    %v4274 = vadd.f32 %v4115, %v4273
    %v4275 = vpop.f32.mrb[0].mxu0
    %4276 = vmatprep.mubr.bf16.mxu0 0
    %4277 = vmatmul.mubr.bf16.gmra.mrb[0].mxu0 %v4152
    %v4278 = vpop.f32.mrb[0].mxu0
    %v4279 = vadd.f32 %v4115, %v4278
    %v4280 = vpop.f32.mrb[0].mxu0
    %v4281 = vpop.f32.mrb[0].mxu0
    %v4282 = vadd.f32 %v4115, %v4281
    %v4283 = vpop.f32.mrb[0].mxu0
    %4284 = vmatprep.mubr.bf16.mxu0 0
    %4285 = vmatmul.mubr.bf16.gmra.mrb[0].mxu0 %v4155
    %v4286 = vpop.f32.mrb[0].mxu0
    %v4287 = vadd.f32 %v4115, %v4286
    %v4288 = vpop.f32.mrb[0].mxu0
    %v4289 = vpop.f32.mrb[0].mxu0
    %v4290 = vadd.f32 %v4115, %v4289
    %v4291 = vpop.f32.mrb[0].mxu0
    %4292 = vmatprep.mubr.bf16.mxu0 0
    %4293 = vmatmul.mubr.bf16.gmra.mrb[0].mxu0 %v4158
    %v4294 = vpop.f32.mrb[0].mxu0
    %v4295 = vadd.f32 %v4115, %v4294
    %v4296 = vpop.f32.mrb[0].mxu0
    %v4297 = vpop.f32.mrb[0].mxu0
    %v4298 = vadd.f32 %v4115, %v4297
    %v4299 = vpop.f32.mrb[0].mxu0
    %4300 = vmatprep.mubr.bf16.mxu0 0
    %4301 = vmatmul.mubr.bf16.gmra.mrb[0].mxu0 %v4161
    %v4302 = vpop.f32.mrb[0].mxu0
    %v4303 = vadd.f32 %v4115, %v4302
    %v4304 = vpop.f32.mrb[0].mxu0
    %v4305 = vpop.f32.mrb[0].mxu0
    %v4306 = vadd.f32 %v4115, %v4305
    %v4307 = vpop.f32.mrb[0].mxu0
    %4308 = vmatprep.mubr.bf16.mxu0 0
    %4309 = vmatmul.mubr.bf16.gmra.mrb[0].mxu0 %v4164
    %v4310 = vpop.f32.mrb[0].mxu0
    %v4311 = vadd.f32 %v4115, %v4310
    %v4312 = vpop.f32.mrb[0].mxu0
    %v4313 = vpop.f32.mrb[0].mxu0
    %v4314 = vadd.f32 %v4115, %v4313
    %v4315 = vpop.f32.mrb[0].mxu0
    %4316 = vmatprep.mubr.bf16.mxu0 0
    %4317 = vmatmul.mubr.bf16.gmra.mrb[0].mxu0 %v4167
    %v4318 = vpop.f32.mrb[0].mxu0
    %v4319 = vadd.f32 %v4115, %v4318
    %v4320 = vpop.f32.mrb[0].mxu0
    %v4321 = vpop.f32.mrb[0].mxu0
    %v4322 = vadd.f32 %v4115, %v4321
    %v4323 = vpop.f32.mrb[0].mxu0
    %4324 = vmatprep.mubr.bf16.mxu0 0
    %4325 = vmatmul.mubr.bf16.gmra.mrb[0].mxu0 %v4170
    %v4326 = vpop.f32.mrb[0].mxu0
    %v4327 = vadd.f32 %v4115, %v4326
    %v4328 = vpop.f32.mrb[0].mxu0
    %v4329 = vpop.f32.mrb[0].mxu0
    %v4330 = vadd.f32 %v4115, %v4329
    %v4331 = vpop.f32.mrb[0].mxu0
    %4332 = vdwg.mxu0
    %v4333 = vsub.f32 0.0, %v4207
    %v4334 = vsub.f32 0.0, %v4210
    %v4335 = vsub.f32 0.0, %v4215
    %v4336 = vsub.f32 0.0, %v4218
    %v4337 = vsub.f32 0.0, %v4223
    %v4338 = vsub.f32 0.0, %v4226
    %v4339 = vsub.f32 0.0, %v4231
    %v4340 = vsub.f32 0.0, %v4234
    %v4341 = vsub.f32 0.0, %v4239
    %v4342 = vsub.f32 0.0, %v4242
    %v4343 = vsub.f32 0.0, %v4247
    %v4344 = vsub.f32 0.0, %v4250
    %v4345 = vsub.f32 0.0, %v4255
    %v4346 = vsub.f32 0.0, %v4258
    %v4347 = vsub.f32 0.0, %v4263
    %v4348 = vsub.f32 0.0, %v4266
    %v4349 = vsub.f32 0.0, %v4271
    %v4350 = vsub.f32 0.0, %v4274
    %v4351 = vsub.f32 0.0, %v4279
    %v4352 = vsub.f32 0.0, %v4282
    %v4353 = vsub.f32 0.0, %v4287
    %v4354 = vsub.f32 0.0, %v4290
    %v4355 = vsub.f32 0.0, %v4295
    %v4356 = vsub.f32 0.0, %v4298
    %v4357 = vsub.f32 0.0, %v4303
    %v4358 = vsub.f32 0.0, %v4306
    %v4359 = vsub.f32 0.0, %v4311
    %v4360 = vsub.f32 0.0, %v4314
    %v4361 = vsub.f32 0.0, %v4319
    %v4362 = vsub.f32 0.0, %v4322
    %v4363 = vsub.f32 0.0, %v4327
    %v4364 = vsub.f32 0.0, %v4330
    %v4365 = vmul.f32 %v4333, 1.442695
    %v4366 = vpow.pop %v4365
    %v4367 = vmul.f32 %v4334, 1.442695
    %v4368 = vpow.pop %v4367
    %v4369 = vmul.f32 %v4335, 1.442695
    %v4370 = vpow.pop %v4369
    %v4371 = vmul.f32 %v4336, 1.442695
    %v4372 = vpow.pop %v4371
    %v4373 = vmul.f32 %v4337, 1.442695
    %v4374 = vpow.pop %v4373
    %v4375 = vmul.f32 %v4338, 1.442695
    %v4376 = vpow.pop %v4375
    %v4377 = vmul.f32 %v4339, 1.442695
    %v4378 = vpow.pop %v4377
    %v4379 = vmul.f32 %v4340, 1.442695
    %v4380 = vpow.pop %v4379
    %v4381 = vmul.f32 %v4341, 1.442695
    %v4382 = vpow.pop %v4381
    %v4383 = vmul.f32 %v4342, 1.442695
    %v4384 = vpow.pop %v4383
    %v4385 = vmul.f32 %v4343, 1.442695
    %v4386 = vpow.pop %v4385
    %v4387 = vmul.f32 %v4344, 1.442695
    %v4388 = vpow.pop %v4387
    %v4389 = vmul.f32 %v4345, 1.442695
    %v4390 = vpow.pop %v4389
    %v4391 = vmul.f32 %v4346, 1.442695
    %v4392 = vpow.pop %v4391
    %v4393 = vmul.f32 %v4347, 1.442695
    %v4394 = vpow.pop %v4393
    %v4395 = vmul.f32 %v4348, 1.442695
    %v4396 = vpow.pop %v4395
    %v4397 = vmul.f32 %v4349, 1.442695
    %v4398 = vpow.pop %v4397
    %v4399 = vmul.f32 %v4350, 1.442695
    %v4400 = vpow.pop %v4399
    %v4401 = vmul.f32 %v4351, 1.442695
    %v4402 = vpow.pop %v4401
    %v4403 = vmul.f32 %v4352, 1.442695
    %v4404 = vpow.pop %v4403
    %v4405 = vmul.f32 %v4353, 1.442695
    %v4406 = vpow.pop %v4405
    %v4407 = vmul.f32 %v4354, 1.442695
    %v4408 = vpow.pop %v4407
    %v4409 = vmul.f32 %v4355, 1.442695
    %v4410 = vpow.pop %v4409
    %v4411 = vmul.f32 %v4356, 1.442695
    %v4412 = vpow.pop %v4411
    %v4413 = vmul.f32 %v4357, 1.442695
    %v4414 = vpow.pop %v4413
    %v4415 = vmul.f32 %v4358, 1.442695
    %v4416 = vpow.pop %v4415
    %v4417 = vmul.f32 %v4359, 1.442695
    %v4418 = vpow.pop %v4417
    %v4419 = vmul.f32 %v4360, 1.442695
    %v4420 = vpow.pop %v4419
    %v4421 = vmul.f32 %v4361, 1.442695
    %v4422 = vpow.pop %v4421
    %v4423 = vmul.f32 %v4362, 1.442695
    %v4424 = vpow.pop %v4423
    %v4425 = vmul.f32 %v4363, 1.442695
    %v4426 = vpow.pop %v4425
    %v4427 = vmul.f32 %v4364, 1.442695
    %v4428 = vpow.pop %v4427
    %v4429 = vadd.f32 %v4366, 1.0
    %v4430 = vadd.f32 %v4368, 1.0
    %v4431 = vadd.f32 %v4370, 1.0
    %v4432 = vadd.f32 %v4372, 1.0
    %v4433 = vadd.f32 %v4374, 1.0
    %v4434 = vadd.f32 %v4376, 1.0
    %v4435 = vadd.f32 %v4378, 1.0
    %v4436 = vadd.f32 %v4380, 1.0
    %v4437 = vadd.f32 %v4382, 1.0
    %v4438 = vadd.f32 %v4384, 1.0
    %v4439 = vadd.f32 %v4386, 1.0
    %v4440 = vadd.f32 %v4388, 1.0
    %v4441 = vadd.f32 %v4390, 1.0
    %v4442 = vadd.f32 %v4392, 1.0
    %v4443 = vadd.f32 %v4394, 1.0
    %v4444 = vadd.f32 %v4396, 1.0
    %v4445 = vadd.f32 %v4398, 1.0
    %v4446 = vadd.f32 %v4400, 1.0
    %v4447 = vadd.f32 %v4402, 1.0
    %v4448 = vadd.f32 %v4404, 1.0
    %v4449 = vadd.f32 %v4406, 1.0
    %v4450 = vadd.f32 %v4408, 1.0
    %v4451 = vadd.f32 %v4410, 1.0
    %v4452 = vadd.f32 %v4412, 1.0
    %v4453 = vadd.f32 %v4414, 1.0
    %v4454 = vadd.f32 %v4416, 1.0
    %v4455 = vadd.f32 %v4418, 1.0
    %v4456 = vadd.f32 %v4420, 1.0
    %v4457 = vadd.f32 %v4422, 1.0
    %v4458 = vadd.f32 %v4424, 1.0
    %v4459 = vadd.f32 %v4426, 1.0
    %v4460 = vadd.f32 %v4428, 1.0
    %v4461 = vrcp.pop %v4429
    %v4462 = vrcp.pop %v4430
    %v4463 = vrcp.pop %v4431
    %v4464 = vrcp.pop %v4432
    %v4465 = vrcp.pop %v4433
    %v4466 = vrcp.pop %v4434
    %v4467 = vrcp.pop %v4435
    %v4468 = vrcp.pop %v4436
    %v4469 = vrcp.pop %v4437
    %v4470 = vrcp.pop %v4438
    %v4471 = vrcp.pop %v4439
    %v4472 = vrcp.pop %v4440
    %v4473 = vrcp.pop %v4441
    %v4474 = vrcp.pop %v4442
    %v4475 = vrcp.pop %v4443
    %v4476 = vrcp.pop %v4444
    %v4477 = vrcp.pop %v4445
    %v4478 = vrcp.pop %v4446
    %v4479 = vrcp.pop %v4447
    %v4480 = vrcp.pop %v4448
    %v4481 = vrcp.pop %v4449
    %v4482 = vrcp.pop %v4450
    %v4483 = vrcp.pop %v4451
    %v4484 = vrcp.pop %v4452
    %v4485 = vrcp.pop %v4453
    %v4486 = vrcp.pop %v4454
    %v4487 = vrcp.pop %v4455
    %v4488 = vrcp.pop %v4456
    %v4489 = vrcp.pop %v4457
    %v4490 = vrcp.pop %v4458
    %v4491 = vrcp.pop %v4459
    %v4492 = vrcp.pop %v4460
    %v4493 = vmul.f32 %v4207, %v4461
    %v4494 = vmul.f32 %v4210, %v4462
    %v4495 = vmul.f32 %v4215, %v4463
    %v4496 = vmul.f32 %v4218, %v4464
    %v4497 = vmul.f32 %v4223, %v4465
    %v4498 = vmul.f32 %v4226, %v4466
    %v4499 = vmul.f32 %v4231, %v4467
    %v4500 = vmul.f32 %v4234, %v4468
    %v4501 = vmul.f32 %v4239, %v4469
    %v4502 = vmul.f32 %v4242, %v4470
    %v4503 = vmul.f32 %v4247, %v4471
    %v4504 = vmul.f32 %v4250, %v4472
    %v4505 = vmul.f32 %v4255, %v4473
    %v4506 = vmul.f32 %v4258, %v4474
    %v4507 = vmul.f32 %v4263, %v4475
    %v4508 = vmul.f32 %v4266, %v4476
    %v4509 = vmul.f32 %v4271, %v4477
    %v4510 = vmul.f32 %v4274, %v4478
    %v4511 = vmul.f32 %v4279, %v4479
    %v4512 = vmul.f32 %v4282, %v4480
    %v4513 = vmul.f32 %v4287, %v4481
    %v4514 = vmul.f32 %v4290, %v4482
    %v4515 = vmul.f32 %v4295, %v4483
    %v4516 = vmul.f32 %v4298, %v4484
    %v4517 = vmul.f32 %v4303, %v4485
    %v4518 = vmul.f32 %v4306, %v4486
    %v4519 = vmul.f32 %v4311, %v4487
    %v4520 = vmul.f32 %v4314, %v4488
    %v4521 = vmul.f32 %v4319, %v4489
    %v4522 = vmul.f32 %v4322, %v4490
    %v4523 = vmul.f32 %v4327, %v4491
    %v4524 = vmul.f32 %v4330, %v4492
    %v4525 = vadd.f32 %v4493, %v4027
    %v4526 = vadd.f32 %v4494, %v4028
    %v4527 = vadd.f32 %v4495, %v4029
    %v4528 = vadd.f32 %v4496, %v4030
    %v4529 = vadd.f32 %v4497, %v4031
    %v4530 = vadd.f32 %v4498, %v4032
    %v4531 = vadd.f32 %v4499, %v4033
    %v4532 = vadd.f32 %v4500, %v4034
    %v4533 = vadd.f32 %v4501, %v4035
    %v4534 = vadd.f32 %v4502, %v4036
    %v4535 = vadd.f32 %v4503, %v4037
    %v4536 = vadd.f32 %v4504, %v4038
    %v4537 = vadd.f32 %v4505, %v4039
    %v4538 = vadd.f32 %v4506, %v4040
    %v4539 = vadd.f32 %v4507, %v4041
    %v4540 = vadd.f32 %v4508, %v4042
    %v4541 = vadd.f32 %v4509, %v4043
    %v4542 = vadd.f32 %v4510, %v4044
    %v4543 = vadd.f32 %v4511, %v4045
    %v4544 = vadd.f32 %v4512, %v4046
    %v4545 = vadd.f32 %v4513, %v4047
    %v4546 = vadd.f32 %v4514, %v4048
    %v4547 = vadd.f32 %v4515, %v4049
    %v4548 = vadd.f32 %v4516, %v4050
    %v4549 = vadd.f32 %v4517, %v4051
    %v4550 = vadd.f32 %v4518, %v4052
    %v4551 = vadd.f32 %v4519, %v4053
    %v4552 = vadd.f32 %v4520, %v4054
    %v4553 = vadd.f32 %v4521, %v4055
    %v4554 = vadd.f32 %v4522, %v4056
    %v4555 = vadd.f32 %v4523, %v4057
    %v4556 = vadd.f32 %v4524, %v4058
    %v4557 = vpack.c.bf16 %v4526, %v4525
    %v4558 = vpack.c.bf16 %v4528, %v4527
    %v4559 = vpack.c.bf16 %v4530, %v4529
    %v4560 = vpack.c.bf16 %v4532, %v4531
    %v4561 = vpack.c.bf16 %v4534, %v4533
    %v4562 = vpack.c.bf16 %v4536, %v4535
    %v4563 = vpack.c.bf16 %v4538, %v4537
    %v4564 = vpack.c.bf16 %v4540, %v4539
    %v4565 = vpack.c.bf16 %v4542, %v4541
    %v4566 = vpack.c.bf16 %v4544, %v4543
    %v4567 = vpack.c.bf16 %v4546, %v4545
    %v4568 = vpack.c.bf16 %v4548, %v4547
    %v4569 = vpack.c.bf16 %v4550, %v4549
    %v4570 = vpack.c.bf16 %v4552, %v4551
    %v4571 = vpack.c.bf16 %v4554, %v4553
    %v4572 = vpack.c.bf16 %v4556, %v4555
    %s4573 = scalar_lea.vmem %s4, 64
    %v4574 = vld [vmem:[%s4573] sm:$0xf]
    %v4575 = vld [vmem:[%s4573 + $0x4] sm:$0xf]
    %v4576 = vld [vmem:[%s4573 + $0x8] sm:$0xf]
    %v4577 = vld [vmem:[%s4573 + $0xc] sm:$0xf]
    %v4578 = vld [vmem:[%s4573 + $0x10] sm:$0xf]
    %v4579 = vld [vmem:[%s4573 + $0x14] sm:$0xf]
    %v4580 = vld [vmem:[%s4573 + $0x18] sm:$0xf]
    %v4581 = vld [vmem:[%s4573 + $0x1c] sm:$0xf]
    %v4582 = vld [vmem:[%s4573 + $0x20] sm:$0xf]
    %v4583 = vld [vmem:[%s4573 + $0x24] sm:$0xf]
    %v4584 = vld [vmem:[%s4573 + $0x28] sm:$0xf]
    %v4585 = vld [vmem:[%s4573 + $0x2c] sm:$0xf]
    %v4586 = vld [vmem:[%s4573 + $0x30] sm:$0xf]
    %v4587 = vld [vmem:[%s4573 + $0x34] sm:$0xf]
    %v4588 = vld [vmem:[%s4573 + $0x38] sm:$0xf]
    %v4589 = vld [vmem:[%s4573 + $0x3c] sm:$0xf]
    %s4590 = scalar_lea.vmem %s5, 2
    %v4591 = vld [vmem:[%s4590] sm:$0x1]
    %v4593 = vlaneseq
    %v4594 = vshrl.u32 %v4593, 7
    %v4595 = vsub.s32 0, %v4594
    %v4596 = vrot.slane %v4591, %v4595
    %v4614 = vunpack.c.l.b16 %v4574
    %v4615 = vunpack.c.l.b16 %v4575
    %v4616 = vunpack.c.l.b16 %v4576
    %v4617 = vunpack.c.l.b16 %v4577
    %v4618 = vunpack.c.l.b16 %v4578
    %v4619 = vunpack.c.l.b16 %v4579
    %v4620 = vunpack.c.l.b16 %v4580
    %v4621 = vunpack.c.l.b16 %v4581
    %v4622 = vunpack.c.l.b16 %v4582
    %v4623 = vunpack.c.l.b16 %v4583
    %v4624 = vunpack.c.l.b16 %v4584
    %v4625 = vunpack.c.l.b16 %v4585
    %v4626 = vunpack.c.l.b16 %v4586
    %v4627 = vunpack.c.l.b16 %v4587
    %v4628 = vunpack.c.l.b16 %v4588
    %v4629 = vunpack.c.l.b16 %v4589
    %v4630 = vpack.c.b16 %v4615, %v4614
    %v4631 = vpack.c.b16 %v4617, %v4616
    %v4632 = vpack.c.b16 %v4619, %v4618
    %v4633 = vpack.c.b16 %v4621, %v4620
    %v4634 = vpack.c.b16 %v4623, %v4622
    %v4635 = vpack.c.b16 %v4625, %v4624
    %v4636 = vpack.c.b16 %v4627, %v4626
    %v4637 = vpack.c.b16 %v4629, %v4628
    %4646 = vmatprep.subr.bf16.mxu0 0
    %4647 = vmatpush1.bf16.msra.mxu0 %v4630
    %4648 = vmatprep.subr.bf16.mxu0 0
    %4649 = vmatpush1.bf16.msra.mxu0 %v4631
    %4650 = vmatprep.subr.bf16.mxu0 0
    %4651 = vmatpush1.bf16.msra.mxu0 %v4632
    %4652 = vmatprep.subr.bf16.mxu0 0
    %4653 = vmatpush1.bf16.msra.mxu0 %v4633
    %4654 = vmatprep.subr.bf16.mxu0 0
    %4655 = vmatpush1.bf16.msra.mxu0 %v4634
    %4656 = vmatprep.subr.bf16.mxu0 0
    %4657 = vmatpush1.bf16.msra.mxu0 %v4635
    %4658 = vmatprep.subr.bf16.mxu0 0
    %4659 = vmatpush1.bf16.msra.mxu0 %v4636
    %4660 = vmatprep.subr.bf16.mxu0 0
    %4661 = vmatpush1.bf16.msra.mxu0 %v4637
    %4662 = vmatprep.subr.bf16.mxu0 0
    %4663 = vmatpush1.bf16.msra.mxu0 0
    %4664 = vmatprep.subr.bf16.mxu0 0
    %4665 = vmatpush1.bf16.msra.mxu0 0
    %4666 = vmatprep.subr.bf16.mxu0 0
    %4667 = vmatpush1.bf16.msra.mxu0 0
    %4668 = vmatprep.subr.bf16.mxu0 0
    %4669 = vmatpush1.bf16.msra.mxu0 0
    %4670 = vmatprep.subr.bf16.mxu0 0
    %4671 = vmatpush1.bf16.msra.mxu0 0
    %4672 = vmatprep.subr.bf16.mxu0 0
    %4673 = vmatpush1.bf16.msra.mxu0 0
    %4674 = vmatprep.subr.bf16.mxu0 0
    %4675 = vmatpush1.bf16.msra.mxu0 0
    %4676 = vmatprep.subr.bf16.mxu0 0
    %4677 = vmatpush1.bf16.msra.mxu0 0
    %4678 = vmatprep.mubr.bf16.mxu0 0
    %4679 = vmatmul.mubr.bf16.gmra.mrb[0].mxu0 %v4557
    %v4680 = vpop.f32.mrb[0].mxu0
    %v4681 = vadd.f32 %v4596, %v4680
    %v4682 = vpop.f32.mrb[0].mxu0
    %v4683 = vpop.f32.mrb[0].mxu0
    %v4684 = vadd.f32 %v4596, %v4683
    %v4685 = vpop.f32.mrb[0].mxu0
    %4686 = vmatprep.mubr.bf16.mxu0 0
    %4687 = vmatmul.mubr.bf16.gmra.mrb[0].mxu0 %v4558
    %v4688 = vpop.f32.mrb[0].mxu0
    %v4689 = vadd.f32 %v4596, %v4688
    %v4690 = vpop.f32.mrb[0].mxu0
    %v4691 = vpop.f32.mrb[0].mxu0
    %v4692 = vadd.f32 %v4596, %v4691
    %v4693 = vpop.f32.mrb[0].mxu0
    %4694 = vmatprep.mubr.bf16.mxu0 0
    %4695 = vmatmul.mubr.bf16.gmra.mrb[0].mxu0 %v4559
    %v4696 = vpop.f32.mrb[0].mxu0
    %v4697 = vadd.f32 %v4596, %v4696
    %v4698 = vpop.f32.mrb[0].mxu0
    %v4699 = vpop.f32.mrb[0].mxu0
    %v4700 = vadd.f32 %v4596, %v4699
    %v4701 = vpop.f32.mrb[0].mxu0
    %4702 = vmatprep.mubr.bf16.mxu0 0
    %4703 = vmatmul.mubr.bf16.gmra.mrb[0].mxu0 %v4560
    %v4704 = vpop.f32.mrb[0].mxu0
    %v4705 = vadd.f32 %v4596, %v4704
    %v4706 = vpop.f32.mrb[0].mxu0
    %v4707 = vpop.f32.mrb[0].mxu0
    %v4708 = vadd.f32 %v4596, %v4707
    %v4709 = vpop.f32.mrb[0].mxu0
    %4710 = vmatprep.mubr.bf16.mxu0 0
    %4711 = vmatmul.mubr.bf16.gmra.mrb[0].mxu0 %v4561
    %v4712 = vpop.f32.mrb[0].mxu0
    %v4713 = vadd.f32 %v4596, %v4712
    %v4714 = vpop.f32.mrb[0].mxu0
    %v4715 = vpop.f32.mrb[0].mxu0
    %v4716 = vadd.f32 %v4596, %v4715
    %v4717 = vpop.f32.mrb[0].mxu0
    %4718 = vmatprep.mubr.bf16.mxu0 0
    %4719 = vmatmul.mubr.bf16.gmra.mrb[0].mxu0 %v4562
    %v4720 = vpop.f32.mrb[0].mxu0
    %v4721 = vadd.f32 %v4596, %v4720
    %v4722 = vpop.f32.mrb[0].mxu0
    %v4723 = vpop.f32.mrb[0].mxu0
    %v4724 = vadd.f32 %v4596, %v4723
    %v4725 = vpop.f32.mrb[0].mxu0
    %4726 = vmatprep.mubr.bf16.mxu0 0
    %4727 = vmatmul.mubr.bf16.gmra.mrb[0].mxu0 %v4563
    %v4728 = vpop.f32.mrb[0].mxu0
    %v4729 = vadd.f32 %v4596, %v4728
    %v4730 = vpop.f32.mrb[0].mxu0
    %v4731 = vpop.f32.mrb[0].mxu0
    %v4732 = vadd.f32 %v4596, %v4731
    %v4733 = vpop.f32.mrb[0].mxu0
    %4734 = vmatprep.mubr.bf16.mxu0 0
    %4735 = vmatmul.mubr.bf16.gmra.mrb[0].mxu0 %v4564
    %v4736 = vpop.f32.mrb[0].mxu0
    %v4737 = vadd.f32 %v4596, %v4736
    %v4738 = vpop.f32.mrb[0].mxu0
    %v4739 = vpop.f32.mrb[0].mxu0
    %v4740 = vadd.f32 %v4596, %v4739
    %v4741 = vpop.f32.mrb[0].mxu0
    %4742 = vmatprep.mubr.bf16.mxu0 0
    %4743 = vmatmul.mubr.bf16.gmra.mrb[0].mxu0 %v4565
    %v4744 = vpop.f32.mrb[0].mxu0
    %v4745 = vadd.f32 %v4596, %v4744
    %v4746 = vpop.f32.mrb[0].mxu0
    %v4747 = vpop.f32.mrb[0].mxu0
    %v4748 = vadd.f32 %v4596, %v4747
    %v4749 = vpop.f32.mrb[0].mxu0
    %4750 = vmatprep.mubr.bf16.mxu0 0
    %4751 = vmatmul.mubr.bf16.gmra.mrb[0].mxu0 %v4566
    %v4752 = vpop.f32.mrb[0].mxu0
    %v4753 = vadd.f32 %v4596, %v4752
    %v4754 = vpop.f32.mrb[0].mxu0
    %v4755 = vpop.f32.mrb[0].mxu0
    %v4756 = vadd.f32 %v4596, %v4755
    %v4757 = vpop.f32.mrb[0].mxu0
    %4758 = vmatprep.mubr.bf16.mxu0 0
    %4759 = vmatmul.mubr.bf16.gmra.mrb[0].mxu0 %v4567
    %v4760 = vpop.f32.mrb[0].mxu0
    %v4761 = vadd.f32 %v4596, %v4760
    %v4762 = vpop.f32.mrb[0].mxu0
    %v4763 = vpop.f32.mrb[0].mxu0
    %v4764 = vadd.f32 %v4596, %v4763
    %v4765 = vpop.f32.mrb[0].mxu0
    %4766 = vmatprep.mubr.bf16.mxu0 0
    %4767 = vmatmul.mubr.bf16.gmra.mrb[0].mxu0 %v4568
    %v4768 = vpop.f32.mrb[0].mxu0
    %v4769 = vadd.f32 %v4596, %v4768
    %v4770 = vpop.f32.mrb[0].mxu0
    %v4771 = vpop.f32.mrb[0].mxu0
    %v4772 = vadd.f32 %v4596, %v4771
    %v4773 = vpop.f32.mrb[0].mxu0
    %4774 = vmatprep.mubr.bf16.mxu0 0
    %4775 = vmatmul.mubr.bf16.gmra.mrb[0].mxu0 %v4569
    %v4776 = vpop.f32.mrb[0].mxu0
    %v4777 = vadd.f32 %v4596, %v4776
    %v4778 = vpop.f32.mrb[0].mxu0
    %v4779 = vpop.f32.mrb[0].mxu0
    %v4780 = vadd.f32 %v4596, %v4779
    %v4781 = vpop.f32.mrb[0].mxu0
    %4782 = vmatprep.mubr.bf16.mxu0 0
    %4783 = vmatmul.mubr.bf16.gmra.mrb[0].mxu0 %v4570
    %v4784 = vpop.f32.mrb[0].mxu0
    %v4785 = vadd.f32 %v4596, %v4784
    %v4786 = vpop.f32.mrb[0].mxu0
    %v4787 = vpop.f32.mrb[0].mxu0
    %v4788 = vadd.f32 %v4596, %v4787
    %v4789 = vpop.f32.mrb[0].mxu0
    %4790 = vmatprep.mubr.bf16.mxu0 0
    %4791 = vmatmul.mubr.bf16.gmra.mrb[0].mxu0 %v4571
    %v4792 = vpop.f32.mrb[0].mxu0
    %v4793 = vadd.f32 %v4596, %v4792
    %v4794 = vpop.f32.mrb[0].mxu0
    %v4795 = vpop.f32.mrb[0].mxu0
    %v4796 = vadd.f32 %v4596, %v4795
    %v4797 = vpop.f32.mrb[0].mxu0
    %4798 = vmatprep.mubr.bf16.mxu0 0
    %4799 = vmatmul.mubr.bf16.gmra.mrb[0].mxu0 %v4572
    %v4800 = vpop.f32.mrb[0].mxu0
    %v4801 = vadd.f32 %v4596, %v4800
    %v4802 = vpop.f32.mrb[0].mxu0
    %v4803 = vpop.f32.mrb[0].mxu0
    %v4804 = vadd.f32 %v4596, %v4803
    %v4805 = vpop.f32.mrb[0].mxu0
    %4806 = vdwg.mxu0
    %v4807 = vsub.f32 0.0, %v4681
    %v4808 = vsub.f32 0.0, %v4684
    %v4809 = vsub.f32 0.0, %v4689
    %v4810 = vsub.f32 0.0, %v4692
    %v4811 = vsub.f32 0.0, %v4697
    %v4812 = vsub.f32 0.0, %v4700
    %v4813 = vsub.f32 0.0, %v4705
    %v4814 = vsub.f32 0.0, %v4708
    %v4815 = vsub.f32 0.0, %v4713
    %v4816 = vsub.f32 0.0, %v4716
    %v4817 = vsub.f32 0.0, %v4721
    %v4818 = vsub.f32 0.0, %v4724
    %v4819 = vsub.f32 0.0, %v4729
    %v4820 = vsub.f32 0.0, %v4732
    %v4821 = vsub.f32 0.0, %v4737
    %v4822 = vsub.f32 0.0, %v4740
    %v4823 = vsub.f32 0.0, %v4745
    %v4824 = vsub.f32 0.0, %v4748
    %v4825 = vsub.f32 0.0, %v4753
    %v4826 = vsub.f32 0.0, %v4756
    %v4827 = vsub.f32 0.0, %v4761
    %v4828 = vsub.f32 0.0, %v4764
    %v4829 = vsub.f32 0.0, %v4769
    %v4830 = vsub.f32 0.0, %v4772
    %v4831 = vsub.f32 0.0, %v4777
    %v4832 = vsub.f32 0.0, %v4780
    %v4833 = vsub.f32 0.0, %v4785
    %v4834 = vsub.f32 0.0, %v4788
    %v4835 = vsub.f32 0.0, %v4793
    %v4836 = vsub.f32 0.0, %v4796
    %v4837 = vsub.f32 0.0, %v4801
    %v4838 = vsub.f32 0.0, %v4804
    %v4839 = vmul.f32 %v4807, 1.442695
    %v4840 = vpow.pop %v4839
    %v4841 = vmul.f32 %v4808, 1.442695
    %v4842 = vpow.pop %v4841
    %v4843 = vmul.f32 %v4809, 1.442695
    %v4844 = vpow.pop %v4843
    %v4845 = vmul.f32 %v4810, 1.442695
    %v4846 = vpow.pop %v4845
    %v4847 = vmul.f32 %v4811, 1.442695
    %v4848 = vpow.pop %v4847
    %v4849 = vmul.f32 %v4812, 1.442695
    %v4850 = vpow.pop %v4849
    %v4851 = vmul.f32 %v4813, 1.442695
    %v4852 = vpow.pop %v4851
    %v4853 = vmul.f32 %v4814, 1.442695
    %v4854 = vpow.pop %v4853
    %v4855 = vmul.f32 %v4815, 1.442695
    %v4856 = vpow.pop %v4855
    %v4857 = vmul.f32 %v4816, 1.442695
    %v4858 = vpow.pop %v4857
    %v4859 = vmul.f32 %v4817, 1.442695
    %v4860 = vpow.pop %v4859
    %v4861 = vmul.f32 %v4818, 1.442695
    %v4862 = vpow.pop %v4861
    %v4863 = vmul.f32 %v4819, 1.442695
    %v4864 = vpow.pop %v4863
    %v4865 = vmul.f32 %v4820, 1.442695
    %v4866 = vpow.pop %v4865
    %v4867 = vmul.f32 %v4821, 1.442695
    %v4868 = vpow.pop %v4867
    %v4869 = vmul.f32 %v4822, 1.442695
    %v4870 = vpow.pop %v4869
    %v4871 = vmul.f32 %v4823, 1.442695
    %v4872 = vpow.pop %v4871
    %v4873 = vmul.f32 %v4824, 1.442695
    %v4874 = vpow.pop %v4873
    %v4875 = vmul.f32 %v4825, 1.442695
    %v4876 = vpow.pop %v4875
    %v4877 = vmul.f32 %v4826, 1.442695
    %v4878 = vpow.pop %v4877
    %v4879 = vmul.f32 %v4827, 1.442695
    %v4880 = vpow.pop %v4879
    %v4881 = vmul.f32 %v4828, 1.442695
    %v4882 = vpow.pop %v4881
    %v4883 = vmul.f32 %v4829, 1.442695
    %v4884 = vpow.pop %v4883
    %v4885 = vmul.f32 %v4830, 1.442695
    %v4886 = vpow.pop %v4885
    %v4887 = vmul.f32 %v4831, 1.442695
    %v4888 = vpow.pop %v4887
    %v4889 = vmul.f32 %v4832, 1.442695
    %v4890 = vpow.pop %v4889
    %v4891 = vmul.f32 %v4833, 1.442695
    %v4892 = vpow.pop %v4891
    %v4893 = vmul.f32 %v4834, 1.442695
    %v4894 = vpow.pop %v4893
    %v4895 = vmul.f32 %v4835, 1.442695
    %v4896 = vpow.pop %v4895
    %v4897 = vmul.f32 %v4836, 1.442695
    %v4898 = vpow.pop %v4897
    %v4899 = vmul.f32 %v4837, 1.442695
    %v4900 = vpow.pop %v4899
    %v4901 = vmul.f32 %v4838, 1.442695
    %v4902 = vpow.pop %v4901
    %v4903 = vadd.f32 %v4840, 1.0
    %v4904 = vadd.f32 %v4842, 1.0
    %v4905 = vadd.f32 %v4844, 1.0
    %v4906 = vadd.f32 %v4846, 1.0
    %v4907 = vadd.f32 %v4848, 1.0
    %v4908 = vadd.f32 %v4850, 1.0
    %v4909 = vadd.f32 %v4852, 1.0
    %v4910 = vadd.f32 %v4854, 1.0
    %v4911 = vadd.f32 %v4856, 1.0
    %v4912 = vadd.f32 %v4858, 1.0
    %v4913 = vadd.f32 %v4860, 1.0
    %v4914 = vadd.f32 %v4862, 1.0
    %v4915 = vadd.f32 %v4864, 1.0
    %v4916 = vadd.f32 %v4866, 1.0
    %v4917 = vadd.f32 %v4868, 1.0
    %v4918 = vadd.f32 %v4870, 1.0
    %v4919 = vadd.f32 %v4872, 1.0
    %v4920 = vadd.f32 %v4874, 1.0
    %v4921 = vadd.f32 %v4876, 1.0
    %v4922 = vadd.f32 %v4878, 1.0
    %v4923 = vadd.f32 %v4880, 1.0
    %v4924 = vadd.f32 %v4882, 1.0
    %v4925 = vadd.f32 %v4884, 1.0
    %v4926 = vadd.f32 %v4886, 1.0
    %v4927 = vadd.f32 %v4888, 1.0
    %v4928 = vadd.f32 %v4890, 1.0
    %v4929 = vadd.f32 %v4892, 1.0
    %v4930 = vadd.f32 %v4894, 1.0
    %v4931 = vadd.f32 %v4896, 1.0
    %v4932 = vadd.f32 %v4898, 1.0
    %v4933 = vadd.f32 %v4900, 1.0
    %v4934 = vadd.f32 %v4902, 1.0
    %v4935 = vrcp.pop %v4903
    %v4936 = vrcp.pop %v4904
    %v4937 = vrcp.pop %v4905
    %v4938 = vrcp.pop %v4906
    %v4939 = vrcp.pop %v4907
    %v4940 = vrcp.pop %v4908
    %v4941 = vrcp.pop %v4909
    %v4942 = vrcp.pop %v4910
    %v4943 = vrcp.pop %v4911
    %v4944 = vrcp.pop %v4912
    %v4945 = vrcp.pop %v4913
    %v4946 = vrcp.pop %v4914
    %v4947 = vrcp.pop %v4915
    %v4948 = vrcp.pop %v4916
    %v4949 = vrcp.pop %v4917
    %v4950 = vrcp.pop %v4918
    %v4951 = vrcp.pop %v4919
    %v4952 = vrcp.pop %v4920
    %v4953 = vrcp.pop %v4921
    %v4954 = vrcp.pop %v4922
    %v4955 = vrcp.pop %v4923
    %v4956 = vrcp.pop %v4924
    %v4957 = vrcp.pop %v4925
    %v4958 = vrcp.pop %v4926
    %v4959 = vrcp.pop %v4927
    %v4960 = vrcp.pop %v4928
    %v4961 = vrcp.pop %v4929
    %v4962 = vrcp.pop %v4930
    %v4963 = vrcp.pop %v4931
    %v4964 = vrcp.pop %v4932
    %v4965 = vrcp.pop %v4933
    %v4966 = vrcp.pop %v4934
    %v4967 = vmul.f32 %v4681, %v4935
    %v4968 = vmul.f32 %v4684, %v4936
    %v4969 = vmul.f32 %v4689, %v4937
    %v4970 = vmul.f32 %v4692, %v4938
    %v4971 = vmul.f32 %v4697, %v4939
    %v4972 = vmul.f32 %v4700, %v4940
    %v4973 = vmul.f32 %v4705, %v4941
    %v4974 = vmul.f32 %v4708, %v4942
    %v4975 = vmul.f32 %v4713, %v4943
    %v4976 = vmul.f32 %v4716, %v4944
    %v4977 = vmul.f32 %v4721, %v4945
    %v4978 = vmul.f32 %v4724, %v4946
    %v4979 = vmul.f32 %v4729, %v4947
    %v4980 = vmul.f32 %v4732, %v4948
    %v4981 = vmul.f32 %v4737, %v4949
    %v4982 = vmul.f32 %v4740, %v4950
    %v4983 = vmul.f32 %v4745, %v4951
    %v4984 = vmul.f32 %v4748, %v4952
    %v4985 = vmul.f32 %v4753, %v4953
    %v4986 = vmul.f32 %v4756, %v4954
    %v4987 = vmul.f32 %v4761, %v4955
    %v4988 = vmul.f32 %v4764, %v4956
    %v4989 = vmul.f32 %v4769, %v4957
    %v4990 = vmul.f32 %v4772, %v4958
    %v4991 = vmul.f32 %v4777, %v4959
    %v4992 = vmul.f32 %v4780, %v4960
    %v4993 = vmul.f32 %v4785, %v4961
    %v4994 = vmul.f32 %v4788, %v4962
    %v4995 = vmul.f32 %v4793, %v4963
    %v4996 = vmul.f32 %v4796, %v4964
    %v4997 = vmul.f32 %v4801, %v4965
    %v4998 = vmul.f32 %v4804, %v4966
    %v4999 = vpack.c.bf16 %v4968, %v4967
    %v5000 = vpack.c.bf16 %v4970, %v4969
    %v5001 = vpack.c.bf16 %v4972, %v4971
    %v5002 = vpack.c.bf16 %v4974, %v4973
    %v5003 = vpack.c.bf16 %v4976, %v4975
    %v5004 = vpack.c.bf16 %v4978, %v4977
    %v5005 = vpack.c.bf16 %v4980, %v4979
    %v5006 = vpack.c.bf16 %v4982, %v4981
    %v5007 = vpack.c.bf16 %v4984, %v4983
    %v5008 = vpack.c.bf16 %v4986, %v4985
    %v5009 = vpack.c.bf16 %v4988, %v4987
    %v5010 = vpack.c.bf16 %v4990, %v4989
    %v5011 = vpack.c.bf16 %v4992, %v4991
    %v5012 = vpack.c.bf16 %v4994, %v4993
    %v5013 = vpack.c.bf16 %v4996, %v4995
    %v5014 = vpack.c.bf16 %v4998, %v4997
    %s5015 = scalar_lea.vmem %s4, 128
    %v5016 = vld [vmem:[%s5015] sm:$0xf]
    %v5017 = vld [vmem:[%s5015 + $0x4] sm:$0xf]
    %v5018 = vld [vmem:[%s5015 + $0x8] sm:$0xf]
    %v5019 = vld [vmem:[%s5015 + $0xc] sm:$0xf]
    %v5020 = vld [vmem:[%s5015 + $0x10] sm:$0xf]
    %v5021 = vld [vmem:[%s5015 + $0x14] sm:$0xf]
    %v5022 = vld [vmem:[%s5015 + $0x18] sm:$0xf]
    %v5023 = vld [vmem:[%s5015 + $0x1c] sm:$0xf]
    %v5024 = vld [vmem:[%s5015 + $0x20] sm:$0xf]
    %v5025 = vld [vmem:[%s5015 + $0x24] sm:$0xf]
    %v5026 = vld [vmem:[%s5015 + $0x28] sm:$0xf]
    %v5027 = vld [vmem:[%s5015 + $0x2c] sm:$0xf]
    %v5028 = vld [vmem:[%s5015 + $0x30] sm:$0xf]
    %v5029 = vld [vmem:[%s5015 + $0x34] sm:$0xf]
    %v5030 = vld [vmem:[%s5015 + $0x38] sm:$0xf]
    %v5031 = vld [vmem:[%s5015 + $0x3c] sm:$0xf]
    %s5032 = scalar_lea.vmem %s5, 3
    %v5033 = vld [vmem:[%s5032] sm:$0x1]
    %v5035 = vlaneseq
    %v5036 = vshrl.u32 %v5035, 7
    %v5037 = vsub.s32 0, %v5036
    %v5038 = vrot.slane %v5033, %v5037
    %v5056 = vunpack.c.l.b16 %v5016
    %v5057 = vunpack.c.l.b16 %v5017
    %v5058 = vunpack.c.l.b16 %v5018
    %v5059 = vunpack.c.l.b16 %v5019
    %v5060 = vunpack.c.l.b16 %v5020
    %v5061 = vunpack.c.l.b16 %v5021
    %v5062 = vunpack.c.l.b16 %v5022
    %v5063 = vunpack.c.l.b16 %v5023
    %v5064 = vunpack.c.l.b16 %v5024
    %v5065 = vunpack.c.l.b16 %v5025
    %v5066 = vunpack.c.l.b16 %v5026
    %v5067 = vunpack.c.l.b16 %v5027
    %v5068 = vunpack.c.l.b16 %v5028
    %v5069 = vunpack.c.l.b16 %v5029
    %v5070 = vunpack.c.l.b16 %v5030
    %v5071 = vunpack.c.l.b16 %v5031
    %v5072 = vpack.c.b16 %v5057, %v5056
    %v5073 = vpack.c.b16 %v5059, %v5058
    %v5074 = vpack.c.b16 %v5061, %v5060
    %v5075 = vpack.c.b16 %v5063, %v5062
    %v5076 = vpack.c.b16 %v5065, %v5064
    %v5077 = vpack.c.b16 %v5067, %v5066
    %v5078 = vpack.c.b16 %v5069, %v5068
    %v5079 = vpack.c.b16 %v5071, %v5070
    %5088 = vmatprep.subr.bf16.mxu0 0
    %5089 = vmatpush1.bf16.msra.mxu0 %v5072
    %5090 = vmatprep.subr.bf16.mxu0 0
    %5091 = vmatpush1.bf16.msra.mxu0 %v5073
    %5092 = vmatprep.subr.bf16.mxu0 0
    %5093 = vmatpush1.bf16.msra.mxu0 %v5074
    %5094 = vmatprep.subr.bf16.mxu0 0
    %5095 = vmatpush1.bf16.msra.mxu0 %v5075
    %5096 = vmatprep.subr.bf16.mxu0 0
    %5097 = vmatpush1.bf16.msra.mxu0 %v5076
    %5098 = vmatprep.subr.bf16.mxu0 0
    %5099 = vmatpush1.bf16.msra.mxu0 %v5077
    %5100 = vmatprep.subr.bf16.mxu0 0
    %5101 = vmatpush1.bf16.msra.mxu0 %v5078
    %5102 = vmatprep.subr.bf16.mxu0 0
    %5103 = vmatpush1.bf16.msra.mxu0 %v5079
    %5104 = vmatprep.subr.bf16.mxu0 0
    %5105 = vmatpush1.bf16.msra.mxu0 0
    %5106 = vmatprep.subr.bf16.mxu0 0
    %5107 = vmatpush1.bf16.msra.mxu0 0
    %5108 = vmatprep.subr.bf16.mxu0 0
    %5109 = vmatpush1.bf16.msra.mxu0 0
    %5110 = vmatprep.subr.bf16.mxu0 0
    %5111 = vmatpush1.bf16.msra.mxu0 0
    %5112 = vmatprep.subr.bf16.mxu0 0
    %5113 = vmatpush1.bf16.msra.mxu0 0
    %5114 = vmatprep.subr.bf16.mxu0 0
    %5115 = vmatpush1.bf16.msra.mxu0 0
    %5116 = vmatprep.subr.bf16.mxu0 0
    %5117 = vmatpush1.bf16.msra.mxu0 0
    %5118 = vmatprep.subr.bf16.mxu0 0
    %5119 = vmatpush1.bf16.msra.mxu0 0
    %5120 = vmatprep.mubr.bf16.mxu0 0
    %5121 = vmatmul.mubr.bf16.gmra.mrb[0].mxu0 %v4999
    %v5122 = vpop.f32.mrb[0].mxu0
    %v5123 = vadd.f32 %v5038, %v5122
    %v5124 = vpop.f32.mrb[0].mxu0
    %v5125 = vpop.f32.mrb[0].mxu0
    %v5126 = vadd.f32 %v5038, %v5125
    %v5127 = vpop.f32.mrb[0].mxu0
    %5128 = vmatprep.mubr.bf16.mxu0 0
    %5129 = vmatmul.mubr.bf16.gmra.mrb[0].mxu0 %v5000
    %v5130 = vpop.f32.mrb[0].mxu0
    %v5131 = vadd.f32 %v5038, %v5130
    %v5132 = vpop.f32.mrb[0].mxu0
    %v5133 = vpop.f32.mrb[0].mxu0
    %v5134 = vadd.f32 %v5038, %v5133
    %v5135 = vpop.f32.mrb[0].mxu0
    %5136 = vmatprep.mubr.bf16.mxu0 0
    %5137 = vmatmul.mubr.bf16.gmra.mrb[0].mxu0 %v5001
    %v5138 = vpop.f32.mrb[0].mxu0
    %v5139 = vadd.f32 %v5038, %v5138
    %v5140 = vpop.f32.mrb[0].mxu0
    %v5141 = vpop.f32.mrb[0].mxu0
    %v5142 = vadd.f32 %v5038, %v5141
    %v5143 = vpop.f32.mrb[0].mxu0
    %5144 = vmatprep.mubr.bf16.mxu0 0
    %5145 = vmatmul.mubr.bf16.gmra.mrb[0].mxu0 %v5002
    %v5146 = vpop.f32.mrb[0].mxu0
    %v5147 = vadd.f32 %v5038, %v5146
    %v5148 = vpop.f32.mrb[0].mxu0
    %v5149 = vpop.f32.mrb[0].mxu0
    %v5150 = vadd.f32 %v5038, %v5149
    %v5151 = vpop.f32.mrb[0].mxu0
    %5152 = vmatprep.mubr.bf16.mxu0 0
    %5153 = vmatmul.mubr.bf16.gmra.mrb[0].mxu0 %v5003
    %v5154 = vpop.f32.mrb[0].mxu0
    %v5155 = vadd.f32 %v5038, %v5154
    %v5156 = vpop.f32.mrb[0].mxu0
    %v5157 = vpop.f32.mrb[0].mxu0
    %v5158 = vadd.f32 %v5038, %v5157
    %v5159 = vpop.f32.mrb[0].mxu0
    %5160 = vmatprep.mubr.bf16.mxu0 0
    %5161 = vmatmul.mubr.bf16.gmra.mrb[0].mxu0 %v5004
    %v5162 = vpop.f32.mrb[0].mxu0
    %v5163 = vadd.f32 %v5038, %v5162
    %v5164 = vpop.f32.mrb[0].mxu0
    %v5165 = vpop.f32.mrb[0].mxu0
    %v5166 = vadd.f32 %v5038, %v5165
    %v5167 = vpop.f32.mrb[0].mxu0
    %5168 = vmatprep.mubr.bf16.mxu0 0
    %5169 = vmatmul.mubr.bf16.gmra.mrb[0].mxu0 %v5005
    %v5170 = vpop.f32.mrb[0].mxu0
    %v5171 = vadd.f32 %v5038, %v5170
    %v5172 = vpop.f32.mrb[0].mxu0
    %v5173 = vpop.f32.mrb[0].mxu0
    %v5174 = vadd.f32 %v5038, %v5173
    %v5175 = vpop.f32.mrb[0].mxu0
    %5176 = vmatprep.mubr.bf16.mxu0 0
    %5177 = vmatmul.mubr.bf16.gmra.mrb[0].mxu0 %v5006
    %v5178 = vpop.f32.mrb[0].mxu0
    %v5179 = vadd.f32 %v5038, %v5178
    %v5180 = vpop.f32.mrb[0].mxu0
    %v5181 = vpop.f32.mrb[0].mxu0
    %v5182 = vadd.f32 %v5038, %v5181
    %v5183 = vpop.f32.mrb[0].mxu0
    %5184 = vmatprep.mubr.bf16.mxu0 0
    %5185 = vmatmul.mubr.bf16.gmra.mrb[0].mxu0 %v5007
    %v5186 = vpop.f32.mrb[0].mxu0
    %v5187 = vadd.f32 %v5038, %v5186
    %v5188 = vpop.f32.mrb[0].mxu0
    %v5189 = vpop.f32.mrb[0].mxu0
    %v5190 = vadd.f32 %v5038, %v5189
    %v5191 = vpop.f32.mrb[0].mxu0
    %5192 = vmatprep.mubr.bf16.mxu0 0
    %5193 = vmatmul.mubr.bf16.gmra.mrb[0].mxu0 %v5008
    %v5194 = vpop.f32.mrb[0].mxu0
    %v5195 = vadd.f32 %v5038, %v5194
    %v5196 = vpop.f32.mrb[0].mxu0
    %v5197 = vpop.f32.mrb[0].mxu0
    %v5198 = vadd.f32 %v5038, %v5197
    %v5199 = vpop.f32.mrb[0].mxu0
    %5200 = vmatprep.mubr.bf16.mxu0 0
    %5201 = vmatmul.mubr.bf16.gmra.mrb[0].mxu0 %v5009
    %v5202 = vpop.f32.mrb[0].mxu0
    %v5203 = vadd.f32 %v5038, %v5202
    %v5204 = vpop.f32.mrb[0].mxu0
    %v5205 = vpop.f32.mrb[0].mxu0
    %v5206 = vadd.f32 %v5038, %v5205
    %v5207 = vpop.f32.mrb[0].mxu0
    %5208 = vmatprep.mubr.bf16.mxu0 0
    %5209 = vmatmul.mubr.bf16.gmra.mrb[0].mxu0 %v5010
    %v5210 = vpop.f32.mrb[0].mxu0
    %v5211 = vadd.f32 %v5038, %v5210
    %v5212 = vpop.f32.mrb[0].mxu0
    %v5213 = vpop.f32.mrb[0].mxu0
    %v5214 = vadd.f32 %v5038, %v5213
    %v5215 = vpop.f32.mrb[0].mxu0
    %5216 = vmatprep.mubr.bf16.mxu0 0
    %5217 = vmatmul.mubr.bf16.gmra.mrb[0].mxu0 %v5011
    %v5218 = vpop.f32.mrb[0].mxu0
    %v5219 = vadd.f32 %v5038, %v5218
    %v5220 = vpop.f32.mrb[0].mxu0
    %v5221 = vpop.f32.mrb[0].mxu0
    %v5222 = vadd.f32 %v5038, %v5221
    %v5223 = vpop.f32.mrb[0].mxu0
    %5224 = vmatprep.mubr.bf16.mxu0 0
    %5225 = vmatmul.mubr.bf16.gmra.mrb[0].mxu0 %v5012
    %v5226 = vpop.f32.mrb[0].mxu0
    %v5227 = vadd.f32 %v5038, %v5226
    %v5228 = vpop.f32.mrb[0].mxu0
    %v5229 = vpop.f32.mrb[0].mxu0
    %v5230 = vadd.f32 %v5038, %v5229
    %v5231 = vpop.f32.mrb[0].mxu0
    %5232 = vmatprep.mubr.bf16.mxu0 0
    %5233 = vmatmul.mubr.bf16.gmra.mrb[0].mxu0 %v5013
    %v5234 = vpop.f32.mrb[0].mxu0
    %v5235 = vadd.f32 %v5038, %v5234
    %v5236 = vpop.f32.mrb[0].mxu0
    %v5237 = vpop.f32.mrb[0].mxu0
    %v5238 = vadd.f32 %v5038, %v5237
    %v5239 = vpop.f32.mrb[0].mxu0
    %5240 = vmatprep.mubr.bf16.mxu0 0
    %5241 = vmatmul.mubr.bf16.gmra.mrb[0].mxu0 %v5014
    %v5242 = vpop.f32.mrb[0].mxu0
    %v5243 = vadd.f32 %v5038, %v5242
    %v5244 = vpop.f32.mrb[0].mxu0
    %v5245 = vpop.f32.mrb[0].mxu0
    %v5246 = vadd.f32 %v5038, %v5245
    %v5247 = vpop.f32.mrb[0].mxu0
    %5248 = vdwg.mxu0
    %v5249 = vsub.f32 0.0, %v5123
    %v5250 = vsub.f32 0.0, %v5126
    %v5251 = vsub.f32 0.0, %v5131
    %v5252 = vsub.f32 0.0, %v5134
    %v5253 = vsub.f32 0.0, %v5139
    %v5254 = vsub.f32 0.0, %v5142
    %v5255 = vsub.f32 0.0, %v5147
    %v5256 = vsub.f32 0.0, %v5150
    %v5257 = vsub.f32 0.0, %v5155
    %v5258 = vsub.f32 0.0, %v5158
    %v5259 = vsub.f32 0.0, %v5163
    %v5260 = vsub.f32 0.0, %v5166
    %v5261 = vsub.f32 0.0, %v5171
    %v5262 = vsub.f32 0.0, %v5174
    %v5263 = vsub.f32 0.0, %v5179
    %v5264 = vsub.f32 0.0, %v5182
    %v5265 = vsub.f32 0.0, %v5187
    %v5266 = vsub.f32 0.0, %v5190
    %v5267 = vsub.f32 0.0, %v5195
    %v5268 = vsub.f32 0.0, %v5198
    %v5269 = vsub.f32 0.0, %v5203
    %v5270 = vsub.f32 0.0, %v5206
    %v5271 = vsub.f32 0.0, %v5211
    %v5272 = vsub.f32 0.0, %v5214
    %v5273 = vsub.f32 0.0, %v5219
    %v5274 = vsub.f32 0.0, %v5222
    %v5275 = vsub.f32 0.0, %v5227
    %v5276 = vsub.f32 0.0, %v5230
    %v5277 = vsub.f32 0.0, %v5235
    %v5278 = vsub.f32 0.0, %v5238
    %v5279 = vsub.f32 0.0, %v5243
    %v5280 = vsub.f32 0.0, %v5246
    %v5281 = vmul.f32 %v5249, 1.442695
    %v5282 = vpow.pop %v5281
    %v5283 = vmul.f32 %v5250, 1.442695
    %v5284 = vpow.pop %v5283
    %v5285 = vmul.f32 %v5251, 1.442695
    %v5286 = vpow.pop %v5285
    %v5287 = vmul.f32 %v5252, 1.442695
    %v5288 = vpow.pop %v5287
    %v5289 = vmul.f32 %v5253, 1.442695
    %v5290 = vpow.pop %v5289
    %v5291 = vmul.f32 %v5254, 1.442695
    %v5292 = vpow.pop %v5291
    %v5293 = vmul.f32 %v5255, 1.442695
    %v5294 = vpow.pop %v5293
    %v5295 = vmul.f32 %v5256, 1.442695
    %v5296 = vpow.pop %v5295
    %v5297 = vmul.f32 %v5257, 1.442695
    %v5298 = vpow.pop %v5297
    %v5299 = vmul.f32 %v5258, 1.442695
    %v5300 = vpow.pop %v5299
    %v5301 = vmul.f32 %v5259, 1.442695
    %v5302 = vpow.pop %v5301
    %v5303 = vmul.f32 %v5260, 1.442695
    %v5304 = vpow.pop %v5303
    %v5305 = vmul.f32 %v5261, 1.442695
    %v5306 = vpow.pop %v5305
    %v5307 = vmul.f32 %v5262, 1.442695
    %v5308 = vpow.pop %v5307
    %v5309 = vmul.f32 %v5263, 1.442695
    %v5310 = vpow.pop %v5309
    %v5311 = vmul.f32 %v5264, 1.442695
    %v5312 = vpow.pop %v5311
    %v5313 = vmul.f32 %v5265, 1.442695
    %v5314 = vpow.pop %v5313
    %v5315 = vmul.f32 %v5266, 1.442695
    %v5316 = vpow.pop %v5315
    %v5317 = vmul.f32 %v5267, 1.442695
    %v5318 = vpow.pop %v5317
    %v5319 = vmul.f32 %v5268, 1.442695
    %v5320 = vpow.pop %v5319
    %v5321 = vmul.f32 %v5269, 1.442695
    %v5322 = vpow.pop %v5321
    %v5323 = vmul.f32 %v5270, 1.442695
    %v5324 = vpow.pop %v5323
    %v5325 = vmul.f32 %v5271, 1.442695
    %v5326 = vpow.pop %v5325
    %v5327 = vmul.f32 %v5272, 1.442695
    %v5328 = vpow.pop %v5327
    %v5329 = vmul.f32 %v5273, 1.442695
    %v5330 = vpow.pop %v5329
    %v5331 = vmul.f32 %v5274, 1.442695
    %v5332 = vpow.pop %v5331
    %v5333 = vmul.f32 %v5275, 1.442695
    %v5334 = vpow.pop %v5333
    %v5335 = vmul.f32 %v5276, 1.442695
    %v5336 = vpow.pop %v5335
    %v5337 = vmul.f32 %v5277, 1.442695
    %v5338 = vpow.pop %v5337
    %v5339 = vmul.f32 %v5278, 1.442695
    %v5340 = vpow.pop %v5339
    %v5341 = vmul.f32 %v5279, 1.442695
    %v5342 = vpow.pop %v5341
    %v5343 = vmul.f32 %v5280, 1.442695
    %v5344 = vpow.pop %v5343
    %v5345 = vadd.f32 %v5282, 1.0
    %v5346 = vadd.f32 %v5284, 1.0
    %v5347 = vadd.f32 %v5286, 1.0
    %v5348 = vadd.f32 %v5288, 1.0
    %v5349 = vadd.f32 %v5290, 1.0
    %v5350 = vadd.f32 %v5292, 1.0
    %v5351 = vadd.f32 %v5294, 1.0
    %v5352 = vadd.f32 %v5296, 1.0
    %v5353 = vadd.f32 %v5298, 1.0
    %v5354 = vadd.f32 %v5300, 1.0
    %v5355 = vadd.f32 %v5302, 1.0
    %v5356 = vadd.f32 %v5304, 1.0
    %v5357 = vadd.f32 %v5306, 1.0
    %v5358 = vadd.f32 %v5308, 1.0
    %v5359 = vadd.f32 %v5310, 1.0
    %v5360 = vadd.f32 %v5312, 1.0
    %v5361 = vadd.f32 %v5314, 1.0
    %v5362 = vadd.f32 %v5316, 1.0
    %v5363 = vadd.f32 %v5318, 1.0
    %v5364 = vadd.f32 %v5320, 1.0
    %v5365 = vadd.f32 %v5322, 1.0
    %v5366 = vadd.f32 %v5324, 1.0
    %v5367 = vadd.f32 %v5326, 1.0
    %v5368 = vadd.f32 %v5328, 1.0
    %v5369 = vadd.f32 %v5330, 1.0
    %v5370 = vadd.f32 %v5332, 1.0
    %v5371 = vadd.f32 %v5334, 1.0
    %v5372 = vadd.f32 %v5336, 1.0
    %v5373 = vadd.f32 %v5338, 1.0
    %v5374 = vadd.f32 %v5340, 1.0
    %v5375 = vadd.f32 %v5342, 1.0
    %v5376 = vadd.f32 %v5344, 1.0
    %v5377 = vrcp.pop %v5345
    %v5378 = vrcp.pop %v5346
    %v5379 = vrcp.pop %v5347
    %v5380 = vrcp.pop %v5348
    %v5381 = vrcp.pop %v5349
    %v5382 = vrcp.pop %v5350
    %v5383 = vrcp.pop %v5351
    %v5384 = vrcp.pop %v5352
    %v5385 = vrcp.pop %v5353
    %v5386 = vrcp.pop %v5354
    %v5387 = vrcp.pop %v5355
    %v5388 = vrcp.pop %v5356
    %v5389 = vrcp.pop %v5357
    %v5390 = vrcp.pop %v5358
    %v5391 = vrcp.pop %v5359
    %v5392 = vrcp.pop %v5360
    %v5393 = vrcp.pop %v5361
    %v5394 = vrcp.pop %v5362
    %v5395 = vrcp.pop %v5363
    %v5396 = vrcp.pop %v5364
    %v5397 = vrcp.pop %v5365
    %v5398 = vrcp.pop %v5366
    %v5399 = vrcp.pop %v5367
    %v5400 = vrcp.pop %v5368
    %v5401 = vrcp.pop %v5369
    %v5402 = vrcp.pop %v5370
    %v5403 = vrcp.pop %v5371
    %v5404 = vrcp.pop %v5372
    %v5405 = vrcp.pop %v5373
    %v5406 = vrcp.pop %v5374
    %v5407 = vrcp.pop %v5375
    %v5408 = vrcp.pop %v5376
    %v5409 = vmul.f32 %v5123, %v5377
    %v5410 = vmul.f32 %v5126, %v5378
    %v5411 = vmul.f32 %v5131, %v5379
    %v5412 = vmul.f32 %v5134, %v5380
    %v5413 = vmul.f32 %v5139, %v5381
    %v5414 = vmul.f32 %v5142, %v5382
    %v5415 = vmul.f32 %v5147, %v5383
    %v5416 = vmul.f32 %v5150, %v5384
    %v5417 = vmul.f32 %v5155, %v5385
    %v5418 = vmul.f32 %v5158, %v5386
    %v5419 = vmul.f32 %v5163, %v5387
    %v5420 = vmul.f32 %v5166, %v5388
    %v5421 = vmul.f32 %v5171, %v5389
    %v5422 = vmul.f32 %v5174, %v5390
    %v5423 = vmul.f32 %v5179, %v5391
    %v5424 = vmul.f32 %v5182, %v5392
    %v5425 = vmul.f32 %v5187, %v5393
    %v5426 = vmul.f32 %v5190, %v5394
    %v5427 = vmul.f32 %v5195, %v5395
    %v5428 = vmul.f32 %v5198, %v5396
    %v5429 = vmul.f32 %v5203, %v5397
    %v5430 = vmul.f32 %v5206, %v5398
    %v5431 = vmul.f32 %v5211, %v5399
    %v5432 = vmul.f32 %v5214, %v5400
    %v5433 = vmul.f32 %v5219, %v5401
    %v5434 = vmul.f32 %v5222, %v5402
    %v5435 = vmul.f32 %v5227, %v5403
    %v5436 = vmul.f32 %v5230, %v5404
    %v5437 = vmul.f32 %v5235, %v5405
    %v5438 = vmul.f32 %v5238, %v5406
    %v5439 = vmul.f32 %v5243, %v5407
    %v5440 = vmul.f32 %v5246, %v5408
    %v5441 = vpack.c.bf16 %v5410, %v5409
    %v5442 = vpack.c.bf16 %v5412, %v5411
    %v5443 = vpack.c.bf16 %v5414, %v5413
    %v5444 = vpack.c.bf16 %v5416, %v5415
    %v5445 = vpack.c.bf16 %v5418, %v5417
    %v5446 = vpack.c.bf16 %v5420, %v5419
    %v5447 = vpack.c.bf16 %v5422, %v5421
    %v5448 = vpack.c.bf16 %v5424, %v5423
    %v5449 = vpack.c.bf16 %v5426, %v5425
    %v5450 = vpack.c.bf16 %v5428, %v5427
    %v5451 = vpack.c.bf16 %v5430, %v5429
    %v5452 = vpack.c.bf16 %v5432, %v5431
    %v5453 = vpack.c.bf16 %v5434, %v5433
    %v5454 = vpack.c.bf16 %v5436, %v5435
    %v5455 = vpack.c.bf16 %v5438, %v5437
    %v5456 = vpack.c.bf16 %v5440, %v5439
    %s5457 = scalar_lea.vmem %s4, 192
    %v5458 = vld [vmem:[%s5457] sm:$0xf]
    %v5459 = vld [vmem:[%s5457 + $0x4] sm:$0xf]
    %v5460 = vld [vmem:[%s5457 + $0x8] sm:$0xf]
    %v5461 = vld [vmem:[%s5457 + $0xc] sm:$0xf]
    %v5462 = vld [vmem:[%s5457 + $0x10] sm:$0xf]
    %v5463 = vld [vmem:[%s5457 + $0x14] sm:$0xf]
    %v5464 = vld [vmem:[%s5457 + $0x18] sm:$0xf]
    %v5465 = vld [vmem:[%s5457 + $0x1c] sm:$0xf]
    %v5466 = vld [vmem:[%s5457 + $0x20] sm:$0xf]
    %v5467 = vld [vmem:[%s5457 + $0x24] sm:$0xf]
    %v5468 = vld [vmem:[%s5457 + $0x28] sm:$0xf]
    %v5469 = vld [vmem:[%s5457 + $0x2c] sm:$0xf]
    %v5470 = vld [vmem:[%s5457 + $0x30] sm:$0xf]
    %v5471 = vld [vmem:[%s5457 + $0x34] sm:$0xf]
    %v5472 = vld [vmem:[%s5457 + $0x38] sm:$0xf]
    %v5473 = vld [vmem:[%s5457 + $0x3c] sm:$0xf]
    %s5474 = scalar_lea.vmem %s5, 4
    %v5475 = vld [vmem:[%s5474] sm:$0x1]
    %v5477 = vlaneseq
    %v5478 = vshrl.u32 %v5477, 7
    %v5479 = vsub.s32 0, %v5478
    %v5480 = vrot.slane %v5475, %v5479
    %v5498 = vunpack.c.l.b16 %v5458
    %v5499 = vunpack.c.l.b16 %v5459
    %v5500 = vunpack.c.l.b16 %v5460
    %v5501 = vunpack.c.l.b16 %v5461
    %v5502 = vunpack.c.l.b16 %v5462
    %v5503 = vunpack.c.l.b16 %v5463
    %v5504 = vunpack.c.l.b16 %v5464
    %v5505 = vunpack.c.l.b16 %v5465
    %v5506 = vunpack.c.l.b16 %v5466
    %v5507 = vunpack.c.l.b16 %v5467
    %v5508 = vunpack.c.l.b16 %v5468
    %v5509 = vunpack.c.l.b16 %v5469
    %v5510 = vunpack.c.l.b16 %v5470
    %v5511 = vunpack.c.l.b16 %v5471
    %v5512 = vunpack.c.l.b16 %v5472
    %v5513 = vunpack.c.l.b16 %v5473
    %v5514 = vpack.c.b16 %v5499, %v5498
    %v5515 = vpack.c.b16 %v5501, %v5500
    %v5516 = vpack.c.b16 %v5503, %v5502
    %v5517 = vpack.c.b16 %v5505, %v5504
    %v5518 = vpack.c.b16 %v5507, %v5506
    %v5519 = vpack.c.b16 %v5509, %v5508
    %v5520 = vpack.c.b16 %v5511, %v5510
    %v5521 = vpack.c.b16 %v5513, %v5512
    %5530 = vmatprep.subr.bf16.mxu0 0
    %5531 = vmatpush1.bf16.msra.mxu0 %v5514
    %5532 = vmatprep.subr.bf16.mxu0 0
    %5533 = vmatpush1.bf16.msra.mxu0 %v5515
    %5534 = vmatprep.subr.bf16.mxu0 0
    %5535 = vmatpush1.bf16.msra.mxu0 %v5516
    %5536 = vmatprep.subr.bf16.mxu0 0
    %5537 = vmatpush1.bf16.msra.mxu0 %v5517
    %5538 = vmatprep.subr.bf16.mxu0 0
    %5539 = vmatpush1.bf16.msra.mxu0 %v5518
    %5540 = vmatprep.subr.bf16.mxu0 0
    %5541 = vmatpush1.bf16.msra.mxu0 %v5519
    %5542 = vmatprep.subr.bf16.mxu0 0
    %5543 = vmatpush1.bf16.msra.mxu0 %v5520
    %5544 = vmatprep.subr.bf16.mxu0 0
    %5545 = vmatpush1.bf16.msra.mxu0 %v5521
    %5546 = vmatprep.subr.bf16.mxu0 0
    %5547 = vmatpush1.bf16.msra.mxu0 0
    %5548 = vmatprep.subr.bf16.mxu0 0
    %5549 = vmatpush1.bf16.msra.mxu0 0
    %5550 = vmatprep.subr.bf16.mxu0 0
    %5551 = vmatpush1.bf16.msra.mxu0 0
    %5552 = vmatprep.subr.bf16.mxu0 0
    %5553 = vmatpush1.bf16.msra.mxu0 0
    %5554 = vmatprep.subr.bf16.mxu0 0
    %5555 = vmatpush1.bf16.msra.mxu0 0
    %5556 = vmatprep.subr.bf16.mxu0 0
    %5557 = vmatpush1.bf16.msra.mxu0 0
    %5558 = vmatprep.subr.bf16.mxu0 0
    %5559 = vmatpush1.bf16.msra.mxu0 0
    %5560 = vmatprep.subr.bf16.mxu0 0
    %5561 = vmatpush1.bf16.msra.mxu0 0
    %5562 = vmatprep.mubr.bf16.mxu0 0
    %5563 = vmatmul.mubr.bf16.gmra.mrb[0].mxu0 %v5441
    %v5564 = vpop.f32.mrb[0].mxu0
    %v5565 = vadd.f32 %v5480, %v5564
    %v5566 = vpop.f32.mrb[0].mxu0
    %v5567 = vpop.f32.mrb[0].mxu0
    %v5568 = vadd.f32 %v5480, %v5567
    %v5569 = vpop.f32.mrb[0].mxu0
    %5570 = vmatprep.mubr.bf16.mxu0 0
    %5571 = vmatmul.mubr.bf16.gmra.mrb[0].mxu0 %v5442
    %v5572 = vpop.f32.mrb[0].mxu0
    %v5573 = vadd.f32 %v5480, %v5572
    %v5574 = vpop.f32.mrb[0].mxu0
    %v5575 = vpop.f32.mrb[0].mxu0
    %v5576 = vadd.f32 %v5480, %v5575
    %v5577 = vpop.f32.mrb[0].mxu0
    %5578 = vmatprep.mubr.bf16.mxu0 0
    %5579 = vmatmul.mubr.bf16.gmra.mrb[0].mxu0 %v5443
    %v5580 = vpop.f32.mrb[0].mxu0
    %v5581 = vadd.f32 %v5480, %v5580
    %v5582 = vpop.f32.mrb[0].mxu0
    %v5583 = vpop.f32.mrb[0].mxu0
    %v5584 = vadd.f32 %v5480, %v5583
    %v5585 = vpop.f32.mrb[0].mxu0
    %5586 = vmatprep.mubr.bf16.mxu0 0
    %5587 = vmatmul.mubr.bf16.gmra.mrb[0].mxu0 %v5444
    %v5588 = vpop.f32.mrb[0].mxu0
    %v5589 = vadd.f32 %v5480, %v5588
    %v5590 = vpop.f32.mrb[0].mxu0
    %v5591 = vpop.f32.mrb[0].mxu0
    %v5592 = vadd.f32 %v5480, %v5591
    %v5593 = vpop.f32.mrb[0].mxu0
    %5594 = vmatprep.mubr.bf16.mxu0 0
    %5595 = vmatmul.mubr.bf16.gmra.mrb[0].mxu0 %v5445
    %v5596 = vpop.f32.mrb[0].mxu0
    %v5597 = vadd.f32 %v5480, %v5596
    %v5598 = vpop.f32.mrb[0].mxu0
    %v5599 = vpop.f32.mrb[0].mxu0
    %v5600 = vadd.f32 %v5480, %v5599
    %v5601 = vpop.f32.mrb[0].mxu0
    %5602 = vmatprep.mubr.bf16.mxu0 0
    %5603 = vmatmul.mubr.bf16.gmra.mrb[0].mxu0 %v5446
    %v5604 = vpop.f32.mrb[0].mxu0
    %v5605 = vadd.f32 %v5480, %v5604
    %v5606 = vpop.f32.mrb[0].mxu0
    %v5607 = vpop.f32.mrb[0].mxu0
    %v5608 = vadd.f32 %v5480, %v5607
    %v5609 = vpop.f32.mrb[0].mxu0
    %5610 = vmatprep.mubr.bf16.mxu0 0
    %5611 = vmatmul.mubr.bf16.gmra.mrb[0].mxu0 %v5447
    %v5612 = vpop.f32.mrb[0].mxu0
    %v5613 = vadd.f32 %v5480, %v5612
    %v5614 = vpop.f32.mrb[0].mxu0
    %v5615 = vpop.f32.mrb[0].mxu0
    %v5616 = vadd.f32 %v5480, %v5615
    %v5617 = vpop.f32.mrb[0].mxu0
    %5618 = vmatprep.mubr.bf16.mxu0 0
    %5619 = vmatmul.mubr.bf16.gmra.mrb[0].mxu0 %v5448
    %v5620 = vpop.f32.mrb[0].mxu0
    %v5621 = vadd.f32 %v5480, %v5620
    %v5622 = vpop.f32.mrb[0].mxu0
    %v5623 = vpop.f32.mrb[0].mxu0
    %v5624 = vadd.f32 %v5480, %v5623
    %v5625 = vpop.f32.mrb[0].mxu0
    %5626 = vmatprep.mubr.bf16.mxu0 0
    %5627 = vmatmul.mubr.bf16.gmra.mrb[0].mxu0 %v5449
    %v5628 = vpop.f32.mrb[0].mxu0
    %v5629 = vadd.f32 %v5480, %v5628
    %v5630 = vpop.f32.mrb[0].mxu0
    %v5631 = vpop.f32.mrb[0].mxu0
    %v5632 = vadd.f32 %v5480, %v5631
    %v5633 = vpop.f32.mrb[0].mxu0
    %5634 = vmatprep.mubr.bf16.mxu0 0
    %5635 = vmatmul.mubr.bf16.gmra.mrb[0].mxu0 %v5450
    %v5636 = vpop.f32.mrb[0].mxu0
    %v5637 = vadd.f32 %v5480, %v5636
    %v5638 = vpop.f32.mrb[0].mxu0
    %v5639 = vpop.f32.mrb[0].mxu0
    %v5640 = vadd.f32 %v5480, %v5639
    %v5641 = vpop.f32.mrb[0].mxu0
    %5642 = vmatprep.mubr.bf16.mxu0 0
    %5643 = vmatmul.mubr.bf16.gmra.mrb[0].mxu0 %v5451
    %v5644 = vpop.f32.mrb[0].mxu0
    %v5645 = vadd.f32 %v5480, %v5644
    %v5646 = vpop.f32.mrb[0].mxu0
    %v5647 = vpop.f32.mrb[0].mxu0
    %v5648 = vadd.f32 %v5480, %v5647
    %v5649 = vpop.f32.mrb[0].mxu0
    %5650 = vmatprep.mubr.bf16.mxu0 0
    %5651 = vmatmul.mubr.bf16.gmra.mrb[0].mxu0 %v5452
    %v5652 = vpop.f32.mrb[0].mxu0
    %v5653 = vadd.f32 %v5480, %v5652
    %v5654 = vpop.f32.mrb[0].mxu0
    %v5655 = vpop.f32.mrb[0].mxu0
    %v5656 = vadd.f32 %v5480, %v5655
    %v5657 = vpop.f32.mrb[0].mxu0
    %5658 = vmatprep.mubr.bf16.mxu0 0
    %5659 = vmatmul.mubr.bf16.gmra.mrb[0].mxu0 %v5453
    %v5660 = vpop.f32.mrb[0].mxu0
    %v5661 = vadd.f32 %v5480, %v5660
    %v5662 = vpop.f32.mrb[0].mxu0
    %v5663 = vpop.f32.mrb[0].mxu0
    %v5664 = vadd.f32 %v5480, %v5663
    %v5665 = vpop.f32.mrb[0].mxu0
    %5666 = vmatprep.mubr.bf16.mxu0 0
    %5667 = vmatmul.mubr.bf16.gmra.mrb[0].mxu0 %v5454
    %v5668 = vpop.f32.mrb[0].mxu0
    %v5669 = vadd.f32 %v5480, %v5668
    %v5670 = vpop.f32.mrb[0].mxu0
    %v5671 = vpop.f32.mrb[0].mxu0
    %v5672 = vadd.f32 %v5480, %v5671
    %v5673 = vpop.f32.mrb[0].mxu0
    %5674 = vmatprep.mubr.bf16.mxu0 0
    %5675 = vmatmul.mubr.bf16.gmra.mrb[0].mxu0 %v5455
    %v5676 = vpop.f32.mrb[0].mxu0
    %v5677 = vadd.f32 %v5480, %v5676
    %v5678 = vpop.f32.mrb[0].mxu0
    %v5679 = vpop.f32.mrb[0].mxu0
    %v5680 = vadd.f32 %v5480, %v5679
    %v5681 = vpop.f32.mrb[0].mxu0
    %5682 = vmatprep.mubr.bf16.mxu0 0
    %5683 = vmatmul.mubr.bf16.gmra.mrb[0].mxu0 %v5456
    %v5684 = vpop.f32.mrb[0].mxu0
    %v5685 = vadd.f32 %v5480, %v5684
    %v5686 = vpop.f32.mrb[0].mxu0
    %v5687 = vpop.f32.mrb[0].mxu0
    %v5688 = vadd.f32 %v5480, %v5687
    %v5689 = vpop.f32.mrb[0].mxu0
    %5690 = vdwg.mxu0
    %v5691 = vsub.f32 0.0, %v5565
    %v5692 = vsub.f32 0.0, %v5568
    %v5693 = vsub.f32 0.0, %v5573
    %v5694 = vsub.f32 0.0, %v5576
    %v5695 = vsub.f32 0.0, %v5581
    %v5696 = vsub.f32 0.0, %v5584
    %v5697 = vsub.f32 0.0, %v5589
    %v5698 = vsub.f32 0.0, %v5592
    %v5699 = vsub.f32 0.0, %v5597
    %v5700 = vsub.f32 0.0, %v5600
    %v5701 = vsub.f32 0.0, %v5605
    %v5702 = vsub.f32 0.0, %v5608
    %v5703 = vsub.f32 0.0, %v5613
    %v5704 = vsub.f32 0.0, %v5616
    %v5705 = vsub.f32 0.0, %v5621
    %v5706 = vsub.f32 0.0, %v5624
    %v5707 = vsub.f32 0.0, %v5629
    %v5708 = vsub.f32 0.0, %v5632
    %v5709 = vsub.f32 0.0, %v5637
    %v5710 = vsub.f32 0.0, %v5640
    %v5711 = vsub.f32 0.0, %v5645
    %v5712 = vsub.f32 0.0, %v5648
    %v5713 = vsub.f32 0.0, %v5653
    %v5714 = vsub.f32 0.0, %v5656
    %v5715 = vsub.f32 0.0, %v5661
    %v5716 = vsub.f32 0.0, %v5664
    %v5717 = vsub.f32 0.0, %v5669
    %v5718 = vsub.f32 0.0, %v5672
    %v5719 = vsub.f32 0.0, %v5677
    %v5720 = vsub.f32 0.0, %v5680
    %v5721 = vsub.f32 0.0, %v5685
    %v5722 = vsub.f32 0.0, %v5688
    %v5723 = vmul.f32 %v5691, 1.442695
    %v5724 = vpow.pop %v5723
    %v5725 = vmul.f32 %v5692, 1.442695
    %v5726 = vpow.pop %v5725
    %v5727 = vmul.f32 %v5693, 1.442695
    %v5728 = vpow.pop %v5727
    %v5729 = vmul.f32 %v5694, 1.442695
    %v5730 = vpow.pop %v5729
    %v5731 = vmul.f32 %v5695, 1.442695
    %v5732 = vpow.pop %v5731
    %v5733 = vmul.f32 %v5696, 1.442695
    %v5734 = vpow.pop %v5733
    %v5735 = vmul.f32 %v5697, 1.442695
    %v5736 = vpow.pop %v5735
    %v5737 = vmul.f32 %v5698, 1.442695
    %v5738 = vpow.pop %v5737
    %v5739 = vmul.f32 %v5699, 1.442695
    %v5740 = vpow.pop %v5739
    %v5741 = vmul.f32 %v5700, 1.442695
    %v5742 = vpow.pop %v5741
    %v5743 = vmul.f32 %v5701, 1.442695
    %v5744 = vpow.pop %v5743
    %v5745 = vmul.f32 %v5702, 1.442695
    %v5746 = vpow.pop %v5745
    %v5747 = vmul.f32 %v5703, 1.442695
    %v5748 = vpow.pop %v5747
    %v5749 = vmul.f32 %v5704, 1.442695
    %v5750 = vpow.pop %v5749
    %v5751 = vmul.f32 %v5705, 1.442695
    %v5752 = vpow.pop %v5751
    %v5753 = vmul.f32 %v5706, 1.442695
    %v5754 = vpow.pop %v5753
    %v5755 = vmul.f32 %v5707, 1.442695
    %v5756 = vpow.pop %v5755
    %v5757 = vmul.f32 %v5708, 1.442695
    %v5758 = vpow.pop %v5757
    %v5759 = vmul.f32 %v5709, 1.442695
    %v5760 = vpow.pop %v5759
    %v5761 = vmul.f32 %v5710, 1.442695
    %v5762 = vpow.pop %v5761
    %v5763 = vmul.f32 %v5711, 1.442695
    %v5764 = vpow.pop %v5763
    %v5765 = vmul.f32 %v5712, 1.442695
    %v5766 = vpow.pop %v5765
    %v5767 = vmul.f32 %v5713, 1.442695
    %v5768 = vpow.pop %v5767
    %v5769 = vmul.f32 %v5714, 1.442695
    %v5770 = vpow.pop %v5769
    %v5771 = vmul.f32 %v5715, 1.442695
    %v5772 = vpow.pop %v5771
    %v5773 = vmul.f32 %v5716, 1.442695
    %v5774 = vpow.pop %v5773
    %v5775 = vmul.f32 %v5717, 1.442695
    %v5776 = vpow.pop %v5775
    %v5777 = vmul.f32 %v5718, 1.442695
    %v5778 = vpow.pop %v5777
    %v5779 = vmul.f32 %v5719, 1.442695
    %v5780 = vpow.pop %v5779
    %v5781 = vmul.f32 %v5720, 1.442695
    %v5782 = vpow.pop %v5781
    %v5783 = vmul.f32 %v5721, 1.442695
    %v5784 = vpow.pop %v5783
    %v5785 = vmul.f32 %v5722, 1.442695
    %v5786 = vpow.pop %v5785
    %v5787 = vadd.f32 %v5724, 1.0
    %v5788 = vadd.f32 %v5726, 1.0
    %v5789 = vadd.f32 %v5728, 1.0
    %v5790 = vadd.f32 %v5730, 1.0
    %v5791 = vadd.f32 %v5732, 1.0
    %v5792 = vadd.f32 %v5734, 1.0
    %v5793 = vadd.f32 %v5736, 1.0
    %v5794 = vadd.f32 %v5738, 1.0
    %v5795 = vadd.f32 %v5740, 1.0
    %v5796 = vadd.f32 %v5742, 1.0
    %v5797 = vadd.f32 %v5744, 1.0
    %v5798 = vadd.f32 %v5746, 1.0
    %v5799 = vadd.f32 %v5748, 1.0
    %v5800 = vadd.f32 %v5750, 1.0
    %v5801 = vadd.f32 %v5752, 1.0
    %v5802 = vadd.f32 %v5754, 1.0
    %v5803 = vadd.f32 %v5756, 1.0
    %v5804 = vadd.f32 %v5758, 1.0
    %v5805 = vadd.f32 %v5760, 1.0
    %v5806 = vadd.f32 %v5762, 1.0
    %v5807 = vadd.f32 %v5764, 1.0
    %v5808 = vadd.f32 %v5766, 1.0
    %v5809 = vadd.f32 %v5768, 1.0
    %v5810 = vadd.f32 %v5770, 1.0
    %v5811 = vadd.f32 %v5772, 1.0
    %v5812 = vadd.f32 %v5774, 1.0
    %v5813 = vadd.f32 %v5776, 1.0
    %v5814 = vadd.f32 %v5778, 1.0
    %v5815 = vadd.f32 %v5780, 1.0
    %v5816 = vadd.f32 %v5782, 1.0
    %v5817 = vadd.f32 %v5784, 1.0
    %v5818 = vadd.f32 %v5786, 1.0
    %v5819 = vrcp.pop %v5787
    %v5820 = vrcp.pop %v5788
    %v5821 = vrcp.pop %v5789
    %v5822 = vrcp.pop %v5790
    %v5823 = vrcp.pop %v5791
    %v5824 = vrcp.pop %v5792
    %v5825 = vrcp.pop %v5793
    %v5826 = vrcp.pop %v5794
    %v5827 = vrcp.pop %v5795
    %v5828 = vrcp.pop %v5796
    %v5829 = vrcp.pop %v5797
    %v5830 = vrcp.pop %v5798
    %v5831 = vrcp.pop %v5799
    %v5832 = vrcp.pop %v5800
    %v5833 = vrcp.pop %v5801
    %v5834 = vrcp.pop %v5802
    %v5835 = vrcp.pop %v5803
    %v5836 = vrcp.pop %v5804
    %v5837 = vrcp.pop %v5805
    %v5838 = vrcp.pop %v5806
    %v5839 = vrcp.pop %v5807
    %v5840 = vrcp.pop %v5808
    %v5841 = vrcp.pop %v5809
    %v5842 = vrcp.pop %v5810
    %v5843 = vrcp.pop %v5811
    %v5844 = vrcp.pop %v5812
    %v5845 = vrcp.pop %v5813
    %v5846 = vrcp.pop %v5814
    %v5847 = vrcp.pop %v5815
    %v5848 = vrcp.pop %v5816
    %v5849 = vrcp.pop %v5817
    %v5850 = vrcp.pop %v5818
    %v5851 = vmul.f32 %v5565, %v5819
    %v5852 = vmul.f32 %v5568, %v5820
    %v5853 = vmul.f32 %v5573, %v5821
    %v5854 = vmul.f32 %v5576, %v5822
    %v5855 = vmul.f32 %v5581, %v5823
    %v5856 = vmul.f32 %v5584, %v5824
    %v5857 = vmul.f32 %v5589, %v5825
    %v5858 = vmul.f32 %v5592, %v5826
    %v5859 = vmul.f32 %v5597, %v5827
    %v5860 = vmul.f32 %v5600, %v5828
    %v5861 = vmul.f32 %v5605, %v5829
    %v5862 = vmul.f32 %v5608, %v5830
    %v5863 = vmul.f32 %v5613, %v5831
    %v5864 = vmul.f32 %v5616, %v5832
    %v5865 = vmul.f32 %v5621, %v5833
    %v5866 = vmul.f32 %v5624, %v5834
    %v5867 = vmul.f32 %v5629, %v5835
    %v5868 = vmul.f32 %v5632, %v5836
    %v5869 = vmul.f32 %v5637, %v5837
    %v5870 = vmul.f32 %v5640, %v5838
    %v5871 = vmul.f32 %v5645, %v5839
    %v5872 = vmul.f32 %v5648, %v5840
    %v5873 = vmul.f32 %v5653, %v5841
    %v5874 = vmul.f32 %v5656, %v5842
    %v5875 = vmul.f32 %v5661, %v5843
    %v5876 = vmul.f32 %v5664, %v5844
    %v5877 = vmul.f32 %v5669, %v5845
    %v5878 = vmul.f32 %v5672, %v5846
    %v5879 = vmul.f32 %v5677, %v5847
    %v5880 = vmul.f32 %v5680, %v5848
    %v5881 = vmul.f32 %v5685, %v5849
    %v5882 = vmul.f32 %v5688, %v5850
    %v5883 = vpack.c.bf16 %v5852, %v5851
    %v5884 = vpack.c.bf16 %v5854, %v5853
    %v5885 = vpack.c.bf16 %v5856, %v5855
    %v5886 = vpack.c.bf16 %v5858, %v5857
    %v5887 = vpack.c.bf16 %v5860, %v5859
    %v5888 = vpack.c.bf16 %v5862, %v5861
    %v5889 = vpack.c.bf16 %v5864, %v5863
    %v5890 = vpack.c.bf16 %v5866, %v5865
    %v5891 = vpack.c.bf16 %v5868, %v5867
    %v5892 = vpack.c.bf16 %v5870, %v5869
    %v5893 = vpack.c.bf16 %v5872, %v5871
    %v5894 = vpack.c.bf16 %v5874, %v5873
    %v5895 = vpack.c.bf16 %v5876, %v5875
    %v5896 = vpack.c.bf16 %v5878, %v5877
    %v5897 = vpack.c.bf16 %v5880, %v5879
    %v5898 = vpack.c.bf16 %v5882, %v5881
    %s5899 = scalar_lea.vmem %s4, 256
    %v5900 = vld [vmem:[%s5899] sm:$0xf]
    %v5901 = vld [vmem:[%s5899 + $0x4] sm:$0xf]
    %v5902 = vld [vmem:[%s5899 + $0x8] sm:$0xf]
    %v5903 = vld [vmem:[%s5899 + $0xc] sm:$0xf]
    %v5904 = vld [vmem:[%s5899 + $0x10] sm:$0xf]
    %v5905 = vld [vmem:[%s5899 + $0x14] sm:$0xf]
    %v5906 = vld [vmem:[%s5899 + $0x18] sm:$0xf]
    %v5907 = vld [vmem:[%s5899 + $0x1c] sm:$0xf]
    %v5908 = vld [vmem:[%s5899 + $0x20] sm:$0xf]
    %v5909 = vld [vmem:[%s5899 + $0x24] sm:$0xf]
    %v5910 = vld [vmem:[%s5899 + $0x28] sm:$0xf]
    %v5911 = vld [vmem:[%s5899 + $0x2c] sm:$0xf]
    %v5912 = vld [vmem:[%s5899 + $0x30] sm:$0xf]
    %v5913 = vld [vmem:[%s5899 + $0x34] sm:$0xf]
    %v5914 = vld [vmem:[%s5899 + $0x38] sm:$0xf]
    %v5915 = vld [vmem:[%s5899 + $0x3c] sm:$0xf]
    %s5916 = scalar_lea.vmem %s5, 5
    %v5917 = vld [vmem:[%s5916] sm:$0x1]
    %v5919 = vlaneseq
    %v5920 = vshrl.u32 %v5919, 7
    %v5921 = vsub.s32 0, %v5920
    %v5922 = vrot.slane %v5917, %v5921
    %v5940 = vunpack.c.l.b16 %v5900
    %v5941 = vunpack.c.l.b16 %v5901
    %v5942 = vunpack.c.l.b16 %v5902
    %v5943 = vunpack.c.l.b16 %v5903
    %v5944 = vunpack.c.l.b16 %v5904
    %v5945 = vunpack.c.l.b16 %v5905
    %v5946 = vunpack.c.l.b16 %v5906
    %v5947 = vunpack.c.l.b16 %v5907
    %v5948 = vunpack.c.l.b16 %v5908
    %v5949 = vunpack.c.l.b16 %v5909
    %v5950 = vunpack.c.l.b16 %v5910
    %v5951 = vunpack.c.l.b16 %v5911
    %v5952 = vunpack.c.l.b16 %v5912
    %v5953 = vunpack.c.l.b16 %v5913
    %v5954 = vunpack.c.l.b16 %v5914
    %v5955 = vunpack.c.l.b16 %v5915
    %v5956 = vpack.c.b16 %v5941, %v5940
    %v5957 = vpack.c.b16 %v5943, %v5942
    %v5958 = vpack.c.b16 %v5945, %v5944
    %v5959 = vpack.c.b16 %v5947, %v5946
    %v5960 = vpack.c.b16 %v5949, %v5948
    %v5961 = vpack.c.b16 %v5951, %v5950
    %v5962 = vpack.c.b16 %v5953, %v5952
    %v5963 = vpack.c.b16 %v5955, %v5954
    %5972 = vmatprep.subr.bf16.mxu0 0
    %5973 = vmatpush1.bf16.msra.mxu0 %v5956
    %5974 = vmatprep.subr.bf16.mxu0 0
    %5975 = vmatpush1.bf16.msra.mxu0 %v5957
    %5976 = vmatprep.subr.bf16.mxu0 0
    %5977 = vmatpush1.bf16.msra.mxu0 %v5958
    %5978 = vmatprep.subr.bf16.mxu0 0
    %5979 = vmatpush1.bf16.msra.mxu0 %v5959
    %5980 = vmatprep.subr.bf16.mxu0 0
    %5981 = vmatpush1.bf16.msra.mxu0 %v5960
    %5982 = vmatprep.subr.bf16.mxu0 0
    %5983 = vmatpush1.bf16.msra.mxu0 %v5961
    %5984 = vmatprep.subr.bf16.mxu0 0
    %5985 = vmatpush1.bf16.msra.mxu0 %v5962
    %5986 = vmatprep.subr.bf16.mxu0 0
    %5987 = vmatpush1.bf16.msra.mxu0 %v5963
    %5988 = vmatprep.subr.bf16.mxu0 0
    %5989 = vmatpush1.bf16.msra.mxu0 0
    %5990 = vmatprep.subr.bf16.mxu0 0
    %5991 = vmatpush1.bf16.msra.mxu0 0
    %5992 = vmatprep.subr.bf16.mxu0 0
    %5993 = vmatpush1.bf16.msra.mxu0 0
    %5994 = vmatprep.subr.bf16.mxu0 0
    %5995 = vmatpush1.bf16.msra.mxu0 0
    %5996 = vmatprep.subr.bf16.mxu0 0
    %5997 = vmatpush1.bf16.msra.mxu0 0
    %5998 = vmatprep.subr.bf16.mxu0 0
    %5999 = vmatpush1.bf16.msra.mxu0 0
    %6000 = vmatprep.subr.bf16.mxu0 0
    %6001 = vmatpush1.bf16.msra.mxu0 0
    %6002 = vmatprep.subr.bf16.mxu0 0
    %6003 = vmatpush1.bf16.msra.mxu0 0
    %6004 = vmatprep.mubr.bf16.mxu0 0
    %6005 = vmatmul.mubr.bf16.gmra.mrb[0].mxu0 %v5883
    %v6006 = vpop.f32.mrb[0].mxu0
    %v6007 = vadd.f32 %v5922, %v6006
    %v6008 = vpop.f32.mrb[0].mxu0
    %v6009 = vpop.f32.mrb[0].mxu0
    %v6010 = vadd.f32 %v5922, %v6009
    %v6011 = vpop.f32.mrb[0].mxu0
    %6012 = vmatprep.mubr.bf16.mxu0 0
    %6013 = vmatmul.mubr.bf16.gmra.mrb[0].mxu0 %v5884
    %v6014 = vpop.f32.mrb[0].mxu0
    %v6015 = vadd.f32 %v5922, %v6014
    %v6016 = vpop.f32.mrb[0].mxu0
    %v6017 = vpop.f32.mrb[0].mxu0
    %v6018 = vadd.f32 %v5922, %v6017
    %v6019 = vpop.f32.mrb[0].mxu0
    %6020 = vmatprep.mubr.bf16.mxu0 0
    %6021 = vmatmul.mubr.bf16.gmra.mrb[0].mxu0 %v5885
    %v6022 = vpop.f32.mrb[0].mxu0
    %v6023 = vadd.f32 %v5922, %v6022
    %v6024 = vpop.f32.mrb[0].mxu0
    %v6025 = vpop.f32.mrb[0].mxu0
    %v6026 = vadd.f32 %v5922, %v6025
    %v6027 = vpop.f32.mrb[0].mxu0
    %6028 = vmatprep.mubr.bf16.mxu0 0
    %6029 = vmatmul.mubr.bf16.gmra.mrb[0].mxu0 %v5886
    %v6030 = vpop.f32.mrb[0].mxu0
    %v6031 = vadd.f32 %v5922, %v6030
    %v6032 = vpop.f32.mrb[0].mxu0
    %v6033 = vpop.f32.mrb[0].mxu0
    %v6034 = vadd.f32 %v5922, %v6033
    %v6035 = vpop.f32.mrb[0].mxu0
    %6036 = vmatprep.mubr.bf16.mxu0 0
    %6037 = vmatmul.mubr.bf16.gmra.mrb[0].mxu0 %v5887
    %v6038 = vpop.f32.mrb[0].mxu0
    %v6039 = vadd.f32 %v5922, %v6038
    %v6040 = vpop.f32.mrb[0].mxu0
    %v6041 = vpop.f32.mrb[0].mxu0
    %v6042 = vadd.f32 %v5922, %v6041
    %v6043 = vpop.f32.mrb[0].mxu0
    %6044 = vmatprep.mubr.bf16.mxu0 0
    %6045 = vmatmul.mubr.bf16.gmra.mrb[0].mxu0 %v5888
    %v6046 = vpop.f32.mrb[0].mxu0
    %v6047 = vadd.f32 %v5922, %v6046
    %v6048 = vpop.f32.mrb[0].mxu0
    %v6049 = vpop.f32.mrb[0].mxu0
    %v6050 = vadd.f32 %v5922, %v6049
    %v6051 = vpop.f32.mrb[0].mxu0
    %6052 = vmatprep.mubr.bf16.mxu0 0
    %6053 = vmatmul.mubr.bf16.gmra.mrb[0].mxu0 %v5889
    %v6054 = vpop.f32.mrb[0].mxu0
    %v6055 = vadd.f32 %v5922, %v6054
    %v6056 = vpop.f32.mrb[0].mxu0
    %v6057 = vpop.f32.mrb[0].mxu0
    %v6058 = vadd.f32 %v5922, %v6057
    %v6059 = vpop.f32.mrb[0].mxu0
    %6060 = vmatprep.mubr.bf16.mxu0 0
    %6061 = vmatmul.mubr.bf16.gmra.mrb[0].mxu0 %v5890
    %v6062 = vpop.f32.mrb[0].mxu0
    %v6063 = vadd.f32 %v5922, %v6062
    %v6064 = vpop.f32.mrb[0].mxu0
    %v6065 = vpop.f32.mrb[0].mxu0
    %v6066 = vadd.f32 %v5922, %v6065
    %v6067 = vpop.f32.mrb[0].mxu0
    %6068 = vmatprep.mubr.bf16.mxu0 0
    %6069 = vmatmul.mubr.bf16.gmra.mrb[0].mxu0 %v5891
    %v6070 = vpop.f32.mrb[0].mxu0
    %v6071 = vadd.f32 %v5922, %v6070
    %v6072 = vpop.f32.mrb[0].mxu0
    %v6073 = vpop.f32.mrb[0].mxu0
    %v6074 = vadd.f32 %v5922, %v6073
    %v6075 = vpop.f32.mrb[0].mxu0
    %6076 = vmatprep.mubr.bf16.mxu0 0
    %6077 = vmatmul.mubr.bf16.gmra.mrb[0].mxu0 %v5892
    %v6078 = vpop.f32.mrb[0].mxu0
    %v6079 = vadd.f32 %v5922, %v6078
    %v6080 = vpop.f32.mrb[0].mxu0
    %v6081 = vpop.f32.mrb[0].mxu0
    %v6082 = vadd.f32 %v5922, %v6081
    %v6083 = vpop.f32.mrb[0].mxu0
    %6084 = vmatprep.mubr.bf16.mxu0 0
    %6085 = vmatmul.mubr.bf16.gmra.mrb[0].mxu0 %v5893
    %v6086 = vpop.f32.mrb[0].mxu0
    %v6087 = vadd.f32 %v5922, %v6086
    %v6088 = vpop.f32.mrb[0].mxu0
    %v6089 = vpop.f32.mrb[0].mxu0
    %v6090 = vadd.f32 %v5922, %v6089
    %v6091 = vpop.f32.mrb[0].mxu0
    %6092 = vmatprep.mubr.bf16.mxu0 0
    %6093 = vmatmul.mubr.bf16.gmra.mrb[0].mxu0 %v5894
    %v6094 = vpop.f32.mrb[0].mxu0
    %v6095 = vadd.f32 %v5922, %v6094
    %v6096 = vpop.f32.mrb[0].mxu0
    %v6097 = vpop.f32.mrb[0].mxu0
    %v6098 = vadd.f32 %v5922, %v6097
    %v6099 = vpop.f32.mrb[0].mxu0
    %6100 = vmatprep.mubr.bf16.mxu0 0
    %6101 = vmatmul.mubr.bf16.gmra.mrb[0].mxu0 %v5895
    %v6102 = vpop.f32.mrb[0].mxu0
    %v6103 = vadd.f32 %v5922, %v6102
    %v6104 = vpop.f32.mrb[0].mxu0
    %v6105 = vpop.f32.mrb[0].mxu0
    %v6106 = vadd.f32 %v5922, %v6105
    %v6107 = vpop.f32.mrb[0].mxu0
    %6108 = vmatprep.mubr.bf16.mxu0 0
    %6109 = vmatmul.mubr.bf16.gmra.mrb[0].mxu0 %v5896
    %v6110 = vpop.f32.mrb[0].mxu0
    %v6111 = vadd.f32 %v5922, %v6110
    %v6112 = vpop.f32.mrb[0].mxu0
    %v6113 = vpop.f32.mrb[0].mxu0
    %v6114 = vadd.f32 %v5922, %v6113
    %v6115 = vpop.f32.mrb[0].mxu0
    %6116 = vmatprep.mubr.bf16.mxu0 0
    %6117 = vmatmul.mubr.bf16.gmra.mrb[0].mxu0 %v5897
    %v6118 = vpop.f32.mrb[0].mxu0
    %v6119 = vadd.f32 %v5922, %v6118
    %v6120 = vpop.f32.mrb[0].mxu0
    %v6121 = vpop.f32.mrb[0].mxu0
    %v6122 = vadd.f32 %v5922, %v6121
    %v6123 = vpop.f32.mrb[0].mxu0
    %6124 = vmatprep.mubr.bf16.mxu0 0
    %6125 = vmatmul.mubr.bf16.gmra.mrb[0].mxu0 %v5898
    %v6126 = vpop.f32.mrb[0].mxu0
    %v6127 = vadd.f32 %v5922, %v6126
    %v6128 = vpop.f32.mrb[0].mxu0
    %v6129 = vpop.f32.mrb[0].mxu0
    %v6130 = vadd.f32 %v5922, %v6129
    %v6131 = vpop.f32.mrb[0].mxu0
    %6132 = vdwg.mxu0
    %v6133 = vsub.f32 0.0, %v6007
    %v6134 = vsub.f32 0.0, %v6010
    %v6135 = vsub.f32 0.0, %v6015
    %v6136 = vsub.f32 0.0, %v6018
    %v6137 = vsub.f32 0.0, %v6023
    %v6138 = vsub.f32 0.0, %v6026
    %v6139 = vsub.f32 0.0, %v6031
    %v6140 = vsub.f32 0.0, %v6034
    %v6141 = vsub.f32 0.0, %v6039
    %v6142 = vsub.f32 0.0, %v6042
    %v6143 = vsub.f32 0.0, %v6047
    %v6144 = vsub.f32 0.0, %v6050
    %v6145 = vsub.f32 0.0, %v6055
    %v6146 = vsub.f32 0.0, %v6058
    %v6147 = vsub.f32 0.0, %v6063
    %v6148 = vsub.f32 0.0, %v6066
    %v6149 = vsub.f32 0.0, %v6071
    %v6150 = vsub.f32 0.0, %v6074
    %v6151 = vsub.f32 0.0, %v6079
    %v6152 = vsub.f32 0.0, %v6082
    %v6153 = vsub.f32 0.0, %v6087
    %v6154 = vsub.f32 0.0, %v6090
    %v6155 = vsub.f32 0.0, %v6095
    %v6156 = vsub.f32 0.0, %v6098
    %v6157 = vsub.f32 0.0, %v6103
    %v6158 = vsub.f32 0.0, %v6106
    %v6159 = vsub.f32 0.0, %v6111
    %v6160 = vsub.f32 0.0, %v6114
    %v6161 = vsub.f32 0.0, %v6119
    %v6162 = vsub.f32 0.0, %v6122
    %v6163 = vsub.f32 0.0, %v6127
    %v6164 = vsub.f32 0.0, %v6130
    %v6165 = vmul.f32 %v6133, 1.442695
    %v6166 = vpow.pop %v6165
    %v6167 = vmul.f32 %v6134, 1.442695
    %v6168 = vpow.pop %v6167
    %v6169 = vmul.f32 %v6135, 1.442695
    %v6170 = vpow.pop %v6169
    %v6171 = vmul.f32 %v6136, 1.442695
    %v6172 = vpow.pop %v6171
    %v6173 = vmul.f32 %v6137, 1.442695
    %v6174 = vpow.pop %v6173
    %v6175 = vmul.f32 %v6138, 1.442695
    %v6176 = vpow.pop %v6175
    %v6177 = vmul.f32 %v6139, 1.442695
    %v6178 = vpow.pop %v6177
    %v6179 = vmul.f32 %v6140, 1.442695
    %v6180 = vpow.pop %v6179
    %v6181 = vmul.f32 %v6141, 1.442695
    %v6182 = vpow.pop %v6181
    %v6183 = vmul.f32 %v6142, 1.442695
    %v6184 = vpow.pop %v6183
    %v6185 = vmul.f32 %v6143, 1.442695
    %v6186 = vpow.pop %v6185
    %v6187 = vmul.f32 %v6144, 1.442695
    %v6188 = vpow.pop %v6187
    %v6189 = vmul.f32 %v6145, 1.442695
    %v6190 = vpow.pop %v6189
    %v6191 = vmul.f32 %v6146, 1.442695
    %v6192 = vpow.pop %v6191
    %v6193 = vmul.f32 %v6147, 1.442695
    %v6194 = vpow.pop %v6193
    %v6195 = vmul.f32 %v6148, 1.442695
    %v6196 = vpow.pop %v6195
    %v6197 = vmul.f32 %v6149, 1.442695
    %v6198 = vpow.pop %v6197
    %v6199 = vmul.f32 %v6150, 1.442695
    %v6200 = vpow.pop %v6199
    %v6201 = vmul.f32 %v6151, 1.442695
    %v6202 = vpow.pop %v6201
    %v6203 = vmul.f32 %v6152, 1.442695
    %v6204 = vpow.pop %v6203
    %v6205 = vmul.f32 %v6153, 1.442695
    %v6206 = vpow.pop %v6205
    %v6207 = vmul.f32 %v6154, 1.442695
    %v6208 = vpow.pop %v6207
    %v6209 = vmul.f32 %v6155, 1.442695
    %v6210 = vpow.pop %v6209
    %v6211 = vmul.f32 %v6156, 1.442695
    %v6212 = vpow.pop %v6211
    %v6213 = vmul.f32 %v6157, 1.442695
    %v6214 = vpow.pop %v6213
    %v6215 = vmul.f32 %v6158, 1.442695
    %v6216 = vpow.pop %v6215
    %v6217 = vmul.f32 %v6159, 1.442695
    %v6218 = vpow.pop %v6217
    %v6219 = vmul.f32 %v6160, 1.442695
    %v6220 = vpow.pop %v6219
    %v6221 = vmul.f32 %v6161, 1.442695
    %v6222 = vpow.pop %v6221
    %v6223 = vmul.f32 %v6162, 1.442695
    %v6224 = vpow.pop %v6223
    %v6225 = vmul.f32 %v6163, 1.442695
    %v6226 = vpow.pop %v6225
    %v6227 = vmul.f32 %v6164, 1.442695
    %v6228 = vpow.pop %v6227
    %v6229 = vadd.f32 %v6166, 1.0
    %v6230 = vadd.f32 %v6168, 1.0
    %v6231 = vadd.f32 %v6170, 1.0
    %v6232 = vadd.f32 %v6172, 1.0
    %v6233 = vadd.f32 %v6174, 1.0
    %v6234 = vadd.f32 %v6176, 1.0
    %v6235 = vadd.f32 %v6178, 1.0
    %v6236 = vadd.f32 %v6180, 1.0
    %v6237 = vadd.f32 %v6182, 1.0
    %v6238 = vadd.f32 %v6184, 1.0
    %v6239 = vadd.f32 %v6186, 1.0
    %v6240 = vadd.f32 %v6188, 1.0
    %v6241 = vadd.f32 %v6190, 1.0
    %v6242 = vadd.f32 %v6192, 1.0
    %v6243 = vadd.f32 %v6194, 1.0
    %v6244 = vadd.f32 %v6196, 1.0
    %v6245 = vadd.f32 %v6198, 1.0
    %v6246 = vadd.f32 %v6200, 1.0
    %v6247 = vadd.f32 %v6202, 1.0
    %v6248 = vadd.f32 %v6204, 1.0
    %v6249 = vadd.f32 %v6206, 1.0
    %v6250 = vadd.f32 %v6208, 1.0
    %v6251 = vadd.f32 %v6210, 1.0
    %v6252 = vadd.f32 %v6212, 1.0
    %v6253 = vadd.f32 %v6214, 1.0
    %v6254 = vadd.f32 %v6216, 1.0
    %v6255 = vadd.f32 %v6218, 1.0
    %v6256 = vadd.f32 %v6220, 1.0
    %v6257 = vadd.f32 %v6222, 1.0
    %v6258 = vadd.f32 %v6224, 1.0
    %v6259 = vadd.f32 %v6226, 1.0
    %v6260 = vadd.f32 %v6228, 1.0
    %v6261 = vrcp.pop %v6229
    %v6262 = vrcp.pop %v6230
    %v6263 = vrcp.pop %v6231
    %v6264 = vrcp.pop %v6232
    %v6265 = vrcp.pop %v6233
    %v6266 = vrcp.pop %v6234
    %v6267 = vrcp.pop %v6235
    %v6268 = vrcp.pop %v6236
    %v6269 = vrcp.pop %v6237
    %v6270 = vrcp.pop %v6238
    %v6271 = vrcp.pop %v6239
    %v6272 = vrcp.pop %v6240
    %v6273 = vrcp.pop %v6241
    %v6274 = vrcp.pop %v6242
    %v6275 = vrcp.pop %v6243
    %v6276 = vrcp.pop %v6244
    %v6277 = vrcp.pop %v6245
    %v6278 = vrcp.pop %v6246
    %v6279 = vrcp.pop %v6247
    %v6280 = vrcp.pop %v6248
    %v6281 = vrcp.pop %v6249
    %v6282 = vrcp.pop %v6250
    %v6283 = vrcp.pop %v6251
    %v6284 = vrcp.pop %v6252
    %v6285 = vrcp.pop %v6253
    %v6286 = vrcp.pop %v6254
    %v6287 = vrcp.pop %v6255
    %v6288 = vrcp.pop %v6256
    %v6289 = vrcp.pop %v6257
    %v6290 = vrcp.pop %v6258
    %v6291 = vrcp.pop %v6259
    %v6292 = vrcp.pop %v6260
    %v6293 = vmul.f32 %v6007, %v6261
    %v6294 = vmul.f32 %v6010, %v6262
    %v6295 = vmul.f32 %v6015, %v6263
    %v6296 = vmul.f32 %v6018, %v6264
    %v6297 = vmul.f32 %v6023, %v6265
    %v6298 = vmul.f32 %v6026, %v6266
    %v6299 = vmul.f32 %v6031, %v6267
    %v6300 = vmul.f32 %v6034, %v6268
    %v6301 = vmul.f32 %v6039, %v6269
    %v6302 = vmul.f32 %v6042, %v6270
    %v6303 = vmul.f32 %v6047, %v6271
    %v6304 = vmul.f32 %v6050, %v6272
    %v6305 = vmul.f32 %v6055, %v6273
    %v6306 = vmul.f32 %v6058, %v6274
    %v6307 = vmul.f32 %v6063, %v6275
    %v6308 = vmul.f32 %v6066, %v6276
    %v6309 = vmul.f32 %v6071, %v6277
    %v6310 = vmul.f32 %v6074, %v6278
    %v6311 = vmul.f32 %v6079, %v6279
    %v6312 = vmul.f32 %v6082, %v6280
    %v6313 = vmul.f32 %v6087, %v6281
    %v6314 = vmul.f32 %v6090, %v6282
    %v6315 = vmul.f32 %v6095, %v6283
    %v6316 = vmul.f32 %v6098, %v6284
    %v6317 = vmul.f32 %v6103, %v6285
    %v6318 = vmul.f32 %v6106, %v6286
    %v6319 = vmul.f32 %v6111, %v6287
    %v6320 = vmul.f32 %v6114, %v6288
    %v6321 = vmul.f32 %v6119, %v6289
    %v6322 = vmul.f32 %v6122, %v6290
    %v6323 = vmul.f32 %v6127, %v6291
    %v6324 = vmul.f32 %v6130, %v6292
    %v6325 = vpack.c.bf16 %v6294, %v6293
    %v6326 = vpack.c.bf16 %v6296, %v6295
    %v6327 = vpack.c.bf16 %v6298, %v6297
    %v6328 = vpack.c.bf16 %v6300, %v6299
    %v6329 = vpack.c.bf16 %v6302, %v6301
    %v6330 = vpack.c.bf16 %v6304, %v6303
    %v6331 = vpack.c.bf16 %v6306, %v6305
    %v6332 = vpack.c.bf16 %v6308, %v6307
    %v6333 = vpack.c.bf16 %v6310, %v6309
    %v6334 = vpack.c.bf16 %v6312, %v6311
    %v6335 = vpack.c.bf16 %v6314, %v6313
    %v6336 = vpack.c.bf16 %v6316, %v6315
    %v6337 = vpack.c.bf16 %v6318, %v6317
    %v6338 = vpack.c.bf16 %v6320, %v6319
    %v6339 = vpack.c.bf16 %v6322, %v6321
    %v6340 = vpack.c.bf16 %v6324, %v6323
    %s6341 = scalar_lea.vmem %s4, 320
    %v6342 = vld [vmem:[%s6341] sm:$0xf]
    %v6343 = vld [vmem:[%s6341 + $0x4] sm:$0xf]
    %v6344 = vld [vmem:[%s6341 + $0x8] sm:$0xf]
    %v6345 = vld [vmem:[%s6341 + $0xc] sm:$0xf]
    %v6346 = vld [vmem:[%s6341 + $0x10] sm:$0xf]
    %v6347 = vld [vmem:[%s6341 + $0x14] sm:$0xf]
    %v6348 = vld [vmem:[%s6341 + $0x18] sm:$0xf]
    %v6349 = vld [vmem:[%s6341 + $0x1c] sm:$0xf]
    %v6350 = vld [vmem:[%s6341 + $0x20] sm:$0xf]
    %v6351 = vld [vmem:[%s6341 + $0x24] sm:$0xf]
    %v6352 = vld [vmem:[%s6341 + $0x28] sm:$0xf]
    %v6353 = vld [vmem:[%s6341 + $0x2c] sm:$0xf]
    %v6354 = vld [vmem:[%s6341 + $0x30] sm:$0xf]
    %v6355 = vld [vmem:[%s6341 + $0x34] sm:$0xf]
    %v6356 = vld [vmem:[%s6341 + $0x38] sm:$0xf]
    %v6357 = vld [vmem:[%s6341 + $0x3c] sm:$0xf]
    %s6358 = scalar_lea.vmem %s5, 6
    %v6359 = vld [vmem:[%s6358] sm:$0x1]
    %v6361 = vlaneseq
    %v6362 = vshrl.u32 %v6361, 7
    %v6363 = vsub.s32 0, %v6362
    %v6364 = vrot.slane %v6359, %v6363
    %v6382 = vunpack.c.l.b16 %v6342
    %v6383 = vunpack.c.l.b16 %v6343
    %v6384 = vunpack.c.l.b16 %v6344
    %v6385 = vunpack.c.l.b16 %v6345
    %v6386 = vunpack.c.l.b16 %v6346
    %v6387 = vunpack.c.l.b16 %v6347
    %v6388 = vunpack.c.l.b16 %v6348
    %v6389 = vunpack.c.l.b16 %v6349
    %v6390 = vunpack.c.l.b16 %v6350
    %v6391 = vunpack.c.l.b16 %v6351
    %v6392 = vunpack.c.l.b16 %v6352
    %v6393 = vunpack.c.l.b16 %v6353
    %v6394 = vunpack.c.l.b16 %v6354
    %v6395 = vunpack.c.l.b16 %v6355
    %v6396 = vunpack.c.l.b16 %v6356
    %v6397 = vunpack.c.l.b16 %v6357
    %v6398 = vpack.c.b16 %v6383, %v6382
    %v6399 = vpack.c.b16 %v6385, %v6384
    %v6400 = vpack.c.b16 %v6387, %v6386
    %v6401 = vpack.c.b16 %v6389, %v6388
    %v6402 = vpack.c.b16 %v6391, %v6390
    %v6403 = vpack.c.b16 %v6393, %v6392
    %v6404 = vpack.c.b16 %v6395, %v6394
    %v6405 = vpack.c.b16 %v6397, %v6396
    %6414 = vmatprep.subr.bf16.mxu0 0
    %6415 = vmatpush1.bf16.msra.mxu0 %v6398
    %6416 = vmatprep.subr.bf16.mxu0 0
    %6417 = vmatpush1.bf16.msra.mxu0 %v6399
    %6418 = vmatprep.subr.bf16.mxu0 0
    %6419 = vmatpush1.bf16.msra.mxu0 %v6400
    %6420 = vmatprep.subr.bf16.mxu0 0
    %6421 = vmatpush1.bf16.msra.mxu0 %v6401
    %6422 = vmatprep.subr.bf16.mxu0 0
    %6423 = vmatpush1.bf16.msra.mxu0 %v6402
    %6424 = vmatprep.subr.bf16.mxu0 0
    %6425 = vmatpush1.bf16.msra.mxu0 %v6403
    %6426 = vmatprep.subr.bf16.mxu0 0
    %6427 = vmatpush1.bf16.msra.mxu0 %v6404
    %6428 = vmatprep.subr.bf16.mxu0 0
    %6429 = vmatpush1.bf16.msra.mxu0 %v6405
    %6430 = vmatprep.subr.bf16.mxu0 0
    %6431 = vmatpush1.bf16.msra.mxu0 0
    %6432 = vmatprep.subr.bf16.mxu0 0
    %6433 = vmatpush1.bf16.msra.mxu0 0
    %6434 = vmatprep.subr.bf16.mxu0 0
    %6435 = vmatpush1.bf16.msra.mxu0 0
    %6436 = vmatprep.subr.bf16.mxu0 0
    %6437 = vmatpush1.bf16.msra.mxu0 0
    %6438 = vmatprep.subr.bf16.mxu0 0
    %6439 = vmatpush1.bf16.msra.mxu0 0
    %6440 = vmatprep.subr.bf16.mxu0 0
    %6441 = vmatpush1.bf16.msra.mxu0 0
    %6442 = vmatprep.subr.bf16.mxu0 0
    %6443 = vmatpush1.bf16.msra.mxu0 0
    %6444 = vmatprep.subr.bf16.mxu0 0
    %6445 = vmatpush1.bf16.msra.mxu0 0
    %6446 = vmatprep.mubr.bf16.mxu0 0
    %6447 = vmatmul.mubr.bf16.gmra.mrb[0].mxu0 %v6325
    %v6448 = vpop.f32.mrb[0].mxu0
    %v6449 = vadd.f32 %v6364, %v6448
    %v6450 = vpop.f32.mrb[0].mxu0
    %v6451 = vpop.f32.mrb[0].mxu0
    %v6452 = vadd.f32 %v6364, %v6451
    %v6453 = vpop.f32.mrb[0].mxu0
    %6454 = vmatprep.mubr.bf16.mxu0 0
    %6455 = vmatmul.mubr.bf16.gmra.mrb[0].mxu0 %v6326
    %v6456 = vpop.f32.mrb[0].mxu0
    %v6457 = vadd.f32 %v6364, %v6456
    %v6458 = vpop.f32.mrb[0].mxu0
    %v6459 = vpop.f32.mrb[0].mxu0
    %v6460 = vadd.f32 %v6364, %v6459
    %v6461 = vpop.f32.mrb[0].mxu0
    %6462 = vmatprep.mubr.bf16.mxu0 0
    %6463 = vmatmul.mubr.bf16.gmra.mrb[0].mxu0 %v6327
    %v6464 = vpop.f32.mrb[0].mxu0
    %v6465 = vadd.f32 %v6364, %v6464
    %v6466 = vpop.f32.mrb[0].mxu0
    %v6467 = vpop.f32.mrb[0].mxu0
    %v6468 = vadd.f32 %v6364, %v6467
    %v6469 = vpop.f32.mrb[0].mxu0
    %6470 = vmatprep.mubr.bf16.mxu0 0
    %6471 = vmatmul.mubr.bf16.gmra.mrb[0].mxu0 %v6328
    %v6472 = vpop.f32.mrb[0].mxu0
    %v6473 = vadd.f32 %v6364, %v6472
    %v6474 = vpop.f32.mrb[0].mxu0
    %v6475 = vpop.f32.mrb[0].mxu0
    %v6476 = vadd.f32 %v6364, %v6475
    %v6477 = vpop.f32.mrb[0].mxu0
    %6478 = vmatprep.mubr.bf16.mxu0 0
    %6479 = vmatmul.mubr.bf16.gmra.mrb[0].mxu0 %v6329
    %v6480 = vpop.f32.mrb[0].mxu0
    %v6481 = vadd.f32 %v6364, %v6480
    %v6482 = vpop.f32.mrb[0].mxu0
    %v6483 = vpop.f32.mrb[0].mxu0
    %v6484 = vadd.f32 %v6364, %v6483
    %v6485 = vpop.f32.mrb[0].mxu0
    %6486 = vmatprep.mubr.bf16.mxu0 0
    %6487 = vmatmul.mubr.bf16.gmra.mrb[0].mxu0 %v6330
    %v6488 = vpop.f32.mrb[0].mxu0
    %v6489 = vadd.f32 %v6364, %v6488
    %v6490 = vpop.f32.mrb[0].mxu0
    %v6491 = vpop.f32.mrb[0].mxu0
    %v6492 = vadd.f32 %v6364, %v6491
    %v6493 = vpop.f32.mrb[0].mxu0
    %6494 = vmatprep.mubr.bf16.mxu0 0
    %6495 = vmatmul.mubr.bf16.gmra.mrb[0].mxu0 %v6331
    %v6496 = vpop.f32.mrb[0].mxu0
    %v6497 = vadd.f32 %v6364, %v6496
    %v6498 = vpop.f32.mrb[0].mxu0
    %v6499 = vpop.f32.mrb[0].mxu0
    %v6500 = vadd.f32 %v6364, %v6499
    %v6501 = vpop.f32.mrb[0].mxu0
    %6502 = vmatprep.mubr.bf16.mxu0 0
    %6503 = vmatmul.mubr.bf16.gmra.mrb[0].mxu0 %v6332
    %v6504 = vpop.f32.mrb[0].mxu0
    %v6505 = vadd.f32 %v6364, %v6504
    %v6506 = vpop.f32.mrb[0].mxu0
    %v6507 = vpop.f32.mrb[0].mxu0
    %v6508 = vadd.f32 %v6364, %v6507
    %v6509 = vpop.f32.mrb[0].mxu0
    %6510 = vmatprep.mubr.bf16.mxu0 0
    %6511 = vmatmul.mubr.bf16.gmra.mrb[0].mxu0 %v6333
    %v6512 = vpop.f32.mrb[0].mxu0
    %v6513 = vadd.f32 %v6364, %v6512
    %v6514 = vpop.f32.mrb[0].mxu0
    %v6515 = vpop.f32.mrb[0].mxu0
    %v6516 = vadd.f32 %v6364, %v6515
    %v6517 = vpop.f32.mrb[0].mxu0
    %6518 = vmatprep.mubr.bf16.mxu0 0
    %6519 = vmatmul.mubr.bf16.gmra.mrb[0].mxu0 %v6334
    %v6520 = vpop.f32.mrb[0].mxu0
    %v6521 = vadd.f32 %v6364, %v6520
    %v6522 = vpop.f32.mrb[0].mxu0
    %v6523 = vpop.f32.mrb[0].mxu0
    %v6524 = vadd.f32 %v6364, %v6523
    %v6525 = vpop.f32.mrb[0].mxu0
    %6526 = vmatprep.mubr.bf16.mxu0 0
    %6527 = vmatmul.mubr.bf16.gmra.mrb[0].mxu0 %v6335
    %v6528 = vpop.f32.mrb[0].mxu0
    %v6529 = vadd.f32 %v6364, %v6528
    %v6530 = vpop.f32.mrb[0].mxu0
    %v6531 = vpop.f32.mrb[0].mxu0
    %v6532 = vadd.f32 %v6364, %v6531
    %v6533 = vpop.f32.mrb[0].mxu0
    %6534 = vmatprep.mubr.bf16.mxu0 0
    %6535 = vmatmul.mubr.bf16.gmra.mrb[0].mxu0 %v6336
    %v6536 = vpop.f32.mrb[0].mxu0
    %v6537 = vadd.f32 %v6364, %v6536
    %v6538 = vpop.f32.mrb[0].mxu0
    %v6539 = vpop.f32.mrb[0].mxu0
    %v6540 = vadd.f32 %v6364, %v6539
    %v6541 = vpop.f32.mrb[0].mxu0
    %6542 = vmatprep.mubr.bf16.mxu0 0
    %6543 = vmatmul.mubr.bf16.gmra.mrb[0].mxu0 %v6337
    %v6544 = vpop.f32.mrb[0].mxu0
    %v6545 = vadd.f32 %v6364, %v6544
    %v6546 = vpop.f32.mrb[0].mxu0
    %v6547 = vpop.f32.mrb[0].mxu0
    %v6548 = vadd.f32 %v6364, %v6547
    %v6549 = vpop.f32.mrb[0].mxu0
    %6550 = vmatprep.mubr.bf16.mxu0 0
    %6551 = vmatmul.mubr.bf16.gmra.mrb[0].mxu0 %v6338
    %v6552 = vpop.f32.mrb[0].mxu0
    %v6553 = vadd.f32 %v6364, %v6552
    %v6554 = vpop.f32.mrb[0].mxu0
    %v6555 = vpop.f32.mrb[0].mxu0
    %v6556 = vadd.f32 %v6364, %v6555
    %v6557 = vpop.f32.mrb[0].mxu0
    %6558 = vmatprep.mubr.bf16.mxu0 0
    %6559 = vmatmul.mubr.bf16.gmra.mrb[0].mxu0 %v6339
    %v6560 = vpop.f32.mrb[0].mxu0
    %v6561 = vadd.f32 %v6364, %v6560
    %v6562 = vpop.f32.mrb[0].mxu0
    %v6563 = vpop.f32.mrb[0].mxu0
    %v6564 = vadd.f32 %v6364, %v6563
    %v6565 = vpop.f32.mrb[0].mxu0
    %6566 = vmatprep.mubr.bf16.mxu0 0
    %6567 = vmatmul.mubr.bf16.gmra.mrb[0].mxu0 %v6340
    %v6568 = vpop.f32.mrb[0].mxu0
    %v6569 = vadd.f32 %v6364, %v6568
    %v6570 = vpop.f32.mrb[0].mxu0
    %v6571 = vpop.f32.mrb[0].mxu0
    %v6572 = vadd.f32 %v6364, %v6571
    %v6573 = vpop.f32.mrb[0].mxu0
    %6574 = vdwg.mxu0
    %v6575 = vsub.f32 0.0, %v6449
    %v6576 = vsub.f32 0.0, %v6452
    %v6577 = vsub.f32 0.0, %v6457
    %v6578 = vsub.f32 0.0, %v6460
    %v6579 = vsub.f32 0.0, %v6465
    %v6580 = vsub.f32 0.0, %v6468
    %v6581 = vsub.f32 0.0, %v6473
    %v6582 = vsub.f32 0.0, %v6476
    %v6583 = vsub.f32 0.0, %v6481
    %v6584 = vsub.f32 0.0, %v6484
    %v6585 = vsub.f32 0.0, %v6489
    %v6586 = vsub.f32 0.0, %v6492
    %v6587 = vsub.f32 0.0, %v6497
    %v6588 = vsub.f32 0.0, %v6500
    %v6589 = vsub.f32 0.0, %v6505
    %v6590 = vsub.f32 0.0, %v6508
    %v6591 = vsub.f32 0.0, %v6513
    %v6592 = vsub.f32 0.0, %v6516
    %v6593 = vsub.f32 0.0, %v6521
    %v6594 = vsub.f32 0.0, %v6524
    %v6595 = vsub.f32 0.0, %v6529
    %v6596 = vsub.f32 0.0, %v6532
    %v6597 = vsub.f32 0.0, %v6537
    %v6598 = vsub.f32 0.0, %v6540
    %v6599 = vsub.f32 0.0, %v6545
    %v6600 = vsub.f32 0.0, %v6548
    %v6601 = vsub.f32 0.0, %v6553
    %v6602 = vsub.f32 0.0, %v6556
    %v6603 = vsub.f32 0.0, %v6561
    %v6604 = vsub.f32 0.0, %v6564
    %v6605 = vsub.f32 0.0, %v6569
    %v6606 = vsub.f32 0.0, %v6572
    %v6607 = vmul.f32 %v6575, 1.442695
    %v6608 = vpow.pop %v6607
    %v6609 = vmul.f32 %v6576, 1.442695
    %v6610 = vpow.pop %v6609
    %v6611 = vmul.f32 %v6577, 1.442695
    %v6612 = vpow.pop %v6611
    %v6613 = vmul.f32 %v6578, 1.442695
    %v6614 = vpow.pop %v6613
    %v6615 = vmul.f32 %v6579, 1.442695
    %v6616 = vpow.pop %v6615
    %v6617 = vmul.f32 %v6580, 1.442695
    %v6618 = vpow.pop %v6617
    %v6619 = vmul.f32 %v6581, 1.442695
    %v6620 = vpow.pop %v6619
    %v6621 = vmul.f32 %v6582, 1.442695
    %v6622 = vpow.pop %v6621
    %v6623 = vmul.f32 %v6583, 1.442695
    %v6624 = vpow.pop %v6623
    %v6625 = vmul.f32 %v6584, 1.442695
    %v6626 = vpow.pop %v6625
    %v6627 = vmul.f32 %v6585, 1.442695
    %v6628 = vpow.pop %v6627
    %v6629 = vmul.f32 %v6586, 1.442695
    %v6630 = vpow.pop %v6629
    %v6631 = vmul.f32 %v6587, 1.442695
    %v6632 = vpow.pop %v6631
    %v6633 = vmul.f32 %v6588, 1.442695
    %v6634 = vpow.pop %v6633
    %v6635 = vmul.f32 %v6589, 1.442695
    %v6636 = vpow.pop %v6635
    %v6637 = vmul.f32 %v6590, 1.442695
    %v6638 = vpow.pop %v6637
    %v6639 = vmul.f32 %v6591, 1.442695
    %v6640 = vpow.pop %v6639
    %v6641 = vmul.f32 %v6592, 1.442695
    %v6642 = vpow.pop %v6641
    %v6643 = vmul.f32 %v6593, 1.442695
    %v6644 = vpow.pop %v6643
    %v6645 = vmul.f32 %v6594, 1.442695
    %v6646 = vpow.pop %v6645
    %v6647 = vmul.f32 %v6595, 1.442695
    %v6648 = vpow.pop %v6647
    %v6649 = vmul.f32 %v6596, 1.442695
    %v6650 = vpow.pop %v6649
    %v6651 = vmul.f32 %v6597, 1.442695
    %v6652 = vpow.pop %v6651
    %v6653 = vmul.f32 %v6598, 1.442695
    %v6654 = vpow.pop %v6653
    %v6655 = vmul.f32 %v6599, 1.442695
    %v6656 = vpow.pop %v6655
    %v6657 = vmul.f32 %v6600, 1.442695
    %v6658 = vpow.pop %v6657
    %v6659 = vmul.f32 %v6601, 1.442695
    %v6660 = vpow.pop %v6659
    %v6661 = vmul.f32 %v6602, 1.442695
    %v6662 = vpow.pop %v6661
    %v6663 = vmul.f32 %v6603, 1.442695
    %v6664 = vpow.pop %v6663
    %v6665 = vmul.f32 %v6604, 1.442695
    %v6666 = vpow.pop %v6665
    %v6667 = vmul.f32 %v6605, 1.442695
    %v6668 = vpow.pop %v6667
    %v6669 = vmul.f32 %v6606, 1.442695
    %v6670 = vpow.pop %v6669
    %v6671 = vadd.f32 %v6608, 1.0
    %v6672 = vadd.f32 %v6610, 1.0
    %v6673 = vadd.f32 %v6612, 1.0
    %v6674 = vadd.f32 %v6614, 1.0
    %v6675 = vadd.f32 %v6616, 1.0
    %v6676 = vadd.f32 %v6618, 1.0
    %v6677 = vadd.f32 %v6620, 1.0
    %v6678 = vadd.f32 %v6622, 1.0
    %v6679 = vadd.f32 %v6624, 1.0
    %v6680 = vadd.f32 %v6626, 1.0
    %v6681 = vadd.f32 %v6628, 1.0
    %v6682 = vadd.f32 %v6630, 1.0
    %v6683 = vadd.f32 %v6632, 1.0
    %v6684 = vadd.f32 %v6634, 1.0
    %v6685 = vadd.f32 %v6636, 1.0
    %v6686 = vadd.f32 %v6638, 1.0
    %v6687 = vadd.f32 %v6640, 1.0
    %v6688 = vadd.f32 %v6642, 1.0
    %v6689 = vadd.f32 %v6644, 1.0
    %v6690 = vadd.f32 %v6646, 1.0
    %v6691 = vadd.f32 %v6648, 1.0
    %v6692 = vadd.f32 %v6650, 1.0
    %v6693 = vadd.f32 %v6652, 1.0
    %v6694 = vadd.f32 %v6654, 1.0
    %v6695 = vadd.f32 %v6656, 1.0
    %v6696 = vadd.f32 %v6658, 1.0
    %v6697 = vadd.f32 %v6660, 1.0
    %v6698 = vadd.f32 %v6662, 1.0
    %v6699 = vadd.f32 %v6664, 1.0
    %v6700 = vadd.f32 %v6666, 1.0
    %v6701 = vadd.f32 %v6668, 1.0
    %v6702 = vadd.f32 %v6670, 1.0
    %v6703 = vrcp.pop %v6671
    %v6704 = vrcp.pop %v6672
    %v6705 = vrcp.pop %v6673
    %v6706 = vrcp.pop %v6674
    %v6707 = vrcp.pop %v6675
    %v6708 = vrcp.pop %v6676
    %v6709 = vrcp.pop %v6677
    %v6710 = vrcp.pop %v6678
    %v6711 = vrcp.pop %v6679
    %v6712 = vrcp.pop %v6680
    %v6713 = vrcp.pop %v6681
    %v6714 = vrcp.pop %v6682
    %v6715 = vrcp.pop %v6683
    %v6716 = vrcp.pop %v6684
    %v6717 = vrcp.pop %v6685
    %v6718 = vrcp.pop %v6686
    %v6719 = vrcp.pop %v6687
    %v6720 = vrcp.pop %v6688
    %v6721 = vrcp.pop %v6689
    %v6722 = vrcp.pop %v6690
    %v6723 = vrcp.pop %v6691
    %v6724 = vrcp.pop %v6692
    %v6725 = vrcp.pop %v6693
    %v6726 = vrcp.pop %v6694
    %v6727 = vrcp.pop %v6695
    %v6728 = vrcp.pop %v6696
    %v6729 = vrcp.pop %v6697
    %v6730 = vrcp.pop %v6698
    %v6731 = vrcp.pop %v6699
    %v6732 = vrcp.pop %v6700
    %v6733 = vrcp.pop %v6701
    %v6734 = vrcp.pop %v6702
    %v6735 = vmul.f32 %v6449, %v6703
    %v6736 = vmul.f32 %v6452, %v6704
    %v6737 = vmul.f32 %v6457, %v6705
    %v6738 = vmul.f32 %v6460, %v6706
    %v6739 = vmul.f32 %v6465, %v6707
    %v6740 = vmul.f32 %v6468, %v6708
    %v6741 = vmul.f32 %v6473, %v6709
    %v6742 = vmul.f32 %v6476, %v6710
    %v6743 = vmul.f32 %v6481, %v6711
    %v6744 = vmul.f32 %v6484, %v6712
    %v6745 = vmul.f32 %v6489, %v6713
    %v6746 = vmul.f32 %v6492, %v6714
    %v6747 = vmul.f32 %v6497, %v6715
    %v6748 = vmul.f32 %v6500, %v6716
    %v6749 = vmul.f32 %v6505, %v6717
    %v6750 = vmul.f32 %v6508, %v6718
    %v6751 = vmul.f32 %v6513, %v6719
    %v6752 = vmul.f32 %v6516, %v6720
    %v6753 = vmul.f32 %v6521, %v6721
    %v6754 = vmul.f32 %v6524, %v6722
    %v6755 = vmul.f32 %v6529, %v6723
    %v6756 = vmul.f32 %v6532, %v6724
    %v6757 = vmul.f32 %v6537, %v6725
    %v6758 = vmul.f32 %v6540, %v6726
    %v6759 = vmul.f32 %v6545, %v6727
    %v6760 = vmul.f32 %v6548, %v6728
    %v6761 = vmul.f32 %v6553, %v6729
    %v6762 = vmul.f32 %v6556, %v6730
    %v6763 = vmul.f32 %v6561, %v6731
    %v6764 = vmul.f32 %v6564, %v6732
    %v6765 = vmul.f32 %v6569, %v6733
    %v6766 = vmul.f32 %v6572, %v6734
    %v6767 = vpack.c.bf16 %v6736, %v6735
    %v6768 = vpack.c.bf16 %v6738, %v6737
    %v6769 = vpack.c.bf16 %v6740, %v6739
    %v6770 = vpack.c.bf16 %v6742, %v6741
    %v6771 = vpack.c.bf16 %v6744, %v6743
    %v6772 = vpack.c.bf16 %v6746, %v6745
    %v6773 = vpack.c.bf16 %v6748, %v6747
    %v6774 = vpack.c.bf16 %v6750, %v6749
    %v6775 = vpack.c.bf16 %v6752, %v6751
    %v6776 = vpack.c.bf16 %v6754, %v6753
    %v6777 = vpack.c.bf16 %v6756, %v6755
    %v6778 = vpack.c.bf16 %v6758, %v6757
    %v6779 = vpack.c.bf16 %v6760, %v6759
    %v6780 = vpack.c.bf16 %v6762, %v6761
    %v6781 = vpack.c.bf16 %v6764, %v6763
    %v6782 = vpack.c.bf16 %v6766, %v6765
    %s6783 = scalar_lea.vmem %s4, 384
    %v6784 = vld [vmem:[%s6783] sm:$0xf]
    %v6785 = vld [vmem:[%s6783 + $0x4] sm:$0xf]
    %v6786 = vld [vmem:[%s6783 + $0x8] sm:$0xf]
    %v6787 = vld [vmem:[%s6783 + $0xc] sm:$0xf]
    %v6788 = vld [vmem:[%s6783 + $0x10] sm:$0xf]
    %v6789 = vld [vmem:[%s6783 + $0x14] sm:$0xf]
    %v6790 = vld [vmem:[%s6783 + $0x18] sm:$0xf]
    %v6791 = vld [vmem:[%s6783 + $0x1c] sm:$0xf]
    %v6792 = vld [vmem:[%s6783 + $0x20] sm:$0xf]
    %v6793 = vld [vmem:[%s6783 + $0x24] sm:$0xf]
    %v6794 = vld [vmem:[%s6783 + $0x28] sm:$0xf]
    %v6795 = vld [vmem:[%s6783 + $0x2c] sm:$0xf]
    %v6796 = vld [vmem:[%s6783 + $0x30] sm:$0xf]
    %v6797 = vld [vmem:[%s6783 + $0x34] sm:$0xf]
    %v6798 = vld [vmem:[%s6783 + $0x38] sm:$0xf]
    %v6799 = vld [vmem:[%s6783 + $0x3c] sm:$0xf]
    %s6800 = scalar_lea.vmem %s5, 7
    %v6801 = vld [vmem:[%s6800] sm:$0x1]
    %v6803 = vlaneseq
    %v6804 = vshrl.u32 %v6803, 7
    %v6805 = vsub.s32 0, %v6804
    %v6806 = vrot.slane %v6801, %v6805
    %v6824 = vunpack.c.l.b16 %v6784
    %v6825 = vunpack.c.l.b16 %v6785
    %v6826 = vunpack.c.l.b16 %v6786
    %v6827 = vunpack.c.l.b16 %v6787
    %v6828 = vunpack.c.l.b16 %v6788
    %v6829 = vunpack.c.l.b16 %v6789
    %v6830 = vunpack.c.l.b16 %v6790
    %v6831 = vunpack.c.l.b16 %v6791
    %v6832 = vunpack.c.l.b16 %v6792
    %v6833 = vunpack.c.l.b16 %v6793
    %v6834 = vunpack.c.l.b16 %v6794
    %v6835 = vunpack.c.l.b16 %v6795
    %v6836 = vunpack.c.l.b16 %v6796
    %v6837 = vunpack.c.l.b16 %v6797
    %v6838 = vunpack.c.l.b16 %v6798
    %v6839 = vunpack.c.l.b16 %v6799
    %v6840 = vpack.c.b16 %v6825, %v6824
    %v6841 = vpack.c.b16 %v6827, %v6826
    %v6842 = vpack.c.b16 %v6829, %v6828
    %v6843 = vpack.c.b16 %v6831, %v6830
    %v6844 = vpack.c.b16 %v6833, %v6832
    %v6845 = vpack.c.b16 %v6835, %v6834
    %v6846 = vpack.c.b16 %v6837, %v6836
    %v6847 = vpack.c.b16 %v6839, %v6838
    %6856 = vmatprep.subr.bf16.mxu0 0
    %6857 = vmatpush1.bf16.msra.mxu0 %v6840
    %6858 = vmatprep.subr.bf16.mxu0 0
    %6859 = vmatpush1.bf16.msra.mxu0 %v6841
    %6860 = vmatprep.subr.bf16.mxu0 0
    %6861 = vmatpush1.bf16.msra.mxu0 %v6842
    %6862 = vmatprep.subr.bf16.mxu0 0
    %6863 = vmatpush1.bf16.msra.mxu0 %v6843
    %6864 = vmatprep.subr.bf16.mxu0 0
    %6865 = vmatpush1.bf16.msra.mxu0 %v6844
    %6866 = vmatprep.subr.bf16.mxu0 0
    %6867 = vmatpush1.bf16.msra.mxu0 %v6845
    %6868 = vmatprep.subr.bf16.mxu0 0
    %6869 = vmatpush1.bf16.msra.mxu0 %v6846
    %6870 = vmatprep.subr.bf16.mxu0 0
    %6871 = vmatpush1.bf16.msra.mxu0 %v6847
    %6872 = vmatprep.subr.bf16.mxu0 0
    %6873 = vmatpush1.bf16.msra.mxu0 0
    %6874 = vmatprep.subr.bf16.mxu0 0
    %6875 = vmatpush1.bf16.msra.mxu0 0
    %6876 = vmatprep.subr.bf16.mxu0 0
    %6877 = vmatpush1.bf16.msra.mxu0 0
    %6878 = vmatprep.subr.bf16.mxu0 0
    %6879 = vmatpush1.bf16.msra.mxu0 0
    %6880 = vmatprep.subr.bf16.mxu0 0
    %6881 = vmatpush1.bf16.msra.mxu0 0
    %6882 = vmatprep.subr.bf16.mxu0 0
    %6883 = vmatpush1.bf16.msra.mxu0 0
    %6884 = vmatprep.subr.bf16.mxu0 0
    %6885 = vmatpush1.bf16.msra.mxu0 0
    %6886 = vmatprep.subr.bf16.mxu0 0
    %6887 = vmatpush1.bf16.msra.mxu0 0
    %6888 = vmatprep.mubr.bf16.mxu0 0
    %6889 = vmatmul.mubr.bf16.gmra.mrb[0].mxu0 %v6767
    %v6890 = vpop.f32.mrb[0].mxu0
    %v6891 = vadd.f32 %v6806, %v6890
    %v6892 = vpop.f32.mrb[0].mxu0
    %v6893 = vpop.f32.mrb[0].mxu0
    %v6894 = vadd.f32 %v6806, %v6893
    %v6895 = vpop.f32.mrb[0].mxu0
    %6896 = vmatprep.mubr.bf16.mxu0 0
    %6897 = vmatmul.mubr.bf16.gmra.mrb[0].mxu0 %v6768
    %v6898 = vpop.f32.mrb[0].mxu0
    %v6899 = vadd.f32 %v6806, %v6898
    %v6900 = vpop.f32.mrb[0].mxu0
    %v6901 = vpop.f32.mrb[0].mxu0
    %v6902 = vadd.f32 %v6806, %v6901
    %v6903 = vpop.f32.mrb[0].mxu0
    %6904 = vmatprep.mubr.bf16.mxu0 0
    %6905 = vmatmul.mubr.bf16.gmra.mrb[0].mxu0 %v6769
    %v6906 = vpop.f32.mrb[0].mxu0
    %v6907 = vadd.f32 %v6806, %v6906
    %v6908 = vpop.f32.mrb[0].mxu0
    %v6909 = vpop.f32.mrb[0].mxu0
    %v6910 = vadd.f32 %v6806, %v6909
    %v6911 = vpop.f32.mrb[0].mxu0
    %6912 = vmatprep.mubr.bf16.mxu0 0
    %6913 = vmatmul.mubr.bf16.gmra.mrb[0].mxu0 %v6770
    %v6914 = vpop.f32.mrb[0].mxu0
    %v6915 = vadd.f32 %v6806, %v6914
    %v6916 = vpop.f32.mrb[0].mxu0
    %v6917 = vpop.f32.mrb[0].mxu0
    %v6918 = vadd.f32 %v6806, %v6917
    %v6919 = vpop.f32.mrb[0].mxu0
    %6920 = vmatprep.mubr.bf16.mxu0 0
    %6921 = vmatmul.mubr.bf16.gmra.mrb[0].mxu0 %v6771
    %v6922 = vpop.f32.mrb[0].mxu0
    %v6923 = vadd.f32 %v6806, %v6922
    %v6924 = vpop.f32.mrb[0].mxu0
    %v6925 = vpop.f32.mrb[0].mxu0
    %v6926 = vadd.f32 %v6806, %v6925
    %v6927 = vpop.f32.mrb[0].mxu0
    %6928 = vmatprep.mubr.bf16.mxu0 0
    %6929 = vmatmul.mubr.bf16.gmra.mrb[0].mxu0 %v6772
    %v6930 = vpop.f32.mrb[0].mxu0
    %v6931 = vadd.f32 %v6806, %v6930
    %v6932 = vpop.f32.mrb[0].mxu0
    %v6933 = vpop.f32.mrb[0].mxu0
    %v6934 = vadd.f32 %v6806, %v6933
    %v6935 = vpop.f32.mrb[0].mxu0
    %6936 = vmatprep.mubr.bf16.mxu0 0
    %6937 = vmatmul.mubr.bf16.gmra.mrb[0].mxu0 %v6773
    %v6938 = vpop.f32.mrb[0].mxu0
    %v6939 = vadd.f32 %v6806, %v6938
    %v6940 = vpop.f32.mrb[0].mxu0
    %v6941 = vpop.f32.mrb[0].mxu0
    %v6942 = vadd.f32 %v6806, %v6941
    %v6943 = vpop.f32.mrb[0].mxu0
    %6944 = vmatprep.mubr.bf16.mxu0 0
    %6945 = vmatmul.mubr.bf16.gmra.mrb[0].mxu0 %v6774
    %v6946 = vpop.f32.mrb[0].mxu0
    %v6947 = vadd.f32 %v6806, %v6946
    %v6948 = vpop.f32.mrb[0].mxu0
    %v6949 = vpop.f32.mrb[0].mxu0
    %v6950 = vadd.f32 %v6806, %v6949
    %v6951 = vpop.f32.mrb[0].mxu0
    %6952 = vmatprep.mubr.bf16.mxu0 0
    %6953 = vmatmul.mubr.bf16.gmra.mrb[0].mxu0 %v6775
    %v6954 = vpop.f32.mrb[0].mxu0
    %v6955 = vadd.f32 %v6806, %v6954
    %v6956 = vpop.f32.mrb[0].mxu0
    %v6957 = vpop.f32.mrb[0].mxu0
    %v6958 = vadd.f32 %v6806, %v6957
    %v6959 = vpop.f32.mrb[0].mxu0
    %6960 = vmatprep.mubr.bf16.mxu0 0
    %6961 = vmatmul.mubr.bf16.gmra.mrb[0].mxu0 %v6776
    %v6962 = vpop.f32.mrb[0].mxu0
    %v6963 = vadd.f32 %v6806, %v6962
    %v6964 = vpop.f32.mrb[0].mxu0
    %v6965 = vpop.f32.mrb[0].mxu0
    %v6966 = vadd.f32 %v6806, %v6965
    %v6967 = vpop.f32.mrb[0].mxu0
    %6968 = vmatprep.mubr.bf16.mxu0 0
    %6969 = vmatmul.mubr.bf16.gmra.mrb[0].mxu0 %v6777
    %v6970 = vpop.f32.mrb[0].mxu0
    %v6971 = vadd.f32 %v6806, %v6970
    %v6972 = vpop.f32.mrb[0].mxu0
    %v6973 = vpop.f32.mrb[0].mxu0
    %v6974 = vadd.f32 %v6806, %v6973
    %v6975 = vpop.f32.mrb[0].mxu0
    %6976 = vmatprep.mubr.bf16.mxu0 0
    %6977 = vmatmul.mubr.bf16.gmra.mrb[0].mxu0 %v6778
    %v6978 = vpop.f32.mrb[0].mxu0
    %v6979 = vadd.f32 %v6806, %v6978
    %v6980 = vpop.f32.mrb[0].mxu0
    %v6981 = vpop.f32.mrb[0].mxu0
    %v6982 = vadd.f32 %v6806, %v6981
    %v6983 = vpop.f32.mrb[0].mxu0
    %6984 = vmatprep.mubr.bf16.mxu0 0
    %6985 = vmatmul.mubr.bf16.gmra.mrb[0].mxu0 %v6779
    %v6986 = vpop.f32.mrb[0].mxu0
    %v6987 = vadd.f32 %v6806, %v6986
    %v6988 = vpop.f32.mrb[0].mxu0
    %v6989 = vpop.f32.mrb[0].mxu0
    %v6990 = vadd.f32 %v6806, %v6989
    %v6991 = vpop.f32.mrb[0].mxu0
    %6992 = vmatprep.mubr.bf16.mxu0 0
    %6993 = vmatmul.mubr.bf16.gmra.mrb[0].mxu0 %v6780
    %v6994 = vpop.f32.mrb[0].mxu0
    %v6995 = vadd.f32 %v6806, %v6994
    %v6996 = vpop.f32.mrb[0].mxu0
    %v6997 = vpop.f32.mrb[0].mxu0
    %v6998 = vadd.f32 %v6806, %v6997
    %v6999 = vpop.f32.mrb[0].mxu0
    %7000 = vmatprep.mubr.bf16.mxu0 0
    %7001 = vmatmul.mubr.bf16.gmra.mrb[0].mxu0 %v6781
    %v7002 = vpop.f32.mrb[0].mxu0
    %v7003 = vadd.f32 %v6806, %v7002
    %v7004 = vpop.f32.mrb[0].mxu0
    %v7005 = vpop.f32.mrb[0].mxu0
    %v7006 = vadd.f32 %v6806, %v7005
    %v7007 = vpop.f32.mrb[0].mxu0
    %7008 = vmatprep.mubr.bf16.mxu0 0
    %7009 = vmatmul.mubr.bf16.gmra.mrb[0].mxu0 %v6782
    %v7010 = vpop.f32.mrb[0].mxu0
    %v7011 = vadd.f32 %v6806, %v7010
    %v7012 = vpop.f32.mrb[0].mxu0
    %v7013 = vpop.f32.mrb[0].mxu0
    %v7014 = vadd.f32 %v6806, %v7013
    %v7015 = vpop.f32.mrb[0].mxu0
    %7016 = vdwg.mxu0
    %v7017 = vsub.f32 0.0, %v6891
    %v7018 = vsub.f32 0.0, %v6894
    %v7019 = vsub.f32 0.0, %v6899
    %v7020 = vsub.f32 0.0, %v6902
    %v7021 = vsub.f32 0.0, %v6907
    %v7022 = vsub.f32 0.0, %v6910
    %v7023 = vsub.f32 0.0, %v6915
    %v7024 = vsub.f32 0.0, %v6918
    %v7025 = vsub.f32 0.0, %v6923
    %v7026 = vsub.f32 0.0, %v6926
    %v7027 = vsub.f32 0.0, %v6931
    %v7028 = vsub.f32 0.0, %v6934
    %v7029 = vsub.f32 0.0, %v6939
    %v7030 = vsub.f32 0.0, %v6942
    %v7031 = vsub.f32 0.0, %v6947
    %v7032 = vsub.f32 0.0, %v6950
    %v7033 = vsub.f32 0.0, %v6955
    %v7034 = vsub.f32 0.0, %v6958
    %v7035 = vsub.f32 0.0, %v6963
    %v7036 = vsub.f32 0.0, %v6966
    %v7037 = vsub.f32 0.0, %v6971
    %v7038 = vsub.f32 0.0, %v6974
    %v7039 = vsub.f32 0.0, %v6979
    %v7040 = vsub.f32 0.0, %v6982
    %v7041 = vsub.f32 0.0, %v6987
    %v7042 = vsub.f32 0.0, %v6990
    %v7043 = vsub.f32 0.0, %v6995
    %v7044 = vsub.f32 0.0, %v6998
    %v7045 = vsub.f32 0.0, %v7003
    %v7046 = vsub.f32 0.0, %v7006
    %v7047 = vsub.f32 0.0, %v7011
    %v7048 = vsub.f32 0.0, %v7014
    %v7049 = vmul.f32 %v7017, 1.442695
    %v7050 = vpow.pop %v7049
    %v7051 = vmul.f32 %v7018, 1.442695
    %v7052 = vpow.pop %v7051
    %v7053 = vmul.f32 %v7019, 1.442695
    %v7054 = vpow.pop %v7053
    %v7055 = vmul.f32 %v7020, 1.442695
    %v7056 = vpow.pop %v7055
    %v7057 = vmul.f32 %v7021, 1.442695
    %v7058 = vpow.pop %v7057
    %v7059 = vmul.f32 %v7022, 1.442695
    %v7060 = vpow.pop %v7059
    %v7061 = vmul.f32 %v7023, 1.442695
    %v7062 = vpow.pop %v7061
    %v7063 = vmul.f32 %v7024, 1.442695
    %v7064 = vpow.pop %v7063
    %v7065 = vmul.f32 %v7025, 1.442695
    %v7066 = vpow.pop %v7065
    %v7067 = vmul.f32 %v7026, 1.442695
    %v7068 = vpow.pop %v7067
    %v7069 = vmul.f32 %v7027, 1.442695
    %v7070 = vpow.pop %v7069
    %v7071 = vmul.f32 %v7028, 1.442695
    %v7072 = vpow.pop %v7071
    %v7073 = vmul.f32 %v7029, 1.442695
    %v7074 = vpow.pop %v7073
    %v7075 = vmul.f32 %v7030, 1.442695
    %v7076 = vpow.pop %v7075
    %v7077 = vmul.f32 %v7031, 1.442695
    %v7078 = vpow.pop %v7077
    %v7079 = vmul.f32 %v7032, 1.442695
    %v7080 = vpow.pop %v7079
    %v7081 = vmul.f32 %v7033, 1.442695
    %v7082 = vpow.pop %v7081
    %v7083 = vmul.f32 %v7034, 1.442695
    %v7084 = vpow.pop %v7083
    %v7085 = vmul.f32 %v7035, 1.442695
    %v7086 = vpow.pop %v7085
    %v7087 = vmul.f32 %v7036, 1.442695
    %v7088 = vpow.pop %v7087
    %v7089 = vmul.f32 %v7037, 1.442695
    %v7090 = vpow.pop %v7089
    %v7091 = vmul.f32 %v7038, 1.442695
    %v7092 = vpow.pop %v7091
    %v7093 = vmul.f32 %v7039, 1.442695
    %v7094 = vpow.pop %v7093
    %v7095 = vmul.f32 %v7040, 1.442695
    %v7096 = vpow.pop %v7095
    %v7097 = vmul.f32 %v7041, 1.442695
    %v7098 = vpow.pop %v7097
    %v7099 = vmul.f32 %v7042, 1.442695
    %v7100 = vpow.pop %v7099
    %v7101 = vmul.f32 %v7043, 1.442695
    %v7102 = vpow.pop %v7101
    %v7103 = vmul.f32 %v7044, 1.442695
    %v7104 = vpow.pop %v7103
    %v7105 = vmul.f32 %v7045, 1.442695
    %v7106 = vpow.pop %v7105
    %v7107 = vmul.f32 %v7046, 1.442695
    %v7108 = vpow.pop %v7107
    %v7109 = vmul.f32 %v7047, 1.442695
    %v7110 = vpow.pop %v7109
    %v7111 = vmul.f32 %v7048, 1.442695
    %v7112 = vpow.pop %v7111
    %v7113 = vadd.f32 %v7050, 1.0
    %v7114 = vadd.f32 %v7052, 1.0
    %v7115 = vadd.f32 %v7054, 1.0
    %v7116 = vadd.f32 %v7056, 1.0
    %v7117 = vadd.f32 %v7058, 1.0
    %v7118 = vadd.f32 %v7060, 1.0
    %v7119 = vadd.f32 %v7062, 1.0
    %v7120 = vadd.f32 %v7064, 1.0
    %v7121 = vadd.f32 %v7066, 1.0
    %v7122 = vadd.f32 %v7068, 1.0
    %v7123 = vadd.f32 %v7070, 1.0
    %v7124 = vadd.f32 %v7072, 1.0
    %v7125 = vadd.f32 %v7074, 1.0
    %v7126 = vadd.f32 %v7076, 1.0
    %v7127 = vadd.f32 %v7078, 1.0
    %v7128 = vadd.f32 %v7080, 1.0
    %v7129 = vadd.f32 %v7082, 1.0
    %v7130 = vadd.f32 %v7084, 1.0
    %v7131 = vadd.f32 %v7086, 1.0
    %v7132 = vadd.f32 %v7088, 1.0
    %v7133 = vadd.f32 %v7090, 1.0
    %v7134 = vadd.f32 %v7092, 1.0
    %v7135 = vadd.f32 %v7094, 1.0
    %v7136 = vadd.f32 %v7096, 1.0
    %v7137 = vadd.f32 %v7098, 1.0
    %v7138 = vadd.f32 %v7100, 1.0
    %v7139 = vadd.f32 %v7102, 1.0
    %v7140 = vadd.f32 %v7104, 1.0
    %v7141 = vadd.f32 %v7106, 1.0
    %v7142 = vadd.f32 %v7108, 1.0
    %v7143 = vadd.f32 %v7110, 1.0
    %v7144 = vadd.f32 %v7112, 1.0
    %v7145 = vrcp.pop %v7113
    %v7146 = vrcp.pop %v7114
    %v7147 = vrcp.pop %v7115
    %v7148 = vrcp.pop %v7116
    %v7149 = vrcp.pop %v7117
    %v7150 = vrcp.pop %v7118
    %v7151 = vrcp.pop %v7119
    %v7152 = vrcp.pop %v7120
    %v7153 = vrcp.pop %v7121
    %v7154 = vrcp.pop %v7122
    %v7155 = vrcp.pop %v7123
    %v7156 = vrcp.pop %v7124
    %v7157 = vrcp.pop %v7125
    %v7158 = vrcp.pop %v7126
    %v7159 = vrcp.pop %v7127
    %v7160 = vrcp.pop %v7128
    %v7161 = vrcp.pop %v7129
    %v7162 = vrcp.pop %v7130
    %v7163 = vrcp.pop %v7131
    %v7164 = vrcp.pop %v7132
    %v7165 = vrcp.pop %v7133
    %v7166 = vrcp.pop %v7134
    %v7167 = vrcp.pop %v7135
    %v7168 = vrcp.pop %v7136
    %v7169 = vrcp.pop %v7137
    %v7170 = vrcp.pop %v7138
    %v7171 = vrcp.pop %v7139
    %v7172 = vrcp.pop %v7140
    %v7173 = vrcp.pop %v7141
    %v7174 = vrcp.pop %v7142
    %v7175 = vrcp.pop %v7143
    %v7176 = vrcp.pop %v7144
    %v7177 = vmul.f32 %v6891, %v7145
    %v7178 = vmul.f32 %v6894, %v7146
    %v7179 = vmul.f32 %v6899, %v7147
    %v7180 = vmul.f32 %v6902, %v7148
    %v7181 = vmul.f32 %v6907, %v7149
    %v7182 = vmul.f32 %v6910, %v7150
    %v7183 = vmul.f32 %v6915, %v7151
    %v7184 = vmul.f32 %v6918, %v7152
    %v7185 = vmul.f32 %v6923, %v7153
    %v7186 = vmul.f32 %v6926, %v7154
    %v7187 = vmul.f32 %v6931, %v7155
    %v7188 = vmul.f32 %v6934, %v7156
    %v7189 = vmul.f32 %v6939, %v7157
    %v7190 = vmul.f32 %v6942, %v7158
    %v7191 = vmul.f32 %v6947, %v7159
    %v7192 = vmul.f32 %v6950, %v7160
    %v7193 = vmul.f32 %v6955, %v7161
    %v7194 = vmul.f32 %v6958, %v7162
    %v7195 = vmul.f32 %v6963, %v7163
    %v7196 = vmul.f32 %v6966, %v7164
    %v7197 = vmul.f32 %v6971, %v7165
    %v7198 = vmul.f32 %v6974, %v7166
    %v7199 = vmul.f32 %v6979, %v7167
    %v7200 = vmul.f32 %v6982, %v7168
    %v7201 = vmul.f32 %v6987, %v7169
    %v7202 = vmul.f32 %v6990, %v7170
    %v7203 = vmul.f32 %v6995, %v7171
    %v7204 = vmul.f32 %v6998, %v7172
    %v7205 = vmul.f32 %v7003, %v7173
    %v7206 = vmul.f32 %v7006, %v7174
    %v7207 = vmul.f32 %v7011, %v7175
    %v7208 = vmul.f32 %v7014, %v7176
    %v7209 = vpack.c.bf16 %v7178, %v7177
    %v7210 = vpack.c.bf16 %v7180, %v7179
    %v7211 = vpack.c.bf16 %v7182, %v7181
    %v7212 = vpack.c.bf16 %v7184, %v7183
    %v7213 = vpack.c.bf16 %v7186, %v7185
    %v7214 = vpack.c.bf16 %v7188, %v7187
    %v7215 = vpack.c.bf16 %v7190, %v7189
    %v7216 = vpack.c.bf16 %v7192, %v7191
    %v7217 = vpack.c.bf16 %v7194, %v7193
    %v7218 = vpack.c.bf16 %v7196, %v7195
    %v7219 = vpack.c.bf16 %v7198, %v7197
    %v7220 = vpack.c.bf16 %v7200, %v7199
    %v7221 = vpack.c.bf16 %v7202, %v7201
    %v7222 = vpack.c.bf16 %v7204, %v7203
    %v7223 = vpack.c.bf16 %v7206, %v7205
    %v7224 = vpack.c.bf16 %v7208, %v7207
    %s7225 = scalar_lea.vmem %s4, 448
    %v7226 = vld [vmem:[%s7225] sm:$0xf]
    %v7227 = vld [vmem:[%s7225 + $0x4] sm:$0xf]
    %v7228 = vld [vmem:[%s7225 + $0x8] sm:$0xf]
    %v7229 = vld [vmem:[%s7225 + $0xc] sm:$0xf]
    %v7230 = vld [vmem:[%s7225 + $0x10] sm:$0xf]
    %v7231 = vld [vmem:[%s7225 + $0x14] sm:$0xf]
    %v7232 = vld [vmem:[%s7225 + $0x18] sm:$0xf]
    %v7233 = vld [vmem:[%s7225 + $0x1c] sm:$0xf]
    %v7234 = vld [vmem:[%s7225 + $0x20] sm:$0xf]
    %v7235 = vld [vmem:[%s7225 + $0x24] sm:$0xf]
    %v7236 = vld [vmem:[%s7225 + $0x28] sm:$0xf]
    %v7237 = vld [vmem:[%s7225 + $0x2c] sm:$0xf]
    %v7238 = vld [vmem:[%s7225 + $0x30] sm:$0xf]
    %v7239 = vld [vmem:[%s7225 + $0x34] sm:$0xf]
    %v7240 = vld [vmem:[%s7225 + $0x38] sm:$0xf]
    %v7241 = vld [vmem:[%s7225 + $0x3c] sm:$0xf]
    %s7242 = scalar_lea.vmem %s5, 8
    %v7243 = vld [vmem:[%s7242] sm:$0x1]
    %v7245 = vlaneseq
    %v7246 = vshrl.u32 %v7245, 7
    %v7247 = vsub.s32 0, %v7246
    %v7248 = vrot.slane %v7243, %v7247
    %v7266 = vunpack.c.l.b16 %v7226
    %v7267 = vunpack.c.l.b16 %v7227
    %v7268 = vunpack.c.l.b16 %v7228
    %v7269 = vunpack.c.l.b16 %v7229
    %v7270 = vunpack.c.l.b16 %v7230
    %v7271 = vunpack.c.l.b16 %v7231
    %v7272 = vunpack.c.l.b16 %v7232
    %v7273 = vunpack.c.l.b16 %v7233
    %v7274 = vunpack.c.l.b16 %v7234
    %v7275 = vunpack.c.l.b16 %v7235
    %v7276 = vunpack.c.l.b16 %v7236
    %v7277 = vunpack.c.l.b16 %v7237
    %v7278 = vunpack.c.l.b16 %v7238
    %v7279 = vunpack.c.l.b16 %v7239
    %v7280 = vunpack.c.l.b16 %v7240
    %v7281 = vunpack.c.l.b16 %v7241
    %v7282 = vpack.c.b16 %v7267, %v7266
    %v7283 = vpack.c.b16 %v7269, %v7268
    %v7284 = vpack.c.b16 %v7271, %v7270
    %v7285 = vpack.c.b16 %v7273, %v7272
    %v7286 = vpack.c.b16 %v7275, %v7274
    %v7287 = vpack.c.b16 %v7277, %v7276
    %v7288 = vpack.c.b16 %v7279, %v7278
    %v7289 = vpack.c.b16 %v7281, %v7280
    %7298 = vmatprep.subr.bf16.mxu0 0
    %7299 = vmatpush1.bf16.msra.mxu0 %v7282
    %7300 = vmatprep.subr.bf16.mxu0 0
    %7301 = vmatpush1.bf16.msra.mxu0 %v7283
    %7302 = vmatprep.subr.bf16.mxu0 0
    %7303 = vmatpush1.bf16.msra.mxu0 %v7284
    %7304 = vmatprep.subr.bf16.mxu0 0
    %7305 = vmatpush1.bf16.msra.mxu0 %v7285
    %7306 = vmatprep.subr.bf16.mxu0 0
    %7307 = vmatpush1.bf16.msra.mxu0 %v7286
    %7308 = vmatprep.subr.bf16.mxu0 0
    %7309 = vmatpush1.bf16.msra.mxu0 %v7287
    %7310 = vmatprep.subr.bf16.mxu0 0
    %7311 = vmatpush1.bf16.msra.mxu0 %v7288
    %7312 = vmatprep.subr.bf16.mxu0 0
    %7313 = vmatpush1.bf16.msra.mxu0 %v7289
    %7314 = vmatprep.subr.bf16.mxu0 0
    %7315 = vmatpush1.bf16.msra.mxu0 0
    %7316 = vmatprep.subr.bf16.mxu0 0
    %7317 = vmatpush1.bf16.msra.mxu0 0
    %7318 = vmatprep.subr.bf16.mxu0 0
    %7319 = vmatpush1.bf16.msra.mxu0 0
    %7320 = vmatprep.subr.bf16.mxu0 0
    %7321 = vmatpush1.bf16.msra.mxu0 0
    %7322 = vmatprep.subr.bf16.mxu0 0
    %7323 = vmatpush1.bf16.msra.mxu0 0
    %7324 = vmatprep.subr.bf16.mxu0 0
    %7325 = vmatpush1.bf16.msra.mxu0 0
    %7326 = vmatprep.subr.bf16.mxu0 0
    %7327 = vmatpush1.bf16.msra.mxu0 0
    %7328 = vmatprep.subr.bf16.mxu0 0
    %7329 = vmatpush1.bf16.msra.mxu0 0
    %7330 = vmatprep.mubr.bf16.mxu0 0
    %7331 = vmatmul.mubr.bf16.gmra.mrb[0].mxu0 %v7209
    %v7332 = vpop.f32.mrb[0].mxu0
    %v7333 = vadd.f32 %v7248, %v7332
    %v7334 = vpop.f32.mrb[0].mxu0
    %v7335 = vpop.f32.mrb[0].mxu0
    %v7336 = vadd.f32 %v7248, %v7335
    %v7337 = vpop.f32.mrb[0].mxu0
    %7338 = vmatprep.mubr.bf16.mxu0 0
    %7339 = vmatmul.mubr.bf16.gmra.mrb[0].mxu0 %v7210
    %v7340 = vpop.f32.mrb[0].mxu0
    %v7341 = vadd.f32 %v7248, %v7340
    %v7342 = vpop.f32.mrb[0].mxu0
    %v7343 = vpop.f32.mrb[0].mxu0
    %v7344 = vadd.f32 %v7248, %v7343
    %v7345 = vpop.f32.mrb[0].mxu0
    %7346 = vmatprep.mubr.bf16.mxu0 0
    %7347 = vmatmul.mubr.bf16.gmra.mrb[0].mxu0 %v7211
    %v7348 = vpop.f32.mrb[0].mxu0
    %v7349 = vadd.f32 %v7248, %v7348
    %v7350 = vpop.f32.mrb[0].mxu0
    %v7351 = vpop.f32.mrb[0].mxu0
    %v7352 = vadd.f32 %v7248, %v7351
    %v7353 = vpop.f32.mrb[0].mxu0
    %7354 = vmatprep.mubr.bf16.mxu0 0
    %7355 = vmatmul.mubr.bf16.gmra.mrb[0].mxu0 %v7212
    %v7356 = vpop.f32.mrb[0].mxu0
    %v7357 = vadd.f32 %v7248, %v7356
    %v7358 = vpop.f32.mrb[0].mxu0
    %v7359 = vpop.f32.mrb[0].mxu0
    %v7360 = vadd.f32 %v7248, %v7359
    %v7361 = vpop.f32.mrb[0].mxu0
    %7362 = vmatprep.mubr.bf16.mxu0 0
    %7363 = vmatmul.mubr.bf16.gmra.mrb[0].mxu0 %v7213
    %v7364 = vpop.f32.mrb[0].mxu0
    %v7365 = vadd.f32 %v7248, %v7364
    %v7366 = vpop.f32.mrb[0].mxu0
    %v7367 = vpop.f32.mrb[0].mxu0
    %v7368 = vadd.f32 %v7248, %v7367
    %v7369 = vpop.f32.mrb[0].mxu0
    %7370 = vmatprep.mubr.bf16.mxu0 0
    %7371 = vmatmul.mubr.bf16.gmra.mrb[0].mxu0 %v7214
    %v7372 = vpop.f32.mrb[0].mxu0
    %v7373 = vadd.f32 %v7248, %v7372
    %v7374 = vpop.f32.mrb[0].mxu0
    %v7375 = vpop.f32.mrb[0].mxu0
    %v7376 = vadd.f32 %v7248, %v7375
    %v7377 = vpop.f32.mrb[0].mxu0
    %7378 = vmatprep.mubr.bf16.mxu0 0
    %7379 = vmatmul.mubr.bf16.gmra.mrb[0].mxu0 %v7215
    %v7380 = vpop.f32.mrb[0].mxu0
    %v7381 = vadd.f32 %v7248, %v7380
    %v7382 = vpop.f32.mrb[0].mxu0
    %v7383 = vpop.f32.mrb[0].mxu0
    %v7384 = vadd.f32 %v7248, %v7383
    %v7385 = vpop.f32.mrb[0].mxu0
    %7386 = vmatprep.mubr.bf16.mxu0 0
    %7387 = vmatmul.mubr.bf16.gmra.mrb[0].mxu0 %v7216
    %v7388 = vpop.f32.mrb[0].mxu0
    %v7389 = vadd.f32 %v7248, %v7388
    %v7390 = vpop.f32.mrb[0].mxu0
    %v7391 = vpop.f32.mrb[0].mxu0
    %v7392 = vadd.f32 %v7248, %v7391
    %v7393 = vpop.f32.mrb[0].mxu0
    %7394 = vmatprep.mubr.bf16.mxu0 0
    %7395 = vmatmul.mubr.bf16.gmra.mrb[0].mxu0 %v7217
    %v7396 = vpop.f32.mrb[0].mxu0
    %v7397 = vadd.f32 %v7248, %v7396
    %v7398 = vpop.f32.mrb[0].mxu0
    %v7399 = vpop.f32.mrb[0].mxu0
    %v7400 = vadd.f32 %v7248, %v7399
    %v7401 = vpop.f32.mrb[0].mxu0
    %7402 = vmatprep.mubr.bf16.mxu0 0
    %7403 = vmatmul.mubr.bf16.gmra.mrb[0].mxu0 %v7218
    %v7404 = vpop.f32.mrb[0].mxu0
    %v7405 = vadd.f32 %v7248, %v7404
    %v7406 = vpop.f32.mrb[0].mxu0
    %v7407 = vpop.f32.mrb[0].mxu0
    %v7408 = vadd.f32 %v7248, %v7407
    %v7409 = vpop.f32.mrb[0].mxu0
    %7410 = vmatprep.mubr.bf16.mxu0 0
    %7411 = vmatmul.mubr.bf16.gmra.mrb[0].mxu0 %v7219
    %v7412 = vpop.f32.mrb[0].mxu0
    %v7413 = vadd.f32 %v7248, %v7412
    %v7414 = vpop.f32.mrb[0].mxu0
    %v7415 = vpop.f32.mrb[0].mxu0
    %v7416 = vadd.f32 %v7248, %v7415
    %v7417 = vpop.f32.mrb[0].mxu0
    %7418 = vmatprep.mubr.bf16.mxu0 0
    %7419 = vmatmul.mubr.bf16.gmra.mrb[0].mxu0 %v7220
    %v7420 = vpop.f32.mrb[0].mxu0
    %v7421 = vadd.f32 %v7248, %v7420
    %v7422 = vpop.f32.mrb[0].mxu0
    %v7423 = vpop.f32.mrb[0].mxu0
    %v7424 = vadd.f32 %v7248, %v7423
    %v7425 = vpop.f32.mrb[0].mxu0
    %7426 = vmatprep.mubr.bf16.mxu0 0
    %7427 = vmatmul.mubr.bf16.gmra.mrb[0].mxu0 %v7221
    %v7428 = vpop.f32.mrb[0].mxu0
    %v7429 = vadd.f32 %v7248, %v7428
    %v7430 = vpop.f32.mrb[0].mxu0
    %v7431 = vpop.f32.mrb[0].mxu0
    %v7432 = vadd.f32 %v7248, %v7431
    %v7433 = vpop.f32.mrb[0].mxu0
    %7434 = vmatprep.mubr.bf16.mxu0 0
    %7435 = vmatmul.mubr.bf16.gmra.mrb[0].mxu0 %v7222
    %v7436 = vpop.f32.mrb[0].mxu0
    %v7437 = vadd.f32 %v7248, %v7436
    %v7438 = vpop.f32.mrb[0].mxu0
    %v7439 = vpop.f32.mrb[0].mxu0
    %v7440 = vadd.f32 %v7248, %v7439
    %v7441 = vpop.f32.mrb[0].mxu0
    %7442 = vmatprep.mubr.bf16.mxu0 0
    %7443 = vmatmul.mubr.bf16.gmra.mrb[0].mxu0 %v7223
    %v7444 = vpop.f32.mrb[0].mxu0
    %v7445 = vadd.f32 %v7248, %v7444
    %v7446 = vpop.f32.mrb[0].mxu0
    %v7447 = vpop.f32.mrb[0].mxu0
    %v7448 = vadd.f32 %v7248, %v7447
    %v7449 = vpop.f32.mrb[0].mxu0
    %7450 = vmatprep.mubr.bf16.mxu0 0
    %7451 = vmatmul.mubr.bf16.gmra.mrb[0].mxu0 %v7224
    %v7452 = vpop.f32.mrb[0].mxu0
    %v7453 = vadd.f32 %v7248, %v7452
    %v7454 = vpop.f32.mrb[0].mxu0
    %v7455 = vpop.f32.mrb[0].mxu0
    %v7456 = vadd.f32 %v7248, %v7455
    %v7457 = vpop.f32.mrb[0].mxu0
    %7458 = vdwg.mxu0
    %v7459 = vmul.f32 %v25, 6.437752
    %v7460 = vmul.f32 %v26, 6.437752
    %v7461 = vmul.f32 %v27, 6.437752
    %v7462 = vmul.f32 %v28, 6.437752
    %v7463 = vmul.f32 %v29, 6.437752
    %v7464 = vmul.f32 %v30, 6.437752
    %v7465 = vmul.f32 %v31, 6.437752
    %v7466 = vmul.f32 %v32, 6.437752
    %v7467 = vmul.f32 %v33, 6.437752
    %v7468 = vmul.f32 %v34, 6.437752
    %v7469 = vmul.f32 %v35, 6.437752
    %v7470 = vmul.f32 %v36, 6.437752
    %v7471 = vmul.f32 %v37, 6.437752
    %v7472 = vmul.f32 %v38, 6.437752
    %v7473 = vmul.f32 %v39, 6.437752
    %v7474 = vmul.f32 %v40, 6.437752
    %v7475 = vmul.f32 %v41, 6.437752
    %v7476 = vmul.f32 %v42, 6.437752
    %v7477 = vmul.f32 %v43, 6.437752
    %v7478 = vmul.f32 %v44, 6.437752
    %v7479 = vmul.f32 %v45, 6.437752
    %v7480 = vmul.f32 %v46, 6.437752
    %v7481 = vmul.f32 %v47, 6.437752
    %v7482 = vmul.f32 %v48, 6.437752
    %v7483 = vmul.f32 %v49, 6.437752
    %v7484 = vmul.f32 %v50, 6.437752
    %v7485 = vmul.f32 %v51, 6.437752
    %v7486 = vmul.f32 %v52, 6.437752
    %v7487 = vmul.f32 %v53, 6.437752
    %v7488 = vmul.f32 %v54, 6.437752
    %v7489 = vmul.f32 %v55, 6.437752
    %v7490 = vmul.f32 %v56, 6.437752
    %v7491 = vmul.f32 %v7459, 1.442695
    %v7492 = vpow.pop %v7491
    %v7493 = vmul.f32 %v7460, 1.442695
    %v7494 = vpow.pop %v7493
    %v7495 = vmul.f32 %v7461, 1.442695
    %v7496 = vpow.pop %v7495
    %v7497 = vmul.f32 %v7462, 1.442695
    %v7498 = vpow.pop %v7497
    %v7499 = vmul.f32 %v7463, 1.442695
    %v7500 = vpow.pop %v7499
    %v7501 = vmul.f32 %v7464, 1.442695
    %v7502 = vpow.pop %v7501
    %v7503 = vmul.f32 %v7465, 1.442695
    %v7504 = vpow.pop %v7503
    %v7505 = vmul.f32 %v7466, 1.442695
    %v7506 = vpow.pop %v7505
    %v7507 = vmul.f32 %v7467, 1.442695
    %v7508 = vpow.pop %v7507
    %v7509 = vmul.f32 %v7468, 1.442695
    %v7510 = vpow.pop %v7509
    %v7511 = vmul.f32 %v7469, 1.442695
    %v7512 = vpow.pop %v7511
    %v7513 = vmul.f32 %v7470, 1.442695
    %v7514 = vpow.pop %v7513
    %v7515 = vmul.f32 %v7471, 1.442695
    %v7516 = vpow.pop %v7515
    %v7517 = vmul.f32 %v7472, 1.442695
    %v7518 = vpow.pop %v7517
    %v7519 = vmul.f32 %v7473, 1.442695
    %v7520 = vpow.pop %v7519
    %v7521 = vmul.f32 %v7474, 1.442695
    %v7522 = vpow.pop %v7521
    %v7523 = vmul.f32 %v7475, 1.442695
    %v7524 = vpow.pop %v7523
    %v7525 = vmul.f32 %v7476, 1.442695
    %v7526 = vpow.pop %v7525
    %v7527 = vmul.f32 %v7477, 1.442695
    %v7528 = vpow.pop %v7527
    %v7529 = vmul.f32 %v7478, 1.442695
    %v7530 = vpow.pop %v7529
    %v7531 = vmul.f32 %v7479, 1.442695
    %v7532 = vpow.pop %v7531
    %v7533 = vmul.f32 %v7480, 1.442695
    %v7534 = vpow.pop %v7533
    %v7535 = vmul.f32 %v7481, 1.442695
    %v7536 = vpow.pop %v7535
    %v7537 = vmul.f32 %v7482, 1.442695
    %v7538 = vpow.pop %v7537
    %v7539 = vmul.f32 %v7483, 1.442695
    %v7540 = vpow.pop %v7539
    %v7541 = vmul.f32 %v7484, 1.442695
    %v7542 = vpow.pop %v7541
    %v7543 = vmul.f32 %v7485, 1.442695
    %v7544 = vpow.pop %v7543
    %v7545 = vmul.f32 %v7486, 1.442695
    %v7546 = vpow.pop %v7545
    %v7547 = vmul.f32 %v7487, 1.442695
    %v7548 = vpow.pop %v7547
    %v7549 = vmul.f32 %v7488, 1.442695
    %v7550 = vpow.pop %v7549
    %v7551 = vmul.f32 %v7489, 1.442695
    %v7552 = vpow.pop %v7551
    %v7553 = vmul.f32 %v7490, 1.442695
    %v7554 = vpow.pop %v7553
    %v7555 = vsub.f32 %v7492, 1.0
    %v7556 = vsub.f32 %v7494, 1.0
    %v7557 = vsub.f32 %v7496, 1.0
    %v7558 = vsub.f32 %v7498, 1.0
    %v7559 = vsub.f32 %v7500, 1.0
    %v7560 = vsub.f32 %v7502, 1.0
    %v7561 = vsub.f32 %v7504, 1.0
    %v7562 = vsub.f32 %v7506, 1.0
    %v7563 = vsub.f32 %v7508, 1.0
    %v7564 = vsub.f32 %v7510, 1.0
    %v7565 = vsub.f32 %v7512, 1.0
    %v7566 = vsub.f32 %v7514, 1.0
    %v7567 = vsub.f32 %v7516, 1.0
    %v7568 = vsub.f32 %v7518, 1.0
    %v7569 = vsub.f32 %v7520, 1.0
    %v7570 = vsub.f32 %v7522, 1.0
    %v7571 = vsub.f32 %v7524, 1.0
    %v7572 = vsub.f32 %v7526, 1.0
    %v7573 = vsub.f32 %v7528, 1.0
    %v7574 = vsub.f32 %v7530, 1.0
    %v7575 = vsub.f32 %v7532, 1.0
    %v7576 = vsub.f32 %v7534, 1.0
    %v7577 = vsub.f32 %v7536, 1.0
    %v7578 = vsub.f32 %v7538, 1.0
    %v7579 = vsub.f32 %v7540, 1.0
    %v7580 = vsub.f32 %v7542, 1.0
    %v7581 = vsub.f32 %v7544, 1.0
    %v7582 = vsub.f32 %v7546, 1.0
    %v7583 = vsub.f32 %v7548, 1.0
    %v7584 = vsub.f32 %v7550, 1.0
    %v7585 = vsub.f32 %v7552, 1.0
    %v7586 = vsub.f32 %v7554, 1.0
    %v7587 = vmul.f32 %v7555, 0.15533373
    %v7588 = vmul.f32 %v7556, 0.15533373
    %v7589 = vmul.f32 %v7557, 0.15533373
    %v7590 = vmul.f32 %v7558, 0.15533373
    %v7591 = vmul.f32 %v7559, 0.15533373
    %v7592 = vmul.f32 %v7560, 0.15533373
    %v7593 = vmul.f32 %v7561, 0.15533373
    %v7594 = vmul.f32 %v7562, 0.15533373
    %v7595 = vmul.f32 %v7563, 0.15533373
    %v7596 = vmul.f32 %v7564, 0.15533373
    %v7597 = vmul.f32 %v7565, 0.15533373
    %v7598 = vmul.f32 %v7566, 0.15533373
    %v7599 = vmul.f32 %v7567, 0.15533373
    %v7600 = vmul.f32 %v7568, 0.15533373
    %v7601 = vmul.f32 %v7569, 0.15533373
    %v7602 = vmul.f32 %v7570, 0.15533373
    %v7603 = vmul.f32 %v7571, 0.15533373
    %v7604 = vmul.f32 %v7572, 0.15533373
    %v7605 = vmul.f32 %v7573, 0.15533373
    %v7606 = vmul.f32 %v7574, 0.15533373
    %v7607 = vmul.f32 %v7575, 0.15533373
    %v7608 = vmul.f32 %v7576, 0.15533373
    %v7609 = vmul.f32 %v7577, 0.15533373
    %v7610 = vmul.f32 %v7578, 0.15533373
    %v7611 = vmul.f32 %v7579, 0.15533373
    %v7612 = vmul.f32 %v7580, 0.15533373
    %v7613 = vmul.f32 %v7581, 0.15533373
    %v7614 = vmul.f32 %v7582, 0.15533373
    %v7615 = vmul.f32 %v7583, 0.15533373
    %v7616 = vmul.f32 %v7584, 0.15533373
    %v7617 = vmul.f32 %v7585, 0.15533373
    %v7618 = vmul.f32 %v7586, 0.15533373
    %v7619 = vrsqrt.pop %v7587
    %v7620 = vrsqrt.pop %v7588
    %v7621 = vrsqrt.pop %v7589
    %v7622 = vrsqrt.pop %v7590
    %v7623 = vrsqrt.pop %v7591
    %v7624 = vrsqrt.pop %v7592
    %v7625 = vrsqrt.pop %v7593
    %v7626 = vrsqrt.pop %v7594
    %v7627 = vrsqrt.pop %v7595
    %v7628 = vrsqrt.pop %v7596
    %v7629 = vrsqrt.pop %v7597
    %v7630 = vrsqrt.pop %v7598
    %v7631 = vrsqrt.pop %v7599
    %v7632 = vrsqrt.pop %v7600
    %v7633 = vrsqrt.pop %v7601
    %v7634 = vrsqrt.pop %v7602
    %v7635 = vrsqrt.pop %v7603
    %v7636 = vrsqrt.pop %v7604
    %v7637 = vrsqrt.pop %v7605
    %v7638 = vrsqrt.pop %v7606
    %v7639 = vrsqrt.pop %v7607
    %v7640 = vrsqrt.pop %v7608
    %v7641 = vrsqrt.pop %v7609
    %v7642 = vrsqrt.pop %v7610
    %v7643 = vrsqrt.pop %v7611
    %v7644 = vrsqrt.pop %v7612
    %v7645 = vrsqrt.pop %v7613
    %v7646 = vrsqrt.pop %v7614
    %v7647 = vrsqrt.pop %v7615
    %v7648 = vrsqrt.pop %v7616
    %v7649 = vrsqrt.pop %v7617
    %v7650 = vrsqrt.pop %v7618
    %7652 = vset.pattern.permute.xlu0 0
    %7653 = vperm.xlu0 %7652, %v7619
    %v7654 = vpop.permute.xlu0 %7653
    %7657 = vset.pattern.permute.xlu0 0
    %7658 = vperm.xlu0 %7657, %v7620
    %v7659 = vpop.permute.xlu0 %7658
    %7662 = vset.pattern.permute.xlu0 0
    %7663 = vperm.xlu0 %7662, %v7621
    %v7664 = vpop.permute.xlu0 %7663
    %7667 = vset.pattern.permute.xlu0 0
    %7668 = vperm.xlu0 %7667, %v7622
    %v7669 = vpop.permute.xlu0 %7668
    %7672 = vset.pattern.permute.xlu0 0
    %7673 = vperm.xlu0 %7672, %v7623
    %v7674 = vpop.permute.xlu0 %7673
    %7677 = vset.pattern.permute.xlu0 0
    %7678 = vperm.xlu0 %7677, %v7624
    %v7679 = vpop.permute.xlu0 %7678
    %7682 = vset.pattern.permute.xlu0 0
    %7683 = vperm.xlu0 %7682, %v7625
    %v7684 = vpop.permute.xlu0 %7683
    %7687 = vset.pattern.permute.xlu0 0
    %7688 = vperm.xlu0 %7687, %v7626
    %v7689 = vpop.permute.xlu0 %7688
    %7692 = vset.pattern.permute.xlu0 0
    %7693 = vperm.xlu0 %7692, %v7627
    %v7694 = vpop.permute.xlu0 %7693
    %7697 = vset.pattern.permute.xlu0 0
    %7698 = vperm.xlu0 %7697, %v7628
    %v7699 = vpop.permute.xlu0 %7698
    %7702 = vset.pattern.permute.xlu0 0
    %7703 = vperm.xlu0 %7702, %v7629
    %v7704 = vpop.permute.xlu0 %7703
    %7707 = vset.pattern.permute.xlu0 0
    %7708 = vperm.xlu0 %7707, %v7630
    %v7709 = vpop.permute.xlu0 %7708
    %7712 = vset.pattern.permute.xlu0 0
    %7713 = vperm.xlu0 %7712, %v7631
    %v7714 = vpop.permute.xlu0 %7713
    %7717 = vset.pattern.permute.xlu0 0
    %7718 = vperm.xlu0 %7717, %v7632
    %v7719 = vpop.permute.xlu0 %7718
    %7722 = vset.pattern.permute.xlu0 0
    %7723 = vperm.xlu0 %7722, %v7633
    %v7724 = vpop.permute.xlu0 %7723
    %7727 = vset.pattern.permute.xlu0 0
    %7728 = vperm.xlu0 %7727, %v7634
    %v7729 = vpop.permute.xlu0 %7728
    %7732 = vset.pattern.permute.xlu0 0
    %7733 = vperm.xlu0 %7732, %v7635
    %v7734 = vpop.permute.xlu0 %7733
    %7737 = vset.pattern.permute.xlu0 0
    %7738 = vperm.xlu0 %7737, %v7636
    %v7739 = vpop.permute.xlu0 %7738
    %7742 = vset.pattern.permute.xlu0 0
    %7743 = vperm.xlu0 %7742, %v7637
    %v7744 = vpop.permute.xlu0 %7743
    %7747 = vset.pattern.permute.xlu0 0
    %7748 = vperm.xlu0 %7747, %v7638
    %v7749 = vpop.permute.xlu0 %7748
    %7752 = vset.pattern.permute.xlu0 0
    %7753 = vperm.xlu0 %7752, %v7639
    %v7754 = vpop.permute.xlu0 %7753
    %7757 = vset.pattern.permute.xlu0 0
    %7758 = vperm.xlu0 %7757, %v7640
    %v7759 = vpop.permute.xlu0 %7758
    %7762 = vset.pattern.permute.xlu0 0
    %7763 = vperm.xlu0 %7762, %v7641
    %v7764 = vpop.permute.xlu0 %7763
    %7767 = vset.pattern.permute.xlu0 0
    %7768 = vperm.xlu0 %7767, %v7642
    %v7769 = vpop.permute.xlu0 %7768
    %7772 = vset.pattern.permute.xlu0 0
    %7773 = vperm.xlu0 %7772, %v7643
    %v7774 = vpop.permute.xlu0 %7773
    %7777 = vset.pattern.permute.xlu0 0
    %7778 = vperm.xlu0 %7777, %v7644
    %v7779 = vpop.permute.xlu0 %7778
    %7782 = vset.pattern.permute.xlu0 0
    %7783 = vperm.xlu0 %7782, %v7645
    %v7784 = vpop.permute.xlu0 %7783
    %7787 = vset.pattern.permute.xlu0 0
    %7788 = vperm.xlu0 %7787, %v7646
    %v7789 = vpop.permute.xlu0 %7788
    %7792 = vset.pattern.permute.xlu0 0
    %7793 = vperm.xlu0 %7792, %v7647
    %v7794 = vpop.permute.xlu0 %7793
    %7797 = vset.pattern.permute.xlu0 0
    %7798 = vperm.xlu0 %7797, %v7648
    %v7799 = vpop.permute.xlu0 %7798
    %7802 = vset.pattern.permute.xlu0 0
    %7803 = vperm.xlu0 %7802, %v7649
    %v7804 = vpop.permute.xlu0 %7803
    %7807 = vset.pattern.permute.xlu0 0
    %7808 = vperm.xlu0 %7807, %v7650
    %v7809 = vpop.permute.xlu0 %7808
    %v7811 = vmul.f32 %v7333, %v7654
    %v7812 = vmul.f32 %v7336, %v7659
    %v7813 = vmul.f32 %v7341, %v7664
    %v7814 = vmul.f32 %v7344, %v7669
    %v7815 = vmul.f32 %v7349, %v7674
    %v7816 = vmul.f32 %v7352, %v7679
    %v7817 = vmul.f32 %v7357, %v7684
    %v7818 = vmul.f32 %v7360, %v7689
    %v7819 = vmul.f32 %v7365, %v7694
    %v7820 = vmul.f32 %v7368, %v7699
    %v7821 = vmul.f32 %v7373, %v7704
    %v7822 = vmul.f32 %v7376, %v7709
    %v7823 = vmul.f32 %v7381, %v7714
    %v7824 = vmul.f32 %v7384, %v7719
    %v7825 = vmul.f32 %v7389, %v7724
    %v7826 = vmul.f32 %v7392, %v7729
    %v7827 = vmul.f32 %v7397, %v7734
    %v7828 = vmul.f32 %v7400, %v7739
    %v7829 = vmul.f32 %v7405, %v7744
    %v7830 = vmul.f32 %v7408, %v7749
    %v7831 = vmul.f32 %v7413, %v7754
    %v7832 = vmul.f32 %v7416, %v7759
    %v7833 = vmul.f32 %v7421, %v7764
    %v7834 = vmul.f32 %v7424, %v7769
    %v7835 = vmul.f32 %v7429, %v7774
    %v7836 = vmul.f32 %v7432, %v7779
    %v7837 = vmul.f32 %v7437, %v7784
    %v7838 = vmul.f32 %v7440, %v7789
    %v7839 = vmul.f32 %v7445, %v7794
    %v7840 = vmul.f32 %v7448, %v7799
    %v7841 = vmul.f32 %v7453, %v7804
    %v7842 = vmul.f32 %v7456, %v7809
    %7843 = vst [vmem:[#allocation2] sm:$0xff] %v7811
    %7844 = vst [vmem:[#allocation2 + $0x8] sm:$0xff] %v7812
    %7845 = vst [vmem:[#allocation2 + $0x10] sm:$0xff] %v7813
    %7846 = vst [vmem:[#allocation2 + $0x18] sm:$0xff] %v7814
    %7847 = vst [vmem:[#allocation2 + $0x20] sm:$0xff] %v7815
    %7848 = vst [vmem:[#allocation2 + $0x28] sm:$0xff] %v7816
    %7849 = vst [vmem:[#allocation2 + $0x30] sm:$0xff] %v7817
    %7850 = vst [vmem:[#allocation2 + $0x38] sm:$0xff] %v7818
    %7851 = vst [vmem:[#allocation2 + $0x40] sm:$0xff] %v7819
    %7852 = vst [vmem:[#allocation2 + $0x48] sm:$0xff] %v7820
    %7853 = vst [vmem:[#allocation2 + $0x50] sm:$0xff] %v7821
    %7854 = vst [vmem:[#allocation2 + $0x58] sm:$0xff] %v7822
    %7855 = vst [vmem:[#allocation2 + $0x60] sm:$0xff] %v7823
    %7856 = vst [vmem:[#allocation2 + $0x68] sm:$0xff] %v7824
    %7857 = vst [vmem:[#allocation2 + $0x70] sm:$0xff] %v7825
    %7858 = vst [vmem:[#allocation2 + $0x78] sm:$0xff] %v7826
    %7859 = vst [vmem:[#allocation2 + $0x80] sm:$0xff] %v7827
    %7860 = vst [vmem:[#allocation2 + $0x88] sm:$0xff] %v7828
    %7861 = vst [vmem:[#allocation2 + $0x90] sm:$0xff] %v7829
    %7862 = vst [vmem:[#allocation2 + $0x98] sm:$0xff] %v7830
    %7863 = vst [vmem:[#allocation2 + $0xa0] sm:$0xff] %v7831
    %7864 = vst [vmem:[#allocation2 + $0xa8] sm:$0xff] %v7832
    %7865 = vst [vmem:[#allocation2 + $0xb0] sm:$0xff] %v7833
    %7866 = vst [vmem:[#allocation2 + $0xb8] sm:$0xff] %v7834
    %7867 = vst [vmem:[#allocation2 + $0xc0] sm:$0xff] %v7835
    %7868 = vst [vmem:[#allocation2 + $0xc8] sm:$0xff] %v7836
    %7869 = vst [vmem:[#allocation2 + $0xd0] sm:$0xff] %v7837
    %7870 = vst [vmem:[#allocation2 + $0xd8] sm:$0xff] %v7838
    %7871 = vst [vmem:[#allocation2 + $0xe0] sm:$0xff] %v7839
    %7872 = vst [vmem:[#allocation2 + $0xe8] sm:$0xff] %v7840
    %7873 = vst [vmem:[#allocation2 + $0xf0] sm:$0xff] %v7841
    %7874 = vst [vmem:[#allocation2 + $0xf8] sm:$0xff] %v7842
    // Predicated region
    $region26: #{tpu_custom_call.1} parent=1 // pred_check
      _
    $region27: #{tpu_custom_call.1} parent=1 // pred_check_branch
      %7876 = sbr.rel (0) target = $region29
    $region28: #{tpu_custom_call.1} parent=1 // pred_region
      %s7878 = ssub.s32 4096, 4096
      %7879 = vsyncadd [#allocation3], %s7878
      %s7880 = sshll.u32 [#allocation2], 4
      %s7881 = int_to_ptr.vmem [resolvable:$true] %s7880
      %7886 = dma.vmem_to_hbm [thread:$0]  %s7881, 4096, %s6, [#allocation3], 128, 128, 8
    $region29: #{tpu_custom_call.1} parent=1 // pred_fallthru
      _
    // Predicated region
    $region30: #{tpu_custom_call.1} parent=1 // pred_check
      _
    $region31: #{tpu_custom_call.1} parent=1 // pred_check_branch
      %7888 = sbr.rel (0) target = $region33
    $region32: #{tpu_custom_call.1} parent=1 // pred_region
      %7889 = dma.done [#allocation3], 4096
    $region33: #{tpu_custom_call.1} parent=1 // pred_fallthru
      _
    %7890 = vsyncpa [#allocation3], 1

</llo_original>
